<compile_context>
chip_gen: v7x
topology: tpu7x:2x2x1
jax: 0.10.0
libtpu: 0.0.40
codegen_flags: <defaults>
</compile_context>

<pallas_src>
import functools

import jax
import jax.numpy as jnp
from jax import lax
from jax.experimental import pallas as pl
from jax.experimental.pallas import tpu as pltpu


# VMEM budget per kernel: <= ~56 MiB so it fits v7x's 64 MiB physical VMEM with headroom
# (v5e/v6e have 128 MiB).  TODO(synk): re-derive per generation from tile + resident-weight sizes.
_VMEM_LIMIT = 56 * 1024 * 1024


def _resident_spec(block_shape, index_map):
    """BlockSpec for grid-invariant (resident) operands: single-buffered when supported."""
    try:
        return pl.BlockSpec(block_shape, index_map,
                            pipeline_mode=pl.Buffered(buffer_count=1))
    except Exception:  # older JAX: no pipeline_mode / Buffered -> default double buffering
        return pl.BlockSpec(block_shape, index_map)


# -------------------- projection: out = x @ W^T, emitted head-major ----------------------
def _proj_heads_kernel(x_ref, w_ref, o_ref, *, n_head, d_head, n_chan):
    # y columns follow HF order: [q(all heads) | k(all heads) | v(all heads)].
    y = lax.dot_general(x_ref[...].astype(jnp.bfloat16), w_ref[...],
                        (((1,), (1,)), ((), ())),
                        preferred_element_type=jnp.float32).astype(jnp.bfloat16)
    hd = n_head * d_head
    for c in range(n_chan):
        for h in range(n_head):
            o_ref[0, h * n_chan + c] = y[:, c * hd + h * d_head:c * hd + (h + 1) * d_head]


def _project_heads(x2d, w, *, bsz, n_head, d_head, n_chan, tq=512):
    """x2d: (rows, bsz*d_model) time-major; w: (n_chan*n_head*d_head, d_model) bf16.
    Returns (bsz, n_chan*n_head, rows, d_head) bf16 with channel index = head*n_chan + c."""
    rows = x2d.shape[0]
    d_model = x2d.shape[1] // bsz
    tq = min(tq, rows)
    return pl.pallas_call(
        functools.partial(_proj_heads_kernel, n_head=n_head, d_head=d_head, n_chan=n_chan),
        grid=(bsz, pl.cdiv(rows, tq)),
        out_shape=jax.ShapeDtypeStruct((bsz, n_chan * n_head, rows, d_head), jnp.bfloat16),
        in_specs=[pl.BlockSpec((tq, d_model), lambda b, i: (i, b)),   # folds the transpose
                  _resident_spec((n_chan * n_head * d_head, d_model), lambda b, i: (0, 0))],
        out_specs=pl.BlockSpec((1, n_chan * n_head, tq, d_head), lambda b, i: (b, 0, i, 0)),
        compiler_params=pltpu.CompilerParams(
            dimension_semantics=("parallel", "parallel"),
            vmem_limit_bytes=_VMEM_LIMIT),
    )(x2d, w)


# ---------------- fused attention per (batch, head): AC + BD + shift + softmax + P@V ------
def _attn_kernel(qkv_ref, rk_ref, rwb_ref, rrb_ref, mask_ref, o_ref, *, scale):
    q = qkv_ref[0, 0]                                  # (qlen, d_head) bf16
    k = qkv_ref[0, 1]
    v = qkv_ref[0, 2]
    rk = rk_ref[0]                                     # (rlen, d_head) bf16

    q32 = q.astype(jnp.float32)
    q_rw = (q32 + rwb_ref[0]).astype(jnp.bfloat16)     # bias adds in f32 (v5e-friendly)
    q_rr = (q32 + rrb_ref[0]).astype(jnp.bfloat16)

    ac = lax.dot_general(q_rw, k, (((1,), (1,)), ((), ())),
                         preferred_element_type=jnp.float32)           # (qlen, klen)
    bd = lax.dot_general(q_rr, rk, (((1,), (1,)), ((), ())),
                         preferred_element_type=jnp.float32)           # (qlen, rlen)

    # Relative shift: shifted[i, j] = bd[i, j + klen - 1 - i].  Implemented as a uniform
    # lane roll plus a per-sublane strided roll (XLU work, hidden under the MXU).  Wrapped
    # values land only on causally-masked positions (j > i) and are killed by the mask.
    bd = pltpu.roll(bd, shift=1, axis=1)
    bd = pltpu.roll(bd, shift=0, axis=1, stride=1, stride_axis=0)

    s = (ac + bd) * scale + mask_ref[...]
    s = s - jnp.max(s, axis=-1, keepdims=True)
    p = jnp.exp(s)
    # approx reciprocal: EUP slot, ~1e-3 rel error -- fine for inference.
    p = p * pl.reciprocal(jnp.sum(p, axis=-1, keepdims=True), approx=True)

    ctx = lax.dot_general(p.astype(jnp.bfloat16), v, (((1,), (0,)), ((), ())),
                          preferred_element_type=jnp.float32)          # (qlen, d_head)
    o_ref[0, 0] = ctx.astype(o_ref.dtype)


# ---------------- output proj + residual LN + PositionwiseFF + LN (row-tiled) -------------
def _layernorm(x, g, b, eps):
    mu = jnp.mean(x, axis=-1, keepdims=True)
    var = jnp.mean(jnp.square(x - mu), axis=-1, keepdims=True)
    return (x - mu) * lax.rsqrt(var + eps) * g + b


def _out_ff_kernel(resid_ref, ctx_ref, wo_ref, ln1_g_ref, ln1_b_ref,
                   w1_ref, b1_ref, w2_ref, b2_ref, ln2_g_ref, ln2_b_ref,
                   out_ref, *, n_head, eps):
    # Attention output projection, contracted per head (ctx is head-major).
    attn = lax.dot_general(ctx_ref[0, 0], wo_ref[0], (((1,), (0,)), ((), ())),
                           preferred_element_type=jnp.float32)
    for h in range(1, n_head):
        attn = attn + lax.dot_general(ctx_ref[0, h], wo_ref[h], (((1,), (0,)), ((), ())),
                                      preferred_element_type=jnp.float32)
    x = _layernorm(resid_ref[...] + attn, ln1_g_ref[...], ln1_b_ref[...], eps)
    # TODO(synk): for very large d_inner on v7x (64 MiB VMEM), K-tile the FF over d_inner
    #             with a reduction grid axis instead of keeping ff_w1/ff_w2 fully resident.
    h1 = lax.dot_general(x.astype(jnp.bfloat16), w1_ref[...], (((1,), (1,)), ((), ())),
                         preferred_element_type=jnp.float32) + b1_ref[...]
    h1 = jnp.maximum(h1, 0.0).astype(jnp.bfloat16)
    y = lax.dot_general(h1, w2_ref[...], (((1,), (1,)), ((), ())),
                        preferred_element_type=jnp.float32) + b2_ref[...]
    out_ref[...] = _layernorm(x + y, ln2_g_ref[...], ln2_b_ref[...], eps)


# ------------------------------------ wrapper ---------------------------------------------
def rel_partial_learnable_decoder_layer(params, w, r, dec_attn_mask, eps=1e-5):
    """w: (qlen, bsz, d_model) f32; r: (rlen, 1, d_model) f32; dec_attn_mask: (qlen, klen) 0/1."""
    qlen, bsz, d_model = w.shape
    rlen = r.shape[0]
    n_head, d_head = params["r_w_bias"].shape
    d_inner = params["ff_w1"].shape[0]
    klen = qlen                                  # mems = None
    assert rlen == klen, "mems (rlen != qlen) not implemented"
    assert d_model % 128 == 0 and qlen % 8 == 0, "expects TPU-friendly shapes"
    scale = 1.0 / (d_head ** 0.5)

    # Weight casts / relayouts (tiny, weight-only).
    # NOTE(synk): in production cache these (or store params in bf16) outside the per-call path.
    wqkv_bf = params["wqkv"].astype(jnp.bfloat16)                         # (3*HD, d_model)
    wr_bf = params["wr"].astype(jnp.bfloat16)                             # (HD, d_model)
    wo_hm = params["wo"].reshape(d_model, n_head, d_head).transpose(1, 2, 0).astype(jnp.bfloat16)
    w1_bf = params["ff_w1"].astype(jnp.bfloat16)                          # (d_inner, d_model)
    w2_bf = params["ff_w2"].astype(jnp.bfloat16)                          # (d_model, d_inner)
    rwb = params["r_w_bias"].reshape(n_head, 1, d_head).astype(jnp.float32)
    rrb = params["r_r_bias"].reshape(n_head, 1, d_head).astype(jnp.float32)

    # Time-major activations viewed as (rows, bsz*d_model): the (qlen,bsz)<->(bsz,qlen)
    # transposes are folded into BlockSpec index maps (no XLA transpose passes).
    w2d = w.reshape(qlen, bsz * d_model)                                  # f32 residual path
    r2d = r.reshape(rlen, d_model)

    # --- QKV / R projections, head-major output (row-tiled, weights resident) ---
    qkv_heads = _project_heads(w2d, wqkv_bf, bsz=bsz, n_head=n_head, d_head=d_head,
                               n_chan=3)                   # (bsz, 3*n_head, qlen, d_head)
    rk_heads = _project_heads(r2d, wr_bf, bsz=1, n_head=n_head, d_head=d_head,
                              n_chan=1)                    # (1, n_head, rlen, d_head)
    rk_heads = rk_heads.reshape(n_head, rlen, d_head)      # metadata-only

    # Additive mask (0 / -1e30), resident in the attention kernel.
    mask_add = jnp.where(dec_attn_mask.astype(bool), jnp.float32(-1e30), jnp.float32(0.0))

    # --- fused attention, one (batch, head) pair per grid step, both axes parallel ---
    ctx = pl.pallas_call(
        functools.partial(_attn_kernel, scale=scale),
        grid=(bsz, n_head),
        out_shape=jax.ShapeDtypeStruct((bsz, n_head, qlen, d_head), jnp.bfloat16),
        in_specs=[
            pl.BlockSpec((1, 3, qlen, d_head), lambda b, h: (b, h, 0, 0)),   # q|k|v of head h
            pl.BlockSpec((1, rlen, d_head), lambda b, h: (h, 0, 0)),         # r_head_k of head h
            pl.BlockSpec((1, 1, d_head), lambda b, h: (h, 0, 0)),            # r_w_bias
            pl.BlockSpec((1, 1, d_head), lambda b, h: (h, 0, 0)),            # r_r_bias
            _resident_spec((qlen, klen), lambda b, h: (0, 0)),               # additive mask
        ],
        out_specs=pl.BlockSpec((1, 1, qlen, d_head), lambda b, h: (b, h, 0, 0)),
        compiler_params=pltpu.CompilerParams(
            dimension_semantics=("parallel", "parallel"),
            vmem_limit_bytes=_VMEM_LIMIT),
    )(qkv_heads, rk_heads, rwb, rrb, mask_add)

    # --- output projection + LN + PositionwiseFF + LN (row-tiled, weights resident) ---
    tq = min(512, qlen)
    out2d = pl.pallas_call(
        functools.partial(_out_ff_kernel, n_head=n_head, eps=eps),
        grid=(bsz, pl.cdiv(qlen, tq)),
        out_shape=jax.ShapeDtypeStruct((qlen, bsz * d_model), jnp.float32),
        in_specs=[
            pl.BlockSpec((tq, d_model), lambda b, i: (i, b)),                 # residual (f32)
            pl.BlockSpec((1, n_head, tq, d_head), lambda b, i: (b, 0, i, 0)), # attention ctx
            _resident_spec((n_head, d_head, d_model), lambda b, i: (0, 0, 0)),# wo (head-major)
            _resident_spec((1, d_model), lambda b, i: (0, 0)),                # ln1 gamma
            _resident_spec((1, d_model), lambda b, i: (0, 0)),                # ln1 beta
            _resident_spec((d_inner, d_model), lambda b, i: (0, 0)),          # ff_w1
            _resident_spec((1, d_inner), lambda b, i: (0, 0)),                # ff_b1
            _resident_spec((d_model, d_inner), lambda b, i: (0, 0)),          # ff_w2
            _resident_spec((1, d_model), lambda b, i: (0, 0)),                # ff_b2
            _resident_spec((1, d_model), lambda b, i: (0, 0)),                # ln2 gamma
            _resident_spec((1, d_model), lambda b, i: (0, 0)),                # ln2 beta
        ],
        out_specs=pl.BlockSpec((tq, d_model), lambda b, i: (i, b)),           # folds transpose
        compiler_params=pltpu.CompilerParams(
            dimension_semantics=("parallel", "parallel"),
            vmem_limit_bytes=_VMEM_LIMIT),
    )(w2d, ctx, wo_hm,
      params["ln1_g"].reshape(1, d_model), params["ln1_b"].reshape(1, d_model),
      w1_bf, params["ff_b1"].reshape(1, d_inner),
      w2_bf, params["ff_b2"].reshape(1, d_model),
      params["ln2_g"].reshape(1, d_model), params["ln2_b"].reshape(1, d_model))

    return out2d.reshape(qlen, bsz, d_model)


# --------------------------- pure-JAX f32 reference (HF semantics) -------------------------
def _reference_forward(params, w, r, dec_attn_mask, eps=1e-5):
    qlen, bsz, d_model = w.shape
    rlen = r.shape[0]
    n_head, d_head = params["r_w_bias"].shape
    scale = 1.0 / (d_head ** 0.5)
    w_heads = jnp.einsum("ibm,hm->ibh", w, params["wqkv"])
    r_head_k = jnp.einsum("rm,hm->rh", r[:, 0, :], params["wr"])
    wq, wk, wv = jnp.split(w_heads, 3, axis=-1)
    wq = wq.reshape(qlen, bsz, n_head, d_head)
    wk = wk.reshape(qlen, bsz, n_head, d_head)
    wv = wv.reshape(qlen, bsz, n_head, d_head)
    rk = r_head_k.reshape(rlen, n_head, d_head)
    AC = jnp.einsum("ibnd,jbnd->ijbn", wq + params["r_w_bias"], wk)
    BD = jnp.einsum("ibnd,jnd->ijbn", wq + params["r_r_bias"], rk)
    zp = jnp.zeros((qlen, 1, bsz, n_head), BD.dtype)
    BDp = jnp.concatenate([zp, BD], axis=1).reshape(rlen + 1, qlen, bsz, n_head)
    BD = BDp[1:].reshape(qlen, rlen, bsz, n_head)
    score = (AC + BD) * scale
    score = jnp.where(dec_attn_mask.astype(bool)[:, :, None, None], -1e30, score)
    prob = jax.nn.softmax(score, axis=1)
    vec = jnp.einsum("ijbn,jbnd->ibnd", prob, wv).reshape(qlen, bsz, n_head * d_head)
    attn_out = jnp.einsum("ibh,mh->ibm", vec, params["wo"])

    def ln(x, g, b):
        mu = jnp.mean(x, -1, keepdims=True)
        va = jnp.mean((x - mu) ** 2, -1, keepdims=True)
        return (x - mu) / jnp.sqrt(va + eps) * g + b

    x = ln(w + attn_out, params["ln1_g"], params["ln1_b"])
    h = jax.nn.relu(jnp.einsum("ibm,km->ibk", x, params["ff_w1"]) + params["ff_b1"])
    y = jnp.einsum("ibk,mk->ibm", h, params["ff_w2"]) + params["ff_b2"]
    return ln(x + y, params["ln2_g"], params["ln2_b"])


def init_params(key, n_head, d_model, d_head, d_inner):
    ks = jax.random.split(key, 8)
    s = 0.02
    return {
        "wqkv": s * jax.random.normal(ks[0], (3 * n_head * d_head, d_model), jnp.float32),
        "wr":   s * jax.random.normal(ks[1], (n_head * d_head, d_model), jnp.float32),
        "wo":   s * jax.random.normal(ks[2], (d_model, n_head * d_head), jnp.float32),
        "r_w_bias": s * jax.random.normal(ks[3], (n_head, d_head), jnp.float32),
        "r_r_bias": s * jax.random.normal(ks[4], (n_head, d_head), jnp.float32),
        "ln1_g": jnp.ones((d_model,), jnp.float32),
        "ln1_b": jnp.zeros((d_model,), jnp.float32),
        "ff_w1": s * jax.random.normal(ks[5], (d_inner, d_model), jnp.float32),
        "ff_b1": jnp.zeros((d_inner,), jnp.float32),
        "ff_w2": s * jax.random.normal(ks[6], (d_model, d_inner), jnp.float32),
        "ff_b2": jnp.zeros((d_model,), jnp.float32),
        "ln2_g": jnp.ones((d_model,), jnp.float32),
        "ln2_b": jnp.zeros((d_model,), jnp.float32),
    }


if __name__ == "__main__":
    n_head, d_model, d_head, d_inner = 4, 128, 32, 256
    qlen, bsz = 128, 2
    rlen = qlen                     # no memory

    key = jax.random.PRNGKey(0)
    kp, kw, kr = jax.random.split(key, 3)
    params = init_params(kp, n_head, d_model, d_head, d_inner)

    dec_inp = jax.random.normal(kw, (qlen, bsz, d_model), jnp.float32)
    r = jax.random.normal(kr, (rlen, 1, d_model), jnp.float32)
    # standard transfo-xl causal mask (1 = masked), triu above diagonal
    dec_attn_mask = jnp.triu(jnp.ones((qlen, qlen), jnp.float32), k=1)

    layer = jax.jit(rel_partial_learnable_decoder_layer)
    out = jax.block_until_ready(layer(params, dec_inp, r, dec_attn_mask))

    assert out.shape == (qlen, bsz, d_model) and out.dtype == jnp.float32
    assert bool(jnp.all(jnp.isfinite(out)))

    ref = _reference_forward(params, dec_inp, r, dec_attn_mask)
    max_err = float(jnp.max(jnp.abs(out - ref)))
    assert max_err < 5e-2, f"max abs err vs reference: {max_err}"

    print("KERNEL_OK")
</pallas_src>

<mosaic_0001>
module attributes {stable_mosaic.version = 11 : i64} {
  func.func @_proj_heads_kernel(%arg0: i32, %arg1: i32, %arg2: memref<128x128xf32, #tpu.memory_space<vmem>>, %arg3: memref<384x128xbf16, #tpu.memory_space<vmem>>, %arg4: memref<1x12x128x32xbf16, #tpu.memory_space<vmem>>) attributes {dimension_semantics = [#tpu.dimension_semantics<parallel>, #tpu.dimension_semantics<parallel>], iteration_bounds = array<i64: 2, 1>, scalar_prefetch = 0 : i64, scratch_operands = 0 : i64, tpu.core_type = #tpu.core_type<tc>, window_params = [{transform_indices = @transform_0, window_bounds = array<i64: 128, 128>}, {pipeline_mode = #tpu.pipeline_mode<synchronous>, transform_indices = @transform_1, window_bounds = array<i64: 384, 128>}, {transform_indices = @transform_2, window_bounds = array<i64: 1, 12, 128, 32>}]} {
    %c0 = arith.constant 0 : index
    %c0_0 = arith.constant 0 : index
    %0 = vector.load %arg2[%c0, %c0_0] : memref<128x128xf32, #tpu.memory_space<vmem>>, vector<128x128xf32>
    %1 = arith.truncf %0 : vector<128x128xf32> to vector<128x128xbf16>
    %c0_1 = arith.constant 0 : index
    %c0_2 = arith.constant 0 : index
    %2 = vector.load %arg3[%c0_1, %c0_2] : memref<384x128xbf16, #tpu.memory_space<vmem>>, vector<384x128xbf16>
    %cst = arith.constant dense<0.000000e+00> : vector<128x384xf32>
    %3 = tpu.matmul %1, %2, %cst {dimension_numbers = #tpu.dot_dimension_numbers<[1], [1], [0], [0], [0, 0, 1, 0], [], []>} : vector<128x128xbf16>, vector<384x128xbf16>, vector<128x384xf32> -> vector<128x384xf32>
    %4 = arith.truncf %3 : vector<128x384xf32> to vector<128x384xbf16>
    %5 = vector.extract_strided_slice %4 {offsets = [0, 0], sizes = [128, 32], strides = [1, 1]} : vector<128x384xbf16> to vector<128x32xbf16>
    %c0_3 = arith.constant 0 : index
    %c0_4 = arith.constant 0 : index
    %c0_5 = arith.constant 0 : index
    %c0_6 = arith.constant 0 : index
    %6 = vector.load %arg4[%c0_3, %c0_4, %c0_5, %c0_6] : memref<1x12x128x32xbf16, #tpu.memory_space<vmem>>, vector<1x1x128x32xbf16>
    %7 = vector.shape_cast %6 : vector<1x1x128x32xbf16> to vector<128x32xbf16>
    %8 = vector.shape_cast %5 : vector<128x32xbf16> to vector<1x1x128x32xbf16>
    tpu.vector_store %arg4[%c0_3, %c0_4, %c0_5, %c0_6], %8 {strides = array<i32>} : memref<1x12x128x32xbf16, #tpu.memory_space<vmem>>, vector<1x1x128x32xbf16>,
    %9 = vector.extract_strided_slice %4 {offsets = [0, 32], sizes = [128, 32], strides = [1, 1]} : vector<128x384xbf16> to vector<128x32xbf16>
    %c0_7 = arith.constant 0 : index
    %c3 = arith.constant 3 : index
    %c0_8 = arith.constant 0 : index
    %c0_9 = arith.constant 0 : index
    %10 = vector.load %arg4[%c0_7, %c3, %c0_8, %c0_9] : memref<1x12x128x32xbf16, #tpu.memory_space<vmem>>, vector<1x1x128x32xbf16>
    %11 = vector.shape_cast %10 : vector<1x1x128x32xbf16> to vector<128x32xbf16>
    %12 = vector.shape_cast %9 : vector<128x32xbf16> to vector<1x1x128x32xbf16>
    tpu.vector_store %arg4[%c0_7, %c3, %c0_8, %c0_9], %12 {strides = array<i32>} : memref<1x12x128x32xbf16, #tpu.memory_space<vmem>>, vector<1x1x128x32xbf16>,
    %13 = vector.extract_strided_slice %4 {offsets = [0, 64], sizes = [128, 32], strides = [1, 1]} : vector<128x384xbf16> to vector<128x32xbf16>
    %c0_10 = arith.constant 0 : index
    %c6 = arith.constant 6 : index
    %c0_11 = arith.constant 0 : index
    %c0_12 = arith.constant 0 : index
    %14 = vector.load %arg4[%c0_10, %c6, %c0_11, %c0_12] : memref<1x12x128x32xbf16, #tpu.memory_space<vmem>>, vector<1x1x128x32xbf16>
    %15 = vector.shape_cast %14 : vector<1x1x128x32xbf16> to vector<128x32xbf16>
    %16 = vector.shape_cast %13 : vector<128x32xbf16> to vector<1x1x128x32xbf16>
    tpu.vector_store %arg4[%c0_10, %c6, %c0_11, %c0_12], %16 {strides = array<i32>} : memref<1x12x128x32xbf16, #tpu.memory_space<vmem>>, vector<1x1x128x32xbf16>,
    %17 = vector.extract_strided_slice %4 {offsets = [0, 96], sizes = [128, 32], strides = [1, 1]} : vector<128x384xbf16> to vector<128x32xbf16>
    %c0_13 = arith.constant 0 : index
    %c9 = arith.constant 9 : index
    %c0_14 = arith.constant 0 : index
    %c0_15 = arith.constant 0 : index
    %18 = vector.load %arg4[%c0_13, %c9, %c0_14, %c0_15] : memref<1x12x128x32xbf16, #tpu.memory_space<vmem>>, vector<1x1x128x32xbf16>
    %19 = vector.shape_cast %18 : vector<1x1x128x32xbf16> to vector<128x32xbf16>
    %20 = vector.shape_cast %17 : vector<128x32xbf16> to vector<1x1x128x32xbf16>
    tpu.vector_store %arg4[%c0_13, %c9, %c0_14, %c0_15], %20 {strides = array<i32>} : memref<1x12x128x32xbf16, #tpu.memory_space<vmem>>, vector<1x1x128x32xbf16>,
    %21 = vector.extract_strided_slice %4 {offsets = [0, 128], sizes = [128, 32], strides = [1, 1]} : vector<128x384xbf16> to vector<128x32xbf16>
    %c0_16 = arith.constant 0 : index
    %c1 = arith.constant 1 : index
    %c0_17 = arith.constant 0 : index
    %c0_18 = arith.constant 0 : index
    %22 = vector.load %arg4[%c0_16, %c1, %c0_17, %c0_18] : memref<1x12x128x32xbf16, #tpu.memory_space<vmem>>, vector<1x1x128x32xbf16>
    %23 = vector.shape_cast %22 : vector<1x1x128x32xbf16> to vector<128x32xbf16>
    %24 = vector.shape_cast %21 : vector<128x32xbf16> to vector<1x1x128x32xbf16>
    tpu.vector_store %arg4[%c0_16, %c1, %c0_17, %c0_18], %24 {strides = array<i32>} : memref<1x12x128x32xbf16, #tpu.memory_space<vmem>>, vector<1x1x128x32xbf16>,
    %25 = vector.extract_strided_slice %4 {offsets = [0, 160], sizes = [128, 32], strides = [1, 1]} : vector<128x384xbf16> to vector<128x32xbf16>
    %c0_19 = arith.constant 0 : index
    %c4 = arith.constant 4 : index
    %c0_20 = arith.constant 0 : index
    %c0_21 = arith.constant 0 : index
    %26 = vector.load %arg4[%c0_19, %c4, %c0_20, %c0_21] : memref<1x12x128x32xbf16, #tpu.memory_space<vmem>>, vector<1x1x128x32xbf16>
    %27 = vector.shape_cast %26 : vector<1x1x128x32xbf16> to vector<128x32xbf16>
    %28 = vector.shape_cast %25 : vector<128x32xbf16> to vector<1x1x128x32xbf16>
    tpu.vector_store %arg4[%c0_19, %c4, %c0_20, %c0_21], %28 {strides = array<i32>} : memref<1x12x128x32xbf16, #tpu.memory_space<vmem>>, vector<1x1x128x32xbf16>,
    %29 = vector.extract_strided_slice %4 {offsets = [0, 192], sizes = [128, 32], strides = [1, 1]} : vector<128x384xbf16> to vector<128x32xbf16>
    %c0_22 = arith.constant 0 : index
    %c7 = arith.constant 7 : index
    %c0_23 = arith.constant 0 : index
    %c0_24 = arith.constant 0 : index
    %30 = vector.load %arg4[%c0_22, %c7, %c0_23, %c0_24] : memref<1x12x128x32xbf16, #tpu.memory_space<vmem>>, vector<1x1x128x32xbf16>
    %31 = vector.shape_cast %30 : vector<1x1x128x32xbf16> to vector<128x32xbf16>
    %32 = vector.shape_cast %29 : vector<128x32xbf16> to vector<1x1x128x32xbf16>
    tpu.vector_store %arg4[%c0_22, %c7, %c0_23, %c0_24], %32 {strides = array<i32>} : memref<1x12x128x32xbf16, #tpu.memory_space<vmem>>, vector<1x1x128x32xbf16>,
    %33 = vector.extract_strided_slice %4 {offsets = [0, 224], sizes = [128, 32], strides = [1, 1]} : vector<128x384xbf16> to vector<128x32xbf16>
    %c0_25 = arith.constant 0 : index
    %c10 = arith.constant 10 : index
    %c0_26 = arith.constant 0 : index
    %c0_27 = arith.constant 0 : index
    %34 = vector.load %arg4[%c0_25, %c10, %c0_26, %c0_27] : memref<1x12x128x32xbf16, #tpu.memory_space<vmem>>, vector<1x1x128x32xbf16>
    %35 = vector.shape_cast %34 : vector<1x1x128x32xbf16> to vector<128x32xbf16>
    %36 = vector.shape_cast %33 : vector<128x32xbf16> to vector<1x1x128x32xbf16>
    tpu.vector_store %arg4[%c0_25, %c10, %c0_26, %c0_27], %36 {strides = array<i32>} : memref<1x12x128x32xbf16, #tpu.memory_space<vmem>>, vector<1x1x128x32xbf16>,
    %37 = vector.extract_strided_slice %4 {offsets = [0, 256], sizes = [128, 32], strides = [1, 1]} : vector<128x384xbf16> to vector<128x32xbf16>
    %c0_28 = arith.constant 0 : index
    %c2 = arith.constant 2 : index
    %c0_29 = arith.constant 0 : index
    %c0_30 = arith.constant 0 : index
    %38 = vector.load %arg4[%c0_28, %c2, %c0_29, %c0_30] : memref<1x12x128x32xbf16, #tpu.memory_space<vmem>>, vector<1x1x128x32xbf16>
    %39 = vector.shape_cast %38 : vector<1x1x128x32xbf16> to vector<128x32xbf16>
    %40 = vector.shape_cast %37 : vector<128x32xbf16> to vector<1x1x128x32xbf16>
    tpu.vector_store %arg4[%c0_28, %c2, %c0_29, %c0_30], %40 {strides = array<i32>} : memref<1x12x128x32xbf16, #tpu.memory_space<vmem>>, vector<1x1x128x32xbf16>,
    %41 = vector.extract_strided_slice %4 {offsets = [0, 288], sizes = [128, 32], strides = [1, 1]} : vector<128x384xbf16> to vector<128x32xbf16>
    %c0_31 = arith.constant 0 : index
    %c5 = arith.constant 5 : index
    %c0_32 = arith.constant 0 : index
    %c0_33 = arith.constant 0 : index
    %42 = vector.load %arg4[%c0_31, %c5, %c0_32, %c0_33] : memref<1x12x128x32xbf16, #tpu.memory_space<vmem>>, vector<1x1x128x32xbf16>
    %43 = vector.shape_cast %42 : vector<1x1x128x32xbf16> to vector<128x32xbf16>
    %44 = vector.shape_cast %41 : vector<128x32xbf16> to vector<1x1x128x32xbf16>
    tpu.vector_store %arg4[%c0_31, %c5, %c0_32, %c0_33], %44 {strides = array<i32>} : memref<1x12x128x32xbf16, #tpu.memory_space<vmem>>, vector<1x1x128x32xbf16>,
    %45 = vector.extract_strided_slice %4 {offsets = [0, 320], sizes = [128, 32], strides = [1, 1]} : vector<128x384xbf16> to vector<128x32xbf16>
    %c0_34 = arith.constant 0 : index
    %c8 = arith.constant 8 : index
    %c0_35 = arith.constant 0 : index
    %c0_36 = arith.constant 0 : index
    %46 = vector.load %arg4[%c0_34, %c8, %c0_35, %c0_36] : memref<1x12x128x32xbf16, #tpu.memory_space<vmem>>, vector<1x1x128x32xbf16>
    %47 = vector.shape_cast %46 : vector<1x1x128x32xbf16> to vector<128x32xbf16>
    %48 = vector.shape_cast %45 : vector<128x32xbf16> to vector<1x1x128x32xbf16>
    tpu.vector_store %arg4[%c0_34, %c8, %c0_35, %c0_36], %48 {strides = array<i32>} : memref<1x12x128x32xbf16, #tpu.memory_space<vmem>>, vector<1x1x128x32xbf16>,
    %49 = vector.extract_strided_slice %4 {offsets = [0, 352], sizes = [128, 32], strides = [1, 1]} : vector<128x384xbf16> to vector<128x32xbf16>
    %c0_37 = arith.constant 0 : index
    %c11 = arith.constant 11 : index
    %c0_38 = arith.constant 0 : index
    %c0_39 = arith.constant 0 : index
    %50 = vector.load %arg4[%c0_37, %c11, %c0_38, %c0_39] : memref<1x12x128x32xbf16, #tpu.memory_space<vmem>>, vector<1x1x128x32xbf16>
    %51 = vector.shape_cast %50 : vector<1x1x128x32xbf16> to vector<128x32xbf16>
    %52 = vector.shape_cast %49 : vector<128x32xbf16> to vector<1x1x128x32xbf16>
    tpu.vector_store %arg4[%c0_37, %c11, %c0_38, %c0_39], %52 {strides = array<i32>} : memref<1x12x128x32xbf16, #tpu.memory_space<vmem>>, vector<1x1x128x32xbf16>,
    return
  }
  func.func @transform_0(%arg0: i32, %arg1: i32) -> (i32, i32) {
    %c0_i32 = arith.constant 0 : i32
    return %arg1, %arg0 : i32, i32
  }
  func.func @transform_1(%arg0: i32, %arg1: i32) -> (i32, i32) {
    %c0_i32 = arith.constant 0 : i32
    %c0_i32_0 = arith.constant 0 : i32
    %c0_i32_1 = arith.constant 0 : i32
    return %c0_i32, %c0_i32_0 : i32, i32
  }
  func.func @transform_2(%arg0: i32, %arg1: i32) -> (i32, i32, i32, i32) {
    %c0_i32 = arith.constant 0 : i32
    %c0_i32_0 = arith.constant 0 : i32
    %c0_i32_1 = arith.constant 0 : i32
    return %arg0, %c0_i32, %arg1, %c0_i32_0 : i32, i32, i32, i32
  }
}

module attributes {stable_mosaic.version = 11 : i64} {
  func.func @_proj_heads_kernel(%arg0: i32, %arg1: i32, %arg2: memref<128x128xf32, #tpu.memory_space<vmem>>, %arg3: memref<128x128xbf16, #tpu.memory_space<vmem>>, %arg4: memref<1x4x128x32xbf16, #tpu.memory_space<vmem>>) attributes {dimension_semantics = [#tpu.dimension_semantics<parallel>, #tpu.dimension_semantics<parallel>], iteration_bounds = array<i64: 1, 1>, scalar_prefetch = 0 : i64, scratch_operands = 0 : i64, tpu.core_type = #tpu.core_type<tc>, window_params = [{transform_indices = @transform_0, window_bounds = array<i64: 128, 128>}, {pipeline_mode = #tpu.pipeline_mode<synchronous>, transform_indices = @transform_1, window_bounds = array<i64: 128, 128>}, {transform_indices = @transform_2, window_bounds = array<i64: 1, 4, 128, 32>}]} {
    %c0 = arith.constant 0 : index
    %c0_0 = arith.constant 0 : index
    %0 = vector.load %arg2[%c0, %c0_0] : memref<128x128xf32, #tpu.memory_space<vmem>>, vector<128x128xf32>
    %1 = arith.truncf %0 : vector<128x128xf32> to vector<128x128xbf16>
    %c0_1 = arith.constant 0 : index
    %c0_2 = arith.constant 0 : index
    %2 = vector.load %arg3[%c0_1, %c0_2] : memref<128x128xbf16, #tpu.memory_space<vmem>>, vector<128x128xbf16>
    %cst = arith.constant dense<0.000000e+00> : vector<128x128xf32>
    %3 = tpu.matmul %1, %2, %cst {dimension_numbers = #tpu.dot_dimension_numbers<[1], [1], [0], [0], [0, 0, 1, 0], [], []>} : vector<128x128xbf16>, vector<128x128xbf16>, vector<128x128xf32> -> vector<128x128xf32>
    %4 = arith.truncf %3 : vector<128x128xf32> to vector<128x128xbf16>
    %5 = vector.extract_strided_slice %4 {offsets = [0, 0], sizes = [128, 32], strides = [1, 1]} : vector<128x128xbf16> to vector<128x32xbf16>
    %c0_3 = arith.constant 0 : index
    %c0_4 = arith.constant 0 : index
    %c0_5 = arith.constant 0 : index
    %c0_6 = arith.constant 0 : index
    %6 = vector.load %arg4[%c0_3, %c0_4, %c0_5, %c0_6] : memref<1x4x128x32xbf16, #tpu.memory_space<vmem>>, vector<1x1x128x32xbf16>
    %7 = vector.shape_cast %6 : vector<1x1x128x32xbf16> to vector<128x32xbf16>
    %8 = vector.shape_cast %5 : vector<128x32xbf16> to vector<1x1x128x32xbf16>
    tpu.vector_store %arg4[%c0_3, %c0_4, %c0_5, %c0_6], %8 {strides = array<i32>} : memref<1x4x128x32xbf16, #tpu.memory_space<vmem>>, vector<1x1x128x32xbf16>,
    %9 = vector.extract_strided_slice %4 {offsets = [0, 32], sizes = [128, 32], strides = [1, 1]} : vector<128x128xbf16> to vector<128x32xbf16>
    %c0_7 = arith.constant 0 : index
    %c1 = arith.constant 1 : index
    %c0_8 = arith.constant 0 : index
    %c0_9 = arith.constant 0 : index
    %10 = vector.load %arg4[%c0_7, %c1, %c0_8, %c0_9] : memref<1x4x128x32xbf16, #tpu.memory_space<vmem>>, vector<1x1x128x32xbf16>
    %11 = vector.shape_cast %10 : vector<1x1x128x32xbf16> to vector<128x32xbf16>
    %12 = vector.shape_cast %9 : vector<128x32xbf16> to vector<1x1x128x32xbf16>
    tpu.vector_store %arg4[%c0_7, %c1, %c0_8, %c0_9], %12 {strides = array<i32>} : memref<1x4x128x32xbf16, #tpu.memory_space<vmem>>, vector<1x1x128x32xbf16>,
    %13 = vector.extract_strided_slice %4 {offsets = [0, 64], sizes = [128, 32], strides = [1, 1]} : vector<128x128xbf16> to vector<128x32xbf16>
    %c0_10 = arith.constant 0 : index
    %c2 = arith.constant 2 : index
    %c0_11 = arith.constant 0 : index
    %c0_12 = arith.constant 0 : index
    %14 = vector.load %arg4[%c0_10, %c2, %c0_11, %c0_12] : memref<1x4x128x32xbf16, #tpu.memory_space<vmem>>, vector<1x1x128x32xbf16>
    %15 = vector.shape_cast %14 : vector<1x1x128x32xbf16> to vector<128x32xbf16>
    %16 = vector.shape_cast %13 : vector<128x32xbf16> to vector<1x1x128x32xbf16>
    tpu.vector_store %arg4[%c0_10, %c2, %c0_11, %c0_12], %16 {strides = array<i32>} : memref<1x4x128x32xbf16, #tpu.memory_space<vmem>>, vector<1x1x128x32xbf16>,
    %17 = vector.extract_strided_slice %4 {offsets = [0, 96], sizes = [128, 32], strides = [1, 1]} : vector<128x128xbf16> to vector<128x32xbf16>
    %c0_13 = arith.constant 0 : index
    %c3 = arith.constant 3 : index
    %c0_14 = arith.constant 0 : index
    %c0_15 = arith.constant 0 : index
    %18 = vector.load %arg4[%c0_13, %c3, %c0_14, %c0_15] : memref<1x4x128x32xbf16, #tpu.memory_space<vmem>>, vector<1x1x128x32xbf16>
    %19 = vector.shape_cast %18 : vector<1x1x128x32xbf16> to vector<128x32xbf16>
    %20 = vector.shape_cast %17 : vector<128x32xbf16> to vector<1x1x128x32xbf16>
    tpu.vector_store %arg4[%c0_13, %c3, %c0_14, %c0_15], %20 {strides = array<i32>} : memref<1x4x128x32xbf16, #tpu.memory_space<vmem>>, vector<1x1x128x32xbf16>,
    return
  }
  func.func @transform_0(%arg0: i32, %arg1: i32) -> (i32, i32) {
    %c0_i32 = arith.constant 0 : i32
    return %arg1, %arg0 : i32, i32
  }
  func.func @transform_1(%arg0: i32, %arg1: i32) -> (i32, i32) {
    %c0_i32 = arith.constant 0 : i32
    %c0_i32_0 = arith.constant 0 : i32
    %c0_i32_1 = arith.constant 0 : i32
    return %c0_i32, %c0_i32_0 : i32, i32
  }
  func.func @transform_2(%arg0: i32, %arg1: i32) -> (i32, i32, i32, i32) {
    %c0_i32 = arith.constant 0 : i32
    %c0_i32_0 = arith.constant 0 : i32
    %c0_i32_1 = arith.constant 0 : i32
    return %arg0, %c0_i32, %arg1, %c0_i32_0 : i32, i32, i32, i32
  }
}

module attributes {stable_mosaic.version = 11 : i64} {
  func.func @_attn_kernel(%arg0: i32, %arg1: i32, %arg2: memref<1x3x128x32xbf16, #tpu.memory_space<vmem>>, %arg3: memref<1x128x32xbf16, #tpu.memory_space<vmem>>, %arg4: memref<1x1x32xf32, #tpu.memory_space<vmem>>, %arg5: memref<1x1x32xf32, #tpu.memory_space<vmem>>, %arg6: memref<128x128xf32, #tpu.memory_space<vmem>>, %arg7: memref<1x1x128x32xbf16, #tpu.memory_space<vmem>>) attributes {dimension_semantics = [#tpu.dimension_semantics<parallel>, #tpu.dimension_semantics<parallel>], iteration_bounds = array<i64: 2, 4>, scalar_prefetch = 0 : i64, scratch_operands = 0 : i64, tpu.core_type = #tpu.core_type<tc>, window_params = [{transform_indices = @transform_0, window_bounds = array<i64: 1, 3, 128, 32>}, {transform_indices = @transform_1, window_bounds = array<i64: 1, 128, 32>}, {transform_indices = @transform_2, window_bounds = array<i64: 1, 1, 32>}, {transform_indices = @transform_3, window_bounds = array<i64: 1, 1, 32>}, {pipeline_mode = #tpu.pipeline_mode<synchronous>, transform_indices = @transform_4, window_bounds = array<i64: 128, 128>}, {transform_indices = @transform_5, window_bounds = array<i64: 1, 1, 128, 32>}]} {
    %c0 = arith.constant 0 : index
    %c0_0 = arith.constant 0 : index
    %c0_1 = arith.constant 0 : index
    %c0_2 = arith.constant 0 : index
    %0 = vector.load %arg2[%c0, %c0_0, %c0_1, %c0_2] : memref<1x3x128x32xbf16, #tpu.memory_space<vmem>>, vector<1x1x128x32xbf16>
    %1 = vector.shape_cast %0 : vector<1x1x128x32xbf16> to vector<128x32xbf16>
    %c0_3 = arith.constant 0 : index
    %c1 = arith.constant 1 : index
    %c0_4 = arith.constant 0 : index
    %c0_5 = arith.constant 0 : index
    %2 = vector.load %arg2[%c0_3, %c1, %c0_4, %c0_5] : memref<1x3x128x32xbf16, #tpu.memory_space<vmem>>, vector<1x1x128x32xbf16>
    %3 = vector.shape_cast %2 : vector<1x1x128x32xbf16> to vector<128x32xbf16>
    %c0_6 = arith.constant 0 : index
    %c2 = arith.constant 2 : index
    %c0_7 = arith.constant 0 : index
    %c0_8 = arith.constant 0 : index
    %4 = vector.load %arg2[%c0_6, %c2, %c0_7, %c0_8] : memref<1x3x128x32xbf16, #tpu.memory_space<vmem>>, vector<1x1x128x32xbf16>
    %5 = vector.shape_cast %4 : vector<1x1x128x32xbf16> to vector<128x32xbf16>
    %c0_9 = arith.constant 0 : index
    %c0_10 = arith.constant 0 : index
    %c0_11 = arith.constant 0 : index
    %6 = vector.load %arg3[%c0_9, %c0_10, %c0_11] : memref<1x128x32xbf16, #tpu.memory_space<vmem>>, vector<1x128x32xbf16>
    %7 = vector.shape_cast %6 : vector<1x128x32xbf16> to vector<128x32xbf16>
    %8 = arith.extf %1 : vector<128x32xbf16> to vector<128x32xf32>
    %c0_12 = arith.constant 0 : index
    %c0_13 = arith.constant 0 : index
    %c0_14 = arith.constant 0 : index
    %9 = vector.load %arg4[%c0_12, %c0_13, %c0_14] : memref<1x1x32xf32, #tpu.memory_space<vmem>>, vector<1x1x32xf32>
    %10 = vector.shape_cast %9 : vector<1x1x32xf32> to vector<1x32xf32>
    %11 = vector.broadcast %10 : vector<1x32xf32> to vector<128x32xf32>
    %12 = arith.addf %8, %11 : vector<128x32xf32>
    %13 = arith.truncf %12 : vector<128x32xf32> to vector<128x32xbf16>
    %c0_15 = arith.constant 0 : index
    %c0_16 = arith.constant 0 : index
    %c0_17 = arith.constant 0 : index
    %14 = vector.load %arg5[%c0_15, %c0_16, %c0_17] : memref<1x1x32xf32, #tpu.memory_space<vmem>>, vector<1x1x32xf32>
    %15 = vector.shape_cast %14 : vector<1x1x32xf32> to vector<1x32xf32>
    %16 = vector.broadcast %15 : vector<1x32xf32> to vector<128x32xf32>
    %17 = arith.addf %8, %16 : vector<128x32xf32>
    %18 = arith.truncf %17 : vector<128x32xf32> to vector<128x32xbf16>
    %cst = arith.constant dense<0.000000e+00> : vector<128x128xf32>
    %19 = tpu.matmul %13, %3, %cst {dimension_numbers = #tpu.dot_dimension_numbers<[1], [1], [0], [0], [0, 0, 1, 0], [], []>} : vector<128x32xbf16>, vector<128x32xbf16>, vector<128x128xf32> -> vector<128x128xf32>
    %cst_18 = arith.constant dense<0.000000e+00> : vector<128x128xf32>
    %20 = tpu.matmul %18, %7, %cst_18 {dimension_numbers = #tpu.dot_dimension_numbers<[1], [1], [0], [0], [0, 0, 1, 0], [], []>} : vector<128x32xbf16>, vector<128x32xbf16>, vector<128x128xf32> -> vector<128x128xf32>
    %c1_i32 = arith.constant 1 : i32
    %21 = tpu.dynamic_rotate %20 by %c1_i32 dim 1 : vector<128x128xf32>, i32 -> vector<128x128xf32>
    %c0_i32 = arith.constant 0 : i32
    %22 = tpu.dynamic_rotate %21 by %c0_i32 dim 1 {stride = 1 : si32, stride_dimension = 0 : si32} : vector<128x128xf32>, i32 -> vector<128x128xf32>
    %23 = arith.addf %19, %22 : vector<128x128xf32>
    %cst_19 = arith.constant 0.176776692 : f32
    %24 = vector.broadcast %cst_19 : f32 to vector<128x128xf32>
    %25 = arith.mulf %23, %24 : vector<128x128xf32>
    %c0_20 = arith.constant 0 : index
    %c0_21 = arith.constant 0 : index
    %26 = vector.load %arg6[%c0_20, %c0_21] : memref<128x128xf32, #tpu.memory_space<vmem>>, vector<128x128xf32>
    %27 = arith.addf %25, %26 : vector<128x128xf32>
    %cst_22 = arith.constant dense<0xFF800000> : vector<128xf32>
    %28 = vector.multi_reduction <maximumf>, %27, %cst_22 [1] : vector<128x128xf32> to vector<128xf32>
    %29 = vector.shape_cast %28 : vector<128xf32> to vector<128x1xf32>
    %30 = vector.broadcast %29 : vector<128x1xf32> to vector<128x128xf32>
    %31 = arith.subf %27, %30 : vector<128x128xf32>
    %32 = math.exp %31 : vector<128x128xf32>
    %cst_23 = arith.constant dense<0.000000e+00> : vector<128xf32>
    %33 = vector.multi_reduction <add>, %32, %cst_23 [1] : vector<128x128xf32> to vector<128xf32>
    %34 = vector.shape_cast %33 : vector<128xf32> to vector<128x1xf32>
    %35 = tpu.reciprocal %34 {approx = true} : vector<128x1xf32> -> vector<128x1xf32>
    %36 = vector.broadcast %35 : vector<128x1xf32> to vector<128x128xf32>
    %37 = arith.mulf %32, %36 : vector<128x128xf32>
    %38 = arith.truncf %37 : vector<128x128xf32> to vector<128x128xbf16>
    %cst_24 = arith.constant dense<0.000000e+00> : vector<128x32xf32>
    %39 = tpu.matmul %38, %5, %cst_24 {dimension_numbers = #tpu.dot_dimension_numbers<[1], [0], [0], [1], [0, 0, 1, 1], [], []>} : vector<128x128xbf16>, vector<128x32xbf16>, vector<128x32xf32> -> vector<128x32xf32>
    %40 = arith.truncf %39 : vector<128x32xf32> to vector<128x32xbf16>
    %c0_25 = arith.constant 0 : index
    %c0_26 = arith.constant 0 : index
    %c0_27 = arith.constant 0 : index
    %c0_28 = arith.constant 0 : index
    %41 = vector.load %arg7[%c0_25, %c0_26, %c0_27, %c0_28] : memref<1x1x128x32xbf16, #tpu.memory_space<vmem>>, vector<1x1x128x32xbf16>
    %42 = vector.shape_cast %41 : vector<1x1x128x32xbf16> to vector<128x32xbf16>
    %43 = vector.shape_cast %40 : vector<128x32xbf16> to vector<1x1x128x32xbf16>
    tpu.vector_store %arg7[%c0_25, %c0_26, %c0_27, %c0_28], %43 {strides = array<i32>} : memref<1x1x128x32xbf16, #tpu.memory_space<vmem>>, vector<1x1x128x32xbf16>,
    return
  }
  func.func @transform_0(%arg0: i32, %arg1: i32) -> (i32, i32, i32, i32) {
    %c0_i32 = arith.constant 0 : i32
    %c0_i32_0 = arith.constant 0 : i32
    %c0_i32_1 = arith.constant 0 : i32
    return %arg0, %arg1, %c0_i32, %c0_i32_0 : i32, i32, i32, i32
  }
  func.func @transform_1(%arg0: i32, %arg1: i32) -> (i32, i32, i32) {
    %c0_i32 = arith.constant 0 : i32
    %c0_i32_0 = arith.constant 0 : i32
    %c0_i32_1 = arith.constant 0 : i32
    return %arg1, %c0_i32, %c0_i32_0 : i32, i32, i32
  }
  func.func @transform_2(%arg0: i32, %arg1: i32) -> (i32, i32, i32) {
    %c0_i32 = arith.constant 0 : i32
    %c0_i32_0 = arith.constant 0 : i32
    %c0_i32_1 = arith.constant 0 : i32
    return %arg1, %c0_i32, %c0_i32_0 : i32, i32, i32
  }
  func.func @transform_3(%arg0: i32, %arg1: i32) -> (i32, i32, i32) {
    %c0_i32 = arith.constant 0 : i32
    %c0_i32_0 = arith.constant 0 : i32
    %c0_i32_1 = arith.constant 0 : i32
    return %arg1, %c0_i32, %c0_i32_0 : i32, i32, i32
  }
  func.func @transform_4(%arg0: i32, %arg1: i32) -> (i32, i32) {
    %c0_i32 = arith.constant 0 : i32
    %c0_i32_0 = arith.constant 0 : i32
    %c0_i32_1 = arith.constant 0 : i32
    return %c0_i32, %c0_i32_0 : i32, i32
  }
  func.func @transform_5(%arg0: i32, %arg1: i32) -> (i32, i32, i32, i32) {
    %c0_i32 = arith.constant 0 : i32
    %c0_i32_0 = arith.constant 0 : i32
    %c0_i32_1 = arith.constant 0 : i32
    return %arg0, %arg1, %c0_i32, %c0_i32_0 : i32, i32, i32, i32
  }
}

module attributes {stable_mosaic.version = 11 : i64} {
  func.func @_out_ff_kernel(%arg0: i32, %arg1: i32, %arg2: memref<128x128xf32, #tpu.memory_space<vmem>>, %arg3: memref<1x4x128x32xbf16, #tpu.memory_space<vmem>>, %arg4: memref<4x32x128xbf16, #tpu.memory_space<vmem>>, %arg5: memref<1x128xf32, #tpu.memory_space<vmem>>, %arg6: memref<1x128xf32, #tpu.memory_space<vmem>>, %arg7: memref<256x128xbf16, #tpu.memory_space<vmem>>, %arg8: memref<1x256xf32, #tpu.memory_space<vmem>>, %arg9: memref<128x256xbf16, #tpu.memory_space<vmem>>, %arg10: memref<1x128xf32, #tpu.memory_space<vmem>>, %arg11: memref<1x128xf32, #tpu.memory_space<vmem>>, %arg12: memref<1x128xf32, #tpu.memory_space<vmem>>, %arg13: memref<128x128xf32, #tpu.memory_space<vmem>>) attributes {dimension_semantics = [#tpu.dimension_semantics<parallel>, #tpu.dimension_semantics<parallel>], iteration_bounds = array<i64: 2, 1>, scalar_prefetch = 0 : i64, scratch_operands = 0 : i64, tpu.core_type = #tpu.core_type<tc>, window_params = [{transform_indices = @transform_0, window_bounds = array<i64: 128, 128>}, {transform_indices = @transform_1, window_bounds = array<i64: 1, 4, 128, 32>}, {pipeline_mode = #tpu.pipeline_mode<synchronous>, transform_indices = @transform_2, window_bounds = array<i64: 4, 32, 128>}, {pipeline_mode = #tpu.pipeline_mode<synchronous>, transform_indices = @transform_3, window_bounds = array<i64: 1, 128>}, {pipeline_mode = #tpu.pipeline_mode<synchronous>, transform_indices = @transform_4, window_bounds = array<i64: 1, 128>}, {pipeline_mode = #tpu.pipeline_mode<synchronous>, transform_indices = @transform_5, window_bounds = array<i64: 256, 128>}, {pipeline_mode = #tpu.pipeline_mode<synchronous>, transform_indices = @transform_6, window_bounds = array<i64: 1, 256>}, {pipeline_mode = #tpu.pipeline_mode<synchronous>, transform_indices = @transform_7, window_bounds = array<i64: 128, 256>}, {pipeline_mode = #tpu.pipeline_mode<synchronous>, transform_indices = @transform_8, window_bounds = array<i64: 1, 128>}, {pipeline_mode = #tpu.pipeline_mode<synchronous>, transform_indices = @transform_9, window_bounds = array<i64: 1, 128>}, {pipeline_mode = #tpu.pipeline_mode<synchronous>, transform_indices = @transform_10, window_bounds = array<i64: 1, 128>}, {transform_indices = @transform_11, window_bounds = array<i64: 128, 128>}]} {
    %c0 = arith.constant 0 : index
    %c0_0 = arith.constant 0 : index
    %c0_1 = arith.constant 0 : index
    %c0_2 = arith.constant 0 : index
    %0 = vector.load %arg3[%c0, %c0_0, %c0_1, %c0_2] : memref<1x4x128x32xbf16, #tpu.memory_space<vmem>>, vector<1x1x128x32xbf16>
    %1 = vector.shape_cast %0 : vector<1x1x128x32xbf16> to vector<128x32xbf16>
    %c0_3 = arith.constant 0 : index
    %c0_4 = arith.constant 0 : index
    %c0_5 = arith.constant 0 : index
    %2 = vector.load %arg4[%c0_3, %c0_4, %c0_5] : memref<4x32x128xbf16, #tpu.memory_space<vmem>>, vector<1x32x128xbf16>
    %3 = vector.shape_cast %2 : vector<1x32x128xbf16> to vector<32x128xbf16>
    %cst = arith.constant dense<0.000000e+00> : vector<128x128xf32>
    %4 = tpu.matmul %1, %3, %cst {dimension_numbers = #tpu.dot_dimension_numbers<[1], [0], [0], [1], [0, 0, 1, 1], [], []>} : vector<128x32xbf16>, vector<32x128xbf16>, vector<128x128xf32> -> vector<128x128xf32>
    %c0_6 = arith.constant 0 : index
    %c1 = arith.constant 1 : index
    %c0_7 = arith.constant 0 : index
    %c0_8 = arith.constant 0 : index
    %5 = vector.load %arg3[%c0_6, %c1, %c0_7, %c0_8] : memref<1x4x128x32xbf16, #tpu.memory_space<vmem>>, vector<1x1x128x32xbf16>
    %6 = vector.shape_cast %5 : vector<1x1x128x32xbf16> to vector<128x32xbf16>
    %c1_9 = arith.constant 1 : index
    %c0_10 = arith.constant 0 : index
    %c0_11 = arith.constant 0 : index
    %7 = vector.load %arg4[%c1_9, %c0_10, %c0_11] : memref<4x32x128xbf16, #tpu.memory_space<vmem>>, vector<1x32x128xbf16>
    %8 = vector.shape_cast %7 : vector<1x32x128xbf16> to vector<32x128xbf16>
    %cst_12 = arith.constant dense<0.000000e+00> : vector<128x128xf32>
    %9 = tpu.matmul %6, %8, %cst_12 {dimension_numbers = #tpu.dot_dimension_numbers<[1], [0], [0], [1], [0, 0, 1, 1], [], []>} : vector<128x32xbf16>, vector<32x128xbf16>, vector<128x128xf32> -> vector<128x128xf32>
    %10 = arith.addf %4, %9 : vector<128x128xf32>
    %c0_13 = arith.constant 0 : index
    %c2 = arith.constant 2 : index
    %c0_14 = arith.constant 0 : index
    %c0_15 = arith.constant 0 : index
    %11 = vector.load %arg3[%c0_13, %c2, %c0_14, %c0_15] : memref<1x4x128x32xbf16, #tpu.memory_space<vmem>>, vector<1x1x128x32xbf16>
    %12 = vector.shape_cast %11 : vector<1x1x128x32xbf16> to vector<128x32xbf16>
    %c2_16 = arith.constant 2 : index
    %c0_17 = arith.constant 0 : index
    %c0_18 = arith.constant 0 : index
    %13 = vector.load %arg4[%c2_16, %c0_17, %c0_18] : memref<4x32x128xbf16, #tpu.memory_space<vmem>>, vector<1x32x128xbf16>
    %14 = vector.shape_cast %13 : vector<1x32x128xbf16> to vector<32x128xbf16>
    %cst_19 = arith.constant dense<0.000000e+00> : vector<128x128xf32>
    %15 = tpu.matmul %12, %14, %cst_19 {dimension_numbers = #tpu.dot_dimension_numbers<[1], [0], [0], [1], [0, 0, 1, 1], [], []>} : vector<128x32xbf16>, vector<32x128xbf16>, vector<128x128xf32> -> vector<128x128xf32>
    %16 = arith.addf %10, %15 : vector<128x128xf32>
    %c0_20 = arith.constant 0 : index
    %c3 = arith.constant 3 : index
    %c0_21 = arith.constant 0 : index
    %c0_22 = arith.constant 0 : index
    %17 = vector.load %arg3[%c0_20, %c3, %c0_21, %c0_22] : memref<1x4x128x32xbf16, #tpu.memory_space<vmem>>, vector<1x1x128x32xbf16>
    %18 = vector.shape_cast %17 : vector<1x1x128x32xbf16> to vector<128x32xbf16>
    %c3_23 = arith.constant 3 : index
    %c0_24 = arith.constant 0 : index
    %c0_25 = arith.constant 0 : index
    %19 = vector.load %arg4[%c3_23, %c0_24, %c0_25] : memref<4x32x128xbf16, #tpu.memory_space<vmem>>, vector<1x32x128xbf16>
    %20 = vector.shape_cast %19 : vector<1x32x128xbf16> to vector<32x128xbf16>
    %cst_26 = arith.constant dense<0.000000e+00> : vector<128x128xf32>
    %21 = tpu.matmul %18, %20, %cst_26 {dimension_numbers = #tpu.dot_dimension_numbers<[1], [0], [0], [1], [0, 0, 1, 1], [], []>} : vector<128x32xbf16>, vector<32x128xbf16>, vector<128x128xf32> -> vector<128x128xf32>
    %22 = arith.addf %16, %21 : vector<128x128xf32>
    %c0_27 = arith.constant 0 : index
    %c0_28 = arith.constant 0 : index
    %23 = vector.load %arg2[%c0_27, %c0_28] : memref<128x128xf32, #tpu.memory_space<vmem>>, vector<128x128xf32>
    %24 = arith.addf %23, %22 : vector<128x128xf32>
    %c0_29 = arith.constant 0 : index
    %c0_30 = arith.constant 0 : index
    %25 = vector.load %arg5[%c0_29, %c0_30] : memref<1x128xf32, #tpu.memory_space<vmem>>, vector<1x128xf32>
    %c0_31 = arith.constant 0 : index
    %c0_32 = arith.constant 0 : index
    %26 = vector.load %arg6[%c0_31, %c0_32] : memref<1x128xf32, #tpu.memory_space<vmem>>, vector<1x128xf32>
    %cst_33 = arith.constant dense<0.000000e+00> : vector<128xf32>
    %27 = vector.multi_reduction <add>, %24, %cst_33 [1] : vector<128x128xf32> to vector<128xf32>
    %28 = vector.shape_cast %27 : vector<128xf32> to vector<128x1xf32>
    %cst_34 = arith.constant 1.280000e+02 : f32
    %29 = vector.broadcast %cst_34 : f32 to vector<128x1xf32>
    %30 = arith.divf %28, %29 : vector<128x1xf32>
    %31 = vector.broadcast %30 : vector<128x1xf32> to vector<128x128xf32>
    %32 = arith.subf %24, %31 : vector<128x128xf32>
    %33 = arith.mulf %32, %32 : vector<128x128xf32>
    %cst_35 = arith.constant dense<0.000000e+00> : vector<128xf32>
    %34 = vector.multi_reduction <add>, %33, %cst_35 [1] : vector<128x128xf32> to vector<128xf32>
    %35 = vector.shape_cast %34 : vector<128xf32> to vector<128x1xf32>
    %cst_36 = arith.constant 1.280000e+02 : f32
    %36 = vector.broadcast %cst_36 : f32 to vector<128x1xf32>
    %37 = arith.divf %35, %36 : vector<128x1xf32>
    %38 = vector.broadcast %30 : vector<128x1xf32> to vector<128x128xf32>
    %39 = arith.subf %24, %38 : vector<128x128xf32>
    %cst_37 = arith.constant 9.99999974E-6 : f32
    %40 = vector.broadcast %cst_37 : f32 to vector<128x1xf32>
    %41 = arith.addf %37, %40 : vector<128x1xf32>
    %42 = math.rsqrt %41 : vector<128x1xf32>
    %43 = vector.broadcast %42 : vector<128x1xf32> to vector<128x128xf32>
    %44 = arith.mulf %39, %43 : vector<128x128xf32>
    %45 = vector.broadcast %25 : vector<1x128xf32> to vector<128x128xf32>
    %46 = arith.mulf %44, %45 : vector<128x128xf32>
    %47 = vector.broadcast %26 : vector<1x128xf32> to vector<128x128xf32>
    %48 = arith.addf %46, %47 : vector<128x128xf32>
    %49 = arith.truncf %48 : vector<128x128xf32> to vector<128x128xbf16>
    %c0_38 = arith.constant 0 : index
    %c0_39 = arith.constant 0 : index
    %50 = vector.load %arg7[%c0_38, %c0_39] : memref<256x128xbf16, #tpu.memory_space<vmem>>, vector<256x128xbf16>
    %cst_40 = arith.constant dense<0.000000e+00> : vector<128x256xf32>
    %51 = tpu.matmul %49, %50, %cst_40 {dimension_numbers = #tpu.dot_dimension_numbers<[1], [1], [0], [0], [0, 0, 1, 0], [], []>} : vector<128x128xbf16>, vector<256x128xbf16>, vector<128x256xf32> -> vector<128x256xf32>
    %c0_41 = arith.constant 0 : index
    %c0_42 = arith.constant 0 : index
    %52 = vector.load %arg8[%c0_41, %c0_42] : memref<1x256xf32, #tpu.memory_space<vmem>>, vector<1x256xf32>
    %53 = vector.broadcast %52 : vector<1x256xf32> to vector<128x256xf32>
    %54 = arith.addf %51, %53 : vector<128x256xf32>
    %cst_43 = arith.constant 0.000000e+00 : f32
    %55 = vector.broadcast %cst_43 : f32 to vector<128x256xf32>
    %56 = arith.maximumf %54, %55 : vector<128x256xf32>
    %57 = arith.truncf %56 : vector<128x256xf32> to vector<128x256xbf16>
    %c0_44 = arith.constant 0 : index
    %c0_45 = arith.constant 0 : index
    %58 = vector.load %arg9[%c0_44, %c0_45] : memref<128x256xbf16, #tpu.memory_space<vmem>>, vector<128x256xbf16>
    %cst_46 = arith.constant dense<0.000000e+00> : vector<128x128xf32>
    %59 = tpu.matmul %57, %58, %cst_46 {dimension_numbers = #tpu.dot_dimension_numbers<[1], [1], [0], [0], [0, 0, 1, 0], [], []>} : vector<128x256xbf16>, vector<128x256xbf16>, vector<128x128xf32> -> vector<128x128xf32>
    %c0_47 = arith.constant 0 : index
    %c0_48 = arith.constant 0 : index
    %60 = vector.load %arg10[%c0_47, %c0_48] : memref<1x128xf32, #tpu.memory_space<vmem>>, vector<1x128xf32>
    %61 = vector.broadcast %60 : vector<1x128xf32> to vector<128x128xf32>
    %62 = arith.addf %59, %61 : vector<128x128xf32>
    %63 = arith.addf %48, %62 : vector<128x128xf32>
    %c0_49 = arith.constant 0 : index
    %c0_50 = arith.constant 0 : index
    %64 = vector.load %arg11[%c0_49, %c0_50] : memref<1x128xf32, #tpu.memory_space<vmem>>, vector<1x128xf32>
    %c0_51 = arith.constant 0 : index
    %c0_52 = arith.constant 0 : index
    %65 = vector.load %arg12[%c0_51, %c0_52] : memref<1x128xf32, #tpu.memory_space<vmem>>, vector<1x128xf32>
    %cst_53 = arith.constant dense<0.000000e+00> : vector<128xf32>
    %66 = vector.multi_reduction <add>, %63, %cst_53 [1] : vector<128x128xf32> to vector<128xf32>
    %67 = vector.shape_cast %66 : vector<128xf32> to vector<128x1xf32>
    %cst_54 = arith.constant 1.280000e+02 : f32
    %68 = vector.broadcast %cst_54 : f32 to vector<128x1xf32>
    %69 = arith.divf %67, %68 : vector<128x1xf32>
    %70 = vector.broadcast %69 : vector<128x1xf32> to vector<128x128xf32>
    %71 = arith.subf %63, %70 : vector<128x128xf32>
    %72 = arith.mulf %71, %71 : vector<128x128xf32>
    %cst_55 = arith.constant dense<0.000000e+00> : vector<128xf32>
    %73 = vector.multi_reduction <add>, %72, %cst_55 [1] : vector<128x128xf32> to vector<128xf32>
    %74 = vector.shape_cast %73 : vector<128xf32> to vector<128x1xf32>
    %cst_56 = arith.constant 1.280000e+02 : f32
    %75 = vector.broadcast %cst_56 : f32 to vector<128x1xf32>
    %76 = arith.divf %74, %75 : vector<128x1xf32>
    %77 = vector.broadcast %69 : vector<128x1xf32> to vector<128x128xf32>
    %78 = arith.subf %63, %77 : vector<128x128xf32>
    %cst_57 = arith.constant 9.99999974E-6 : f32
    %79 = vector.broadcast %cst_57 : f32 to vector<128x1xf32>
    %80 = arith.addf %76, %79 : vector<128x1xf32>
    %81 = math.rsqrt %80 : vector<128x1xf32>
    %82 = vector.broadcast %81 : vector<128x1xf32> to vector<128x128xf32>
    %83 = arith.mulf %78, %82 : vector<128x128xf32>
    %84 = vector.broadcast %64 : vector<1x128xf32> to vector<128x128xf32>
    %85 = arith.mulf %83, %84 : vector<128x128xf32>
    %86 = vector.broadcast %65 : vector<1x128xf32> to vector<128x128xf32>
    %87 = arith.addf %85, %86 : vector<128x128xf32>
    %c0_58 = arith.constant 0 : index
    %c0_59 = arith.constant 0 : index
    %88 = vector.load %arg13[%c0_58, %c0_59] : memref<128x128xf32, #tpu.memory_space<vmem>>, vector<128x128xf32>
    tpu.vector_store %arg13[%c0_58, %c0_59], %87 {strides = array<i32>} : memref<128x128xf32, #tpu.memory_space<vmem>>, vector<128x128xf32>,
    return
  }
  func.func @transform_0(%arg0: i32, %arg1: i32) -> (i32, i32) {
    %c0_i32 = arith.constant 0 : i32
    return %arg1, %arg0 : i32, i32
  }
  func.func @transform_1(%arg0: i32, %arg1: i32) -> (i32, i32, i32, i32) {
    %c0_i32 = arith.constant 0 : i32
    %c0_i32_0 = arith.constant 0 : i32
    %c0_i32_1 = arith.constant 0 : i32
    return %arg0, %c0_i32, %arg1, %c0_i32_0 : i32, i32, i32, i32
  }
  func.func @transform_2(%arg0: i32, %arg1: i32) -> (i32, i32, i32) {
    %c0_i32 = arith.constant 0 : i32
    %c0_i32_0 = arith.constant 0 : i32
    %c0_i32_1 = arith.constant 0 : i32
    %c0_i32_2 = arith.constant 0 : i32
    return %c0_i32, %c0_i32_0, %c0_i32_1 : i32, i32, i32
  }
  func.func @transform_3(%arg0: i32, %arg1: i32) -> (i32, i32) {
    %c0_i32 = arith.constant 0 : i32
    %c0_i32_0 = arith.constant 0 : i32
    %c0_i32_1 = arith.constant 0 : i32
    return %c0_i32, %c0_i32_0 : i32, i32
  }
  func.func @transform_4(%arg0: i32, %arg1: i32) -> (i32, i32) {
    %c0_i32 = arith.constant 0 : i32
    %c0_i32_0 = arith.constant 0 : i32
    %c0_i32_1 = arith.constant 0 : i32
    return %c0_i32, %c0_i32_0 : i32, i32
  }
  func.func @transform_5(%arg0: i32, %arg1: i32) -> (i32, i32) {
    %c0_i32 = arith.constant 0 : i32
    %c0_i32_0 = arith.constant 0 : i32
    %c0_i32_1 = arith.constant 0 : i32
    return %c0_i32, %c0_i32_0 : i32, i32
  }
  func.func @transform_6(%arg0: i32, %arg1: i32) -> (i32, i32) {
    %c0_i32 = arith.constant 0 : i32
    %c0_i32_0 = arith.constant 0 : i32
    %c0_i32_1 = arith.constant 0 : i32
    return %c0_i32, %c0_i32_0 : i32, i32
  }
  func.func @transform_7(%arg0: i32, %arg1: i32) -> (i32, i32) {
    %c0_i32 = arith.constant 0 : i32
    %c0_i32_0 = arith.constant 0 : i32
    %c0_i32_1 = arith.constant 0 : i32
    return %c0_i32, %c0_i32_0 : i32, i32
  }
  func.func @transform_8(%arg0: i32, %arg1: i32) -> (i32, i32) {
    %c0_i32 = arith.constant 0 : i32
    %c0_i32_0 = arith.constant 0 : i32
    %c0_i32_1 = arith.constant 0 : i32
    return %c0_i32, %c0_i32_0 : i32, i32
  }
  func.func @transform_9(%arg0: i32, %arg1: i32) -> (i32, i32) {
    %c0_i32 = arith.constant 0 : i32
    %c0_i32_0 = arith.constant 0 : i32
    %c0_i32_1 = arith.constant 0 : i32
    return %c0_i32, %c0_i32_0 : i32, i32
  }
  func.func @transform_10(%arg0: i32, %arg1: i32) -> (i32, i32) {
    %c0_i32 = arith.constant 0 : i32
    %c0_i32_0 = arith.constant 0 : i32
    %c0_i32_1 = arith.constant 0 : i32
    return %c0_i32, %c0_i32_0 : i32, i32
  }
  func.func @transform_11(%arg0: i32, %arg1: i32) -> (i32, i32) {
    %c0_i32 = arith.constant 0 : i32
    return %arg1, %arg0 : i32, i32
  }
}

</mosaic_0001>

<llo_original>
// kernel: rel_partial_learnable_decoder_layer.5
$region0: #{rel_partial_learnable_decoder_layer.5}
  #allocation0 [shape = 'u32[]', space=smem, size = 0x4, offset = 0x4, fixed_abs, tag = 'smem constant byte address 0x4 - core index']
  #allocation1 [shape = 'u32[144,128]{1,0:T(1,128)}', space=vmem, size = 0x12000, scoped, tag = 'internal scratch']
  %s0 = inlined_call_operand.vmem [shape: f32[128,128], index: 0, kind: input, shape index: {}]
  %s1 = inlined_call_operand.vmem [shape: bf16[128,128], index: 1, kind: input, shape index: {}]
  %s2 = inlined_call_operand.vmem [shape: bf16[1,4,128,32], index: 2, kind: output, shape index: {}]
  %s3 = sld [smem:[#allocation0]]
  $region18: #{rel_partial_learnable_decoder_layer.5} parent=0
    _
  %s5 = ssub.s32 1, %s3
  %s6 = scalar_select 0, %s5, %s3
  // Predicated region
  $region2: #{rel_partial_learnable_decoder_layer.5} parent=0 // pred_check
    _
  $region3: #{rel_partial_learnable_decoder_layer.5} parent=0 // pred_check_branch
    %8 = sbr.rel (0) target = $region5
  $region4: #{rel_partial_learnable_decoder_layer.5} parent=0 // pred_region
    _
  $region5: #{rel_partial_learnable_decoder_layer.5} parent=0 // pred_fallthru
    _
  // Predicated region
  $region6: #{rel_partial_learnable_decoder_layer.5} parent=0 // pred_check
    _
  $region7: #{rel_partial_learnable_decoder_layer.5} parent=0 // pred_check_branch
    %10 = sbr.rel (0) target = $region9
  $region8: #{rel_partial_learnable_decoder_layer.5} parent=0 // pred_region
    _
  $region9: #{rel_partial_learnable_decoder_layer.5} parent=0 // pred_fallthru
    _
  %v12 = vld [vmem:[%s0] sm:$0xff]
  %v13 = vld [vmem:[%s0 + $0x8] sm:$0xff]
  %v14 = vld [vmem:[%s0 + $0x10] sm:$0xff]
  %v15 = vld [vmem:[%s0 + $0x18] sm:$0xff]
  %v16 = vld [vmem:[%s0 + $0x20] sm:$0xff]
  %v17 = vld [vmem:[%s0 + $0x28] sm:$0xff]
  %v18 = vld [vmem:[%s0 + $0x30] sm:$0xff]
  %v19 = vld [vmem:[%s0 + $0x38] sm:$0xff]
  %v20 = vld [vmem:[%s0 + $0x40] sm:$0xff]
  %v21 = vld [vmem:[%s0 + $0x48] sm:$0xff]
  %v22 = vld [vmem:[%s0 + $0x50] sm:$0xff]
  %v23 = vld [vmem:[%s0 + $0x58] sm:$0xff]
  %v24 = vld [vmem:[%s0 + $0x60] sm:$0xff]
  %v25 = vld [vmem:[%s0 + $0x68] sm:$0xff]
  %v26 = vld [vmem:[%s0 + $0x70] sm:$0xff]
  %v27 = vld [vmem:[%s0 + $0x78] sm:$0xff]
  %v28 = vpack.c.bf16 %v13, %v12
  %v29 = vpack.c.bf16 %v15, %v14
  %v30 = vpack.c.bf16 %v17, %v16
  %v31 = vpack.c.bf16 %v19, %v18
  %v32 = vpack.c.bf16 %v21, %v20
  %v33 = vpack.c.bf16 %v23, %v22
  %v34 = vpack.c.bf16 %v25, %v24
  %v35 = vpack.c.bf16 %v27, %v26
  %v36 = vld [vmem:[%s1] sm:$0xf]
  %v37 = vld [vmem:[%s1 + $0x4] sm:$0xf]
  %v38 = vld [vmem:[%s1 + $0x8] sm:$0xf]
  %v39 = vld [vmem:[%s1 + $0xc] sm:$0xf]
  %v40 = vld [vmem:[%s1 + $0x10] sm:$0xf]
  %v41 = vld [vmem:[%s1 + $0x14] sm:$0xf]
  %v42 = vld [vmem:[%s1 + $0x18] sm:$0xf]
  %v43 = vld [vmem:[%s1 + $0x1c] sm:$0xf]
  %v44 = vld [vmem:[%s1 + $0x20] sm:$0xf]
  %v45 = vld [vmem:[%s1 + $0x24] sm:$0xf]
  %v46 = vld [vmem:[%s1 + $0x28] sm:$0xf]
  %v47 = vld [vmem:[%s1 + $0x2c] sm:$0xf]
  %v48 = vld [vmem:[%s1 + $0x30] sm:$0xf]
  %v49 = vld [vmem:[%s1 + $0x34] sm:$0xf]
  %v50 = vld [vmem:[%s1 + $0x38] sm:$0xf]
  %v51 = vld [vmem:[%s1 + $0x3c] sm:$0xf]
  %v68 = vunpack.c.l.b16 %v36
  %v69 = vunpack.c.l.b16 %v37
  %v70 = vunpack.c.l.b16 %v38
  %v71 = vunpack.c.l.b16 %v39
  %v72 = vunpack.c.l.b16 %v40
  %v73 = vunpack.c.l.b16 %v41
  %v74 = vunpack.c.l.b16 %v42
  %v75 = vunpack.c.l.b16 %v43
  %v76 = vunpack.c.l.b16 %v44
  %v77 = vunpack.c.l.b16 %v45
  %v78 = vunpack.c.l.b16 %v46
  %v79 = vunpack.c.l.b16 %v47
  %v80 = vunpack.c.l.b16 %v48
  %v81 = vunpack.c.l.b16 %v49
  %v82 = vunpack.c.l.b16 %v50
  %v83 = vunpack.c.l.b16 %v51
  %v84 = vpack.c.b16 %v69, %v68
  %v85 = vpack.c.b16 %v71, %v70
  %v86 = vpack.c.b16 %v73, %v72
  %v87 = vpack.c.b16 %v75, %v74
  %v88 = vpack.c.b16 %v77, %v76
  %v89 = vpack.c.b16 %v79, %v78
  %v90 = vpack.c.b16 %v81, %v80
  %v91 = vpack.c.b16 %v83, %v82
  %100 = vmatprep.subr.bf16.mxu0 0
  %101 = vmatpush1.bf16.xpose.msra.mxu0 %v84
  %102 = vmatprep.subr.bf16.mxu0 0
  %103 = vmatpush1.bf16.xpose.msra.mxu0 %v85
  %104 = vmatprep.subr.bf16.mxu0 0
  %105 = vmatpush1.bf16.xpose.msra.mxu0 %v86
  %106 = vmatprep.subr.bf16.mxu0 0
  %107 = vmatpush1.bf16.xpose.msra.mxu0 %v87
  %108 = vmatprep.subr.bf16.mxu0 0
  %109 = vmatpush1.bf16.xpose.msra.mxu0 %v88
  %110 = vmatprep.subr.bf16.mxu0 0
  %111 = vmatpush1.bf16.xpose.msra.mxu0 %v89
  %112 = vmatprep.subr.bf16.mxu0 0
  %113 = vmatpush1.bf16.xpose.msra.mxu0 %v90
  %114 = vmatprep.subr.bf16.mxu0 0
  %115 = vmatpush1.bf16.xpose.msra.mxu0 %v91
  %116 = vmatprep.subr.bf16.mxu0 0
  %117 = vmatpush1.bf16.xpose.msra.mxu0 0
  %118 = vmatprep.subr.bf16.mxu0 0
  %119 = vmatpush1.bf16.xpose.msra.mxu0 0
  %120 = vmatprep.subr.bf16.mxu0 0
  %121 = vmatpush1.bf16.xpose.msra.mxu0 0
  %122 = vmatprep.subr.bf16.mxu0 0
  %123 = vmatpush1.bf16.xpose.msra.mxu0 0
  %124 = vmatprep.subr.bf16.mxu0 0
  %125 = vmatpush1.bf16.xpose.msra.mxu0 0
  %126 = vmatprep.subr.bf16.mxu0 0
  %127 = vmatpush1.bf16.xpose.msra.mxu0 0
  %128 = vmatprep.subr.bf16.mxu0 0
  %129 = vmatpush1.bf16.xpose.msra.mxu0 0
  %130 = vmatprep.subr.bf16.mxu0 0
  %131 = vmatpush1.bf16.xpose.msra.mxu0 0
  %132 = vmatprep.mubr.bf16.mxu0 0
  %133 = vmatmul.mubr.bf16.gmra.mrb[0].mxu0 %v28
  %v134 = vpop.f32.mrb[0].mxu0
  %v135 = vadd.f32 0.0, %v134
  %v136 = vpop.f32.mrb[0].mxu0
  %v137 = vpop.f32.mrb[0].mxu0
  %v138 = vadd.f32 0.0, %v137
  %v139 = vpop.f32.mrb[0].mxu0
  %140 = vmatprep.mubr.bf16.mxu0 0
  %141 = vmatmul.mubr.bf16.gmra.mrb[0].mxu0 %v29
  %v142 = vpop.f32.mrb[0].mxu0
  %v143 = vadd.f32 0.0, %v142
  %v144 = vpop.f32.mrb[0].mxu0
  %v145 = vpop.f32.mrb[0].mxu0
  %v146 = vadd.f32 0.0, %v145
  %v147 = vpop.f32.mrb[0].mxu0
  %148 = vmatprep.mubr.bf16.mxu0 0
  %149 = vmatmul.mubr.bf16.gmra.mrb[0].mxu0 %v30
  %v150 = vpop.f32.mrb[0].mxu0
  %v151 = vadd.f32 0.0, %v150
  %v152 = vpop.f32.mrb[0].mxu0
  %v153 = vpop.f32.mrb[0].mxu0
  %v154 = vadd.f32 0.0, %v153
  %v155 = vpop.f32.mrb[0].mxu0
  %156 = vmatprep.mubr.bf16.mxu0 0
  %157 = vmatmul.mubr.bf16.gmra.mrb[0].mxu0 %v31
  %v158 = vpop.f32.mrb[0].mxu0
  %v159 = vadd.f32 0.0, %v158
  %v160 = vpop.f32.mrb[0].mxu0
  %v161 = vpop.f32.mrb[0].mxu0
  %v162 = vadd.f32 0.0, %v161
  %v163 = vpop.f32.mrb[0].mxu0
  %164 = vmatprep.mubr.bf16.mxu0 0
  %165 = vmatmul.mubr.bf16.gmra.mrb[0].mxu0 %v32
  %v166 = vpop.f32.mrb[0].mxu0
  %v167 = vadd.f32 0.0, %v166
  %v168 = vpop.f32.mrb[0].mxu0
  %v169 = vpop.f32.mrb[0].mxu0
  %v170 = vadd.f32 0.0, %v169
  %v171 = vpop.f32.mrb[0].mxu0
  %172 = vmatprep.mubr.bf16.mxu0 0
  %173 = vmatmul.mubr.bf16.gmra.mrb[0].mxu0 %v33
  %v174 = vpop.f32.mrb[0].mxu0
  %v175 = vadd.f32 0.0, %v174
  %v176 = vpop.f32.mrb[0].mxu0
  %v177 = vpop.f32.mrb[0].mxu0
  %v178 = vadd.f32 0.0, %v177
  %v179 = vpop.f32.mrb[0].mxu0
  %180 = vmatprep.mubr.bf16.mxu0 0
  %181 = vmatmul.mubr.bf16.gmra.mrb[0].mxu0 %v34
  %v182 = vpop.f32.mrb[0].mxu0
  %v183 = vadd.f32 0.0, %v182
  %v184 = vpop.f32.mrb[0].mxu0
  %v185 = vpop.f32.mrb[0].mxu0
  %v186 = vadd.f32 0.0, %v185
  %v187 = vpop.f32.mrb[0].mxu0
  %188 = vmatprep.mubr.bf16.mxu0 0
  %189 = vmatmul.mubr.bf16.gmra.mrb[0].mxu0 %v35
  %v190 = vpop.f32.mrb[0].mxu0
  %v191 = vadd.f32 0.0, %v190
  %v192 = vpop.f32.mrb[0].mxu0
  %v193 = vpop.f32.mrb[0].mxu0
  %v194 = vadd.f32 0.0, %v193
  %v195 = vpop.f32.mrb[0].mxu0
  %196 = vdwg.mxu0
  %v197 = vpack.c.bf16 %v138, %v135
  %v198 = vpack.c.bf16 %v146, %v143
  %v199 = vpack.c.bf16 %v154, %v151
  %v200 = vpack.c.bf16 %v162, %v159
  %v201 = vpack.c.bf16 %v170, %v167
  %v202 = vpack.c.bf16 %v178, %v175
  %v203 = vpack.c.bf16 %v186, %v183
  %v204 = vpack.c.bf16 %v194, %v191
  %v213 = vunpack.c.l.b16 %v197
  %v214 = vunpack.c.h.b16 %v197
  %v215 = vunpack.c.l.b16 %v198
  %v216 = vunpack.c.h.b16 %v198
  %v217 = vunpack.c.l.b16 %v199
  %v218 = vunpack.c.h.b16 %v199
  %v219 = vunpack.c.l.b16 %v200
  %v220 = vunpack.c.h.b16 %v200
  %v221 = vunpack.c.l.b16 %v201
  %v222 = vunpack.c.h.b16 %v201
  %v223 = vunpack.c.l.b16 %v202
  %v224 = vunpack.c.h.b16 %v202
  %v225 = vunpack.c.l.b16 %v203
  %v226 = vunpack.c.h.b16 %v203
  %v227 = vunpack.c.l.b16 %v204
  %v228 = vunpack.c.h.b16 %v204
  %v229 = vpack.c.b16 %v213, %v213
  %v230 = vpack.c.b16 %v214, %v214
  %v231 = vpack.c.b16 %v215, %v215
  %v232 = vpack.c.b16 %v216, %v216
  %v233 = vpack.c.b16 %v217, %v217
  %v234 = vpack.c.b16 %v218, %v218
  %v235 = vpack.c.b16 %v219, %v219
  %v236 = vpack.c.b16 %v220, %v220
  %v237 = vpack.c.b16 %v221, %v221
  %v238 = vpack.c.b16 %v222, %v222
  %v239 = vpack.c.b16 %v223, %v223
  %v240 = vpack.c.b16 %v224, %v224
  %v241 = vpack.c.b16 %v225, %v225
  %v242 = vpack.c.b16 %v226, %v226
  %v243 = vpack.c.b16 %v227, %v227
  %v244 = vpack.c.b16 %v228, %v228
  %vm261 = vcmask 257024
  %262 = vst.msk [vmem:[%s2] sm:$0xf] %vm261, %v229
  %263 = vst.msk [vmem:[%s2 + $0x4] sm:$0xf] %vm261, %v230
  %264 = vst.msk [vmem:[%s2 + $0x8] sm:$0xf] %vm261, %v231
  %265 = vst.msk [vmem:[%s2 + $0xc] sm:$0xf] %vm261, %v232
  %266 = vst.msk [vmem:[%s2 + $0x10] sm:$0xf] %vm261, %v233
  %267 = vst.msk [vmem:[%s2 + $0x14] sm:$0xf] %vm261, %v234
  %268 = vst.msk [vmem:[%s2 + $0x18] sm:$0xf] %vm261, %v235
  %269 = vst.msk [vmem:[%s2 + $0x1c] sm:$0xf] %vm261, %v236
  %270 = vst.msk [vmem:[%s2 + $0x20] sm:$0xf] %vm261, %v237
  %271 = vst.msk [vmem:[%s2 + $0x24] sm:$0xf] %vm261, %v238
  %272 = vst.msk [vmem:[%s2 + $0x28] sm:$0xf] %vm261, %v239
  %273 = vst.msk [vmem:[%s2 + $0x2c] sm:$0xf] %vm261, %v240
  %274 = vst.msk [vmem:[%s2 + $0x30] sm:$0xf] %vm261, %v241
  %275 = vst.msk [vmem:[%s2 + $0x34] sm:$0xf] %vm261, %v242
  %276 = vst.msk [vmem:[%s2 + $0x38] sm:$0xf] %vm261, %v243
  %277 = vst.msk [vmem:[%s2 + $0x3c] sm:$0xf] %vm261, %v244
  %278 = vrot.lane.b32.xlu0 %v229, 96
  %v279 = vpop.permute.xlu0 %278
  %280 = vrot.lane.b32.xlu0 %v230, 96
  %v281 = vpop.permute.xlu0 %280
  %282 = vrot.lane.b32.xlu0 %v231, 96
  %v283 = vpop.permute.xlu0 %282
  %284 = vrot.lane.b32.xlu0 %v232, 96
  %v285 = vpop.permute.xlu0 %284
  %286 = vrot.lane.b32.xlu0 %v233, 96
  %v287 = vpop.permute.xlu0 %286
  %288 = vrot.lane.b32.xlu0 %v234, 96
  %v289 = vpop.permute.xlu0 %288
  %290 = vrot.lane.b32.xlu0 %v235, 96
  %v291 = vpop.permute.xlu0 %290
  %292 = vrot.lane.b32.xlu0 %v236, 96
  %v293 = vpop.permute.xlu0 %292
  %294 = vrot.lane.b32.xlu0 %v237, 96
  %v295 = vpop.permute.xlu0 %294
  %296 = vrot.lane.b32.xlu0 %v238, 96
  %v297 = vpop.permute.xlu0 %296
  %298 = vrot.lane.b32.xlu0 %v239, 96
  %v299 = vpop.permute.xlu0 %298
  %300 = vrot.lane.b32.xlu0 %v240, 96
  %v301 = vpop.permute.xlu0 %300
  %302 = vrot.lane.b32.xlu0 %v241, 96
  %v303 = vpop.permute.xlu0 %302
  %304 = vrot.lane.b32.xlu0 %v242, 96
  %v305 = vpop.permute.xlu0 %304
  %306 = vrot.lane.b32.xlu0 %v243, 96
  %v307 = vpop.permute.xlu0 %306
  %308 = vrot.lane.b32.xlu0 %v244, 96
  %v309 = vpop.permute.xlu0 %308
  %s326 = scalar_lea.vmem %s2, 64
  %327 = vst.msk [vmem:[%s326] sm:$0xf] %vm261, %v279
  %328 = vst.msk [vmem:[%s326 + $0x4] sm:$0xf] %vm261, %v281
  %329 = vst.msk [vmem:[%s326 + $0x8] sm:$0xf] %vm261, %v283
  %330 = vst.msk [vmem:[%s326 + $0xc] sm:$0xf] %vm261, %v285
  %331 = vst.msk [vmem:[%s326 + $0x10] sm:$0xf] %vm261, %v287
  %332 = vst.msk [vmem:[%s326 + $0x14] sm:$0xf] %vm261, %v289
  %333 = vst.msk [vmem:[%s326 + $0x18] sm:$0xf] %vm261, %v291
  %334 = vst.msk [vmem:[%s326 + $0x1c] sm:$0xf] %vm261, %v293
  %335 = vst.msk [vmem:[%s326 + $0x20] sm:$0xf] %vm261, %v295
  %336 = vst.msk [vmem:[%s326 + $0x24] sm:$0xf] %vm261, %v297
  %337 = vst.msk [vmem:[%s326 + $0x28] sm:$0xf] %vm261, %v299
  %338 = vst.msk [vmem:[%s326 + $0x2c] sm:$0xf] %vm261, %v301
  %339 = vst.msk [vmem:[%s326 + $0x30] sm:$0xf] %vm261, %v303
  %340 = vst.msk [vmem:[%s326 + $0x34] sm:$0xf] %vm261, %v305
  %341 = vst.msk [vmem:[%s326 + $0x38] sm:$0xf] %vm261, %v307
  %342 = vst.msk [vmem:[%s326 + $0x3c] sm:$0xf] %vm261, %v309
  %343 = vrot.lane.b32.xlu0 %v229, 64
  %v344 = vpop.permute.xlu0 %343
  %345 = vrot.lane.b32.xlu0 %v230, 64
  %v346 = vpop.permute.xlu0 %345
  %347 = vrot.lane.b32.xlu0 %v231, 64
  %v348 = vpop.permute.xlu0 %347
  %349 = vrot.lane.b32.xlu0 %v232, 64
  %v350 = vpop.permute.xlu0 %349
  %351 = vrot.lane.b32.xlu0 %v233, 64
  %v352 = vpop.permute.xlu0 %351
  %353 = vrot.lane.b32.xlu0 %v234, 64
  %v354 = vpop.permute.xlu0 %353
  %355 = vrot.lane.b32.xlu0 %v235, 64
  %v356 = vpop.permute.xlu0 %355
  %357 = vrot.lane.b32.xlu0 %v236, 64
  %v358 = vpop.permute.xlu0 %357
  %359 = vrot.lane.b32.xlu0 %v237, 64
  %v360 = vpop.permute.xlu0 %359
  %361 = vrot.lane.b32.xlu0 %v238, 64
  %v362 = vpop.permute.xlu0 %361
  %363 = vrot.lane.b32.xlu0 %v239, 64
  %v364 = vpop.permute.xlu0 %363
  %365 = vrot.lane.b32.xlu0 %v240, 64
  %v366 = vpop.permute.xlu0 %365
  %367 = vrot.lane.b32.xlu0 %v241, 64
  %v368 = vpop.permute.xlu0 %367
  %369 = vrot.lane.b32.xlu0 %v242, 64
  %v370 = vpop.permute.xlu0 %369
  %371 = vrot.lane.b32.xlu0 %v243, 64
  %v372 = vpop.permute.xlu0 %371
  %373 = vrot.lane.b32.xlu0 %v244, 64
  %v374 = vpop.permute.xlu0 %373
  %s391 = scalar_lea.vmem %s2, 128
  %392 = vst.msk [vmem:[%s391] sm:$0xf] %vm261, %v344
  %393 = vst.msk [vmem:[%s391 + $0x4] sm:$0xf] %vm261, %v346
  %394 = vst.msk [vmem:[%s391 + $0x8] sm:$0xf] %vm261, %v348
  %395 = vst.msk [vmem:[%s391 + $0xc] sm:$0xf] %vm261, %v350
  %396 = vst.msk [vmem:[%s391 + $0x10] sm:$0xf] %vm261, %v352
  %397 = vst.msk [vmem:[%s391 + $0x14] sm:$0xf] %vm261, %v354
  %398 = vst.msk [vmem:[%s391 + $0x18] sm:$0xf] %vm261, %v356
  %399 = vst.msk [vmem:[%s391 + $0x1c] sm:$0xf] %vm261, %v358
  %400 = vst.msk [vmem:[%s391 + $0x20] sm:$0xf] %vm261, %v360
  %401 = vst.msk [vmem:[%s391 + $0x24] sm:$0xf] %vm261, %v362
  %402 = vst.msk [vmem:[%s391 + $0x28] sm:$0xf] %vm261, %v364
  %403 = vst.msk [vmem:[%s391 + $0x2c] sm:$0xf] %vm261, %v366
  %404 = vst.msk [vmem:[%s391 + $0x30] sm:$0xf] %vm261, %v368
  %405 = vst.msk [vmem:[%s391 + $0x34] sm:$0xf] %vm261, %v370
  %406 = vst.msk [vmem:[%s391 + $0x38] sm:$0xf] %vm261, %v372
  %407 = vst.msk [vmem:[%s391 + $0x3c] sm:$0xf] %vm261, %v374
  %408 = vrot.lane.b32.xlu0 %v229, 32
  %v409 = vpop.permute.xlu0 %408
  %410 = vrot.lane.b32.xlu0 %v230, 32
  %v411 = vpop.permute.xlu0 %410
  %412 = vrot.lane.b32.xlu0 %v231, 32
  %v413 = vpop.permute.xlu0 %412
  %414 = vrot.lane.b32.xlu0 %v232, 32
  %v415 = vpop.permute.xlu0 %414
  %416 = vrot.lane.b32.xlu0 %v233, 32
  %v417 = vpop.permute.xlu0 %416
  %418 = vrot.lane.b32.xlu0 %v234, 32
  %v419 = vpop.permute.xlu0 %418
  %420 = vrot.lane.b32.xlu0 %v235, 32
  %v421 = vpop.permute.xlu0 %420
  %422 = vrot.lane.b32.xlu0 %v236, 32
  %v423 = vpop.permute.xlu0 %422
  %424 = vrot.lane.b32.xlu0 %v237, 32
  %v425 = vpop.permute.xlu0 %424
  %426 = vrot.lane.b32.xlu0 %v238, 32
  %v427 = vpop.permute.xlu0 %426
  %428 = vrot.lane.b32.xlu0 %v239, 32
  %v429 = vpop.permute.xlu0 %428
  %430 = vrot.lane.b32.xlu0 %v240, 32
  %v431 = vpop.permute.xlu0 %430
  %432 = vrot.lane.b32.xlu0 %v241, 32
  %v433 = vpop.permute.xlu0 %432
  %434 = vrot.lane.b32.xlu0 %v242, 32
  %v435 = vpop.permute.xlu0 %434
  %436 = vrot.lane.b32.xlu0 %v243, 32
  %v437 = vpop.permute.xlu0 %436
  %438 = vrot.lane.b32.xlu0 %v244, 32
  %v439 = vpop.permute.xlu0 %438
  %s456 = scalar_lea.vmem %s2, 192
  %457 = vst.msk [vmem:[%s456] sm:$0xf] %vm261, %v409
  %458 = vst.msk [vmem:[%s456 + $0x4] sm:$0xf] %vm261, %v411
  %459 = vst.msk [vmem:[%s456 + $0x8] sm:$0xf] %vm261, %v413
  %460 = vst.msk [vmem:[%s456 + $0xc] sm:$0xf] %vm261, %v415
  %461 = vst.msk [vmem:[%s456 + $0x10] sm:$0xf] %vm261, %v417
  %462 = vst.msk [vmem:[%s456 + $0x14] sm:$0xf] %vm261, %v419
  %463 = vst.msk [vmem:[%s456 + $0x18] sm:$0xf] %vm261, %v421
  %464 = vst.msk [vmem:[%s456 + $0x1c] sm:$0xf] %vm261, %v423
  %465 = vst.msk [vmem:[%s456 + $0x20] sm:$0xf] %vm261, %v425
  %466 = vst.msk [vmem:[%s456 + $0x24] sm:$0xf] %vm261, %v427
  %467 = vst.msk [vmem:[%s456 + $0x28] sm:$0xf] %vm261, %v429
  %468 = vst.msk [vmem:[%s456 + $0x2c] sm:$0xf] %vm261, %v431
  %469 = vst.msk [vmem:[%s456 + $0x30] sm:$0xf] %vm261, %v433
  %470 = vst.msk [vmem:[%s456 + $0x34] sm:$0xf] %vm261, %v435
  %471 = vst.msk [vmem:[%s456 + $0x38] sm:$0xf] %vm261, %v437
  %472 = vst.msk [vmem:[%s456 + $0x3c] sm:$0xf] %vm261, %v439
  // Predicated region
  $region10: #{rel_partial_learnable_decoder_layer.5} parent=0 // pred_check
    _
  $region11: #{rel_partial_learnable_decoder_layer.5} parent=0 // pred_check_branch
    %474 = sbr.rel (0) target = $region13
  $region12: #{rel_partial_learnable_decoder_layer.5} parent=0 // pred_region
    _
  $region13: #{rel_partial_learnable_decoder_layer.5} parent=0 // pred_fallthru
    _
  // Predicated region
  $region14: #{rel_partial_learnable_decoder_layer.5} parent=0 // pred_check
    _
  $region15: #{rel_partial_learnable_decoder_layer.5} parent=0 // pred_check_branch
    %476 = sbr.rel (0) target = $region17
  $region16: #{rel_partial_learnable_decoder_layer.5} parent=0 // pred_region
    _
  $region17: #{rel_partial_learnable_decoder_layer.5} parent=0 // pred_fallthru
    _

// kernel: rel_partial_learnable_decoder_layer.6
$region0: #{rel_partial_learnable_decoder_layer.6}
  #allocation0 [shape = 'u32[]', space=smem, size = 0x4, offset = 0x4, fixed_abs, tag = 'smem constant byte address 0x4 - core index']
  #allocation1 [shape = 'u32[144,128]{1,0:T(1,128)}', space=vmem, size = 0x12000, scoped, tag = 'internal scratch']
  %s0 = inlined_call_operand.vmem [shape: bf16[2,12,128,32], index: 0, kind: input, shape index: {}]
  %s1 = inlined_call_operand.vmem [shape: bf16[4,128,32], index: 1, kind: input, shape index: {}]
  %s2 = inlined_call_operand.vmem [shape: f32[4,1,32], index: 2, kind: input, shape index: {}]
  %s3 = inlined_call_operand.vmem [shape: f32[4,1,32], index: 3, kind: input, shape index: {}]
  %s4 = inlined_call_operand.vmem [shape: f32[128,128], index: 4, kind: input, shape index: {}]
  %s5 = inlined_call_operand.vmem [shape: bf16[2,4,128,32], index: 5, kind: output, shape index: {}]
  %s6 = sld [smem:[#allocation0]]
  $region53: #{rel_partial_learnable_decoder_layer.6} parent=0
    _
  %s8 = ssub.s32 1, %s6
  %s9 = scalar_select 0, %s8, %s6
  loop: start=0, step=1, limit=10
  $region2: #{rel_partial_learnable_decoder_layer.6} parent=0 // loop_pre_header
    _
  $region3: #{rel_partial_learnable_decoder_layer.6} parent=0 // loop_header
    %s11 = sphi 0, %s15
    %p12 = scmp.ge.s32.totalorder %s11, 10
    %s18 = sphi 0, %s30
    %s19 = sphi 0, %s26
    %s20 = sphi 0, %s18
    %s21 = sphi 0, %s19
    %s22 = sphi 0, %s20
    %s23 = sphi 0, %s21
    %s35 = sphi 0, %s37
    %s38 = sphi 0, %s35
    %s39 = sphi 0, %s38
    %s55 = sphi 0, %s39
    %s61 = sphi 0, %s63
    %s64 = sphi 0, %s61
    %s65 = sphi 0, %s64
    %s81 = sphi 0, %s65
    %s87 = sphi 0, %s89
    %s90 = sphi 0, %s87
    %s91 = sphi 0, %s90
    %s107 = sphi 0, %s91
    %s113 = sphi 0, %s115
    %s116 = sphi 0, %s113
    %s117 = sphi 0, %s116
    %s133 = sphi 0, %s117
    %s137 = sphi 0, %s137
    %s139 = sphi 0, %s137
    %s140 = sphi 0, %s139
    %s154 = sphi 0, %s140
    %s162 = sphi 0, %s164
    %s165 = sphi 0, %s162
    %s166 = sphi 0, %s165
    %s182 = sphi 0, %s166
  $region4: #{rel_partial_learnable_decoder_layer.6} parent=0 // loop_header_branch
    %14 = sbr.rel (%p12) target = $region8
  $region5: #{rel_partial_learnable_decoder_layer.6} parent=0 // loop_body
    %s16 = ssub.s32 %s11, 1
    %s17 = ssub.s32 %s11, 2
    %s24 = sadd.s32 1, %s19
    %p25 = scmp.ge.s32.totalorder %s24, 4
    %s26 = scalar_select %p25, 0, %s24
    %s27 = sadd.s32 1, %s18
    %s28 = scalar_select %p25, %s27, %s18
    %p29 = scmp.ge.s32.totalorder %s28, 2
    %s30 = scalar_select %p29, 0, %s28
    %s31 = ssub.s32 %s18, %s30
    %s32 = ssub.s32 %s19, %s26
    %s33 = sor.u32 %s31, %s32
    %p34 = scmp.eq.s32.totalorder %s33, 0
    %s36 = sadd.s32 %s35, 1
    %s37 = scalar_select %p34, %s35, %s36
    %p40 = pneg %p34
    %p41 = scmp.eq.s32.totalorder %s11, 7
    %p42 = por %p40, %p41
    %p43 = scmp.ne.s32.totalorder %s35, %s38
    %p44 = scmp.eq.s32.totalorder %s11, 0
    %p45 = por %p43, %p44
    %p46 = scmp.ne.s32.totalorder %s35, %s38
    %p47 = scmp.eq.s32.totalorder %s16, 7
    %p48 = por %p46, %p47
    %p49 = scmp.ne.s32.totalorder %s38, %s39
    %p50 = scmp.eq.s32.totalorder %s16, 0
    %p51 = por %p49, %p50
    %p52 = scmp.ne.s32.totalorder %s38, %s39
    %p53 = scmp.eq.s32.totalorder %s17, 7
    %p54 = por %p52, %p53
    %p56 = scmp.ne.s32.totalorder %s39, %s55
    %p57 = scmp.eq.s32.totalorder %s17, 0
    %p58 = por %p56, %p57
    %s59 = ssub.s32 %s19, %s26
    %p60 = scmp.eq.s32.totalorder %s59, 0
    %s62 = sadd.s32 %s61, 1
    %s63 = scalar_select %p60, %s61, %s62
    %p66 = pneg %p60
    %p67 = scmp.eq.s32.totalorder %s11, 7
    %p68 = por %p66, %p67
    %p69 = scmp.ne.s32.totalorder %s61, %s64
    %p70 = scmp.eq.s32.totalorder %s11, 0
    %p71 = por %p69, %p70
    %p72 = scmp.ne.s32.totalorder %s61, %s64
    %p73 = scmp.eq.s32.totalorder %s16, 7
    %p74 = por %p72, %p73
    %p75 = scmp.ne.s32.totalorder %s64, %s65
    %p76 = scmp.eq.s32.totalorder %s16, 0
    %p77 = por %p75, %p76
    %p78 = scmp.ne.s32.totalorder %s64, %s65
    %p79 = scmp.eq.s32.totalorder %s17, 7
    %p80 = por %p78, %p79
    %p82 = scmp.ne.s32.totalorder %s65, %s81
    %p83 = scmp.eq.s32.totalorder %s17, 0
    %p84 = por %p82, %p83
    %s85 = ssub.s32 %s19, %s26
    %p86 = scmp.eq.s32.totalorder %s85, 0
    %s88 = sadd.s32 %s87, 1
    %s89 = scalar_select %p86, %s87, %s88
    %p92 = pneg %p86
    %p93 = scmp.eq.s32.totalorder %s11, 7
    %p94 = por %p92, %p93
    %p95 = scmp.ne.s32.totalorder %s87, %s90
    %p96 = scmp.eq.s32.totalorder %s11, 0
    %p97 = por %p95, %p96
    %p98 = scmp.ne.s32.totalorder %s87, %s90
    %p99 = scmp.eq.s32.totalorder %s16, 7
    %p100 = por %p98, %p99
    %p101 = scmp.ne.s32.totalorder %s90, %s91
    %p102 = scmp.eq.s32.totalorder %s16, 0
    %p103 = por %p101, %p102
    %p104 = scmp.ne.s32.totalorder %s90, %s91
    %p105 = scmp.eq.s32.totalorder %s17, 7
    %p106 = por %p104, %p105
    %p108 = scmp.ne.s32.totalorder %s91, %s107
    %p109 = scmp.eq.s32.totalorder %s17, 0
    %p110 = por %p108, %p109
    %s111 = ssub.s32 %s19, %s26
    %p112 = scmp.eq.s32.totalorder %s111, 0
    %s114 = sadd.s32 %s113, 1
    %s115 = scalar_select %p112, %s113, %s114
    %p118 = pneg %p112
    %p119 = scmp.eq.s32.totalorder %s11, 7
    %p120 = por %p118, %p119
    %p121 = scmp.ne.s32.totalorder %s113, %s116
    %p122 = scmp.eq.s32.totalorder %s11, 0
    %p123 = por %p121, %p122
    %p124 = scmp.ne.s32.totalorder %s113, %s116
    %p125 = scmp.eq.s32.totalorder %s16, 7
    %p126 = por %p124, %p125
    %p127 = scmp.ne.s32.totalorder %s116, %s117
    %p128 = scmp.eq.s32.totalorder %s16, 0
    %p129 = por %p127, %p128
    %p130 = scmp.ne.s32.totalorder %s116, %s117
    %p131 = scmp.eq.s32.totalorder %s17, 7
    %p132 = por %p130, %p131
    %p134 = scmp.ne.s32.totalorder %s117, %s133
    %p135 = scmp.eq.s32.totalorder %s17, 0
    %p136 = por %p134, %p135
    %s138 = sadd.s32 %s137, 1
    %p141 = scmp.eq.s32.totalorder %s11, 7
    %p142 = scmp.ne.s32.totalorder %s137, %s139
    %p143 = scmp.eq.s32.totalorder %s11, 0
    %p144 = por %p142, %p143
    %p145 = scmp.ne.s32.totalorder %s137, %s139
    %p146 = scmp.eq.s32.totalorder %s16, 7
    %p147 = por %p145, %p146
    %p148 = scmp.ne.s32.totalorder %s139, %s140
    %p149 = scmp.eq.s32.totalorder %s16, 0
    %p150 = por %p148, %p149
    %p151 = scmp.ne.s32.totalorder %s139, %s140
    %p152 = scmp.eq.s32.totalorder %s17, 7
    %p153 = por %p151, %p152
    %p155 = scmp.ne.s32.totalorder %s140, %s154
    %p156 = scmp.eq.s32.totalorder %s17, 0
    %p157 = por %p155, %p156
    %s158 = ssub.s32 %s18, %s30
    %s159 = ssub.s32 %s19, %s26
    %s160 = sor.u32 %s158, %s159
    %p161 = scmp.eq.s32.totalorder %s160, 0
    %s163 = sadd.s32 %s162, 1
    %s164 = scalar_select %p161, %s162, %s163
    %p167 = pneg %p161
    %p168 = scmp.eq.s32.totalorder %s11, 7
    %p169 = por %p167, %p168
    %p170 = scmp.ne.s32.totalorder %s162, %s165
    %p171 = scmp.eq.s32.totalorder %s11, 0
    %p172 = por %p170, %p171
    %p173 = scmp.ne.s32.totalorder %s162, %s165
    %p174 = scmp.eq.s32.totalorder %s16, 7
    %p175 = por %p173, %p174
    %p176 = scmp.ne.s32.totalorder %s165, %s166
    %p177 = scmp.eq.s32.totalorder %s16, 0
    %p178 = por %p176, %p177
    %p179 = scmp.ne.s32.totalorder %s165, %s166
    %p180 = scmp.eq.s32.totalorder %s17, 7
    %p181 = por %p179, %p180
    %p183 = scmp.ne.s32.totalorder %s166, %s182
    %p184 = scmp.eq.s32.totalorder %s17, 0
    %p185 = por %p183, %p184
    %p186 = scmp.le.s32.totalorder 1, %s11
    %p187 = scmp.lt.s32.totalorder %s11, 9
    %p188 = pnand %p186, %p187
    %p189 = pneg %p188
    // Predicated region
    $region9: #{rel_partial_learnable_decoder_layer.6} parent=5 // pred_check
      _
    $region10: #{rel_partial_learnable_decoder_layer.6} parent=5 // pred_check_branch
      %191 = sbr.rel (%p188) target = $region12
    $region11: #{rel_partial_learnable_decoder_layer.6} parent=5 // pred_region
      %s192 = ssub.s32 %s11, 1
      // Predicated region
      $region13: #{rel_partial_learnable_decoder_layer.6} parent=11 // pred_check
        %p193 = pneg %p150
      $region14: #{rel_partial_learnable_decoder_layer.6} parent=11 // pred_check_branch
        %195 = sbr.rel (%p193) target = $region16
      $region15: #{rel_partial_learnable_decoder_layer.6} parent=11 // pred_region
        _
      $region16: #{rel_partial_learnable_decoder_layer.6} parent=11 // pred_fallthru
        _
    $region12: #{rel_partial_learnable_decoder_layer.6} parent=5 // pred_fallthru
      _
    %p196 = scmp.lt.s32.totalorder %s11, 8
    // Predicated region
    $region17: #{rel_partial_learnable_decoder_layer.6} parent=5 // pred_check
      %p197 = pneg %p196
    $region18: #{rel_partial_learnable_decoder_layer.6} parent=5 // pred_check_branch
      %199 = sbr.rel (%p197) target = $region20
    $region19: #{rel_partial_learnable_decoder_layer.6} parent=5 // pred_region
      // Predicated region
      $region21: #{rel_partial_learnable_decoder_layer.6} parent=19 // pred_check
        %p200 = pneg %p45
      $region22: #{rel_partial_learnable_decoder_layer.6} parent=19 // pred_check_branch
        %202 = sbr.rel (%p200) target = $region24
      $region23: #{rel_partial_learnable_decoder_layer.6} parent=19 // pred_region
        %s203 = smul.u32 3, %s19
        %p204 = scmp.lt.s32.totalorder %s18, 1
        %s205 = scalar_select %p204, %s18, 1
        %p206 = scmp.lt.s32.totalorder %s203, 11
        %s207 = scalar_select %p206, %s203, 11
        %s208 = smul.addr %s207, 16
        %s209 = smul.addr %s205, 192
        %s210 = sadd.s32 %s208, %s209
        %s211 = smul.addr %s210, 4
        %s212 = scalar_lea.vmem %s0, %s211
        %s213 = smul.u32 3, %s19
      $region24: #{rel_partial_learnable_decoder_layer.6} parent=19 // pred_fallthru
        _
      // Predicated region
      $region25: #{rel_partial_learnable_decoder_layer.6} parent=19 // pred_check
        %p214 = pneg %p71
      $region26: #{rel_partial_learnable_decoder_layer.6} parent=19 // pred_check_branch
        %216 = sbr.rel (%p214) target = $region28
      $region27: #{rel_partial_learnable_decoder_layer.6} parent=19 // pred_region
        %p217 = scmp.lt.s32.totalorder %s19, 3
        %s218 = scalar_select %p217, %s19, 3
        %s219 = smul.addr %s218, 16
        %s220 = smul.addr %s219, 4
        %s221 = scalar_lea.vmem %s1, %s220
      $region28: #{rel_partial_learnable_decoder_layer.6} parent=19 // pred_fallthru
        _
      // Predicated region
      $region29: #{rel_partial_learnable_decoder_layer.6} parent=19 // pred_check
        %p222 = pneg %p97
      $region30: #{rel_partial_learnable_decoder_layer.6} parent=19 // pred_check_branch
        %224 = sbr.rel (%p222) target = $region32
      $region31: #{rel_partial_learnable_decoder_layer.6} parent=19 // pred_region
        %p225 = scmp.lt.s32.totalorder %s19, 3
        %s226 = scalar_select %p225, %s19, 3
        %s227 = scalar_lea.vmem %s2, %s226
      $region32: #{rel_partial_learnable_decoder_layer.6} parent=19 // pred_fallthru
        _
      // Predicated region
      $region33: #{rel_partial_learnable_decoder_layer.6} parent=19 // pred_check
        %p228 = pneg %p123
      $region34: #{rel_partial_learnable_decoder_layer.6} parent=19 // pred_check_branch
        %230 = sbr.rel (%p228) target = $region36
      $region35: #{rel_partial_learnable_decoder_layer.6} parent=19 // pred_region
        %p231 = scmp.lt.s32.totalorder %s19, 3
        %s232 = scalar_select %p231, %s19, 3
        %s233 = scalar_lea.vmem %s3, %s232
      $region36: #{rel_partial_learnable_decoder_layer.6} parent=19 // pred_fallthru
        _
    $region20: #{rel_partial_learnable_decoder_layer.6} parent=5 // pred_fallthru
      _
    %p234 = scmp.le.s32.totalorder 1, %s11
    %p235 = scmp.lt.s32.totalorder %s11, 9
    %p236 = pnand %p234, %p235
    %p237 = pneg %p236
    // Predicated region
    $region37: #{rel_partial_learnable_decoder_layer.6} parent=5 // pred_check
      _
    $region38: #{rel_partial_learnable_decoder_layer.6} parent=5 // pred_check_branch
      %239 = sbr.rel (%p236) target = $region40
    $region39: #{rel_partial_learnable_decoder_layer.6} parent=5 // pred_region
      %s240 = ssub.s32 %s11, 1
      %s241 = smul.u32 3, %s21
      %p242 = scmp.lt.s32.totalorder %s20, 1
      %s243 = scalar_select %p242, %s20, 1
      %p244 = scmp.lt.s32.totalorder %s241, 11
      %s245 = scalar_select %p244, %s241, 11
      %s246 = smul.addr %s245, 16
      %s247 = smul.addr %s243, 192
      %s248 = sadd.s32 %s246, %s247
      %s249 = smul.addr %s248, 4
      %s250 = scalar_lea.vmem %s0, %s249
      %p251 = pneg %p51
      %p252 = pneg %p48
      %p253 = scmp.lt.s32.totalorder %s21, 3
      %s254 = scalar_select %p253, %s21, 3
      %s255 = smul.addr %s254, 16
      %s256 = smul.addr %s255, 4
      %s257 = scalar_lea.vmem %s1, %s256
      %p258 = pneg %p77
      %p259 = pneg %p74
      %p260 = scmp.lt.s32.totalorder %s21, 3
      %s261 = scalar_select %p260, %s21, 3
      %s262 = scalar_lea.vmem %s2, %s261
      %p263 = pneg %p103
      %p264 = pneg %p100
      %p265 = scmp.lt.s32.totalorder %s21, 3
      %s266 = scalar_select %p265, %s21, 3
      %s267 = scalar_lea.vmem %s3, %s266
      %p268 = pneg %p129
      %p269 = pneg %p126
      %p270 = pneg %p150
      %p271 = pneg %p147
      %p272 = pneg %p178
      %p273 = pneg %p175
      %p274 = scmp.lt.s32.totalorder %s20, 1
      %s275 = scalar_select %p274, %s20, 1
      %p276 = scmp.lt.s32.totalorder %s21, 3
      %s277 = scalar_select %p276, %s21, 3
      %s278 = smul.addr %s277, 16
      %s279 = smul.addr %s275, 64
      %s280 = sadd.s32 %s278, %s279
      %s281 = smul.addr %s280, 4
      %s282 = scalar_lea.vmem %s5, %s281
      %s283 = smul.u32 3, %s21
      %p284 = scmp.lt.s32.totalorder %s20, 1
      %s285 = scalar_select %p284, %s20, 1
      %p286 = scmp.lt.s32.totalorder %s283, 11
      %s287 = scalar_select %p286, %s283, 11
      %s288 = smul.addr %s287, 16
      %s289 = smul.addr %s285, 192
      %s290 = sadd.s32 %s288, %s289
      %s291 = smul.addr %s290, 4
      %s292 = scalar_lea.vmem %s0, %s291
      %s293 = smul.u32 3, %s21
      %p294 = scmp.lt.s32.totalorder %s21, 3
      %s295 = scalar_select %p294, %s21, 3
      %s296 = smul.addr %s295, 16
      %s297 = smul.addr %s296, 4
      %s298 = scalar_lea.vmem %s1, %s297
      %p299 = scmp.lt.s32.totalorder %s21, 3
      %s300 = scalar_select %p299, %s21, 3
      %s301 = scalar_lea.vmem %s2, %s300
      %p302 = scmp.lt.s32.totalorder %s21, 3
      %s303 = scalar_select %p302, %s21, 3
      %s304 = scalar_lea.vmem %s3, %s303
      %p305 = scmp.lt.s32.totalorder %s20, 1
      %s306 = scalar_select %p305, %s20, 1
      %p307 = scmp.lt.s32.totalorder %s21, 3
      %s308 = scalar_select %p307, %s21, 3
      %s309 = smul.addr %s308, 16
      %s310 = smul.addr %s306, 64
      %s311 = sadd.s32 %s309, %s310
      %s312 = smul.addr %s311, 4
      %s313 = scalar_lea.vmem %s5, %s312
      %v315 = vld [vmem:[%s292] sm:$0xf]
      %v316 = vld [vmem:[%s292 + $0x4] sm:$0xf]
      %v317 = vld [vmem:[%s292 + $0x8] sm:$0xf]
      %v318 = vld [vmem:[%s292 + $0xc] sm:$0xf]
      %v319 = vld [vmem:[%s292 + $0x10] sm:$0xf]
      %v320 = vld [vmem:[%s292 + $0x14] sm:$0xf]
      %v321 = vld [vmem:[%s292 + $0x18] sm:$0xf]
      %v322 = vld [vmem:[%s292 + $0x1c] sm:$0xf]
      %v323 = vld [vmem:[%s292 + $0x20] sm:$0xf]
      %v324 = vld [vmem:[%s292 + $0x24] sm:$0xf]
      %v325 = vld [vmem:[%s292 + $0x28] sm:$0xf]
      %v326 = vld [vmem:[%s292 + $0x2c] sm:$0xf]
      %v327 = vld [vmem:[%s292 + $0x30] sm:$0xf]
      %v328 = vld [vmem:[%s292 + $0x34] sm:$0xf]
      %v329 = vld [vmem:[%s292 + $0x38] sm:$0xf]
      %v330 = vld [vmem:[%s292 + $0x3c] sm:$0xf]
      %s331 = scalar_lea.vmem %s292, 64
      %v332 = vld [vmem:[%s331] sm:$0xf]
      %v333 = vld [vmem:[%s331 + $0x4] sm:$0xf]
      %v334 = vld [vmem:[%s331 + $0x8] sm:$0xf]
      %v335 = vld [vmem:[%s331 + $0xc] sm:$0xf]
      %v336 = vld [vmem:[%s331 + $0x10] sm:$0xf]
      %v337 = vld [vmem:[%s331 + $0x14] sm:$0xf]
      %v338 = vld [vmem:[%s331 + $0x18] sm:$0xf]
      %v339 = vld [vmem:[%s331 + $0x1c] sm:$0xf]
      %v340 = vld [vmem:[%s331 + $0x20] sm:$0xf]
      %v341 = vld [vmem:[%s331 + $0x24] sm:$0xf]
      %v342 = vld [vmem:[%s331 + $0x28] sm:$0xf]
      %v343 = vld [vmem:[%s331 + $0x2c] sm:$0xf]
      %v344 = vld [vmem:[%s331 + $0x30] sm:$0xf]
      %v345 = vld [vmem:[%s331 + $0x34] sm:$0xf]
      %v346 = vld [vmem:[%s331 + $0x38] sm:$0xf]
      %v347 = vld [vmem:[%s331 + $0x3c] sm:$0xf]
      %s348 = scalar_lea.vmem %s292, 128
      %v349 = vld [vmem:[%s348] sm:$0xf]
      %v350 = vld [vmem:[%s348 + $0x4] sm:$0xf]
      %v351 = vld [vmem:[%s348 + $0x8] sm:$0xf]
      %v352 = vld [vmem:[%s348 + $0xc] sm:$0xf]
      %v353 = vld [vmem:[%s348 + $0x10] sm:$0xf]
      %v354 = vld [vmem:[%s348 + $0x14] sm:$0xf]
      %v355 = vld [vmem:[%s348 + $0x18] sm:$0xf]
      %v356 = vld [vmem:[%s348 + $0x1c] sm:$0xf]
      %v357 = vld [vmem:[%s348 + $0x20] sm:$0xf]
      %v358 = vld [vmem:[%s348 + $0x24] sm:$0xf]
      %v359 = vld [vmem:[%s348 + $0x28] sm:$0xf]
      %v360 = vld [vmem:[%s348 + $0x2c] sm:$0xf]
      %v361 = vld [vmem:[%s348 + $0x30] sm:$0xf]
      %v362 = vld [vmem:[%s348 + $0x34] sm:$0xf]
      %v363 = vld [vmem:[%s348 + $0x38] sm:$0xf]
      %v364 = vld [vmem:[%s348 + $0x3c] sm:$0xf]
      %v365 = vld [vmem:[%s298] sm:$0xf]
      %v366 = vld [vmem:[%s298 + $0x4] sm:$0xf]
      %v367 = vld [vmem:[%s298 + $0x8] sm:$0xf]
      %v368 = vld [vmem:[%s298 + $0xc] sm:$0xf]
      %v369 = vld [vmem:[%s298 + $0x10] sm:$0xf]
      %v370 = vld [vmem:[%s298 + $0x14] sm:$0xf]
      %v371 = vld [vmem:[%s298 + $0x18] sm:$0xf]
      %v372 = vld [vmem:[%s298 + $0x1c] sm:$0xf]
      %v373 = vld [vmem:[%s298 + $0x20] sm:$0xf]
      %v374 = vld [vmem:[%s298 + $0x24] sm:$0xf]
      %v375 = vld [vmem:[%s298 + $0x28] sm:$0xf]
      %v376 = vld [vmem:[%s298 + $0x2c] sm:$0xf]
      %v377 = vld [vmem:[%s298 + $0x30] sm:$0xf]
      %v378 = vld [vmem:[%s298 + $0x34] sm:$0xf]
      %v379 = vld [vmem:[%s298 + $0x38] sm:$0xf]
      %v380 = vld [vmem:[%s298 + $0x3c] sm:$0xf]
      %v381 = vunpack.c.l.bf16 %v315
      %v382 = vunpack.c.l.bf16 %v316
      %v383 = vunpack.c.l.bf16 %v317
      %v384 = vunpack.c.l.bf16 %v318
      %v385 = vunpack.c.l.bf16 %v319
      %v386 = vunpack.c.l.bf16 %v320
      %v387 = vunpack.c.l.bf16 %v321
      %v388 = vunpack.c.l.bf16 %v322
      %v389 = vunpack.c.l.bf16 %v323
      %v390 = vunpack.c.l.bf16 %v324
      %v391 = vunpack.c.l.bf16 %v325
      %v392 = vunpack.c.l.bf16 %v326
      %v393 = vunpack.c.l.bf16 %v327
      %v394 = vunpack.c.l.bf16 %v328
      %v395 = vunpack.c.l.bf16 %v329
      %v396 = vunpack.c.l.bf16 %v330
      %v397 = vld [vmem:[%s301] sm:$0x1]
      %v399 = vlaneseq
      %v400 = vshrl.u32 %v399, 7
      %v401 = vsub.s32 0, %v400
      %v402 = vrot.slane %v397, %v401
      %v404 = vadd.f32 %v381, %v402
      %v405 = vadd.f32 %v382, %v402
      %v406 = vadd.f32 %v383, %v402
      %v407 = vadd.f32 %v384, %v402
      %v408 = vadd.f32 %v385, %v402
      %v409 = vadd.f32 %v386, %v402
      %v410 = vadd.f32 %v387, %v402
      %v411 = vadd.f32 %v388, %v402
      %v412 = vadd.f32 %v389, %v402
      %v413 = vadd.f32 %v390, %v402
      %v414 = vadd.f32 %v391, %v402
      %v415 = vadd.f32 %v392, %v402
      %v416 = vadd.f32 %v393, %v402
      %v417 = vadd.f32 %v394, %v402
      %v418 = vadd.f32 %v395, %v402
      %v419 = vadd.f32 %v396, %v402
      %v420 = vpack.c.bf16 %v405, %v404
      %v421 = vpack.c.bf16 %v407, %v406
      %v422 = vpack.c.bf16 %v409, %v408
      %v423 = vpack.c.bf16 %v411, %v410
      %v424 = vpack.c.bf16 %v413, %v412
      %v425 = vpack.c.bf16 %v415, %v414
      %v426 = vpack.c.bf16 %v417, %v416
      %v427 = vpack.c.bf16 %v419, %v418
      %v428 = vld [vmem:[%s304] sm:$0x1]
      %v430 = vlaneseq
      %v431 = vshrl.u32 %v430, 7
      %v432 = vsub.s32 0, %v431
      %v433 = vrot.slane %v428, %v432
      %v435 = vadd.f32 %v381, %v433
      %v436 = vadd.f32 %v382, %v433
      %v437 = vadd.f32 %v383, %v433
      %v438 = vadd.f32 %v384, %v433
      %v439 = vadd.f32 %v385, %v433
      %v440 = vadd.f32 %v386, %v433
      %v441 = vadd.f32 %v387, %v433
      %v442 = vadd.f32 %v388, %v433
      %v443 = vadd.f32 %v389, %v433
      %v444 = vadd.f32 %v390, %v433
      %v445 = vadd.f32 %v391, %v433
      %v446 = vadd.f32 %v392, %v433
      %v447 = vadd.f32 %v393, %v433
      %v448 = vadd.f32 %v394, %v433
      %v449 = vadd.f32 %v395, %v433
      %v450 = vadd.f32 %v396, %v433
      %v451 = vpack.c.bf16 %v436, %v435
      %v452 = vpack.c.bf16 %v438, %v437
      %v453 = vpack.c.bf16 %v440, %v439
      %v454 = vpack.c.bf16 %v442, %v441
      %v455 = vpack.c.bf16 %v444, %v443
      %v456 = vpack.c.bf16 %v446, %v445
      %v457 = vpack.c.bf16 %v448, %v447
      %v458 = vpack.c.bf16 %v450, %v449
      %v475 = vunpack.c.l.b16 %v365
      %v476 = vunpack.c.l.b16 %v366
      %v477 = vunpack.c.l.b16 %v367
      %v478 = vunpack.c.l.b16 %v368
      %v479 = vunpack.c.l.b16 %v369
      %v480 = vunpack.c.l.b16 %v370
      %v481 = vunpack.c.l.b16 %v371
      %v482 = vunpack.c.l.b16 %v372
      %v483 = vunpack.c.l.b16 %v373
      %v484 = vunpack.c.l.b16 %v374
      %v485 = vunpack.c.l.b16 %v375
      %v486 = vunpack.c.l.b16 %v376
      %v487 = vunpack.c.l.b16 %v377
      %v488 = vunpack.c.l.b16 %v378
      %v489 = vunpack.c.l.b16 %v379
      %v490 = vunpack.c.l.b16 %v380
      %v491 = vpack.c.b16 %v476, %v475
      %v492 = vpack.c.b16 %v478, %v477
      %v493 = vpack.c.b16 %v480, %v479
      %v494 = vpack.c.b16 %v482, %v481
      %v495 = vpack.c.b16 %v484, %v483
      %v496 = vpack.c.b16 %v486, %v485
      %v497 = vpack.c.b16 %v488, %v487
      %v498 = vpack.c.b16 %v490, %v489
      %vm499 = vcmask 261120
      %v501 = vsel %vm499, %v451, 0
      %v504 = vsel %vm499, %v452, 0
      %v507 = vsel %vm499, %v453, 0
      %v510 = vsel %vm499, %v454, 0
      %v513 = vsel %vm499, %v455, 0
      %v516 = vsel %vm499, %v456, 0
      %v519 = vsel %vm499, %v457, 0
      %v522 = vsel %vm499, %v458, 0
      %v525 = vsel %vm499, %v491, 0
      %v528 = vsel %vm499, %v492, 0
      %v531 = vsel %vm499, %v493, 0
      %v534 = vsel %vm499, %v494, 0
      %v537 = vsel %vm499, %v495, 0
      %v540 = vsel %vm499, %v496, 0
      %v543 = vsel %vm499, %v497, 0
      %v546 = vsel %vm499, %v498, 0
      %548 = vmatprep.subr.bf16.mxu0 0
      %549 = vmatpush1.bf16.xpose.msra.mxu0 %v525
      %550 = vmatprep.subr.bf16.mxu0 0
      %551 = vmatpush1.bf16.xpose.msra.mxu0 %v528
      %552 = vmatprep.subr.bf16.mxu0 0
      %553 = vmatpush1.bf16.xpose.msra.mxu0 %v531
      %554 = vmatprep.subr.bf16.mxu0 0
      %555 = vmatpush1.bf16.xpose.msra.mxu0 %v534
      %556 = vmatprep.subr.bf16.mxu0 0
      %557 = vmatpush1.bf16.xpose.msra.mxu0 %v537
      %558 = vmatprep.subr.bf16.mxu0 0
      %559 = vmatpush1.bf16.xpose.msra.mxu0 %v540
      %560 = vmatprep.subr.bf16.mxu0 0
      %561 = vmatpush1.bf16.xpose.msra.mxu0 %v543
      %562 = vmatprep.subr.bf16.mxu0 0
      %563 = vmatpush1.bf16.xpose.msra.mxu0 %v546
      %564 = vmatprep.subr.bf16.mxu0 0
      %565 = vmatpush1.bf16.xpose.msra.mxu0 0
      %566 = vmatprep.subr.bf16.mxu0 0
      %567 = vmatpush1.bf16.xpose.msra.mxu0 0
      %568 = vmatprep.subr.bf16.mxu0 0
      %569 = vmatpush1.bf16.xpose.msra.mxu0 0
      %570 = vmatprep.subr.bf16.mxu0 0
      %571 = vmatpush1.bf16.xpose.msra.mxu0 0
      %572 = vmatprep.subr.bf16.mxu0 0
      %573 = vmatpush1.bf16.xpose.msra.mxu0 0
      %574 = vmatprep.subr.bf16.mxu0 0
      %575 = vmatpush1.bf16.xpose.msra.mxu0 0
      %576 = vmatprep.subr.bf16.mxu0 0
      %577 = vmatpush1.bf16.xpose.msra.mxu0 0
      %578 = vmatprep.subr.bf16.mxu0 0
      %579 = vmatpush1.bf16.xpose.msra.mxu0 0
      %580 = vmatprep.mubr.bf16.mxu0 0
      %581 = vmatmul.mubr.bf16.gmra.mrb[0].mxu0 %v501
      %v582 = vpop.f32.mrb[0].mxu0
      %v583 = vadd.f32 0.0, %v582
      %v584 = vpop.f32.mrb[0].mxu0
      %v585 = vpop.f32.mrb[0].mxu0
      %v586 = vadd.f32 0.0, %v585
      %v587 = vpop.f32.mrb[0].mxu0
      %588 = vmatprep.mubr.bf16.mxu0 0
      %589 = vmatmul.mubr.bf16.gmra.mrb[0].mxu0 %v504
      %v590 = vpop.f32.mrb[0].mxu0
      %v591 = vadd.f32 0.0, %v590
      %v592 = vpop.f32.mrb[0].mxu0
      %v593 = vpop.f32.mrb[0].mxu0
      %v594 = vadd.f32 0.0, %v593
      %v595 = vpop.f32.mrb[0].mxu0
      %596 = vmatprep.mubr.bf16.mxu0 0
      %597 = vmatmul.mubr.bf16.gmra.mrb[0].mxu0 %v507
      %v598 = vpop.f32.mrb[0].mxu0
      %v599 = vadd.f32 0.0, %v598
      %v600 = vpop.f32.mrb[0].mxu0
      %v601 = vpop.f32.mrb[0].mxu0
      %v602 = vadd.f32 0.0, %v601
      %v603 = vpop.f32.mrb[0].mxu0
      %604 = vmatprep.mubr.bf16.mxu0 0
      %605 = vmatmul.mubr.bf16.gmra.mrb[0].mxu0 %v510
      %v606 = vpop.f32.mrb[0].mxu0
      %v607 = vadd.f32 0.0, %v606
      %v608 = vpop.f32.mrb[0].mxu0
      %v609 = vpop.f32.mrb[0].mxu0
      %v610 = vadd.f32 0.0, %v609
      %v611 = vpop.f32.mrb[0].mxu0
      %612 = vmatprep.mubr.bf16.mxu0 0
      %613 = vmatmul.mubr.bf16.gmra.mrb[0].mxu0 %v513
      %v614 = vpop.f32.mrb[0].mxu0
      %v615 = vadd.f32 0.0, %v614
      %v616 = vpop.f32.mrb[0].mxu0
      %v617 = vpop.f32.mrb[0].mxu0
      %v618 = vadd.f32 0.0, %v617
      %v619 = vpop.f32.mrb[0].mxu0
      %620 = vmatprep.mubr.bf16.mxu0 0
      %621 = vmatmul.mubr.bf16.gmra.mrb[0].mxu0 %v516
      %v622 = vpop.f32.mrb[0].mxu0
      %v623 = vadd.f32 0.0, %v622
      %v624 = vpop.f32.mrb[0].mxu0
      %v625 = vpop.f32.mrb[0].mxu0
      %v626 = vadd.f32 0.0, %v625
      %v627 = vpop.f32.mrb[0].mxu0
      %628 = vmatprep.mubr.bf16.mxu0 0
      %629 = vmatmul.mubr.bf16.gmra.mrb[0].mxu0 %v519
      %v630 = vpop.f32.mrb[0].mxu0
      %v631 = vadd.f32 0.0, %v630
      %v632 = vpop.f32.mrb[0].mxu0
      %v633 = vpop.f32.mrb[0].mxu0
      %v634 = vadd.f32 0.0, %v633
      %v635 = vpop.f32.mrb[0].mxu0
      %636 = vmatprep.mubr.bf16.mxu0 0
      %637 = vmatmul.mubr.bf16.gmra.mrb[0].mxu0 %v522
      %v638 = vpop.f32.mrb[0].mxu0
      %v639 = vadd.f32 0.0, %v638
      %v640 = vpop.f32.mrb[0].mxu0
      %v641 = vpop.f32.mrb[0].mxu0
      %v642 = vadd.f32 0.0, %v641
      %v643 = vpop.f32.mrb[0].mxu0
      %644 = vdwg.mxu0
      %645 = vrot.lane.b32.xlu0 %v583, 1
      %v646 = vpop.permute.xlu0 %645
      %647 = vrot.lane.b32.xlu0 %v586, 1
      %v648 = vpop.permute.xlu0 %647
      %649 = vrot.lane.b32.xlu0 %v591, 1
      %v650 = vpop.permute.xlu0 %649
      %651 = vrot.lane.b32.xlu0 %v594, 1
      %v652 = vpop.permute.xlu0 %651
      %653 = vrot.lane.b32.xlu0 %v599, 1
      %v654 = vpop.permute.xlu0 %653
      %655 = vrot.lane.b32.xlu0 %v602, 1
      %v656 = vpop.permute.xlu0 %655
      %657 = vrot.lane.b32.xlu0 %v607, 1
      %v658 = vpop.permute.xlu0 %657
      %659 = vrot.lane.b32.xlu0 %v610, 1
      %v660 = vpop.permute.xlu0 %659
      %661 = vrot.lane.b32.xlu0 %v615, 1
      %v662 = vpop.permute.xlu0 %661
      %663 = vrot.lane.b32.xlu0 %v618, 1
      %v664 = vpop.permute.xlu0 %663
      %665 = vrot.lane.b32.xlu0 %v623, 1
      %v666 = vpop.permute.xlu0 %665
      %667 = vrot.lane.b32.xlu0 %v626, 1
      %v668 = vpop.permute.xlu0 %667
      %669 = vrot.lane.b32.xlu0 %v631, 1
      %v670 = vpop.permute.xlu0 %669
      %671 = vrot.lane.b32.xlu0 %v634, 1
      %v672 = vpop.permute.xlu0 %671
      %673 = vrot.lane.b32.xlu0 %v639, 1
      %v674 = vpop.permute.xlu0 %673
      %675 = vrot.lane.b32.xlu0 %v642, 1
      %v676 = vpop.permute.xlu0 %675
      %678 = vrot.lane.b32.xlu0 %v646, 256
      %v679 = vpop.permute.xlu0 %678
      %s681 = sor.u32 256, 8
      %682 = vrot.lane.b32.xlu0 %v648, %s681
      %v683 = vpop.permute.xlu0 %682
      %s685 = sor.u32 256, 16
      %686 = vrot.lane.b32.xlu0 %v650, %s685
      %v687 = vpop.permute.xlu0 %686
      %s689 = sor.u32 256, 24
      %690 = vrot.lane.b32.xlu0 %v652, %s689
      %v691 = vpop.permute.xlu0 %690
      %s693 = sor.u32 256, 32
      %694 = vrot.lane.b32.xlu0 %v654, %s693
      %v695 = vpop.permute.xlu0 %694
      %s697 = sor.u32 256, 40
      %698 = vrot.lane.b32.xlu0 %v656, %s697
      %v699 = vpop.permute.xlu0 %698
      %s701 = sor.u32 256, 48
      %702 = vrot.lane.b32.xlu0 %v658, %s701
      %v703 = vpop.permute.xlu0 %702
      %s705 = sor.u32 256, 56
      %706 = vrot.lane.b32.xlu0 %v660, %s705
      %v707 = vpop.permute.xlu0 %706
      %s709 = sor.u32 256, 64
      %710 = vrot.lane.b32.xlu0 %v662, %s709
      %v711 = vpop.permute.xlu0 %710
      %s713 = sor.u32 256, 72
      %714 = vrot.lane.b32.xlu0 %v664, %s713
      %v715 = vpop.permute.xlu0 %714
      %s717 = sor.u32 256, 80
      %718 = vrot.lane.b32.xlu0 %v666, %s717
      %v719 = vpop.permute.xlu0 %718
      %s721 = sor.u32 256, 88
      %722 = vrot.lane.b32.xlu0 %v668, %s721
      %v723 = vpop.permute.xlu0 %722
      %s725 = sor.u32 256, 96
      %726 = vrot.lane.b32.xlu0 %v670, %s725
      %v727 = vpop.permute.xlu0 %726
      %s729 = sor.u32 256, 104
      %730 = vrot.lane.b32.xlu0 %v672, %s729
      %v731 = vpop.permute.xlu0 %730
      %s733 = sor.u32 256, 112
      %734 = vrot.lane.b32.xlu0 %v674, %s733
      %v735 = vpop.permute.xlu0 %734
      %s737 = sor.u32 256, 120
      %738 = vrot.lane.b32.xlu0 %v676, %s737
      %v739 = vpop.permute.xlu0 %738
      %v756 = vunpack.c.l.b16 %v332
      %v757 = vunpack.c.l.b16 %v333
      %v758 = vunpack.c.l.b16 %v334
      %v759 = vunpack.c.l.b16 %v335
      %v760 = vunpack.c.l.b16 %v336
      %v761 = vunpack.c.l.b16 %v337
      %v762 = vunpack.c.l.b16 %v338
      %v763 = vunpack.c.l.b16 %v339
      %v764 = vunpack.c.l.b16 %v340
      %v765 = vunpack.c.l.b16 %v341
      %v766 = vunpack.c.l.b16 %v342
      %v767 = vunpack.c.l.b16 %v343
      %v768 = vunpack.c.l.b16 %v344
      %v769 = vunpack.c.l.b16 %v345
      %v770 = vunpack.c.l.b16 %v346
      %v771 = vunpack.c.l.b16 %v347
      %v772 = vpack.c.b16 %v757, %v756
      %v773 = vpack.c.b16 %v759, %v758
      %v774 = vpack.c.b16 %v761, %v760
      %v775 = vpack.c.b16 %v763, %v762
      %v776 = vpack.c.b16 %v765, %v764
      %v777 = vpack.c.b16 %v767, %v766
      %v778 = vpack.c.b16 %v769, %v768
      %v779 = vpack.c.b16 %v771, %v770
      %v781 = vsel %vm499, %v420, 0
      %v784 = vsel %vm499, %v421, 0
      %v787 = vsel %vm499, %v422, 0
      %v790 = vsel %vm499, %v423, 0
      %v793 = vsel %vm499, %v424, 0
      %v796 = vsel %vm499, %v425, 0
      %v799 = vsel %vm499, %v426, 0
      %v802 = vsel %vm499, %v427, 0
      %v805 = vsel %vm499, %v772, 0
      %v808 = vsel %vm499, %v773, 0
      %v811 = vsel %vm499, %v774, 0
      %v814 = vsel %vm499, %v775, 0
      %v817 = vsel %vm499, %v776, 0
      %v820 = vsel %vm499, %v777, 0
      %v823 = vsel %vm499, %v778, 0
      %v826 = vsel %vm499, %v779, 0
      %828 = vmatprep.subr.bf16.mxu0 0
      %829 = vmatpush1.bf16.xpose.msra.mxu0 %v805
      %830 = vmatprep.subr.bf16.mxu0 0
      %831 = vmatpush1.bf16.xpose.msra.mxu0 %v808
      %832 = vmatprep.subr.bf16.mxu0 0
      %833 = vmatpush1.bf16.xpose.msra.mxu0 %v811
      %834 = vmatprep.subr.bf16.mxu0 0
      %835 = vmatpush1.bf16.xpose.msra.mxu0 %v814
      %836 = vmatprep.subr.bf16.mxu0 0
      %837 = vmatpush1.bf16.xpose.msra.mxu0 %v817
      %838 = vmatprep.subr.bf16.mxu0 0
      %839 = vmatpush1.bf16.xpose.msra.mxu0 %v820
      %840 = vmatprep.subr.bf16.mxu0 0
      %841 = vmatpush1.bf16.xpose.msra.mxu0 %v823
      %842 = vmatprep.subr.bf16.mxu0 0
      %843 = vmatpush1.bf16.xpose.msra.mxu0 %v826
      %844 = vmatprep.subr.bf16.mxu0 0
      %845 = vmatpush1.bf16.xpose.msra.mxu0 0
      %846 = vmatprep.subr.bf16.mxu0 0
      %847 = vmatpush1.bf16.xpose.msra.mxu0 0
      %848 = vmatprep.subr.bf16.mxu0 0
      %849 = vmatpush1.bf16.xpose.msra.mxu0 0
      %850 = vmatprep.subr.bf16.mxu0 0
      %851 = vmatpush1.bf16.xpose.msra.mxu0 0
      %852 = vmatprep.subr.bf16.mxu0 0
      %853 = vmatpush1.bf16.xpose.msra.mxu0 0
      %854 = vmatprep.subr.bf16.mxu0 0
      %855 = vmatpush1.bf16.xpose.msra.mxu0 0
      %856 = vmatprep.subr.bf16.mxu0 0
      %857 = vmatpush1.bf16.xpose.msra.mxu0 0
      %858 = vmatprep.subr.bf16.mxu0 0
      %859 = vmatpush1.bf16.xpose.msra.mxu0 0
      %860 = vmatprep.mubr.bf16.mxu0 0
      %861 = vmatmul.mubr.bf16.gmra.mrb[0].mxu0 %v781
      %v862 = vpop.f32.mrb[0].mxu0
      %v863 = vadd.f32 %v679, %v862
      %v864 = vpop.f32.mrb[0].mxu0
      %v865 = vpop.f32.mrb[0].mxu0
      %v866 = vadd.f32 %v683, %v865
      %v867 = vpop.f32.mrb[0].mxu0
      %868 = vmatprep.mubr.bf16.mxu0 0
      %869 = vmatmul.mubr.bf16.gmra.mrb[0].mxu0 %v784
      %v870 = vpop.f32.mrb[0].mxu0
      %v871 = vadd.f32 %v687, %v870
      %v872 = vpop.f32.mrb[0].mxu0
      %v873 = vpop.f32.mrb[0].mxu0
      %v874 = vadd.f32 %v691, %v873
      %v875 = vpop.f32.mrb[0].mxu0
      %876 = vmatprep.mubr.bf16.mxu0 0
      %877 = vmatmul.mubr.bf16.gmra.mrb[0].mxu0 %v787
      %v878 = vpop.f32.mrb[0].mxu0
      %v879 = vadd.f32 %v695, %v878
      %v880 = vpop.f32.mrb[0].mxu0
      %v881 = vpop.f32.mrb[0].mxu0
      %v882 = vadd.f32 %v699, %v881
      %v883 = vpop.f32.mrb[0].mxu0
      %884 = vmatprep.mubr.bf16.mxu0 0
      %885 = vmatmul.mubr.bf16.gmra.mrb[0].mxu0 %v790
      %v886 = vpop.f32.mrb[0].mxu0
      %v887 = vadd.f32 %v703, %v886
      %v888 = vpop.f32.mrb[0].mxu0
      %v889 = vpop.f32.mrb[0].mxu0
      %v890 = vadd.f32 %v707, %v889
      %v891 = vpop.f32.mrb[0].mxu0
      %892 = vmatprep.mubr.bf16.mxu0 0
      %893 = vmatmul.mubr.bf16.gmra.mrb[0].mxu0 %v793
      %v894 = vpop.f32.mrb[0].mxu0
      %v895 = vadd.f32 %v711, %v894
      %v896 = vpop.f32.mrb[0].mxu0
      %v897 = vpop.f32.mrb[0].mxu0
      %v898 = vadd.f32 %v715, %v897
      %v899 = vpop.f32.mrb[0].mxu0
      %900 = vmatprep.mubr.bf16.mxu0 0
      %901 = vmatmul.mubr.bf16.gmra.mrb[0].mxu0 %v796
      %v902 = vpop.f32.mrb[0].mxu0
      %v903 = vadd.f32 %v719, %v902
      %v904 = vpop.f32.mrb[0].mxu0
      %v905 = vpop.f32.mrb[0].mxu0
      %v906 = vadd.f32 %v723, %v905
      %v907 = vpop.f32.mrb[0].mxu0
      %908 = vmatprep.mubr.bf16.mxu0 0
      %909 = vmatmul.mubr.bf16.gmra.mrb[0].mxu0 %v799
      %v910 = vpop.f32.mrb[0].mxu0
      %v911 = vadd.f32 %v727, %v910
      %v912 = vpop.f32.mrb[0].mxu0
      %v913 = vpop.f32.mrb[0].mxu0
      %v914 = vadd.f32 %v731, %v913
      %v915 = vpop.f32.mrb[0].mxu0
      %916 = vmatprep.mubr.bf16.mxu0 0
      %917 = vmatmul.mubr.bf16.gmra.mrb[0].mxu0 %v802
      %v918 = vpop.f32.mrb[0].mxu0
      %v919 = vadd.f32 %v735, %v918
      %v920 = vpop.f32.mrb[0].mxu0
      %v921 = vpop.f32.mrb[0].mxu0
      %v922 = vadd.f32 %v739, %v921
      %v923 = vpop.f32.mrb[0].mxu0
      %924 = vdwg.mxu0
      %v925 = vmul.f32 %v863, 0.17677669
      %v926 = vmul.f32 %v866, 0.17677669
      %v927 = vmul.f32 %v871, 0.17677669
      %v928 = vmul.f32 %v874, 0.17677669
      %v929 = vmul.f32 %v879, 0.17677669
      %v930 = vmul.f32 %v882, 0.17677669
      %v931 = vmul.f32 %v887, 0.17677669
      %v932 = vmul.f32 %v890, 0.17677669
      %v933 = vmul.f32 %v895, 0.17677669
      %v934 = vmul.f32 %v898, 0.17677669
      %v935 = vmul.f32 %v903, 0.17677669
      %v936 = vmul.f32 %v906, 0.17677669
      %v937 = vmul.f32 %v911, 0.17677669
      %v938 = vmul.f32 %v914, 0.17677669
      %v939 = vmul.f32 %v919, 0.17677669
      %v940 = vmul.f32 %v922, 0.17677669
      %v941 = vld [vmem:[%s4] sm:$0xff]
      %v942 = vld [vmem:[%s4 + $0x8] sm:$0xff]
      %v943 = vld [vmem:[%s4 + $0x10] sm:$0xff]
      %v944 = vld [vmem:[%s4 + $0x18] sm:$0xff]
      %v945 = vld [vmem:[%s4 + $0x20] sm:$0xff]
      %v946 = vld [vmem:[%s4 + $0x28] sm:$0xff]
      %v947 = vld [vmem:[%s4 + $0x30] sm:$0xff]
      %v948 = vld [vmem:[%s4 + $0x38] sm:$0xff]
      %v949 = vld [vmem:[%s4 + $0x40] sm:$0xff]
      %v950 = vld [vmem:[%s4 + $0x48] sm:$0xff]
      %v951 = vld [vmem:[%s4 + $0x50] sm:$0xff]
      %v952 = vld [vmem:[%s4 + $0x58] sm:$0xff]
      %v953 = vld [vmem:[%s4 + $0x60] sm:$0xff]
      %v954 = vld [vmem:[%s4 + $0x68] sm:$0xff]
      %v955 = vld [vmem:[%s4 + $0x70] sm:$0xff]
      %v956 = vld [vmem:[%s4 + $0x78] sm:$0xff]
      %v957 = vadd.f32 %v925, %v941
      %v958 = vadd.f32 %v926, %v942
      %v959 = vadd.f32 %v927, %v943
      %v960 = vadd.f32 %v928, %v944
      %v961 = vadd.f32 %v929, %v945
      %v962 = vadd.f32 %v930, %v946
      %v963 = vadd.f32 %v931, %v947
      %v964 = vadd.f32 %v932, %v948
      %v965 = vadd.f32 %v933, %v949
      %v966 = vadd.f32 %v934, %v950
      %v967 = vadd.f32 %v935, %v951
      %v968 = vadd.f32 %v936, %v952
      %v969 = vadd.f32 %v937, %v953
      %v970 = vadd.f32 %v938, %v954
      %v971 = vadd.f32 %v939, %v955
      %v972 = vadd.f32 %v940, %v956
      %973 = vmax.xlane.f32.xlu0 %v957
      %v974 = vpop.xlane.xlu0 %973
      %975 = vmax.xlane.f32.xlu0 %v958
      %v976 = vpop.xlane.xlu0 %975
      %977 = vmax.xlane.f32.xlu0 %v959
      %v978 = vpop.xlane.xlu0 %977
      %979 = vmax.xlane.f32.xlu0 %v960
      %v980 = vpop.xlane.xlu0 %979
      %981 = vmax.xlane.f32.xlu0 %v961
      %v982 = vpop.xlane.xlu0 %981
      %983 = vmax.xlane.f32.xlu0 %v962
      %v984 = vpop.xlane.xlu0 %983
      %985 = vmax.xlane.f32.xlu0 %v963
      %v986 = vpop.xlane.xlu0 %985
      %987 = vmax.xlane.f32.xlu0 %v964
      %v988 = vpop.xlane.xlu0 %987
      %989 = vmax.xlane.f32.xlu0 %v965
      %v990 = vpop.xlane.xlu0 %989
      %991 = vmax.xlane.f32.xlu0 %v966
      %v992 = vpop.xlane.xlu0 %991
      %993 = vmax.xlane.f32.xlu0 %v967
      %v994 = vpop.xlane.xlu0 %993
      %995 = vmax.xlane.f32.xlu0 %v968
      %v996 = vpop.xlane.xlu0 %995
      %997 = vmax.xlane.f32.xlu0 %v969
      %v998 = vpop.xlane.xlu0 %997
      %999 = vmax.xlane.f32.xlu0 %v970
      %v1000 = vpop.xlane.xlu0 %999
      %1001 = vmax.xlane.f32.xlu0 %v971
      %v1002 = vpop.xlane.xlu0 %1001
      %1003 = vmax.xlane.f32.xlu0 %v972
      %v1004 = vpop.xlane.xlu0 %1003
      %v1005 = vsub.f32 %v957, %v974
      %v1006 = vsub.f32 %v958, %v976
      %v1007 = vsub.f32 %v959, %v978
      %v1008 = vsub.f32 %v960, %v980
      %v1009 = vsub.f32 %v961, %v982
      %v1010 = vsub.f32 %v962, %v984
      %v1011 = vsub.f32 %v963, %v986
      %v1012 = vsub.f32 %v964, %v988
      %v1013 = vsub.f32 %v965, %v990
      %v1014 = vsub.f32 %v966, %v992
      %v1015 = vsub.f32 %v967, %v994
      %v1016 = vsub.f32 %v968, %v996
      %v1017 = vsub.f32 %v969, %v998
      %v1018 = vsub.f32 %v970, %v1000
      %v1019 = vsub.f32 %v971, %v1002
      %v1020 = vsub.f32 %v972, %v1004
      %v1021 = vmul.f32 %v1005, 1.442695
      %v1022 = vpow.pop %v1021
      %v1023 = vmul.f32 %v1006, 1.442695
      %v1024 = vpow.pop %v1023
      %v1025 = vmul.f32 %v1007, 1.442695
      %v1026 = vpow.pop %v1025
      %v1027 = vmul.f32 %v1008, 1.442695
      %v1028 = vpow.pop %v1027
      %v1029 = vmul.f32 %v1009, 1.442695
      %v1030 = vpow.pop %v1029
      %v1031 = vmul.f32 %v1010, 1.442695
      %v1032 = vpow.pop %v1031
      %v1033 = vmul.f32 %v1011, 1.442695
      %v1034 = vpow.pop %v1033
      %v1035 = vmul.f32 %v1012, 1.442695
      %v1036 = vpow.pop %v1035
      %v1037 = vmul.f32 %v1013, 1.442695
      %v1038 = vpow.pop %v1037
      %v1039 = vmul.f32 %v1014, 1.442695
      %v1040 = vpow.pop %v1039
      %v1041 = vmul.f32 %v1015, 1.442695
      %v1042 = vpow.pop %v1041
      %v1043 = vmul.f32 %v1016, 1.442695
      %v1044 = vpow.pop %v1043
      %v1045 = vmul.f32 %v1017, 1.442695
      %v1046 = vpow.pop %v1045
      %v1047 = vmul.f32 %v1018, 1.442695
      %v1048 = vpow.pop %v1047
      %v1049 = vmul.f32 %v1019, 1.442695
      %v1050 = vpow.pop %v1049
      %v1051 = vmul.f32 %v1020, 1.442695
      %v1052 = vpow.pop %v1051
      %1053 = vadd.xlane.f32.xlu0 %v1022
      %v1054 = vpop.xlane.xlu0 %1053
      %1055 = vadd.xlane.f32.xlu0 %v1024
      %v1056 = vpop.xlane.xlu0 %1055
      %1057 = vadd.xlane.f32.xlu0 %v1026
      %v1058 = vpop.xlane.xlu0 %1057
      %1059 = vadd.xlane.f32.xlu0 %v1028
      %v1060 = vpop.xlane.xlu0 %1059
      %1061 = vadd.xlane.f32.xlu0 %v1030
      %v1062 = vpop.xlane.xlu0 %1061
      %1063 = vadd.xlane.f32.xlu0 %v1032
      %v1064 = vpop.xlane.xlu0 %1063
      %1065 = vadd.xlane.f32.xlu0 %v1034
      %v1066 = vpop.xlane.xlu0 %1065
      %1067 = vadd.xlane.f32.xlu0 %v1036
      %v1068 = vpop.xlane.xlu0 %1067
      %1069 = vadd.xlane.f32.xlu0 %v1038
      %v1070 = vpop.xlane.xlu0 %1069
      %1071 = vadd.xlane.f32.xlu0 %v1040
      %v1072 = vpop.xlane.xlu0 %1071
      %1073 = vadd.xlane.f32.xlu0 %v1042
      %v1074 = vpop.xlane.xlu0 %1073
      %1075 = vadd.xlane.f32.xlu0 %v1044
      %v1076 = vpop.xlane.xlu0 %1075
      %1077 = vadd.xlane.f32.xlu0 %v1046
      %v1078 = vpop.xlane.xlu0 %1077
      %1079 = vadd.xlane.f32.xlu0 %v1048
      %v1080 = vpop.xlane.xlu0 %1079
      %1081 = vadd.xlane.f32.xlu0 %v1050
      %v1082 = vpop.xlane.xlu0 %1081
      %1083 = vadd.xlane.f32.xlu0 %v1052
      %v1084 = vpop.xlane.xlu0 %1083
      %v1085 = vrcp.pop %v1054
      %v1086 = vrcp.pop %v1056
      %v1087 = vrcp.pop %v1058
      %v1088 = vrcp.pop %v1060
      %v1089 = vrcp.pop %v1062
      %v1090 = vrcp.pop %v1064
      %v1091 = vrcp.pop %v1066
      %v1092 = vrcp.pop %v1068
      %v1093 = vrcp.pop %v1070
      %v1094 = vrcp.pop %v1072
      %v1095 = vrcp.pop %v1074
      %v1096 = vrcp.pop %v1076
      %v1097 = vrcp.pop %v1078
      %v1098 = vrcp.pop %v1080
      %v1099 = vrcp.pop %v1082
      %v1100 = vrcp.pop %v1084
      %v1101 = vmul.f32 %v1022, %v1085
      %v1102 = vmul.f32 %v1024, %v1086
      %v1103 = vmul.f32 %v1026, %v1087
      %v1104 = vmul.f32 %v1028, %v1088
      %v1105 = vmul.f32 %v1030, %v1089
      %v1106 = vmul.f32 %v1032, %v1090
      %v1107 = vmul.f32 %v1034, %v1091
      %v1108 = vmul.f32 %v1036, %v1092
      %v1109 = vmul.f32 %v1038, %v1093
      %v1110 = vmul.f32 %v1040, %v1094
      %v1111 = vmul.f32 %v1042, %v1095
      %v1112 = vmul.f32 %v1044, %v1096
      %v1113 = vmul.f32 %v1046, %v1097
      %v1114 = vmul.f32 %v1048, %v1098
      %v1115 = vmul.f32 %v1050, %v1099
      %v1116 = vmul.f32 %v1052, %v1100
      %v1117 = vpack.c.bf16 %v1102, %v1101
      %v1118 = vpack.c.bf16 %v1104, %v1103
      %v1119 = vpack.c.bf16 %v1106, %v1105
      %v1120 = vpack.c.bf16 %v1108, %v1107
      %v1121 = vpack.c.bf16 %v1110, %v1109
      %v1122 = vpack.c.bf16 %v1112, %v1111
      %v1123 = vpack.c.bf16 %v1114, %v1113
      %v1124 = vpack.c.bf16 %v1116, %v1115
      %v1141 = vunpack.c.l.b16 %v349
      %v1142 = vunpack.c.l.b16 %v350
      %v1143 = vunpack.c.l.b16 %v351
      %v1144 = vunpack.c.l.b16 %v352
      %v1145 = vunpack.c.l.b16 %v353
      %v1146 = vunpack.c.l.b16 %v354
      %v1147 = vunpack.c.l.b16 %v355
      %v1148 = vunpack.c.l.b16 %v356
      %v1149 = vunpack.c.l.b16 %v357
      %v1150 = vunpack.c.l.b16 %v358
      %v1151 = vunpack.c.l.b16 %v359
      %v1152 = vunpack.c.l.b16 %v360
      %v1153 = vunpack.c.l.b16 %v361
      %v1154 = vunpack.c.l.b16 %v362
      %v1155 = vunpack.c.l.b16 %v363
      %v1156 = vunpack.c.l.b16 %v364
      %v1157 = vpack.c.b16 %v1142, %v1141
      %v1158 = vpack.c.b16 %v1144, %v1143
      %v1159 = vpack.c.b16 %v1146, %v1145
      %v1160 = vpack.c.b16 %v1148, %v1147
      %v1161 = vpack.c.b16 %v1150, %v1149
      %v1162 = vpack.c.b16 %v1152, %v1151
      %v1163 = vpack.c.b16 %v1154, %v1153
      %v1164 = vpack.c.b16 %v1156, %v1155
      %1173 = vmatprep.subr.bf16.mxu0 0
      %1174 = vmatpush1.bf16.msra.mxu0 %v1157
      %1175 = vmatprep.subr.bf16.mxu0 0
      %1176 = vmatpush1.bf16.msra.mxu0 %v1158
      %1177 = vmatprep.subr.bf16.mxu0 0
      %1178 = vmatpush1.bf16.msra.mxu0 %v1159
      %1179 = vmatprep.subr.bf16.mxu0 0
      %1180 = vmatpush1.bf16.msra.mxu0 %v1160
      %1181 = vmatprep.subr.bf16.mxu0 0
      %1182 = vmatpush1.bf16.msra.mxu0 %v1161
      %1183 = vmatprep.subr.bf16.mxu0 0
      %1184 = vmatpush1.bf16.msra.mxu0 %v1162
      %1185 = vmatprep.subr.bf16.mxu0 0
      %1186 = vmatpush1.bf16.msra.mxu0 %v1163
      %1187 = vmatprep.subr.bf16.mxu0 0
      %1188 = vmatpush1.bf16.msra.mxu0 %v1164
      %1189 = vmatprep.subr.bf16.mxu0 0
      %1190 = vmatpush1.bf16.msra.mxu0 0
      %1191 = vmatprep.subr.bf16.mxu0 0
      %1192 = vmatpush1.bf16.msra.mxu0 0
      %1193 = vmatprep.subr.bf16.mxu0 0
      %1194 = vmatpush1.bf16.msra.mxu0 0
      %1195 = vmatprep.subr.bf16.mxu0 0
      %1196 = vmatpush1.bf16.msra.mxu0 0
      %1197 = vmatprep.subr.bf16.mxu0 0
      %1198 = vmatpush1.bf16.msra.mxu0 0
      %1199 = vmatprep.subr.bf16.mxu0 0
      %1200 = vmatpush1.bf16.msra.mxu0 0
      %1201 = vmatprep.subr.bf16.mxu0 0
      %1202 = vmatpush1.bf16.msra.mxu0 0
      %1203 = vmatprep.subr.bf16.mxu0 0
      %1204 = vmatpush1.bf16.msra.mxu0 0
      %1205 = vmatprep.mubr.bf16.mxu0 0
      %1206 = vmatmul.mubr.bf16.gmra.mrb[0].mxu0 %v1117
      %v1207 = vpop.f32.mrb[0].mxu0
      %v1208 = vadd.f32 0.0, %v1207
      %v1209 = vpop.f32.mrb[0].mxu0
      %v1210 = vpop.f32.mrb[0].mxu0
      %v1211 = vadd.f32 0.0, %v1210
      %v1212 = vpop.f32.mrb[0].mxu0
      %1213 = vmatprep.mubr.bf16.mxu0 0
      %1214 = vmatmul.mubr.bf16.gmra.mrb[0].mxu0 %v1118
      %v1215 = vpop.f32.mrb[0].mxu0
      %v1216 = vadd.f32 0.0, %v1215
      %v1217 = vpop.f32.mrb[0].mxu0
      %v1218 = vpop.f32.mrb[0].mxu0
      %v1219 = vadd.f32 0.0, %v1218
      %v1220 = vpop.f32.mrb[0].mxu0
      %1221 = vmatprep.mubr.bf16.mxu0 0
      %1222 = vmatmul.mubr.bf16.gmra.mrb[0].mxu0 %v1119
      %v1223 = vpop.f32.mrb[0].mxu0
      %v1224 = vadd.f32 0.0, %v1223
      %v1225 = vpop.f32.mrb[0].mxu0
      %v1226 = vpop.f32.mrb[0].mxu0
      %v1227 = vadd.f32 0.0, %v1226
      %v1228 = vpop.f32.mrb[0].mxu0
      %1229 = vmatprep.mubr.bf16.mxu0 0
      %1230 = vmatmul.mubr.bf16.gmra.mrb[0].mxu0 %v1120
      %v1231 = vpop.f32.mrb[0].mxu0
      %v1232 = vadd.f32 0.0, %v1231
      %v1233 = vpop.f32.mrb[0].mxu0
      %v1234 = vpop.f32.mrb[0].mxu0
      %v1235 = vadd.f32 0.0, %v1234
      %v1236 = vpop.f32.mrb[0].mxu0
      %1237 = vmatprep.mubr.bf16.mxu0 0
      %1238 = vmatmul.mubr.bf16.gmra.mrb[0].mxu0 %v1121
      %v1239 = vpop.f32.mrb[0].mxu0
      %v1240 = vadd.f32 0.0, %v1239
      %v1241 = vpop.f32.mrb[0].mxu0
      %v1242 = vpop.f32.mrb[0].mxu0
      %v1243 = vadd.f32 0.0, %v1242
      %v1244 = vpop.f32.mrb[0].mxu0
      %1245 = vmatprep.mubr.bf16.mxu0 0
      %1246 = vmatmul.mubr.bf16.gmra.mrb[0].mxu0 %v1122
      %v1247 = vpop.f32.mrb[0].mxu0
      %v1248 = vadd.f32 0.0, %v1247
      %v1249 = vpop.f32.mrb[0].mxu0
      %v1250 = vpop.f32.mrb[0].mxu0
      %v1251 = vadd.f32 0.0, %v1250
      %v1252 = vpop.f32.mrb[0].mxu0
      %1253 = vmatprep.mubr.bf16.mxu0 0
      %1254 = vmatmul.mubr.bf16.gmra.mrb[0].mxu0 %v1123
      %v1255 = vpop.f32.mrb[0].mxu0
      %v1256 = vadd.f32 0.0, %v1255
      %v1257 = vpop.f32.mrb[0].mxu0
      %v1258 = vpop.f32.mrb[0].mxu0
      %v1259 = vadd.f32 0.0, %v1258
      %v1260 = vpop.f32.mrb[0].mxu0
      %1261 = vmatprep.mubr.bf16.mxu0 0
      %1262 = vmatmul.mubr.bf16.gmra.mrb[0].mxu0 %v1124
      %v1263 = vpop.f32.mrb[0].mxu0
      %v1264 = vadd.f32 0.0, %v1263
      %v1265 = vpop.f32.mrb[0].mxu0
      %v1266 = vpop.f32.mrb[0].mxu0
      %v1267 = vadd.f32 0.0, %v1266
      %v1268 = vpop.f32.mrb[0].mxu0
      %1269 = vdwg.mxu0
      %v1270 = vpack.c.bf16 %v1211, %v1208
      %v1271 = vpack.c.bf16 %v1219, %v1216
      %v1272 = vpack.c.bf16 %v1227, %v1224
      %v1273 = vpack.c.bf16 %v1235, %v1232
      %v1274 = vpack.c.bf16 %v1243, %v1240
      %v1275 = vpack.c.bf16 %v1251, %v1248
      %v1276 = vpack.c.bf16 %v1259, %v1256
      %v1277 = vpack.c.bf16 %v1267, %v1264
      %v1286 = vunpack.c.l.b16 %v1270
      %v1287 = vunpack.c.h.b16 %v1270
      %v1288 = vunpack.c.l.b16 %v1271
      %v1289 = vunpack.c.h.b16 %v1271
      %v1290 = vunpack.c.l.b16 %v1272
      %v1291 = vunpack.c.h.b16 %v1272
      %v1292 = vunpack.c.l.b16 %v1273
      %v1293 = vunpack.c.h.b16 %v1273
      %v1294 = vunpack.c.l.b16 %v1274
      %v1295 = vunpack.c.h.b16 %v1274
      %v1296 = vunpack.c.l.b16 %v1275
      %v1297 = vunpack.c.h.b16 %v1275
      %v1298 = vunpack.c.l.b16 %v1276
      %v1299 = vunpack.c.h.b16 %v1276
      %v1300 = vunpack.c.l.b16 %v1277
      %v1301 = vunpack.c.h.b16 %v1277
      %v1302 = vpack.c.b16 %v1286, %v1286
      %v1303 = vpack.c.b16 %v1287, %v1287
      %v1304 = vpack.c.b16 %v1288, %v1288
      %v1305 = vpack.c.b16 %v1289, %v1289
      %v1306 = vpack.c.b16 %v1290, %v1290
      %v1307 = vpack.c.b16 %v1291, %v1291
      %v1308 = vpack.c.b16 %v1292, %v1292
      %v1309 = vpack.c.b16 %v1293, %v1293
      %v1310 = vpack.c.b16 %v1294, %v1294
      %v1311 = vpack.c.b16 %v1295, %v1295
      %v1312 = vpack.c.b16 %v1296, %v1296
      %v1313 = vpack.c.b16 %v1297, %v1297
      %v1314 = vpack.c.b16 %v1298, %v1298
      %v1315 = vpack.c.b16 %v1299, %v1299
      %v1316 = vpack.c.b16 %v1300, %v1300
      %v1317 = vpack.c.b16 %v1301, %v1301
      %vm1334 = vcmask 257024
      %1335 = vst.msk [vmem:[%s313] sm:$0xf] %vm1334, %v1302
      %1336 = vst.msk [vmem:[%s313 + $0x4] sm:$0xf] %vm1334, %v1303
      %1337 = vst.msk [vmem:[%s313 + $0x8] sm:$0xf] %vm1334, %v1304
      %1338 = vst.msk [vmem:[%s313 + $0xc] sm:$0xf] %vm1334, %v1305
      %1339 = vst.msk [vmem:[%s313 + $0x10] sm:$0xf] %vm1334, %v1306
      %1340 = vst.msk [vmem:[%s313 + $0x14] sm:$0xf] %vm1334, %v1307
      %1341 = vst.msk [vmem:[%s313 + $0x18] sm:$0xf] %vm1334, %v1308
      %1342 = vst.msk [vmem:[%s313 + $0x1c] sm:$0xf] %vm1334, %v1309
      %1343 = vst.msk [vmem:[%s313 + $0x20] sm:$0xf] %vm1334, %v1310
      %1344 = vst.msk [vmem:[%s313 + $0x24] sm:$0xf] %vm1334, %v1311
      %1345 = vst.msk [vmem:[%s313 + $0x28] sm:$0xf] %vm1334, %v1312
      %1346 = vst.msk [vmem:[%s313 + $0x2c] sm:$0xf] %vm1334, %v1313
      %1347 = vst.msk [vmem:[%s313 + $0x30] sm:$0xf] %vm1334, %v1314
      %1348 = vst.msk [vmem:[%s313 + $0x34] sm:$0xf] %vm1334, %v1315
      %1349 = vst.msk [vmem:[%s313 + $0x38] sm:$0xf] %vm1334, %v1316
      %1350 = vst.msk [vmem:[%s313 + $0x3c] sm:$0xf] %vm1334, %v1317
      %p1351 = scmp.lt.s32.totalorder %s20, 1
      %s1352 = scalar_select %p1351, %s20, 1
      %p1353 = scmp.lt.s32.totalorder %s21, 3
      %s1354 = scalar_select %p1353, %s21, 3
      %s1355 = smul.addr %s1354, 16
      %s1356 = smul.addr %s1352, 64
      %s1357 = sadd.s32 %s1355, %s1356
      %s1358 = smul.addr %s1357, 4
      %s1359 = scalar_lea.vmem %s5, %s1358
      // Predicated region
      $region41: #{rel_partial_learnable_decoder_layer.6} parent=39 // pred_check
        %p1360 = pneg %p175
      $region42: #{rel_partial_learnable_decoder_layer.6} parent=39 // pred_check_branch
        %1362 = sbr.rel (%p1360) target = $region44
      $region43: #{rel_partial_learnable_decoder_layer.6} parent=39 // pred_region
        _
      $region44: #{rel_partial_learnable_decoder_layer.6} parent=39 // pred_fallthru
        _
    $region40: #{rel_partial_learnable_decoder_layer.6} parent=5 // pred_fallthru
      _
    %p1363 = scmp.le.s32.totalorder 2, %s11
    // Predicated region
    $region45: #{rel_partial_learnable_decoder_layer.6} parent=5 // pred_check
      %p1364 = pneg %p1363
    $region46: #{rel_partial_learnable_decoder_layer.6} parent=5 // pred_check_branch
      %1366 = sbr.rel (%p1364) target = $region48
    $region47: #{rel_partial_learnable_decoder_layer.6} parent=5 // pred_region
      %s1367 = ssub.s32 %s11, 2
      // Predicated region
      $region49: #{rel_partial_learnable_decoder_layer.6} parent=47 // pred_check
        %p1368 = pneg %p181
      $region50: #{rel_partial_learnable_decoder_layer.6} parent=47 // pred_check_branch
        %1370 = sbr.rel (%p1368) target = $region52
      $region51: #{rel_partial_learnable_decoder_layer.6} parent=47 // pred_region
        %p1371 = scmp.lt.s32.totalorder %s22, 1
        %s1372 = scalar_select %p1371, %s22, 1
        %p1373 = scmp.lt.s32.totalorder %s23, 3
        %s1374 = scalar_select %p1373, %s23, 3
        %s1375 = smul.addr %s1374, 16
        %s1376 = smul.addr %s1372, 64
        %s1377 = sadd.s32 %s1375, %s1376
        %s1378 = smul.addr %s1377, 4
        %s1379 = scalar_lea.vmem %s5, %s1378
      $region52: #{rel_partial_learnable_decoder_layer.6} parent=47 // pred_fallthru
        _
    $region48: #{rel_partial_learnable_decoder_layer.6} parent=5 // pred_fallthru
      _
  $region6: #{rel_partial_learnable_decoder_layer.6} parent=0 // loop_footer
    %s15 = sadd.s32 1, %s11
  $region7: #{rel_partial_learnable_decoder_layer.6} parent=0 // loop_footer_branch
    %10 = sbr.rel target = $region3
  $region8: #{rel_partial_learnable_decoder_layer.6} parent=0 // loop_exit
    _

// kernel: rel_partial_learnable_decoder_layer.4
$region0: #{rel_partial_learnable_decoder_layer.4}
  #allocation0 [shape = 'u32[]', space=smem, size = 0x4, offset = 0x4, fixed_abs, tag = 'smem constant byte address 0x4 - core index']
  #allocation1 [shape = 'u32[144,128]{1,0:T(1,128)}', space=vmem, size = 0x12000, scoped, tag = 'internal scratch']
  %s0 = inlined_call_operand.vmem [shape: f32[128,256], index: 0, kind: input, shape index: {}]
  %s1 = inlined_call_operand.vmem [shape: bf16[384,128], index: 1, kind: input, shape index: {}]
  %s2 = inlined_call_operand.vmem [shape: bf16[2,12,128,32], index: 2, kind: output, shape index: {}]
  %s3 = sld [smem:[#allocation0]]
  $region79: #{rel_partial_learnable_decoder_layer.4} parent=0
    _
  %s5 = ssub.s32 1, %s3
  %s6 = scalar_select 0, %s5, %s3
  $region1: #{rel_partial_learnable_decoder_layer.4} parent=0
    #allocation2 [shape = 'u8[131072]{0}', space=vmem, size = 0x20000, scoped, tag = 'input window, operand 0']
    loop: start=0, step=1, limit=4
    $region2: #{rel_partial_learnable_decoder_layer.4} parent=1 // loop_pre_header
      _
    $region3: #{rel_partial_learnable_decoder_layer.4} parent=1 // loop_header
      %s8 = sphi 0, %s12
      %p9 = scmp.ge.s32.totalorder %s8, 4
      %s15 = sphi 0, %s27
      %s16 = sphi 0, %s23
      %s17 = sphi 0, %s15
      %s18 = sphi 0, %s16
      %s19 = sphi 0, %s17
      %s20 = sphi 0, %s18
      %s32 = sphi 0, %s34
      %s35 = sphi 0, %s32
      %s36 = sphi 0, %s35
      %s52 = sphi 0, %s36
      %s56 = sphi 0, %s56
      %s58 = sphi 0, %s56
      %s59 = sphi 0, %s58
      %s73 = sphi 0, %s59
      %s81 = sphi 0, %s83
      %s84 = sphi 0, %s81
      %s85 = sphi 0, %s84
      %s101 = sphi 0, %s85
    $region4: #{rel_partial_learnable_decoder_layer.4} parent=1 // loop_header_branch
      %11 = sbr.rel (%p9) target = $region8
    $region5: #{rel_partial_learnable_decoder_layer.4} parent=1 // loop_body
      %s13 = ssub.s32 %s8, 1
      %s14 = ssub.s32 %s8, 2
      %s21 = sadd.s32 1, %s16
      %p22 = scmp.ge.s32.totalorder %s21, 1
      %s23 = scalar_select %p22, 0, %s21
      %s24 = sadd.s32 1, %s15
      %s25 = scalar_select %p22, %s24, %s15
      %p26 = scmp.ge.s32.totalorder %s25, 2
      %s27 = scalar_select %p26, 0, %s25
      %s28 = ssub.s32 %s16, %s23
      %s29 = ssub.s32 %s15, %s27
      %s30 = sor.u32 %s28, %s29
      %p31 = scmp.eq.s32.totalorder %s30, 0
      %s33 = sadd.s32 %s32, 1
      %s34 = scalar_select %p31, %s32, %s33
      %p37 = pneg %p31
      %p38 = scmp.eq.s32.totalorder %s8, 1
      %p39 = por %p37, %p38
      %p40 = scmp.ne.s32.totalorder %s32, %s35
      %p41 = scmp.eq.s32.totalorder %s8, 0
      %p42 = por %p40, %p41
      %p43 = scmp.ne.s32.totalorder %s32, %s35
      %p44 = scmp.eq.s32.totalorder %s13, 1
      %p45 = por %p43, %p44
      %p46 = scmp.ne.s32.totalorder %s35, %s36
      %p47 = scmp.eq.s32.totalorder %s13, 0
      %p48 = por %p46, %p47
      %p49 = scmp.ne.s32.totalorder %s35, %s36
      %p50 = scmp.eq.s32.totalorder %s14, 1
      %p51 = por %p49, %p50
      %p53 = scmp.ne.s32.totalorder %s36, %s52
      %p54 = scmp.eq.s32.totalorder %s14, 0
      %p55 = por %p53, %p54
      %s57 = sadd.s32 %s56, 1
      %p60 = scmp.eq.s32.totalorder %s8, 1
      %p61 = scmp.ne.s32.totalorder %s56, %s58
      %p62 = scmp.eq.s32.totalorder %s8, 0
      %p63 = por %p61, %p62
      %p64 = scmp.ne.s32.totalorder %s56, %s58
      %p65 = scmp.eq.s32.totalorder %s13, 1
      %p66 = por %p64, %p65
      %p67 = scmp.ne.s32.totalorder %s58, %s59
      %p68 = scmp.eq.s32.totalorder %s13, 0
      %p69 = por %p67, %p68
      %p70 = scmp.ne.s32.totalorder %s58, %s59
      %p71 = scmp.eq.s32.totalorder %s14, 1
      %p72 = por %p70, %p71
      %p74 = scmp.ne.s32.totalorder %s59, %s73
      %p75 = scmp.eq.s32.totalorder %s14, 0
      %p76 = por %p74, %p75
      %s77 = ssub.s32 %s15, %s27
      %s78 = ssub.s32 %s16, %s23
      %s79 = sor.u32 %s77, %s78
      %p80 = scmp.eq.s32.totalorder %s79, 0
      %s82 = sadd.s32 %s81, 1
      %s83 = scalar_select %p80, %s81, %s82
      %p86 = pneg %p80
      %p87 = scmp.eq.s32.totalorder %s8, 1
      %p88 = por %p86, %p87
      %p89 = scmp.ne.s32.totalorder %s81, %s84
      %p90 = scmp.eq.s32.totalorder %s8, 0
      %p91 = por %p89, %p90
      %p92 = scmp.ne.s32.totalorder %s81, %s84
      %p93 = scmp.eq.s32.totalorder %s13, 1
      %p94 = por %p92, %p93
      %p95 = scmp.ne.s32.totalorder %s84, %s85
      %p96 = scmp.eq.s32.totalorder %s13, 0
      %p97 = por %p95, %p96
      %p98 = scmp.ne.s32.totalorder %s84, %s85
      %p99 = scmp.eq.s32.totalorder %s14, 1
      %p100 = por %p98, %p99
      %p102 = scmp.ne.s32.totalorder %s85, %s101
      %p103 = scmp.eq.s32.totalorder %s14, 0
      %p104 = por %p102, %p103
      %p105 = scmp.le.s32.totalorder 1, %s8
      %p106 = scmp.lt.s32.totalorder %s8, 3
      %p107 = pnand %p105, %p106
      %p108 = pneg %p107
      // Predicated region
      $region9: #{rel_partial_learnable_decoder_layer.4} parent=5 // pred_check
        _
      $region10: #{rel_partial_learnable_decoder_layer.4} parent=5 // pred_check_branch
        %110 = sbr.rel (%p107) target = $region12
      $region11: #{rel_partial_learnable_decoder_layer.4} parent=5 // pred_region
        %s111 = ssub.s32 %s8, 1
        // Predicated region
        $region13: #{rel_partial_learnable_decoder_layer.4} parent=11 // pred_check
          %p112 = pneg %p69
        $region14: #{rel_partial_learnable_decoder_layer.4} parent=11 // pred_check_branch
          %114 = sbr.rel (%p112) target = $region16
        $region15: #{rel_partial_learnable_decoder_layer.4} parent=11 // pred_region
          _
        $region16: #{rel_partial_learnable_decoder_layer.4} parent=11 // pred_fallthru
          _
      $region12: #{rel_partial_learnable_decoder_layer.4} parent=5 // pred_fallthru
        _
      %p115 = scmp.lt.s32.totalorder %s8, 2
      // Predicated region
      $region17: #{rel_partial_learnable_decoder_layer.4} parent=5 // pred_check
        %p116 = pneg %p115
      $region18: #{rel_partial_learnable_decoder_layer.4} parent=5 // pred_check_branch
        %118 = sbr.rel (%p116) target = $region20
      $region19: #{rel_partial_learnable_decoder_layer.4} parent=5 // pred_region
        // Predicated region
        $region21: #{rel_partial_learnable_decoder_layer.4} parent=19 // pred_check
          %p119 = pneg %p42
        $region22: #{rel_partial_learnable_decoder_layer.4} parent=19 // pred_check_branch
          %121 = sbr.rel (%p119) target = $region24
        $region23: #{rel_partial_learnable_decoder_layer.4} parent=19 // pred_region
          %s122 = sand.u32 %s32, 1
          %s123 = sand.u32 %s32, 1
          %s124 = smul.addr %s123, 128
          %s125 = scalar_lea.vmem [#allocation2], %s124
          %s126 = smul.u32 16, %s16
          %s127 = smul.addr %s126, 2
          %s128 = sadd.s32 %s15, %s127
          %s129 = smul.addr %s128, 8
          %s130 = scalar_lea.vmem %s0, %s129
          // Predicated region
          $region25: #{rel_partial_learnable_decoder_layer.4} parent=23 // pred_check
            _
          $region26: #{rel_partial_learnable_decoder_layer.4} parent=23 // pred_check_branch
            %132 = sbr.rel (0) target = $region28
          $region27: #{rel_partial_learnable_decoder_layer.4} parent=23 // pred_region
            // Predicated region
            $region29: #{rel_partial_learnable_decoder_layer.4} parent=27 // pred_check
              _
            $region30: #{rel_partial_learnable_decoder_layer.4} parent=27 // pred_check_branch
              %134 = sbr.rel (0) target = $region32
            $region31: #{rel_partial_learnable_decoder_layer.4} parent=27 // pred_region
              // Predicated region
              $region44: #{rel_partial_learnable_decoder_layer.4} parent=31 // pred_check
                _
              $region45: #{rel_partial_learnable_decoder_layer.4} parent=31 // pred_check_branch
                %179 = sbr.rel (0) target = $region47
              $region46: #{rel_partial_learnable_decoder_layer.4} parent=31 // pred_region
                loop: start=0, step=1, limit=1
                $region48: #{rel_partial_learnable_decoder_layer.4} parent=46 // loop_pre_header
                  _
                $region49: #{rel_partial_learnable_decoder_layer.4} parent=46 // loop_header
                  %s181 = sphi 0, %s185
                  %p182 = scmp.ge.s32.totalorder %s181, 1
                  %s186 = sphi %s130, %s130
                  %s187 = sphi %s125, %s125
                $region50: #{rel_partial_learnable_decoder_layer.4} parent=46 // loop_header_branch
                  %184 = sbr.rel (%p182) target = $region54
                $region51: #{rel_partial_learnable_decoder_layer.4} parent=46 // loop_body
                  %v188 = vld [vmem:[%s186] sm:$0xff]
                  %189 = vst [vmem:[%s187] sm:$0xff] %v188
                  %v190 = vld [vmem:[%s186 + $0x10] sm:$0xff]
                  %191 = vst [vmem:[%s187 + $0x8] sm:$0xff] %v190
                  %v192 = vld [vmem:[%s186 + $0x20] sm:$0xff]
                  %193 = vst [vmem:[%s187 + $0x10] sm:$0xff] %v192
                  %v194 = vld [vmem:[%s186 + $0x30] sm:$0xff]
                  %195 = vst [vmem:[%s187 + $0x18] sm:$0xff] %v194
                  %v196 = vld [vmem:[%s186 + $0x40] sm:$0xff]
                  %197 = vst [vmem:[%s187 + $0x20] sm:$0xff] %v196
                  %v198 = vld [vmem:[%s186 + $0x50] sm:$0xff]
                  %199 = vst [vmem:[%s187 + $0x28] sm:$0xff] %v198
                  %v200 = vld [vmem:[%s186 + $0x60] sm:$0xff]
                  %201 = vst [vmem:[%s187 + $0x30] sm:$0xff] %v200
                  %v202 = vld [vmem:[%s186 + $0x70] sm:$0xff]
                  %203 = vst [vmem:[%s187 + $0x38] sm:$0xff] %v202
                  %v204 = vld [vmem:[%s186 + $0x80] sm:$0xff]
                  %205 = vst [vmem:[%s187 + $0x40] sm:$0xff] %v204
                  %v206 = vld [vmem:[%s186 + $0x90] sm:$0xff]
                  %207 = vst [vmem:[%s187 + $0x48] sm:$0xff] %v206
                  %v208 = vld [vmem:[%s186 + $0xa0] sm:$0xff]
                  %209 = vst [vmem:[%s187 + $0x50] sm:$0xff] %v208
                  %v210 = vld [vmem:[%s186 + $0xb0] sm:$0xff]
                  %211 = vst [vmem:[%s187 + $0x58] sm:$0xff] %v210
                  %v212 = vld [vmem:[%s186 + $0xc0] sm:$0xff]
                  %213 = vst [vmem:[%s187 + $0x60] sm:$0xff] %v212
                  %v214 = vld [vmem:[%s186 + $0xd0] sm:$0xff]
                  %215 = vst [vmem:[%s187 + $0x68] sm:$0xff] %v214
                  %v216 = vld [vmem:[%s186 + $0xe0] sm:$0xff]
                  %217 = vst [vmem:[%s187 + $0x70] sm:$0xff] %v216
                  %v218 = vld [vmem:[%s186 + $0xf0] sm:$0xff]
                  %219 = vst [vmem:[%s187 + $0x78] sm:$0xff] %v218
                $region52: #{rel_partial_learnable_decoder_layer.4} parent=46 // loop_footer
                  %s185 = sadd.s32 1, %s181
                $region53: #{rel_partial_learnable_decoder_layer.4} parent=46 // loop_footer_branch
                  %180 = sbr.rel target = $region49
                $region54: #{rel_partial_learnable_decoder_layer.4} parent=46 // loop_exit
                  _
              $region47: #{rel_partial_learnable_decoder_layer.4} parent=31 // pred_fallthru
                _
              // Predicated region
              $region55: #{rel_partial_learnable_decoder_layer.4} parent=31 // pred_check
                _
              $region56: #{rel_partial_learnable_decoder_layer.4} parent=31 // pred_check_branch
                %221 = sbr.rel target = $region58
              $region57: #{rel_partial_learnable_decoder_layer.4} parent=31 // pred_region
                _
              $region58: #{rel_partial_learnable_decoder_layer.4} parent=31 // pred_fallthru
                _
            $region32: #{rel_partial_learnable_decoder_layer.4} parent=27 // pred_fallthru
              _
            // Predicated region
            $region33: #{rel_partial_learnable_decoder_layer.4} parent=27 // pred_check
              _
            $region34: #{rel_partial_learnable_decoder_layer.4} parent=27 // pred_check_branch
              %136 = sbr.rel target = $region36
            $region35: #{rel_partial_learnable_decoder_layer.4} parent=27 // pred_region
              loop: start=0, step=1, limit=1
              $region37: #{rel_partial_learnable_decoder_layer.4} parent=35 // loop_pre_header
                _
              $region38: #{rel_partial_learnable_decoder_layer.4} parent=35 // loop_header
                %s139 = sphi 0, %s143
                %p140 = scmp.ge.s32.totalorder %s139, 1
                %s144 = sphi %s130, %s130
                %s145 = sphi %s125, %s125
              $region39: #{rel_partial_learnable_decoder_layer.4} parent=35 // loop_header_branch
                %142 = sbr.rel (%p140) target = $region43
              $region40: #{rel_partial_learnable_decoder_layer.4} parent=35 // loop_body
                %v146 = vld [vmem:[%s144] sm:$0xff]
                %147 = vst [vmem:[%s145] sm:$0xff] %v146
                %v148 = vld [vmem:[%s144 + $0x10] sm:$0xff]
                %149 = vst [vmem:[%s145 + $0x8] sm:$0xff] %v148
                %v150 = vld [vmem:[%s144 + $0x20] sm:$0xff]
                %151 = vst [vmem:[%s145 + $0x10] sm:$0xff] %v150
                %v152 = vld [vmem:[%s144 + $0x30] sm:$0xff]
                %153 = vst [vmem:[%s145 + $0x18] sm:$0xff] %v152
                %v154 = vld [vmem:[%s144 + $0x40] sm:$0xff]
                %155 = vst [vmem:[%s145 + $0x20] sm:$0xff] %v154
                %v156 = vld [vmem:[%s144 + $0x50] sm:$0xff]
                %157 = vst [vmem:[%s145 + $0x28] sm:$0xff] %v156
                %v158 = vld [vmem:[%s144 + $0x60] sm:$0xff]
                %159 = vst [vmem:[%s145 + $0x30] sm:$0xff] %v158
                %v160 = vld [vmem:[%s144 + $0x70] sm:$0xff]
                %161 = vst [vmem:[%s145 + $0x38] sm:$0xff] %v160
                %v162 = vld [vmem:[%s144 + $0x80] sm:$0xff]
                %163 = vst [vmem:[%s145 + $0x40] sm:$0xff] %v162
                %v164 = vld [vmem:[%s144 + $0x90] sm:$0xff]
                %165 = vst [vmem:[%s145 + $0x48] sm:$0xff] %v164
                %v166 = vld [vmem:[%s144 + $0xa0] sm:$0xff]
                %167 = vst [vmem:[%s145 + $0x50] sm:$0xff] %v166
                %v168 = vld [vmem:[%s144 + $0xb0] sm:$0xff]
                %169 = vst [vmem:[%s145 + $0x58] sm:$0xff] %v168
                %v170 = vld [vmem:[%s144 + $0xc0] sm:$0xff]
                %171 = vst [vmem:[%s145 + $0x60] sm:$0xff] %v170
                %v172 = vld [vmem:[%s144 + $0xd0] sm:$0xff]
                %173 = vst [vmem:[%s145 + $0x68] sm:$0xff] %v172
                %v174 = vld [vmem:[%s144 + $0xe0] sm:$0xff]
                %175 = vst [vmem:[%s145 + $0x70] sm:$0xff] %v174
                %v176 = vld [vmem:[%s144 + $0xf0] sm:$0xff]
                %177 = vst [vmem:[%s145 + $0x78] sm:$0xff] %v176
              $region41: #{rel_partial_learnable_decoder_layer.4} parent=35 // loop_footer
                %s143 = sadd.s32 1, %s139
              $region42: #{rel_partial_learnable_decoder_layer.4} parent=35 // loop_footer_branch
                %138 = sbr.rel target = $region38
              $region43: #{rel_partial_learnable_decoder_layer.4} parent=35 // loop_exit
                _
            $region36: #{rel_partial_learnable_decoder_layer.4} parent=27 // pred_fallthru
              _
          $region28: #{rel_partial_learnable_decoder_layer.4} parent=23 // pred_fallthru
            _
          %222 = vnop
        $region24: #{rel_partial_learnable_decoder_layer.4} parent=19 // pred_fallthru
          _
      $region20: #{rel_partial_learnable_decoder_layer.4} parent=5 // pred_fallthru
        _
      %p223 = scmp.le.s32.totalorder 1, %s8
      %p224 = scmp.lt.s32.totalorder %s8, 3
      %p225 = pnand %p223, %p224
      %p226 = pneg %p225
      // Predicated region
      $region59: #{rel_partial_learnable_decoder_layer.4} parent=5 // pred_check
        _
      $region60: #{rel_partial_learnable_decoder_layer.4} parent=5 // pred_check_branch
        %228 = sbr.rel (%p225) target = $region62
      $region61: #{rel_partial_learnable_decoder_layer.4} parent=5 // pred_region
        %s229 = ssub.s32 %s8, 1
        %s230 = sand.u32 %s35, 1
        %s231 = sand.u32 %s35, 1
        %s232 = smul.addr %s231, 128
        %s233 = scalar_lea.vmem [#allocation2], %s232
        // Predicated region
        $region63: #{rel_partial_learnable_decoder_layer.4} parent=61 // pred_check
          %p234 = pneg %p48
        $region64: #{rel_partial_learnable_decoder_layer.4} parent=61 // pred_check_branch
          %236 = sbr.rel (%p234) target = $region66
        $region65: #{rel_partial_learnable_decoder_layer.4} parent=61 // pred_region
          _
        $region66: #{rel_partial_learnable_decoder_layer.4} parent=61 // pred_fallthru
          _
        %s237 = sand.u32 %s35, 1
        %s238 = sand.u32 %s35, 1
        %s239 = smul.addr %s238, 128
        %s240 = scalar_lea.vmem [#allocation2], %s239
        %p241 = pneg %p48
        %p242 = pneg %p45
        %p243 = pneg %p69
        %p244 = pneg %p66
        %p245 = pneg %p97
        %p246 = pneg %p94
        %s247 = smul.u32 16, %s18
        %p248 = scmp.lt.s32.totalorder %s17, 1
        %s249 = scalar_select %p248, %s17, 1
        %p250 = scmp.lt.s32.totalorder %s247, 15
        %s251 = scalar_select %p250, %s247, 15
        %s252 = smul.addr %s249, 192
        %s253 = sadd.s32 %s251, %s252
        %s254 = smul.addr %s253, 4
        %s255 = scalar_lea.vmem %s2, %s254
        %s256 = smul.u32 16, %s18
        %s257 = smul.u32 16, %s18
        %p258 = scmp.lt.s32.totalorder %s17, 1
        %s259 = scalar_select %p258, %s17, 1
        %p260 = scmp.lt.s32.totalorder %s257, 15
        %s261 = scalar_select %p260, %s257, 15
        %s262 = smul.addr %s259, 192
        %s263 = sadd.s32 %s261, %s262
        %s264 = smul.addr %s263, 4
        %s265 = scalar_lea.vmem %s2, %s264
        %s266 = smul.u32 16, %s18
        %v268 = vld [vmem:[%s233] sm:$0xff]
        %v269 = vld [vmem:[%s233 + $0x8] sm:$0xff]
        %v270 = vld [vmem:[%s233 + $0x10] sm:$0xff]
        %v271 = vld [vmem:[%s233 + $0x18] sm:$0xff]
        %v272 = vld [vmem:[%s233 + $0x20] sm:$0xff]
        %v273 = vld [vmem:[%s233 + $0x28] sm:$0xff]
        %v274 = vld [vmem:[%s233 + $0x30] sm:$0xff]
        %v275 = vld [vmem:[%s233 + $0x38] sm:$0xff]
        %v276 = vld [vmem:[%s233 + $0x40] sm:$0xff]
        %v277 = vld [vmem:[%s233 + $0x48] sm:$0xff]
        %v278 = vld [vmem:[%s233 + $0x50] sm:$0xff]
        %v279 = vld [vmem:[%s233 + $0x58] sm:$0xff]
        %v280 = vld [vmem:[%s233 + $0x60] sm:$0xff]
        %v281 = vld [vmem:[%s233 + $0x68] sm:$0xff]
        %v282 = vld [vmem:[%s233 + $0x70] sm:$0xff]
        %v283 = vld [vmem:[%s233 + $0x78] sm:$0xff]
        %v284 = vpack.c.bf16 %v269, %v268
        %v285 = vpack.c.bf16 %v271, %v270
        %v286 = vpack.c.bf16 %v273, %v272
        %v287 = vpack.c.bf16 %v275, %v274
        %v288 = vpack.c.bf16 %v277, %v276
        %v289 = vpack.c.bf16 %v279, %v278
        %v290 = vpack.c.bf16 %v281, %v280
        %v291 = vpack.c.bf16 %v283, %v282
        %v292 = vld [vmem:[%s1] sm:$0xf]
        %v293 = vld [vmem:[%s1 + $0x4] sm:$0xf]
        %v294 = vld [vmem:[%s1 + $0x8] sm:$0xf]
        %v295 = vld [vmem:[%s1 + $0xc] sm:$0xf]
        %v296 = vld [vmem:[%s1 + $0x10] sm:$0xf]
        %v297 = vld [vmem:[%s1 + $0x14] sm:$0xf]
        %v298 = vld [vmem:[%s1 + $0x18] sm:$0xf]
        %v299 = vld [vmem:[%s1 + $0x1c] sm:$0xf]
        %v300 = vld [vmem:[%s1 + $0x20] sm:$0xf]
        %v301 = vld [vmem:[%s1 + $0x24] sm:$0xf]
        %v302 = vld [vmem:[%s1 + $0x28] sm:$0xf]
        %v303 = vld [vmem:[%s1 + $0x2c] sm:$0xf]
        %v304 = vld [vmem:[%s1 + $0x30] sm:$0xf]
        %v305 = vld [vmem:[%s1 + $0x34] sm:$0xf]
        %v306 = vld [vmem:[%s1 + $0x38] sm:$0xf]
        %v307 = vld [vmem:[%s1 + $0x3c] sm:$0xf]
        %v308 = vld [vmem:[%s1 + $0x40] sm:$0xf]
        %v309 = vld [vmem:[%s1 + $0x44] sm:$0xf]
        %v310 = vld [vmem:[%s1 + $0x48] sm:$0xf]
        %v311 = vld [vmem:[%s1 + $0x4c] sm:$0xf]
        %v312 = vld [vmem:[%s1 + $0x50] sm:$0xf]
        %v313 = vld [vmem:[%s1 + $0x54] sm:$0xf]
        %v314 = vld [vmem:[%s1 + $0x58] sm:$0xf]
        %v315 = vld [vmem:[%s1 + $0x5c] sm:$0xf]
        %v316 = vld [vmem:[%s1 + $0x60] sm:$0xf]
        %v317 = vld [vmem:[%s1 + $0x64] sm:$0xf]
        %v318 = vld [vmem:[%s1 + $0x68] sm:$0xf]
        %v319 = vld [vmem:[%s1 + $0x6c] sm:$0xf]
        %v320 = vld [vmem:[%s1 + $0x70] sm:$0xf]
        %v321 = vld [vmem:[%s1 + $0x74] sm:$0xf]
        %v322 = vld [vmem:[%s1 + $0x78] sm:$0xf]
        %v323 = vld [vmem:[%s1 + $0x7c] sm:$0xf]
        %v324 = vld [vmem:[%s1 + $0x80] sm:$0xf]
        %v325 = vld [vmem:[%s1 + $0x84] sm:$0xf]
        %v326 = vld [vmem:[%s1 + $0x88] sm:$0xf]
        %v327 = vld [vmem:[%s1 + $0x8c] sm:$0xf]
        %v328 = vld [vmem:[%s1 + $0x90] sm:$0xf]
        %v329 = vld [vmem:[%s1 + $0x94] sm:$0xf]
        %v330 = vld [vmem:[%s1 + $0x98] sm:$0xf]
        %v331 = vld [vmem:[%s1 + $0x9c] sm:$0xf]
        %v332 = vld [vmem:[%s1 + $0xa0] sm:$0xf]
        %v333 = vld [vmem:[%s1 + $0xa4] sm:$0xf]
        %v334 = vld [vmem:[%s1 + $0xa8] sm:$0xf]
        %v335 = vld [vmem:[%s1 + $0xac] sm:$0xf]
        %v336 = vld [vmem:[%s1 + $0xb0] sm:$0xf]
        %v337 = vld [vmem:[%s1 + $0xb4] sm:$0xf]
        %v338 = vld [vmem:[%s1 + $0xb8] sm:$0xf]
        %v339 = vld [vmem:[%s1 + $0xbc] sm:$0xf]
        %v388 = vunpack.c.l.b16 %v292
        %v389 = vunpack.c.l.b16 %v293
        %v390 = vunpack.c.l.b16 %v294
        %v391 = vunpack.c.l.b16 %v295
        %v392 = vunpack.c.l.b16 %v296
        %v393 = vunpack.c.l.b16 %v297
        %v394 = vunpack.c.l.b16 %v298
        %v395 = vunpack.c.l.b16 %v299
        %v396 = vunpack.c.l.b16 %v300
        %v397 = vunpack.c.l.b16 %v301
        %v398 = vunpack.c.l.b16 %v302
        %v399 = vunpack.c.l.b16 %v303
        %v400 = vunpack.c.l.b16 %v304
        %v401 = vunpack.c.l.b16 %v305
        %v402 = vunpack.c.l.b16 %v306
        %v403 = vunpack.c.l.b16 %v307
        %v404 = vunpack.c.l.b16 %v308
        %v405 = vunpack.c.l.b16 %v309
        %v406 = vunpack.c.l.b16 %v310
        %v407 = vunpack.c.l.b16 %v311
        %v408 = vunpack.c.l.b16 %v312
        %v409 = vunpack.c.l.b16 %v313
        %v410 = vunpack.c.l.b16 %v314
        %v411 = vunpack.c.l.b16 %v315
        %v412 = vunpack.c.l.b16 %v316
        %v413 = vunpack.c.l.b16 %v317
        %v414 = vunpack.c.l.b16 %v318
        %v415 = vunpack.c.l.b16 %v319
        %v416 = vunpack.c.l.b16 %v320
        %v417 = vunpack.c.l.b16 %v321
        %v418 = vunpack.c.l.b16 %v322
        %v419 = vunpack.c.l.b16 %v323
        %v420 = vunpack.c.l.b16 %v324
        %v421 = vunpack.c.l.b16 %v325
        %v422 = vunpack.c.l.b16 %v326
        %v423 = vunpack.c.l.b16 %v327
        %v424 = vunpack.c.l.b16 %v328
        %v425 = vunpack.c.l.b16 %v329
        %v426 = vunpack.c.l.b16 %v330
        %v427 = vunpack.c.l.b16 %v331
        %v428 = vunpack.c.l.b16 %v332
        %v429 = vunpack.c.l.b16 %v333
        %v430 = vunpack.c.l.b16 %v334
        %v431 = vunpack.c.l.b16 %v335
        %v432 = vunpack.c.l.b16 %v336
        %v433 = vunpack.c.l.b16 %v337
        %v434 = vunpack.c.l.b16 %v338
        %v435 = vunpack.c.l.b16 %v339
        %v436 = vpack.c.b16 %v389, %v388
        %v437 = vpack.c.b16 %v391, %v390
        %v438 = vpack.c.b16 %v393, %v392
        %v439 = vpack.c.b16 %v395, %v394
        %v440 = vpack.c.b16 %v397, %v396
        %v441 = vpack.c.b16 %v399, %v398
        %v442 = vpack.c.b16 %v401, %v400
        %v443 = vpack.c.b16 %v403, %v402
        %v444 = vpack.c.b16 %v405, %v404
        %v445 = vpack.c.b16 %v407, %v406
        %v446 = vpack.c.b16 %v409, %v408
        %v447 = vpack.c.b16 %v411, %v410
        %v448 = vpack.c.b16 %v413, %v412
        %v449 = vpack.c.b16 %v415, %v414
        %v450 = vpack.c.b16 %v417, %v416
        %v451 = vpack.c.b16 %v419, %v418
        %v452 = vpack.c.b16 %v421, %v420
        %v453 = vpack.c.b16 %v423, %v422
        %v454 = vpack.c.b16 %v425, %v424
        %v455 = vpack.c.b16 %v427, %v426
        %v456 = vpack.c.b16 %v429, %v428
        %v457 = vpack.c.b16 %v431, %v430
        %v458 = vpack.c.b16 %v433, %v432
        %v459 = vpack.c.b16 %v435, %v434
        %484 = vmatprep.subr.bf16.mxu0 0
        %485 = vmatpush1.bf16.xpose.msra.mxu0 %v436
        %486 = vmatprep.subr.bf16.mxu0 0
        %487 = vmatpush1.bf16.xpose.msra.mxu0 %v437
        %488 = vmatprep.subr.bf16.mxu0 0
        %489 = vmatpush1.bf16.xpose.msra.mxu0 %v438
        %490 = vmatprep.subr.bf16.mxu0 0
        %491 = vmatpush1.bf16.xpose.msra.mxu0 %v439
        %492 = vmatprep.subr.bf16.mxu0 0
        %493 = vmatpush1.bf16.xpose.msra.mxu0 %v440
        %494 = vmatprep.subr.bf16.mxu0 0
        %495 = vmatpush1.bf16.xpose.msra.mxu0 %v441
        %496 = vmatprep.subr.bf16.mxu0 0
        %497 = vmatpush1.bf16.xpose.msra.mxu0 %v442
        %498 = vmatprep.subr.bf16.mxu0 0
        %499 = vmatpush1.bf16.xpose.msra.mxu0 %v443
        %500 = vmatprep.subr.bf16.mxu0 0
        %501 = vmatpush1.bf16.xpose.msra.mxu0 %v444
        %502 = vmatprep.subr.bf16.mxu0 0
        %503 = vmatpush1.bf16.xpose.msra.mxu0 %v445
        %504 = vmatprep.subr.bf16.mxu0 0
        %505 = vmatpush1.bf16.xpose.msra.mxu0 %v446
        %506 = vmatprep.subr.bf16.mxu0 0
        %507 = vmatpush1.bf16.xpose.msra.mxu0 %v447
        %508 = vmatprep.subr.bf16.mxu0 0
        %509 = vmatpush1.bf16.xpose.msra.mxu0 %v448
        %510 = vmatprep.subr.bf16.mxu0 0
        %511 = vmatpush1.bf16.xpose.msra.mxu0 %v449
        %512 = vmatprep.subr.bf16.mxu0 0
        %513 = vmatpush1.bf16.xpose.msra.mxu0 %v450
        %514 = vmatprep.subr.bf16.mxu0 0
        %515 = vmatpush1.bf16.xpose.msra.mxu0 %v451
        %516 = vmatprep.mubr.bf16.mxu0 0
        %517 = vmatmul.mubr.bf16.gmra.mrb[0].mxu0 %v284
        %v518 = vpop.f32.mrb[0].mxu0
        %v519 = vadd.f32 0.0, %v518
        %v520 = vpop.f32.mrb[0].mxu0
        %v521 = vadd.f32 0.0, %v520
        %v522 = vpop.f32.mrb[0].mxu0
        %v523 = vadd.f32 0.0, %v522
        %v524 = vpop.f32.mrb[0].mxu0
        %v525 = vadd.f32 0.0, %v524
        %526 = vmatprep.mubr.bf16.mxu0 0
        %527 = vmatmul.mubr.bf16.gmra.mrb[0].mxu0 %v285
        %v528 = vpop.f32.mrb[0].mxu0
        %v529 = vadd.f32 0.0, %v528
        %v530 = vpop.f32.mrb[0].mxu0
        %v531 = vadd.f32 0.0, %v530
        %v532 = vpop.f32.mrb[0].mxu0
        %v533 = vadd.f32 0.0, %v532
        %v534 = vpop.f32.mrb[0].mxu0
        %v535 = vadd.f32 0.0, %v534
        %536 = vmatprep.mubr.bf16.mxu0 0
        %537 = vmatmul.mubr.bf16.gmra.mrb[0].mxu0 %v286
        %v538 = vpop.f32.mrb[0].mxu0
        %v539 = vadd.f32 0.0, %v538
        %v540 = vpop.f32.mrb[0].mxu0
        %v541 = vadd.f32 0.0, %v540
        %v542 = vpop.f32.mrb[0].mxu0
        %v543 = vadd.f32 0.0, %v542
        %v544 = vpop.f32.mrb[0].mxu0
        %v545 = vadd.f32 0.0, %v544
        %546 = vmatprep.mubr.bf16.mxu0 0
        %547 = vmatmul.mubr.bf16.gmra.mrb[0].mxu0 %v287
        %v548 = vpop.f32.mrb[0].mxu0
        %v549 = vadd.f32 0.0, %v548
        %v550 = vpop.f32.mrb[0].mxu0
        %v551 = vadd.f32 0.0, %v550
        %v552 = vpop.f32.mrb[0].mxu0
        %v553 = vadd.f32 0.0, %v552
        %v554 = vpop.f32.mrb[0].mxu0
        %v555 = vadd.f32 0.0, %v554
        %556 = vmatprep.mubr.bf16.mxu0 0
        %557 = vmatmul.mubr.bf16.gmra.mrb[0].mxu0 %v288
        %v558 = vpop.f32.mrb[0].mxu0
        %v559 = vadd.f32 0.0, %v558
        %v560 = vpop.f32.mrb[0].mxu0
        %v561 = vadd.f32 0.0, %v560
        %v562 = vpop.f32.mrb[0].mxu0
        %v563 = vadd.f32 0.0, %v562
        %v564 = vpop.f32.mrb[0].mxu0
        %v565 = vadd.f32 0.0, %v564
        %566 = vmatprep.mubr.bf16.mxu0 0
        %567 = vmatmul.mubr.bf16.gmra.mrb[0].mxu0 %v289
        %v568 = vpop.f32.mrb[0].mxu0
        %v569 = vadd.f32 0.0, %v568
        %v570 = vpop.f32.mrb[0].mxu0
        %v571 = vadd.f32 0.0, %v570
        %v572 = vpop.f32.mrb[0].mxu0
        %v573 = vadd.f32 0.0, %v572
        %v574 = vpop.f32.mrb[0].mxu0
        %v575 = vadd.f32 0.0, %v574
        %576 = vmatprep.mubr.bf16.mxu0 0
        %577 = vmatmul.mubr.bf16.gmra.mrb[0].mxu0 %v290
        %v578 = vpop.f32.mrb[0].mxu0
        %v579 = vadd.f32 0.0, %v578
        %v580 = vpop.f32.mrb[0].mxu0
        %v581 = vadd.f32 0.0, %v580
        %v582 = vpop.f32.mrb[0].mxu0
        %v583 = vadd.f32 0.0, %v582
        %v584 = vpop.f32.mrb[0].mxu0
        %v585 = vadd.f32 0.0, %v584
        %586 = vmatprep.mubr.bf16.mxu0 0
        %587 = vmatmul.mubr.bf16.gmra.mrb[0].mxu0 %v291
        %v588 = vpop.f32.mrb[0].mxu0
        %v589 = vadd.f32 0.0, %v588
        %v590 = vpop.f32.mrb[0].mxu0
        %v591 = vadd.f32 0.0, %v590
        %v592 = vpop.f32.mrb[0].mxu0
        %v593 = vadd.f32 0.0, %v592
        %v594 = vpop.f32.mrb[0].mxu0
        %v595 = vadd.f32 0.0, %v594
        %596 = vdwg.mxu0
        %597 = vmatprep.subr.bf16.mxu0 0
        %598 = vmatpush1.bf16.xpose.msra.mxu0 %v452
        %599 = vmatprep.subr.bf16.mxu0 0
        %600 = vmatpush1.bf16.xpose.msra.mxu0 %v453
        %601 = vmatprep.subr.bf16.mxu0 0
        %602 = vmatpush1.bf16.xpose.msra.mxu0 %v454
        %603 = vmatprep.subr.bf16.mxu0 0
        %604 = vmatpush1.bf16.xpose.msra.mxu0 %v455
        %605 = vmatprep.subr.bf16.mxu0 0
        %606 = vmatpush1.bf16.xpose.msra.mxu0 %v456
        %607 = vmatprep.subr.bf16.mxu0 0
        %608 = vmatpush1.bf16.xpose.msra.mxu0 %v457
        %609 = vmatprep.subr.bf16.mxu0 0
        %610 = vmatpush1.bf16.xpose.msra.mxu0 %v458
        %611 = vmatprep.subr.bf16.mxu0 0
        %612 = vmatpush1.bf16.xpose.msra.mxu0 %v459
        %613 = vmatprep.subr.bf16.mxu0 0
        %614 = vmatpush1.bf16.xpose.msra.mxu0 0
        %615 = vmatprep.subr.bf16.mxu0 0
        %616 = vmatpush1.bf16.xpose.msra.mxu0 0
        %617 = vmatprep.subr.bf16.mxu0 0
        %618 = vmatpush1.bf16.xpose.msra.mxu0 0
        %619 = vmatprep.subr.bf16.mxu0 0
        %620 = vmatpush1.bf16.xpose.msra.mxu0 0
        %621 = vmatprep.subr.bf16.mxu0 0
        %622 = vmatpush1.bf16.xpose.msra.mxu0 0
        %623 = vmatprep.subr.bf16.mxu0 0
        %624 = vmatpush1.bf16.xpose.msra.mxu0 0
        %625 = vmatprep.subr.bf16.mxu0 0
        %626 = vmatpush1.bf16.xpose.msra.mxu0 0
        %627 = vmatprep.subr.bf16.mxu0 0
        %628 = vmatpush1.bf16.xpose.msra.mxu0 0
        %629 = vmatprep.mubr.bf16.mxu0 0
        %630 = vmatmul.mubr.bf16.gmra.mrb[0].mxu0 %v284
        %v631 = vpop.f32.mrb[0].mxu0
        %v632 = vadd.f32 0.0, %v631
        %v633 = vpop.f32.mrb[0].mxu0
        %v634 = vpop.f32.mrb[0].mxu0
        %v635 = vadd.f32 0.0, %v634
        %v636 = vpop.f32.mrb[0].mxu0
        %637 = vmatprep.mubr.bf16.mxu0 0
        %638 = vmatmul.mubr.bf16.gmra.mrb[0].mxu0 %v285
        %v639 = vpop.f32.mrb[0].mxu0
        %v640 = vadd.f32 0.0, %v639
        %v641 = vpop.f32.mrb[0].mxu0
        %v642 = vpop.f32.mrb[0].mxu0
        %v643 = vadd.f32 0.0, %v642
        %v644 = vpop.f32.mrb[0].mxu0
        %645 = vmatprep.mubr.bf16.mxu0 0
        %646 = vmatmul.mubr.bf16.gmra.mrb[0].mxu0 %v286
        %v647 = vpop.f32.mrb[0].mxu0
        %v648 = vadd.f32 0.0, %v647
        %v649 = vpop.f32.mrb[0].mxu0
        %v650 = vpop.f32.mrb[0].mxu0
        %v651 = vadd.f32 0.0, %v650
        %v652 = vpop.f32.mrb[0].mxu0
        %653 = vmatprep.mubr.bf16.mxu0 0
        %654 = vmatmul.mubr.bf16.gmra.mrb[0].mxu0 %v287
        %v655 = vpop.f32.mrb[0].mxu0
        %v656 = vadd.f32 0.0, %v655
        %v657 = vpop.f32.mrb[0].mxu0
        %v658 = vpop.f32.mrb[0].mxu0
        %v659 = vadd.f32 0.0, %v658
        %v660 = vpop.f32.mrb[0].mxu0
        %661 = vmatprep.mubr.bf16.mxu0 0
        %662 = vmatmul.mubr.bf16.gmra.mrb[0].mxu0 %v288
        %v663 = vpop.f32.mrb[0].mxu0
        %v664 = vadd.f32 0.0, %v663
        %v665 = vpop.f32.mrb[0].mxu0
        %v666 = vpop.f32.mrb[0].mxu0
        %v667 = vadd.f32 0.0, %v666
        %v668 = vpop.f32.mrb[0].mxu0
        %669 = vmatprep.mubr.bf16.mxu0 0
        %670 = vmatmul.mubr.bf16.gmra.mrb[0].mxu0 %v289
        %v671 = vpop.f32.mrb[0].mxu0
        %v672 = vadd.f32 0.0, %v671
        %v673 = vpop.f32.mrb[0].mxu0
        %v674 = vpop.f32.mrb[0].mxu0
        %v675 = vadd.f32 0.0, %v674
        %v676 = vpop.f32.mrb[0].mxu0
        %677 = vmatprep.mubr.bf16.mxu0 0
        %678 = vmatmul.mubr.bf16.gmra.mrb[0].mxu0 %v290
        %v679 = vpop.f32.mrb[0].mxu0
        %v680 = vadd.f32 0.0, %v679
        %v681 = vpop.f32.mrb[0].mxu0
        %v682 = vpop.f32.mrb[0].mxu0
        %v683 = vadd.f32 0.0, %v682
        %v684 = vpop.f32.mrb[0].mxu0
        %685 = vmatprep.mubr.bf16.mxu0 0
        %686 = vmatmul.mubr.bf16.gmra.mrb[0].mxu0 %v291
        %v687 = vpop.f32.mrb[0].mxu0
        %v688 = vadd.f32 0.0, %v687
        %v689 = vpop.f32.mrb[0].mxu0
        %v690 = vpop.f32.mrb[0].mxu0
        %v691 = vadd.f32 0.0, %v690
        %v692 = vpop.f32.mrb[0].mxu0
        %693 = vdwg.mxu0
        %v694 = vpack.c.bf16 %v523, %v519
        %v695 = vpack.c.bf16 %v525, %v521
        %v696 = vpack.c.bf16 %v635, %v632
        %v697 = vpack.c.bf16 %v533, %v529
        %v698 = vpack.c.bf16 %v535, %v531
        %v699 = vpack.c.bf16 %v643, %v640
        %v700 = vpack.c.bf16 %v543, %v539
        %v701 = vpack.c.bf16 %v545, %v541
        %v702 = vpack.c.bf16 %v651, %v648
        %v703 = vpack.c.bf16 %v553, %v549
        %v704 = vpack.c.bf16 %v555, %v551
        %v705 = vpack.c.bf16 %v659, %v656
        %v706 = vpack.c.bf16 %v563, %v559
        %v707 = vpack.c.bf16 %v565, %v561
        %v708 = vpack.c.bf16 %v667, %v664
        %v709 = vpack.c.bf16 %v573, %v569
        %v710 = vpack.c.bf16 %v575, %v571
        %v711 = vpack.c.bf16 %v675, %v672
        %v712 = vpack.c.bf16 %v583, %v579
        %v713 = vpack.c.bf16 %v585, %v581
        %v714 = vpack.c.bf16 %v683, %v680
        %v715 = vpack.c.bf16 %v593, %v589
        %v716 = vpack.c.bf16 %v595, %v591
        %v717 = vpack.c.bf16 %v691, %v688
        %v726 = vunpack.c.l.b16 %v694
        %v727 = vunpack.c.h.b16 %v694
        %v728 = vunpack.c.l.b16 %v697
        %v729 = vunpack.c.h.b16 %v697
        %v730 = vunpack.c.l.b16 %v700
        %v731 = vunpack.c.h.b16 %v700
        %v732 = vunpack.c.l.b16 %v703
        %v733 = vunpack.c.h.b16 %v703
        %v734 = vunpack.c.l.b16 %v706
        %v735 = vunpack.c.h.b16 %v706
        %v736 = vunpack.c.l.b16 %v709
        %v737 = vunpack.c.h.b16 %v709
        %v738 = vunpack.c.l.b16 %v712
        %v739 = vunpack.c.h.b16 %v712
        %v740 = vunpack.c.l.b16 %v715
        %v741 = vunpack.c.h.b16 %v715
        %v742 = vpack.c.b16 %v726, %v726
        %v743 = vpack.c.b16 %v727, %v727
        %v744 = vpack.c.b16 %v728, %v728
        %v745 = vpack.c.b16 %v729, %v729
        %v746 = vpack.c.b16 %v730, %v730
        %v747 = vpack.c.b16 %v731, %v731
        %v748 = vpack.c.b16 %v732, %v732
        %v749 = vpack.c.b16 %v733, %v733
        %v750 = vpack.c.b16 %v734, %v734
        %v751 = vpack.c.b16 %v735, %v735
        %v752 = vpack.c.b16 %v736, %v736
        %v753 = vpack.c.b16 %v737, %v737
        %v754 = vpack.c.b16 %v738, %v738
        %v755 = vpack.c.b16 %v739, %v739
        %v756 = vpack.c.b16 %v740, %v740
        %v757 = vpack.c.b16 %v741, %v741
        %vm774 = vcmask 257024
        %775 = vst.msk [vmem:[%s265] sm:$0xf] %vm774, %v742
        %776 = vst.msk [vmem:[%s265 + $0x4] sm:$0xf] %vm774, %v743
        %777 = vst.msk [vmem:[%s265 + $0x8] sm:$0xf] %vm774, %v744
        %778 = vst.msk [vmem:[%s265 + $0xc] sm:$0xf] %vm774, %v745
        %779 = vst.msk [vmem:[%s265 + $0x10] sm:$0xf] %vm774, %v746
        %780 = vst.msk [vmem:[%s265 + $0x14] sm:$0xf] %vm774, %v747
        %781 = vst.msk [vmem:[%s265 + $0x18] sm:$0xf] %vm774, %v748
        %782 = vst.msk [vmem:[%s265 + $0x1c] sm:$0xf] %vm774, %v749
        %783 = vst.msk [vmem:[%s265 + $0x20] sm:$0xf] %vm774, %v750
        %784 = vst.msk [vmem:[%s265 + $0x24] sm:$0xf] %vm774, %v751
        %785 = vst.msk [vmem:[%s265 + $0x28] sm:$0xf] %vm774, %v752
        %786 = vst.msk [vmem:[%s265 + $0x2c] sm:$0xf] %vm774, %v753
        %787 = vst.msk [vmem:[%s265 + $0x30] sm:$0xf] %vm774, %v754
        %788 = vst.msk [vmem:[%s265 + $0x34] sm:$0xf] %vm774, %v755
        %789 = vst.msk [vmem:[%s265 + $0x38] sm:$0xf] %vm774, %v756
        %790 = vst.msk [vmem:[%s265 + $0x3c] sm:$0xf] %vm774, %v757
        %791 = vrot.lane.b32.xlu0 %v742, 96
        %v792 = vpop.permute.xlu0 %791
        %793 = vrot.lane.b32.xlu0 %v743, 96
        %v794 = vpop.permute.xlu0 %793
        %795 = vrot.lane.b32.xlu0 %v744, 96
        %v796 = vpop.permute.xlu0 %795
        %797 = vrot.lane.b32.xlu0 %v745, 96
        %v798 = vpop.permute.xlu0 %797
        %799 = vrot.lane.b32.xlu0 %v746, 96
        %v800 = vpop.permute.xlu0 %799
        %801 = vrot.lane.b32.xlu0 %v747, 96
        %v802 = vpop.permute.xlu0 %801
        %803 = vrot.lane.b32.xlu0 %v748, 96
        %v804 = vpop.permute.xlu0 %803
        %805 = vrot.lane.b32.xlu0 %v749, 96
        %v806 = vpop.permute.xlu0 %805
        %807 = vrot.lane.b32.xlu0 %v750, 96
        %v808 = vpop.permute.xlu0 %807
        %809 = vrot.lane.b32.xlu0 %v751, 96
        %v810 = vpop.permute.xlu0 %809
        %811 = vrot.lane.b32.xlu0 %v752, 96
        %v812 = vpop.permute.xlu0 %811
        %813 = vrot.lane.b32.xlu0 %v753, 96
        %v814 = vpop.permute.xlu0 %813
        %815 = vrot.lane.b32.xlu0 %v754, 96
        %v816 = vpop.permute.xlu0 %815
        %817 = vrot.lane.b32.xlu0 %v755, 96
        %v818 = vpop.permute.xlu0 %817
        %819 = vrot.lane.b32.xlu0 %v756, 96
        %v820 = vpop.permute.xlu0 %819
        %821 = vrot.lane.b32.xlu0 %v757, 96
        %v822 = vpop.permute.xlu0 %821
        %s839 = scalar_lea.vmem %s265, 192
        %840 = vst.msk [vmem:[%s839] sm:$0xf] %vm774, %v792
        %841 = vst.msk [vmem:[%s839 + $0x4] sm:$0xf] %vm774, %v794
        %842 = vst.msk [vmem:[%s839 + $0x8] sm:$0xf] %vm774, %v796
        %843 = vst.msk [vmem:[%s839 + $0xc] sm:$0xf] %vm774, %v798
        %844 = vst.msk [vmem:[%s839 + $0x10] sm:$0xf] %vm774, %v800
        %845 = vst.msk [vmem:[%s839 + $0x14] sm:$0xf] %vm774, %v802
        %846 = vst.msk [vmem:[%s839 + $0x18] sm:$0xf] %vm774, %v804
        %847 = vst.msk [vmem:[%s839 + $0x1c] sm:$0xf] %vm774, %v806
        %848 = vst.msk [vmem:[%s839 + $0x20] sm:$0xf] %vm774, %v808
        %849 = vst.msk [vmem:[%s839 + $0x24] sm:$0xf] %vm774, %v810
        %850 = vst.msk [vmem:[%s839 + $0x28] sm:$0xf] %vm774, %v812
        %851 = vst.msk [vmem:[%s839 + $0x2c] sm:$0xf] %vm774, %v814
        %852 = vst.msk [vmem:[%s839 + $0x30] sm:$0xf] %vm774, %v816
        %853 = vst.msk [vmem:[%s839 + $0x34] sm:$0xf] %vm774, %v818
        %854 = vst.msk [vmem:[%s839 + $0x38] sm:$0xf] %vm774, %v820
        %855 = vst.msk [vmem:[%s839 + $0x3c] sm:$0xf] %vm774, %v822
        %856 = vrot.lane.b32.xlu0 %v742, 64
        %v857 = vpop.permute.xlu0 %856
        %858 = vrot.lane.b32.xlu0 %v743, 64
        %v859 = vpop.permute.xlu0 %858
        %860 = vrot.lane.b32.xlu0 %v744, 64
        %v861 = vpop.permute.xlu0 %860
        %862 = vrot.lane.b32.xlu0 %v745, 64
        %v863 = vpop.permute.xlu0 %862
        %864 = vrot.lane.b32.xlu0 %v746, 64
        %v865 = vpop.permute.xlu0 %864
        %866 = vrot.lane.b32.xlu0 %v747, 64
        %v867 = vpop.permute.xlu0 %866
        %868 = vrot.lane.b32.xlu0 %v748, 64
        %v869 = vpop.permute.xlu0 %868
        %870 = vrot.lane.b32.xlu0 %v749, 64
        %v871 = vpop.permute.xlu0 %870
        %872 = vrot.lane.b32.xlu0 %v750, 64
        %v873 = vpop.permute.xlu0 %872
        %874 = vrot.lane.b32.xlu0 %v751, 64
        %v875 = vpop.permute.xlu0 %874
        %876 = vrot.lane.b32.xlu0 %v752, 64
        %v877 = vpop.permute.xlu0 %876
        %878 = vrot.lane.b32.xlu0 %v753, 64
        %v879 = vpop.permute.xlu0 %878
        %880 = vrot.lane.b32.xlu0 %v754, 64
        %v881 = vpop.permute.xlu0 %880
        %882 = vrot.lane.b32.xlu0 %v755, 64
        %v883 = vpop.permute.xlu0 %882
        %884 = vrot.lane.b32.xlu0 %v756, 64
        %v885 = vpop.permute.xlu0 %884
        %886 = vrot.lane.b32.xlu0 %v757, 64
        %v887 = vpop.permute.xlu0 %886
        %s904 = scalar_lea.vmem %s265, 384
        %905 = vst.msk [vmem:[%s904] sm:$0xf] %vm774, %v857
        %906 = vst.msk [vmem:[%s904 + $0x4] sm:$0xf] %vm774, %v859
        %907 = vst.msk [vmem:[%s904 + $0x8] sm:$0xf] %vm774, %v861
        %908 = vst.msk [vmem:[%s904 + $0xc] sm:$0xf] %vm774, %v863
        %909 = vst.msk [vmem:[%s904 + $0x10] sm:$0xf] %vm774, %v865
        %910 = vst.msk [vmem:[%s904 + $0x14] sm:$0xf] %vm774, %v867
        %911 = vst.msk [vmem:[%s904 + $0x18] sm:$0xf] %vm774, %v869
        %912 = vst.msk [vmem:[%s904 + $0x1c] sm:$0xf] %vm774, %v871
        %913 = vst.msk [vmem:[%s904 + $0x20] sm:$0xf] %vm774, %v873
        %914 = vst.msk [vmem:[%s904 + $0x24] sm:$0xf] %vm774, %v875
        %915 = vst.msk [vmem:[%s904 + $0x28] sm:$0xf] %vm774, %v877
        %916 = vst.msk [vmem:[%s904 + $0x2c] sm:$0xf] %vm774, %v879
        %917 = vst.msk [vmem:[%s904 + $0x30] sm:$0xf] %vm774, %v881
        %918 = vst.msk [vmem:[%s904 + $0x34] sm:$0xf] %vm774, %v883
        %919 = vst.msk [vmem:[%s904 + $0x38] sm:$0xf] %vm774, %v885
        %920 = vst.msk [vmem:[%s904 + $0x3c] sm:$0xf] %vm774, %v887
        %921 = vrot.lane.b32.xlu0 %v742, 32
        %v922 = vpop.permute.xlu0 %921
        %923 = vrot.lane.b32.xlu0 %v743, 32
        %v924 = vpop.permute.xlu0 %923
        %925 = vrot.lane.b32.xlu0 %v744, 32
        %v926 = vpop.permute.xlu0 %925
        %927 = vrot.lane.b32.xlu0 %v745, 32
        %v928 = vpop.permute.xlu0 %927
        %929 = vrot.lane.b32.xlu0 %v746, 32
        %v930 = vpop.permute.xlu0 %929
        %931 = vrot.lane.b32.xlu0 %v747, 32
        %v932 = vpop.permute.xlu0 %931
        %933 = vrot.lane.b32.xlu0 %v748, 32
        %v934 = vpop.permute.xlu0 %933
        %935 = vrot.lane.b32.xlu0 %v749, 32
        %v936 = vpop.permute.xlu0 %935
        %937 = vrot.lane.b32.xlu0 %v750, 32
        %v938 = vpop.permute.xlu0 %937
        %939 = vrot.lane.b32.xlu0 %v751, 32
        %v940 = vpop.permute.xlu0 %939
        %941 = vrot.lane.b32.xlu0 %v752, 32
        %v942 = vpop.permute.xlu0 %941
        %943 = vrot.lane.b32.xlu0 %v753, 32
        %v944 = vpop.permute.xlu0 %943
        %945 = vrot.lane.b32.xlu0 %v754, 32
        %v946 = vpop.permute.xlu0 %945
        %947 = vrot.lane.b32.xlu0 %v755, 32
        %v948 = vpop.permute.xlu0 %947
        %949 = vrot.lane.b32.xlu0 %v756, 32
        %v950 = vpop.permute.xlu0 %949
        %951 = vrot.lane.b32.xlu0 %v757, 32
        %v952 = vpop.permute.xlu0 %951
        %s969 = scalar_lea.vmem %s265, 576
        %970 = vst.msk [vmem:[%s969] sm:$0xf] %vm774, %v922
        %971 = vst.msk [vmem:[%s969 + $0x4] sm:$0xf] %vm774, %v924
        %972 = vst.msk [vmem:[%s969 + $0x8] sm:$0xf] %vm774, %v926
        %973 = vst.msk [vmem:[%s969 + $0xc] sm:$0xf] %vm774, %v928
        %974 = vst.msk [vmem:[%s969 + $0x10] sm:$0xf] %vm774, %v930
        %975 = vst.msk [vmem:[%s969 + $0x14] sm:$0xf] %vm774, %v932
        %976 = vst.msk [vmem:[%s969 + $0x18] sm:$0xf] %vm774, %v934
        %977 = vst.msk [vmem:[%s969 + $0x1c] sm:$0xf] %vm774, %v936
        %978 = vst.msk [vmem:[%s969 + $0x20] sm:$0xf] %vm774, %v938
        %979 = vst.msk [vmem:[%s969 + $0x24] sm:$0xf] %vm774, %v940
        %980 = vst.msk [vmem:[%s969 + $0x28] sm:$0xf] %vm774, %v942
        %981 = vst.msk [vmem:[%s969 + $0x2c] sm:$0xf] %vm774, %v944
        %982 = vst.msk [vmem:[%s969 + $0x30] sm:$0xf] %vm774, %v946
        %983 = vst.msk [vmem:[%s969 + $0x34] sm:$0xf] %vm774, %v948
        %984 = vst.msk [vmem:[%s969 + $0x38] sm:$0xf] %vm774, %v950
        %985 = vst.msk [vmem:[%s969 + $0x3c] sm:$0xf] %vm774, %v952
        %v994 = vunpack.c.l.b16 %v695
        %v995 = vunpack.c.h.b16 %v695
        %v996 = vunpack.c.l.b16 %v698
        %v997 = vunpack.c.h.b16 %v698
        %v998 = vunpack.c.l.b16 %v701
        %v999 = vunpack.c.h.b16 %v701
        %v1000 = vunpack.c.l.b16 %v704
        %v1001 = vunpack.c.h.b16 %v704
        %v1002 = vunpack.c.l.b16 %v707
        %v1003 = vunpack.c.h.b16 %v707
        %v1004 = vunpack.c.l.b16 %v710
        %v1005 = vunpack.c.h.b16 %v710
        %v1006 = vunpack.c.l.b16 %v713
        %v1007 = vunpack.c.h.b16 %v713
        %v1008 = vunpack.c.l.b16 %v716
        %v1009 = vunpack.c.h.b16 %v716
        %v1010 = vpack.c.b16 %v994, %v994
        %v1011 = vpack.c.b16 %v995, %v995
        %v1012 = vpack.c.b16 %v996, %v996
        %v1013 = vpack.c.b16 %v997, %v997
        %v1014 = vpack.c.b16 %v998, %v998
        %v1015 = vpack.c.b16 %v999, %v999
        %v1016 = vpack.c.b16 %v1000, %v1000
        %v1017 = vpack.c.b16 %v1001, %v1001
        %v1018 = vpack.c.b16 %v1002, %v1002
        %v1019 = vpack.c.b16 %v1003, %v1003
        %v1020 = vpack.c.b16 %v1004, %v1004
        %v1021 = vpack.c.b16 %v1005, %v1005
        %v1022 = vpack.c.b16 %v1006, %v1006
        %v1023 = vpack.c.b16 %v1007, %v1007
        %v1024 = vpack.c.b16 %v1008, %v1008
        %v1025 = vpack.c.b16 %v1009, %v1009
        %s1042 = scalar_lea.vmem %s265, 64
        %1043 = vst.msk [vmem:[%s1042] sm:$0xf] %vm774, %v1010
        %1044 = vst.msk [vmem:[%s1042 + $0x4] sm:$0xf] %vm774, %v1011
        %1045 = vst.msk [vmem:[%s1042 + $0x8] sm:$0xf] %vm774, %v1012
        %1046 = vst.msk [vmem:[%s1042 + $0xc] sm:$0xf] %vm774, %v1013
        %1047 = vst.msk [vmem:[%s1042 + $0x10] sm:$0xf] %vm774, %v1014
        %1048 = vst.msk [vmem:[%s1042 + $0x14] sm:$0xf] %vm774, %v1015
        %1049 = vst.msk [vmem:[%s1042 + $0x18] sm:$0xf] %vm774, %v1016
        %1050 = vst.msk [vmem:[%s1042 + $0x1c] sm:$0xf] %vm774, %v1017
        %1051 = vst.msk [vmem:[%s1042 + $0x20] sm:$0xf] %vm774, %v1018
        %1052 = vst.msk [vmem:[%s1042 + $0x24] sm:$0xf] %vm774, %v1019
        %1053 = vst.msk [vmem:[%s1042 + $0x28] sm:$0xf] %vm774, %v1020
        %1054 = vst.msk [vmem:[%s1042 + $0x2c] sm:$0xf] %vm774, %v1021
        %1055 = vst.msk [vmem:[%s1042 + $0x30] sm:$0xf] %vm774, %v1022
        %1056 = vst.msk [vmem:[%s1042 + $0x34] sm:$0xf] %vm774, %v1023
        %1057 = vst.msk [vmem:[%s1042 + $0x38] sm:$0xf] %vm774, %v1024
        %1058 = vst.msk [vmem:[%s1042 + $0x3c] sm:$0xf] %vm774, %v1025
        %1059 = vrot.lane.b32.xlu0 %v1010, 96
        %v1060 = vpop.permute.xlu0 %1059
        %1061 = vrot.lane.b32.xlu0 %v1011, 96
        %v1062 = vpop.permute.xlu0 %1061
        %1063 = vrot.lane.b32.xlu0 %v1012, 96
        %v1064 = vpop.permute.xlu0 %1063
        %1065 = vrot.lane.b32.xlu0 %v1013, 96
        %v1066 = vpop.permute.xlu0 %1065
        %1067 = vrot.lane.b32.xlu0 %v1014, 96
        %v1068 = vpop.permute.xlu0 %1067
        %1069 = vrot.lane.b32.xlu0 %v1015, 96
        %v1070 = vpop.permute.xlu0 %1069
        %1071 = vrot.lane.b32.xlu0 %v1016, 96
        %v1072 = vpop.permute.xlu0 %1071
        %1073 = vrot.lane.b32.xlu0 %v1017, 96
        %v1074 = vpop.permute.xlu0 %1073
        %1075 = vrot.lane.b32.xlu0 %v1018, 96
        %v1076 = vpop.permute.xlu0 %1075
        %1077 = vrot.lane.b32.xlu0 %v1019, 96
        %v1078 = vpop.permute.xlu0 %1077
        %1079 = vrot.lane.b32.xlu0 %v1020, 96
        %v1080 = vpop.permute.xlu0 %1079
        %1081 = vrot.lane.b32.xlu0 %v1021, 96
        %v1082 = vpop.permute.xlu0 %1081
        %1083 = vrot.lane.b32.xlu0 %v1022, 96
        %v1084 = vpop.permute.xlu0 %1083
        %1085 = vrot.lane.b32.xlu0 %v1023, 96
        %v1086 = vpop.permute.xlu0 %1085
        %1087 = vrot.lane.b32.xlu0 %v1024, 96
        %v1088 = vpop.permute.xlu0 %1087
        %1089 = vrot.lane.b32.xlu0 %v1025, 96
        %v1090 = vpop.permute.xlu0 %1089
        %s1107 = scalar_lea.vmem %s265, 256
        %1108 = vst.msk [vmem:[%s1107] sm:$0xf] %vm774, %v1060
        %1109 = vst.msk [vmem:[%s1107 + $0x4] sm:$0xf] %vm774, %v1062
        %1110 = vst.msk [vmem:[%s1107 + $0x8] sm:$0xf] %vm774, %v1064
        %1111 = vst.msk [vmem:[%s1107 + $0xc] sm:$0xf] %vm774, %v1066
        %1112 = vst.msk [vmem:[%s1107 + $0x10] sm:$0xf] %vm774, %v1068
        %1113 = vst.msk [vmem:[%s1107 + $0x14] sm:$0xf] %vm774, %v1070
        %1114 = vst.msk [vmem:[%s1107 + $0x18] sm:$0xf] %vm774, %v1072
        %1115 = vst.msk [vmem:[%s1107 + $0x1c] sm:$0xf] %vm774, %v1074
        %1116 = vst.msk [vmem:[%s1107 + $0x20] sm:$0xf] %vm774, %v1076
        %1117 = vst.msk [vmem:[%s1107 + $0x24] sm:$0xf] %vm774, %v1078
        %1118 = vst.msk [vmem:[%s1107 + $0x28] sm:$0xf] %vm774, %v1080
        %1119 = vst.msk [vmem:[%s1107 + $0x2c] sm:$0xf] %vm774, %v1082
        %1120 = vst.msk [vmem:[%s1107 + $0x30] sm:$0xf] %vm774, %v1084
        %1121 = vst.msk [vmem:[%s1107 + $0x34] sm:$0xf] %vm774, %v1086
        %1122 = vst.msk [vmem:[%s1107 + $0x38] sm:$0xf] %vm774, %v1088
        %1123 = vst.msk [vmem:[%s1107 + $0x3c] sm:$0xf] %vm774, %v1090
        %1124 = vrot.lane.b32.xlu0 %v1010, 64
        %v1125 = vpop.permute.xlu0 %1124
        %1126 = vrot.lane.b32.xlu0 %v1011, 64
        %v1127 = vpop.permute.xlu0 %1126
        %1128 = vrot.lane.b32.xlu0 %v1012, 64
        %v1129 = vpop.permute.xlu0 %1128
        %1130 = vrot.lane.b32.xlu0 %v1013, 64
        %v1131 = vpop.permute.xlu0 %1130
        %1132 = vrot.lane.b32.xlu0 %v1014, 64
        %v1133 = vpop.permute.xlu0 %1132
        %1134 = vrot.lane.b32.xlu0 %v1015, 64
        %v1135 = vpop.permute.xlu0 %1134
        %1136 = vrot.lane.b32.xlu0 %v1016, 64
        %v1137 = vpop.permute.xlu0 %1136
        %1138 = vrot.lane.b32.xlu0 %v1017, 64
        %v1139 = vpop.permute.xlu0 %1138
        %1140 = vrot.lane.b32.xlu0 %v1018, 64
        %v1141 = vpop.permute.xlu0 %1140
        %1142 = vrot.lane.b32.xlu0 %v1019, 64
        %v1143 = vpop.permute.xlu0 %1142
        %1144 = vrot.lane.b32.xlu0 %v1020, 64
        %v1145 = vpop.permute.xlu0 %1144
        %1146 = vrot.lane.b32.xlu0 %v1021, 64
        %v1147 = vpop.permute.xlu0 %1146
        %1148 = vrot.lane.b32.xlu0 %v1022, 64
        %v1149 = vpop.permute.xlu0 %1148
        %1150 = vrot.lane.b32.xlu0 %v1023, 64
        %v1151 = vpop.permute.xlu0 %1150
        %1152 = vrot.lane.b32.xlu0 %v1024, 64
        %v1153 = vpop.permute.xlu0 %1152
        %1154 = vrot.lane.b32.xlu0 %v1025, 64
        %v1155 = vpop.permute.xlu0 %1154
        %s1172 = scalar_lea.vmem %s265, 448
        %1173 = vst.msk [vmem:[%s1172] sm:$0xf] %vm774, %v1125
        %1174 = vst.msk [vmem:[%s1172 + $0x4] sm:$0xf] %vm774, %v1127
        %1175 = vst.msk [vmem:[%s1172 + $0x8] sm:$0xf] %vm774, %v1129
        %1176 = vst.msk [vmem:[%s1172 + $0xc] sm:$0xf] %vm774, %v1131
        %1177 = vst.msk [vmem:[%s1172 + $0x10] sm:$0xf] %vm774, %v1133
        %1178 = vst.msk [vmem:[%s1172 + $0x14] sm:$0xf] %vm774, %v1135
        %1179 = vst.msk [vmem:[%s1172 + $0x18] sm:$0xf] %vm774, %v1137
        %1180 = vst.msk [vmem:[%s1172 + $0x1c] sm:$0xf] %vm774, %v1139
        %1181 = vst.msk [vmem:[%s1172 + $0x20] sm:$0xf] %vm774, %v1141
        %1182 = vst.msk [vmem:[%s1172 + $0x24] sm:$0xf] %vm774, %v1143
        %1183 = vst.msk [vmem:[%s1172 + $0x28] sm:$0xf] %vm774, %v1145
        %1184 = vst.msk [vmem:[%s1172 + $0x2c] sm:$0xf] %vm774, %v1147
        %1185 = vst.msk [vmem:[%s1172 + $0x30] sm:$0xf] %vm774, %v1149
        %1186 = vst.msk [vmem:[%s1172 + $0x34] sm:$0xf] %vm774, %v1151
        %1187 = vst.msk [vmem:[%s1172 + $0x38] sm:$0xf] %vm774, %v1153
        %1188 = vst.msk [vmem:[%s1172 + $0x3c] sm:$0xf] %vm774, %v1155
        %1189 = vrot.lane.b32.xlu0 %v1010, 32
        %v1190 = vpop.permute.xlu0 %1189
        %1191 = vrot.lane.b32.xlu0 %v1011, 32
        %v1192 = vpop.permute.xlu0 %1191
        %1193 = vrot.lane.b32.xlu0 %v1012, 32
        %v1194 = vpop.permute.xlu0 %1193
        %1195 = vrot.lane.b32.xlu0 %v1013, 32
        %v1196 = vpop.permute.xlu0 %1195
        %1197 = vrot.lane.b32.xlu0 %v1014, 32
        %v1198 = vpop.permute.xlu0 %1197
        %1199 = vrot.lane.b32.xlu0 %v1015, 32
        %v1200 = vpop.permute.xlu0 %1199
        %1201 = vrot.lane.b32.xlu0 %v1016, 32
        %v1202 = vpop.permute.xlu0 %1201
        %1203 = vrot.lane.b32.xlu0 %v1017, 32
        %v1204 = vpop.permute.xlu0 %1203
        %1205 = vrot.lane.b32.xlu0 %v1018, 32
        %v1206 = vpop.permute.xlu0 %1205
        %1207 = vrot.lane.b32.xlu0 %v1019, 32
        %v1208 = vpop.permute.xlu0 %1207
        %1209 = vrot.lane.b32.xlu0 %v1020, 32
        %v1210 = vpop.permute.xlu0 %1209
        %1211 = vrot.lane.b32.xlu0 %v1021, 32
        %v1212 = vpop.permute.xlu0 %1211
        %1213 = vrot.lane.b32.xlu0 %v1022, 32
        %v1214 = vpop.permute.xlu0 %1213
        %1215 = vrot.lane.b32.xlu0 %v1023, 32
        %v1216 = vpop.permute.xlu0 %1215
        %1217 = vrot.lane.b32.xlu0 %v1024, 32
        %v1218 = vpop.permute.xlu0 %1217
        %1219 = vrot.lane.b32.xlu0 %v1025, 32
        %v1220 = vpop.permute.xlu0 %1219
        %s1237 = scalar_lea.vmem %s265, 640
        %1238 = vst.msk [vmem:[%s1237] sm:$0xf] %vm774, %v1190
        %1239 = vst.msk [vmem:[%s1237 + $0x4] sm:$0xf] %vm774, %v1192
        %1240 = vst.msk [vmem:[%s1237 + $0x8] sm:$0xf] %vm774, %v1194
        %1241 = vst.msk [vmem:[%s1237 + $0xc] sm:$0xf] %vm774, %v1196
        %1242 = vst.msk [vmem:[%s1237 + $0x10] sm:$0xf] %vm774, %v1198
        %1243 = vst.msk [vmem:[%s1237 + $0x14] sm:$0xf] %vm774, %v1200
        %1244 = vst.msk [vmem:[%s1237 + $0x18] sm:$0xf] %vm774, %v1202
        %1245 = vst.msk [vmem:[%s1237 + $0x1c] sm:$0xf] %vm774, %v1204
        %1246 = vst.msk [vmem:[%s1237 + $0x20] sm:$0xf] %vm774, %v1206
        %1247 = vst.msk [vmem:[%s1237 + $0x24] sm:$0xf] %vm774, %v1208
        %1248 = vst.msk [vmem:[%s1237 + $0x28] sm:$0xf] %vm774, %v1210
        %1249 = vst.msk [vmem:[%s1237 + $0x2c] sm:$0xf] %vm774, %v1212
        %1250 = vst.msk [vmem:[%s1237 + $0x30] sm:$0xf] %vm774, %v1214
        %1251 = vst.msk [vmem:[%s1237 + $0x34] sm:$0xf] %vm774, %v1216
        %1252 = vst.msk [vmem:[%s1237 + $0x38] sm:$0xf] %vm774, %v1218
        %1253 = vst.msk [vmem:[%s1237 + $0x3c] sm:$0xf] %vm774, %v1220
        %v1262 = vunpack.c.l.b16 %v696
        %v1263 = vunpack.c.h.b16 %v696
        %v1264 = vunpack.c.l.b16 %v699
        %v1265 = vunpack.c.h.b16 %v699
        %v1266 = vunpack.c.l.b16 %v702
        %v1267 = vunpack.c.h.b16 %v702
        %v1268 = vunpack.c.l.b16 %v705
        %v1269 = vunpack.c.h.b16 %v705
        %v1270 = vunpack.c.l.b16 %v708
        %v1271 = vunpack.c.h.b16 %v708
        %v1272 = vunpack.c.l.b16 %v711
        %v1273 = vunpack.c.h.b16 %v711
        %v1274 = vunpack.c.l.b16 %v714
        %v1275 = vunpack.c.h.b16 %v714
        %v1276 = vunpack.c.l.b16 %v717
        %v1277 = vunpack.c.h.b16 %v717
        %v1278 = vpack.c.b16 %v1262, %v1262
        %v1279 = vpack.c.b16 %v1263, %v1263
        %v1280 = vpack.c.b16 %v1264, %v1264
        %v1281 = vpack.c.b16 %v1265, %v1265
        %v1282 = vpack.c.b16 %v1266, %v1266
        %v1283 = vpack.c.b16 %v1267, %v1267
        %v1284 = vpack.c.b16 %v1268, %v1268
        %v1285 = vpack.c.b16 %v1269, %v1269
        %v1286 = vpack.c.b16 %v1270, %v1270
        %v1287 = vpack.c.b16 %v1271, %v1271
        %v1288 = vpack.c.b16 %v1272, %v1272
        %v1289 = vpack.c.b16 %v1273, %v1273
        %v1290 = vpack.c.b16 %v1274, %v1274
        %v1291 = vpack.c.b16 %v1275, %v1275
        %v1292 = vpack.c.b16 %v1276, %v1276
        %v1293 = vpack.c.b16 %v1277, %v1277
        %s1310 = scalar_lea.vmem %s265, 128
        %1311 = vst.msk [vmem:[%s1310] sm:$0xf] %vm774, %v1278
        %1312 = vst.msk [vmem:[%s1310 + $0x4] sm:$0xf] %vm774, %v1279
        %1313 = vst.msk [vmem:[%s1310 + $0x8] sm:$0xf] %vm774, %v1280
        %1314 = vst.msk [vmem:[%s1310 + $0xc] sm:$0xf] %vm774, %v1281
        %1315 = vst.msk [vmem:[%s1310 + $0x10] sm:$0xf] %vm774, %v1282
        %1316 = vst.msk [vmem:[%s1310 + $0x14] sm:$0xf] %vm774, %v1283
        %1317 = vst.msk [vmem:[%s1310 + $0x18] sm:$0xf] %vm774, %v1284
        %1318 = vst.msk [vmem:[%s1310 + $0x1c] sm:$0xf] %vm774, %v1285
        %1319 = vst.msk [vmem:[%s1310 + $0x20] sm:$0xf] %vm774, %v1286
        %1320 = vst.msk [vmem:[%s1310 + $0x24] sm:$0xf] %vm774, %v1287
        %1321 = vst.msk [vmem:[%s1310 + $0x28] sm:$0xf] %vm774, %v1288
        %1322 = vst.msk [vmem:[%s1310 + $0x2c] sm:$0xf] %vm774, %v1289
        %1323 = vst.msk [vmem:[%s1310 + $0x30] sm:$0xf] %vm774, %v1290
        %1324 = vst.msk [vmem:[%s1310 + $0x34] sm:$0xf] %vm774, %v1291
        %1325 = vst.msk [vmem:[%s1310 + $0x38] sm:$0xf] %vm774, %v1292
        %1326 = vst.msk [vmem:[%s1310 + $0x3c] sm:$0xf] %vm774, %v1293
        %1327 = vrot.lane.b32.xlu0 %v1278, 96
        %v1328 = vpop.permute.xlu0 %1327
        %1329 = vrot.lane.b32.xlu0 %v1279, 96
        %v1330 = vpop.permute.xlu0 %1329
        %1331 = vrot.lane.b32.xlu0 %v1280, 96
        %v1332 = vpop.permute.xlu0 %1331
        %1333 = vrot.lane.b32.xlu0 %v1281, 96
        %v1334 = vpop.permute.xlu0 %1333
        %1335 = vrot.lane.b32.xlu0 %v1282, 96
        %v1336 = vpop.permute.xlu0 %1335
        %1337 = vrot.lane.b32.xlu0 %v1283, 96
        %v1338 = vpop.permute.xlu0 %1337
        %1339 = vrot.lane.b32.xlu0 %v1284, 96
        %v1340 = vpop.permute.xlu0 %1339
        %1341 = vrot.lane.b32.xlu0 %v1285, 96
        %v1342 = vpop.permute.xlu0 %1341
        %1343 = vrot.lane.b32.xlu0 %v1286, 96
        %v1344 = vpop.permute.xlu0 %1343
        %1345 = vrot.lane.b32.xlu0 %v1287, 96
        %v1346 = vpop.permute.xlu0 %1345
        %1347 = vrot.lane.b32.xlu0 %v1288, 96
        %v1348 = vpop.permute.xlu0 %1347
        %1349 = vrot.lane.b32.xlu0 %v1289, 96
        %v1350 = vpop.permute.xlu0 %1349
        %1351 = vrot.lane.b32.xlu0 %v1290, 96
        %v1352 = vpop.permute.xlu0 %1351
        %1353 = vrot.lane.b32.xlu0 %v1291, 96
        %v1354 = vpop.permute.xlu0 %1353
        %1355 = vrot.lane.b32.xlu0 %v1292, 96
        %v1356 = vpop.permute.xlu0 %1355
        %1357 = vrot.lane.b32.xlu0 %v1293, 96
        %v1358 = vpop.permute.xlu0 %1357
        %s1375 = scalar_lea.vmem %s265, 320
        %1376 = vst.msk [vmem:[%s1375] sm:$0xf] %vm774, %v1328
        %1377 = vst.msk [vmem:[%s1375 + $0x4] sm:$0xf] %vm774, %v1330
        %1378 = vst.msk [vmem:[%s1375 + $0x8] sm:$0xf] %vm774, %v1332
        %1379 = vst.msk [vmem:[%s1375 + $0xc] sm:$0xf] %vm774, %v1334
        %1380 = vst.msk [vmem:[%s1375 + $0x10] sm:$0xf] %vm774, %v1336
        %1381 = vst.msk [vmem:[%s1375 + $0x14] sm:$0xf] %vm774, %v1338
        %1382 = vst.msk [vmem:[%s1375 + $0x18] sm:$0xf] %vm774, %v1340
        %1383 = vst.msk [vmem:[%s1375 + $0x1c] sm:$0xf] %vm774, %v1342
        %1384 = vst.msk [vmem:[%s1375 + $0x20] sm:$0xf] %vm774, %v1344
        %1385 = vst.msk [vmem:[%s1375 + $0x24] sm:$0xf] %vm774, %v1346
        %1386 = vst.msk [vmem:[%s1375 + $0x28] sm:$0xf] %vm774, %v1348
        %1387 = vst.msk [vmem:[%s1375 + $0x2c] sm:$0xf] %vm774, %v1350
        %1388 = vst.msk [vmem:[%s1375 + $0x30] sm:$0xf] %vm774, %v1352
        %1389 = vst.msk [vmem:[%s1375 + $0x34] sm:$0xf] %vm774, %v1354
        %1390 = vst.msk [vmem:[%s1375 + $0x38] sm:$0xf] %vm774, %v1356
        %1391 = vst.msk [vmem:[%s1375 + $0x3c] sm:$0xf] %vm774, %v1358
        %1392 = vrot.lane.b32.xlu0 %v1278, 64
        %v1393 = vpop.permute.xlu0 %1392
        %1394 = vrot.lane.b32.xlu0 %v1279, 64
        %v1395 = vpop.permute.xlu0 %1394
        %1396 = vrot.lane.b32.xlu0 %v1280, 64
        %v1397 = vpop.permute.xlu0 %1396
        %1398 = vrot.lane.b32.xlu0 %v1281, 64
        %v1399 = vpop.permute.xlu0 %1398
        %1400 = vrot.lane.b32.xlu0 %v1282, 64
        %v1401 = vpop.permute.xlu0 %1400
        %1402 = vrot.lane.b32.xlu0 %v1283, 64
        %v1403 = vpop.permute.xlu0 %1402
        %1404 = vrot.lane.b32.xlu0 %v1284, 64
        %v1405 = vpop.permute.xlu0 %1404
        %1406 = vrot.lane.b32.xlu0 %v1285, 64
        %v1407 = vpop.permute.xlu0 %1406
        %1408 = vrot.lane.b32.xlu0 %v1286, 64
        %v1409 = vpop.permute.xlu0 %1408
        %1410 = vrot.lane.b32.xlu0 %v1287, 64
        %v1411 = vpop.permute.xlu0 %1410
        %1412 = vrot.lane.b32.xlu0 %v1288, 64
        %v1413 = vpop.permute.xlu0 %1412
        %1414 = vrot.lane.b32.xlu0 %v1289, 64
        %v1415 = vpop.permute.xlu0 %1414
        %1416 = vrot.lane.b32.xlu0 %v1290, 64
        %v1417 = vpop.permute.xlu0 %1416
        %1418 = vrot.lane.b32.xlu0 %v1291, 64
        %v1419 = vpop.permute.xlu0 %1418
        %1420 = vrot.lane.b32.xlu0 %v1292, 64
        %v1421 = vpop.permute.xlu0 %1420
        %1422 = vrot.lane.b32.xlu0 %v1293, 64
        %v1423 = vpop.permute.xlu0 %1422
        %s1440 = scalar_lea.vmem %s265, 512
        %1441 = vst.msk [vmem:[%s1440] sm:$0xf] %vm774, %v1393
        %1442 = vst.msk [vmem:[%s1440 + $0x4] sm:$0xf] %vm774, %v1395
        %1443 = vst.msk [vmem:[%s1440 + $0x8] sm:$0xf] %vm774, %v1397
        %1444 = vst.msk [vmem:[%s1440 + $0xc] sm:$0xf] %vm774, %v1399
        %1445 = vst.msk [vmem:[%s1440 + $0x10] sm:$0xf] %vm774, %v1401
        %1446 = vst.msk [vmem:[%s1440 + $0x14] sm:$0xf] %vm774, %v1403
        %1447 = vst.msk [vmem:[%s1440 + $0x18] sm:$0xf] %vm774, %v1405
        %1448 = vst.msk [vmem:[%s1440 + $0x1c] sm:$0xf] %vm774, %v1407
        %1449 = vst.msk [vmem:[%s1440 + $0x20] sm:$0xf] %vm774, %v1409
        %1450 = vst.msk [vmem:[%s1440 + $0x24] sm:$0xf] %vm774, %v1411
        %1451 = vst.msk [vmem:[%s1440 + $0x28] sm:$0xf] %vm774, %v1413
        %1452 = vst.msk [vmem:[%s1440 + $0x2c] sm:$0xf] %vm774, %v1415
        %1453 = vst.msk [vmem:[%s1440 + $0x30] sm:$0xf] %vm774, %v1417
        %1454 = vst.msk [vmem:[%s1440 + $0x34] sm:$0xf] %vm774, %v1419
        %1455 = vst.msk [vmem:[%s1440 + $0x38] sm:$0xf] %vm774, %v1421
        %1456 = vst.msk [vmem:[%s1440 + $0x3c] sm:$0xf] %vm774, %v1423
        %1457 = vrot.lane.b32.xlu0 %v1278, 32
        %v1458 = vpop.permute.xlu0 %1457
        %1459 = vrot.lane.b32.xlu0 %v1279, 32
        %v1460 = vpop.permute.xlu0 %1459
        %1461 = vrot.lane.b32.xlu0 %v1280, 32
        %v1462 = vpop.permute.xlu0 %1461
        %1463 = vrot.lane.b32.xlu0 %v1281, 32
        %v1464 = vpop.permute.xlu0 %1463
        %1465 = vrot.lane.b32.xlu0 %v1282, 32
        %v1466 = vpop.permute.xlu0 %1465
        %1467 = vrot.lane.b32.xlu0 %v1283, 32
        %v1468 = vpop.permute.xlu0 %1467
        %1469 = vrot.lane.b32.xlu0 %v1284, 32
        %v1470 = vpop.permute.xlu0 %1469
        %1471 = vrot.lane.b32.xlu0 %v1285, 32
        %v1472 = vpop.permute.xlu0 %1471
        %1473 = vrot.lane.b32.xlu0 %v1286, 32
        %v1474 = vpop.permute.xlu0 %1473
        %1475 = vrot.lane.b32.xlu0 %v1287, 32
        %v1476 = vpop.permute.xlu0 %1475
        %1477 = vrot.lane.b32.xlu0 %v1288, 32
        %v1478 = vpop.permute.xlu0 %1477
        %1479 = vrot.lane.b32.xlu0 %v1289, 32
        %v1480 = vpop.permute.xlu0 %1479
        %1481 = vrot.lane.b32.xlu0 %v1290, 32
        %v1482 = vpop.permute.xlu0 %1481
        %1483 = vrot.lane.b32.xlu0 %v1291, 32
        %v1484 = vpop.permute.xlu0 %1483
        %1485 = vrot.lane.b32.xlu0 %v1292, 32
        %v1486 = vpop.permute.xlu0 %1485
        %1487 = vrot.lane.b32.xlu0 %v1293, 32
        %v1488 = vpop.permute.xlu0 %1487
        %s1505 = scalar_lea.vmem %s265, 704
        %1506 = vst.msk [vmem:[%s1505] sm:$0xf] %vm774, %v1458
        %1507 = vst.msk [vmem:[%s1505 + $0x4] sm:$0xf] %vm774, %v1460
        %1508 = vst.msk [vmem:[%s1505 + $0x8] sm:$0xf] %vm774, %v1462
        %1509 = vst.msk [vmem:[%s1505 + $0xc] sm:$0xf] %vm774, %v1464
        %1510 = vst.msk [vmem:[%s1505 + $0x10] sm:$0xf] %vm774, %v1466
        %1511 = vst.msk [vmem:[%s1505 + $0x14] sm:$0xf] %vm774, %v1468
        %1512 = vst.msk [vmem:[%s1505 + $0x18] sm:$0xf] %vm774, %v1470
        %1513 = vst.msk [vmem:[%s1505 + $0x1c] sm:$0xf] %vm774, %v1472
        %1514 = vst.msk [vmem:[%s1505 + $0x20] sm:$0xf] %vm774, %v1474
        %1515 = vst.msk [vmem:[%s1505 + $0x24] sm:$0xf] %vm774, %v1476
        %1516 = vst.msk [vmem:[%s1505 + $0x28] sm:$0xf] %vm774, %v1478
        %1517 = vst.msk [vmem:[%s1505 + $0x2c] sm:$0xf] %vm774, %v1480
        %1518 = vst.msk [vmem:[%s1505 + $0x30] sm:$0xf] %vm774, %v1482
        %1519 = vst.msk [vmem:[%s1505 + $0x34] sm:$0xf] %vm774, %v1484
        %1520 = vst.msk [vmem:[%s1505 + $0x38] sm:$0xf] %vm774, %v1486
        %1521 = vst.msk [vmem:[%s1505 + $0x3c] sm:$0xf] %vm774, %v1488
        %s1522 = smul.u32 16, %s18
        %p1523 = scmp.lt.s32.totalorder %s17, 1
        %s1524 = scalar_select %p1523, %s17, 1
        %p1525 = scmp.lt.s32.totalorder %s1522, 15
        %s1526 = scalar_select %p1525, %s1522, 15
        %s1527 = smul.addr %s1524, 192
        %s1528 = sadd.s32 %s1526, %s1527
        %s1529 = smul.addr %s1528, 4
        %s1530 = scalar_lea.vmem %s2, %s1529
        // Predicated region
        $region67: #{rel_partial_learnable_decoder_layer.4} parent=61 // pred_check
          %p1531 = pneg %p94
        $region68: #{rel_partial_learnable_decoder_layer.4} parent=61 // pred_check_branch
          %1533 = sbr.rel (%p1531) target = $region70
        $region69: #{rel_partial_learnable_decoder_layer.4} parent=61 // pred_region
          %s1534 = smul.u32 16, %s18
        $region70: #{rel_partial_learnable_decoder_layer.4} parent=61 // pred_fallthru
          _
      $region62: #{rel_partial_learnable_decoder_layer.4} parent=5 // pred_fallthru
        _
      %p1535 = scmp.le.s32.totalorder 2, %s8
      // Predicated region
      $region71: #{rel_partial_learnable_decoder_layer.4} parent=5 // pred_check
        %p1536 = pneg %p1535
      $region72: #{rel_partial_learnable_decoder_layer.4} parent=5 // pred_check_branch
        %1538 = sbr.rel (%p1536) target = $region74
      $region73: #{rel_partial_learnable_decoder_layer.4} parent=5 // pred_region
        %s1539 = ssub.s32 %s8, 2
        // Predicated region
        $region75: #{rel_partial_learnable_decoder_layer.4} parent=73 // pred_check
          %p1540 = pneg %p100
        $region76: #{rel_partial_learnable_decoder_layer.4} parent=73 // pred_check_branch
          %1542 = sbr.rel (%p1540) target = $region78
        $region77: #{rel_partial_learnable_decoder_layer.4} parent=73 // pred_region
          %s1543 = smul.u32 16, %s20
          %p1544 = scmp.lt.s32.totalorder %s19, 1
          %s1545 = scalar_select %p1544, %s19, 1
          %p1546 = scmp.lt.s32.totalorder %s1543, 15
          %s1547 = scalar_select %p1546, %s1543, 15
          %s1548 = smul.addr %s1545, 192
          %s1549 = sadd.s32 %s1547, %s1548
          %s1550 = smul.addr %s1549, 4
          %s1551 = scalar_lea.vmem %s2, %s1550
        $region78: #{rel_partial_learnable_decoder_layer.4} parent=73 // pred_fallthru
          _
      $region74: #{rel_partial_learnable_decoder_layer.4} parent=5 // pred_fallthru
        _
    $region6: #{rel_partial_learnable_decoder_layer.4} parent=1 // loop_footer
      %s12 = sadd.s32 1, %s8
    $region7: #{rel_partial_learnable_decoder_layer.4} parent=1 // loop_footer_branch
      %7 = sbr.rel target = $region3
    $region8: #{rel_partial_learnable_decoder_layer.4} parent=1 // loop_exit
      _

// kernel: rel_partial_learnable_decoder_layer.7
$region0: #{rel_partial_learnable_decoder_layer.7}
  #allocation0 [shape = 'u32[]', space=smem, size = 0x4, offset = 0x4, fixed_abs, tag = 'smem constant byte address 0x4 - core index']
  #allocation1 [shape = 'u32[144,128]{1,0:T(1,128)}', space=vmem, size = 0x12000, scoped, tag = 'internal scratch']
  %s0 = inlined_call_operand.vmem [shape: f32[128,256], index: 0, kind: input, shape index: {}]
  %s1 = inlined_call_operand.vmem [shape: bf16[2,4,128,32], index: 1, kind: input, shape index: {}]
  %s2 = inlined_call_operand.vmem [shape: bf16[4,32,128], index: 2, kind: input, shape index: {}]
  %s3 = inlined_call_operand.vmem [shape: f32[1,128], index: 3, kind: input, shape index: {}]
  %s4 = inlined_call_operand.vmem [shape: f32[1,128], index: 4, kind: input, shape index: {}]
  %s5 = inlined_call_operand.vmem [shape: bf16[256,128], index: 5, kind: input, shape index: {}]
  %s6 = inlined_call_operand.vmem [shape: f32[1,256], index: 6, kind: input, shape index: {}]
  %s7 = inlined_call_operand.vmem [shape: bf16[128,256], index: 7, kind: input, shape index: {}]
  %s8 = inlined_call_operand.vmem [shape: f32[1,128], index: 8, kind: input, shape index: {}]
  %s9 = inlined_call_operand.vmem [shape: f32[1,128], index: 9, kind: input, shape index: {}]
  %s10 = inlined_call_operand.vmem [shape: f32[1,128], index: 10, kind: input, shape index: {}]
  %s11 = inlined_call_operand.vmem [shape: f32[128,256], index: 11, kind: output, shape index: {}]
  %s12 = sld [smem:[#allocation0]]
  $region149: #{rel_partial_learnable_decoder_layer.7} parent=0
    _
  %s14 = ssub.s32 1, %s12
  %s15 = scalar_select 0, %s14, %s12
  $region1: #{rel_partial_learnable_decoder_layer.7} parent=0
    #allocation2 [shape = 'u8[131072]{0}', space=vmem, size = 0x20000, scoped, tag = 'input window, operand 0']
    #allocation3 [shape = 'u8[131072]{0}', space=vmem, size = 0x20000, scoped, tag = 'output window, operand 0']
    loop: start=0, step=1, limit=4
    $region2: #{rel_partial_learnable_decoder_layer.7} parent=1 // loop_pre_header
      _
    $region3: #{rel_partial_learnable_decoder_layer.7} parent=1 // loop_header
      %s17 = sphi 0, %s21
      %p18 = scmp.ge.s32.totalorder %s17, 4
      %s24 = sphi 0, %s36
      %s25 = sphi 0, %s32
      %s26 = sphi 0, %s24
      %s27 = sphi 0, %s25
      %s28 = sphi 0, %s26
      %s29 = sphi 0, %s27
      %s41 = sphi 0, %s43
      %s44 = sphi 0, %s41
      %s45 = sphi 0, %s44
      %s61 = sphi 0, %s45
      %s69 = sphi 0, %s71
      %s72 = sphi 0, %s69
      %s73 = sphi 0, %s72
      %s89 = sphi 0, %s73
      %s93 = sphi 0, %s93
      %s95 = sphi 0, %s93
      %s96 = sphi 0, %s95
      %s110 = sphi 0, %s96
      %s114 = sphi 0, %s114
      %s116 = sphi 0, %s114
      %s117 = sphi 0, %s116
      %s131 = sphi 0, %s117
      %s135 = sphi 0, %s135
      %s137 = sphi 0, %s135
      %s138 = sphi 0, %s137
      %s152 = sphi 0, %s138
      %s156 = sphi 0, %s156
      %s158 = sphi 0, %s156
      %s159 = sphi 0, %s158
      %s173 = sphi 0, %s159
      %s177 = sphi 0, %s177
      %s179 = sphi 0, %s177
      %s180 = sphi 0, %s179
      %s194 = sphi 0, %s180
      %s198 = sphi 0, %s198
      %s200 = sphi 0, %s198
      %s201 = sphi 0, %s200
      %s215 = sphi 0, %s201
      %s219 = sphi 0, %s219
      %s221 = sphi 0, %s219
      %s222 = sphi 0, %s221
      %s236 = sphi 0, %s222
      %s240 = sphi 0, %s240
      %s242 = sphi 0, %s240
      %s243 = sphi 0, %s242
      %s257 = sphi 0, %s243
      %s261 = sphi 0, %s261
      %s263 = sphi 0, %s261
      %s264 = sphi 0, %s263
      %s278 = sphi 0, %s264
      %s286 = sphi 0, %s288
      %s289 = sphi 0, %s286
      %s290 = sphi 0, %s289
      %s306 = sphi 0, %s290
    $region4: #{rel_partial_learnable_decoder_layer.7} parent=1 // loop_header_branch
      %20 = sbr.rel (%p18) target = $region8
    $region5: #{rel_partial_learnable_decoder_layer.7} parent=1 // loop_body
      %s22 = ssub.s32 %s17, 1
      %s23 = ssub.s32 %s17, 2
      %s30 = sadd.s32 1, %s25
      %p31 = scmp.ge.s32.totalorder %s30, 1
      %s32 = scalar_select %p31, 0, %s30
      %s33 = sadd.s32 1, %s24
      %s34 = scalar_select %p31, %s33, %s24
      %p35 = scmp.ge.s32.totalorder %s34, 2
      %s36 = scalar_select %p35, 0, %s34
      %s37 = ssub.s32 %s25, %s32
      %s38 = ssub.s32 %s24, %s36
      %s39 = sor.u32 %s37, %s38
      %p40 = scmp.eq.s32.totalorder %s39, 0
      %s42 = sadd.s32 %s41, 1
      %s43 = scalar_select %p40, %s41, %s42
      %p46 = pneg %p40
      %p47 = scmp.eq.s32.totalorder %s17, 1
      %p48 = por %p46, %p47
      %p49 = scmp.ne.s32.totalorder %s41, %s44
      %p50 = scmp.eq.s32.totalorder %s17, 0
      %p51 = por %p49, %p50
      %p52 = scmp.ne.s32.totalorder %s41, %s44
      %p53 = scmp.eq.s32.totalorder %s22, 1
      %p54 = por %p52, %p53
      %p55 = scmp.ne.s32.totalorder %s44, %s45
      %p56 = scmp.eq.s32.totalorder %s22, 0
      %p57 = por %p55, %p56
      %p58 = scmp.ne.s32.totalorder %s44, %s45
      %p59 = scmp.eq.s32.totalorder %s23, 1
      %p60 = por %p58, %p59
      %p62 = scmp.ne.s32.totalorder %s45, %s61
      %p63 = scmp.eq.s32.totalorder %s23, 0
      %p64 = por %p62, %p63
      %s65 = ssub.s32 %s24, %s36
      %s66 = ssub.s32 %s25, %s32
      %s67 = sor.u32 %s65, %s66
      %p68 = scmp.eq.s32.totalorder %s67, 0
      %s70 = sadd.s32 %s69, 1
      %s71 = scalar_select %p68, %s69, %s70
      %p74 = pneg %p68
      %p75 = scmp.eq.s32.totalorder %s17, 1
      %p76 = por %p74, %p75
      %p77 = scmp.ne.s32.totalorder %s69, %s72
      %p78 = scmp.eq.s32.totalorder %s17, 0
      %p79 = por %p77, %p78
      %p80 = scmp.ne.s32.totalorder %s69, %s72
      %p81 = scmp.eq.s32.totalorder %s22, 1
      %p82 = por %p80, %p81
      %p83 = scmp.ne.s32.totalorder %s72, %s73
      %p84 = scmp.eq.s32.totalorder %s22, 0
      %p85 = por %p83, %p84
      %p86 = scmp.ne.s32.totalorder %s72, %s73
      %p87 = scmp.eq.s32.totalorder %s23, 1
      %p88 = por %p86, %p87
      %p90 = scmp.ne.s32.totalorder %s73, %s89
      %p91 = scmp.eq.s32.totalorder %s23, 0
      %p92 = por %p90, %p91
      %s94 = sadd.s32 %s93, 1
      %p97 = scmp.eq.s32.totalorder %s17, 1
      %p98 = scmp.ne.s32.totalorder %s93, %s95
      %p99 = scmp.eq.s32.totalorder %s17, 0
      %p100 = por %p98, %p99
      %p101 = scmp.ne.s32.totalorder %s93, %s95
      %p102 = scmp.eq.s32.totalorder %s22, 1
      %p103 = por %p101, %p102
      %p104 = scmp.ne.s32.totalorder %s95, %s96
      %p105 = scmp.eq.s32.totalorder %s22, 0
      %p106 = por %p104, %p105
      %p107 = scmp.ne.s32.totalorder %s95, %s96
      %p108 = scmp.eq.s32.totalorder %s23, 1
      %p109 = por %p107, %p108
      %p111 = scmp.ne.s32.totalorder %s96, %s110
      %p112 = scmp.eq.s32.totalorder %s23, 0
      %p113 = por %p111, %p112
      %s115 = sadd.s32 %s114, 1
      %p118 = scmp.eq.s32.totalorder %s17, 1
      %p119 = scmp.ne.s32.totalorder %s114, %s116
      %p120 = scmp.eq.s32.totalorder %s17, 0
      %p121 = por %p119, %p120
      %p122 = scmp.ne.s32.totalorder %s114, %s116
      %p123 = scmp.eq.s32.totalorder %s22, 1
      %p124 = por %p122, %p123
      %p125 = scmp.ne.s32.totalorder %s116, %s117
      %p126 = scmp.eq.s32.totalorder %s22, 0
      %p127 = por %p125, %p126
      %p128 = scmp.ne.s32.totalorder %s116, %s117
      %p129 = scmp.eq.s32.totalorder %s23, 1
      %p130 = por %p128, %p129
      %p132 = scmp.ne.s32.totalorder %s117, %s131
      %p133 = scmp.eq.s32.totalorder %s23, 0
      %p134 = por %p132, %p133
      %s136 = sadd.s32 %s135, 1
      %p139 = scmp.eq.s32.totalorder %s17, 1
      %p140 = scmp.ne.s32.totalorder %s135, %s137
      %p141 = scmp.eq.s32.totalorder %s17, 0
      %p142 = por %p140, %p141
      %p143 = scmp.ne.s32.totalorder %s135, %s137
      %p144 = scmp.eq.s32.totalorder %s22, 1
      %p145 = por %p143, %p144
      %p146 = scmp.ne.s32.totalorder %s137, %s138
      %p147 = scmp.eq.s32.totalorder %s22, 0
      %p148 = por %p146, %p147
      %p149 = scmp.ne.s32.totalorder %s137, %s138
      %p150 = scmp.eq.s32.totalorder %s23, 1
      %p151 = por %p149, %p150
      %p153 = scmp.ne.s32.totalorder %s138, %s152
      %p154 = scmp.eq.s32.totalorder %s23, 0
      %p155 = por %p153, %p154
      %s157 = sadd.s32 %s156, 1
      %p160 = scmp.eq.s32.totalorder %s17, 1
      %p161 = scmp.ne.s32.totalorder %s156, %s158
      %p162 = scmp.eq.s32.totalorder %s17, 0
      %p163 = por %p161, %p162
      %p164 = scmp.ne.s32.totalorder %s156, %s158
      %p165 = scmp.eq.s32.totalorder %s22, 1
      %p166 = por %p164, %p165
      %p167 = scmp.ne.s32.totalorder %s158, %s159
      %p168 = scmp.eq.s32.totalorder %s22, 0
      %p169 = por %p167, %p168
      %p170 = scmp.ne.s32.totalorder %s158, %s159
      %p171 = scmp.eq.s32.totalorder %s23, 1
      %p172 = por %p170, %p171
      %p174 = scmp.ne.s32.totalorder %s159, %s173
      %p175 = scmp.eq.s32.totalorder %s23, 0
      %p176 = por %p174, %p175
      %s178 = sadd.s32 %s177, 1
      %p181 = scmp.eq.s32.totalorder %s17, 1
      %p182 = scmp.ne.s32.totalorder %s177, %s179
      %p183 = scmp.eq.s32.totalorder %s17, 0
      %p184 = por %p182, %p183
      %p185 = scmp.ne.s32.totalorder %s177, %s179
      %p186 = scmp.eq.s32.totalorder %s22, 1
      %p187 = por %p185, %p186
      %p188 = scmp.ne.s32.totalorder %s179, %s180
      %p189 = scmp.eq.s32.totalorder %s22, 0
      %p190 = por %p188, %p189
      %p191 = scmp.ne.s32.totalorder %s179, %s180
      %p192 = scmp.eq.s32.totalorder %s23, 1
      %p193 = por %p191, %p192
      %p195 = scmp.ne.s32.totalorder %s180, %s194
      %p196 = scmp.eq.s32.totalorder %s23, 0
      %p197 = por %p195, %p196
      %s199 = sadd.s32 %s198, 1
      %p202 = scmp.eq.s32.totalorder %s17, 1
      %p203 = scmp.ne.s32.totalorder %s198, %s200
      %p204 = scmp.eq.s32.totalorder %s17, 0
      %p205 = por %p203, %p204
      %p206 = scmp.ne.s32.totalorder %s198, %s200
      %p207 = scmp.eq.s32.totalorder %s22, 1
      %p208 = por %p206, %p207
      %p209 = scmp.ne.s32.totalorder %s200, %s201
      %p210 = scmp.eq.s32.totalorder %s22, 0
      %p211 = por %p209, %p210
      %p212 = scmp.ne.s32.totalorder %s200, %s201
      %p213 = scmp.eq.s32.totalorder %s23, 1
      %p214 = por %p212, %p213
      %p216 = scmp.ne.s32.totalorder %s201, %s215
      %p217 = scmp.eq.s32.totalorder %s23, 0
      %p218 = por %p216, %p217
      %s220 = sadd.s32 %s219, 1
      %p223 = scmp.eq.s32.totalorder %s17, 1
      %p224 = scmp.ne.s32.totalorder %s219, %s221
      %p225 = scmp.eq.s32.totalorder %s17, 0
      %p226 = por %p224, %p225
      %p227 = scmp.ne.s32.totalorder %s219, %s221
      %p228 = scmp.eq.s32.totalorder %s22, 1
      %p229 = por %p227, %p228
      %p230 = scmp.ne.s32.totalorder %s221, %s222
      %p231 = scmp.eq.s32.totalorder %s22, 0
      %p232 = por %p230, %p231
      %p233 = scmp.ne.s32.totalorder %s221, %s222
      %p234 = scmp.eq.s32.totalorder %s23, 1
      %p235 = por %p233, %p234
      %p237 = scmp.ne.s32.totalorder %s222, %s236
      %p238 = scmp.eq.s32.totalorder %s23, 0
      %p239 = por %p237, %p238
      %s241 = sadd.s32 %s240, 1
      %p244 = scmp.eq.s32.totalorder %s17, 1
      %p245 = scmp.ne.s32.totalorder %s240, %s242
      %p246 = scmp.eq.s32.totalorder %s17, 0
      %p247 = por %p245, %p246
      %p248 = scmp.ne.s32.totalorder %s240, %s242
      %p249 = scmp.eq.s32.totalorder %s22, 1
      %p250 = por %p248, %p249
      %p251 = scmp.ne.s32.totalorder %s242, %s243
      %p252 = scmp.eq.s32.totalorder %s22, 0
      %p253 = por %p251, %p252
      %p254 = scmp.ne.s32.totalorder %s242, %s243
      %p255 = scmp.eq.s32.totalorder %s23, 1
      %p256 = por %p254, %p255
      %p258 = scmp.ne.s32.totalorder %s243, %s257
      %p259 = scmp.eq.s32.totalorder %s23, 0
      %p260 = por %p258, %p259
      %s262 = sadd.s32 %s261, 1
      %p265 = scmp.eq.s32.totalorder %s17, 1
      %p266 = scmp.ne.s32.totalorder %s261, %s263
      %p267 = scmp.eq.s32.totalorder %s17, 0
      %p268 = por %p266, %p267
      %p269 = scmp.ne.s32.totalorder %s261, %s263
      %p270 = scmp.eq.s32.totalorder %s22, 1
      %p271 = por %p269, %p270
      %p272 = scmp.ne.s32.totalorder %s263, %s264
      %p273 = scmp.eq.s32.totalorder %s22, 0
      %p274 = por %p272, %p273
      %p275 = scmp.ne.s32.totalorder %s263, %s264
      %p276 = scmp.eq.s32.totalorder %s23, 1
      %p277 = por %p275, %p276
      %p279 = scmp.ne.s32.totalorder %s264, %s278
      %p280 = scmp.eq.s32.totalorder %s23, 0
      %p281 = por %p279, %p280
      %s282 = ssub.s32 %s25, %s32
      %s283 = ssub.s32 %s24, %s36
      %s284 = sor.u32 %s282, %s283
      %p285 = scmp.eq.s32.totalorder %s284, 0
      %s287 = sadd.s32 %s286, 1
      %s288 = scalar_select %p285, %s286, %s287
      %p291 = pneg %p285
      %p292 = scmp.eq.s32.totalorder %s17, 1
      %p293 = por %p291, %p292
      %p294 = scmp.ne.s32.totalorder %s286, %s289
      %p295 = scmp.eq.s32.totalorder %s17, 0
      %p296 = por %p294, %p295
      %p297 = scmp.ne.s32.totalorder %s286, %s289
      %p298 = scmp.eq.s32.totalorder %s22, 1
      %p299 = por %p297, %p298
      %p300 = scmp.ne.s32.totalorder %s289, %s290
      %p301 = scmp.eq.s32.totalorder %s22, 0
      %p302 = por %p300, %p301
      %p303 = scmp.ne.s32.totalorder %s289, %s290
      %p304 = scmp.eq.s32.totalorder %s23, 1
      %p305 = por %p303, %p304
      %p307 = scmp.ne.s32.totalorder %s290, %s306
      %p308 = scmp.eq.s32.totalorder %s23, 0
      %p309 = por %p307, %p308
      %p310 = scmp.le.s32.totalorder 1, %s17
      %p311 = scmp.lt.s32.totalorder %s17, 3
      %p312 = pnand %p310, %p311
      %p313 = pneg %p312
      // Predicated region
      $region9: #{rel_partial_learnable_decoder_layer.7} parent=5 // pred_check
        _
      $region10: #{rel_partial_learnable_decoder_layer.7} parent=5 // pred_check_branch
        %315 = sbr.rel (%p312) target = $region12
      $region11: #{rel_partial_learnable_decoder_layer.7} parent=5 // pred_region
        %s316 = ssub.s32 %s17, 1
        // Predicated region
        $region13: #{rel_partial_learnable_decoder_layer.7} parent=11 // pred_check
          %p317 = pneg %p106
        $region14: #{rel_partial_learnable_decoder_layer.7} parent=11 // pred_check_branch
          %319 = sbr.rel (%p317) target = $region16
        $region15: #{rel_partial_learnable_decoder_layer.7} parent=11 // pred_region
          _
        $region16: #{rel_partial_learnable_decoder_layer.7} parent=11 // pred_fallthru
          _
        // Predicated region
        $region17: #{rel_partial_learnable_decoder_layer.7} parent=11 // pred_check
          %p320 = pneg %p127
        $region18: #{rel_partial_learnable_decoder_layer.7} parent=11 // pred_check_branch
          %322 = sbr.rel (%p320) target = $region20
        $region19: #{rel_partial_learnable_decoder_layer.7} parent=11 // pred_region
          _
        $region20: #{rel_partial_learnable_decoder_layer.7} parent=11 // pred_fallthru
          _
        // Predicated region
        $region21: #{rel_partial_learnable_decoder_layer.7} parent=11 // pred_check
          %p323 = pneg %p148
        $region22: #{rel_partial_learnable_decoder_layer.7} parent=11 // pred_check_branch
          %325 = sbr.rel (%p323) target = $region24
        $region23: #{rel_partial_learnable_decoder_layer.7} parent=11 // pred_region
          _
        $region24: #{rel_partial_learnable_decoder_layer.7} parent=11 // pred_fallthru
          _
        // Predicated region
        $region25: #{rel_partial_learnable_decoder_layer.7} parent=11 // pred_check
          %p326 = pneg %p169
        $region26: #{rel_partial_learnable_decoder_layer.7} parent=11 // pred_check_branch
          %328 = sbr.rel (%p326) target = $region28
        $region27: #{rel_partial_learnable_decoder_layer.7} parent=11 // pred_region
          _
        $region28: #{rel_partial_learnable_decoder_layer.7} parent=11 // pred_fallthru
          _
        // Predicated region
        $region29: #{rel_partial_learnable_decoder_layer.7} parent=11 // pred_check
          %p329 = pneg %p190
        $region30: #{rel_partial_learnable_decoder_layer.7} parent=11 // pred_check_branch
          %331 = sbr.rel (%p329) target = $region32
        $region31: #{rel_partial_learnable_decoder_layer.7} parent=11 // pred_region
          _
        $region32: #{rel_partial_learnable_decoder_layer.7} parent=11 // pred_fallthru
          _
        // Predicated region
        $region33: #{rel_partial_learnable_decoder_layer.7} parent=11 // pred_check
          %p332 = pneg %p211
        $region34: #{rel_partial_learnable_decoder_layer.7} parent=11 // pred_check_branch
          %334 = sbr.rel (%p332) target = $region36
        $region35: #{rel_partial_learnable_decoder_layer.7} parent=11 // pred_region
          _
        $region36: #{rel_partial_learnable_decoder_layer.7} parent=11 // pred_fallthru
          _
        // Predicated region
        $region37: #{rel_partial_learnable_decoder_layer.7} parent=11 // pred_check
          %p335 = pneg %p232
        $region38: #{rel_partial_learnable_decoder_layer.7} parent=11 // pred_check_branch
          %337 = sbr.rel (%p335) target = $region40
        $region39: #{rel_partial_learnable_decoder_layer.7} parent=11 // pred_region
          _
        $region40: #{rel_partial_learnable_decoder_layer.7} parent=11 // pred_fallthru
          _
        // Predicated region
        $region41: #{rel_partial_learnable_decoder_layer.7} parent=11 // pred_check
          %p338 = pneg %p253
        $region42: #{rel_partial_learnable_decoder_layer.7} parent=11 // pred_check_branch
          %340 = sbr.rel (%p338) target = $region44
        $region43: #{rel_partial_learnable_decoder_layer.7} parent=11 // pred_region
          _
        $region44: #{rel_partial_learnable_decoder_layer.7} parent=11 // pred_fallthru
          _
        // Predicated region
        $region45: #{rel_partial_learnable_decoder_layer.7} parent=11 // pred_check
          %p341 = pneg %p274
        $region46: #{rel_partial_learnable_decoder_layer.7} parent=11 // pred_check_branch
          %343 = sbr.rel (%p341) target = $region48
        $region47: #{rel_partial_learnable_decoder_layer.7} parent=11 // pred_region
          _
        $region48: #{rel_partial_learnable_decoder_layer.7} parent=11 // pred_fallthru
          _
      $region12: #{rel_partial_learnable_decoder_layer.7} parent=5 // pred_fallthru
        _
      %p344 = scmp.lt.s32.totalorder %s17, 2
      // Predicated region
      $region49: #{rel_partial_learnable_decoder_layer.7} parent=5 // pred_check
        %p345 = pneg %p344
      $region50: #{rel_partial_learnable_decoder_layer.7} parent=5 // pred_check_branch
        %347 = sbr.rel (%p345) target = $region52
      $region51: #{rel_partial_learnable_decoder_layer.7} parent=5 // pred_region
        // Predicated region
        $region53: #{rel_partial_learnable_decoder_layer.7} parent=51 // pred_check
          %p348 = pneg %p51
        $region54: #{rel_partial_learnable_decoder_layer.7} parent=51 // pred_check_branch
          %350 = sbr.rel (%p348) target = $region56
        $region55: #{rel_partial_learnable_decoder_layer.7} parent=51 // pred_region
          %s351 = sand.u32 %s41, 1
          %s352 = sand.u32 %s41, 1
          %s353 = smul.addr %s352, 128
          %s354 = scalar_lea.vmem [#allocation2], %s353
          %s355 = smul.u32 16, %s25
          %s356 = smul.addr %s355, 2
          %s357 = sadd.s32 %s24, %s356
          %s358 = smul.addr %s357, 8
          %s359 = scalar_lea.vmem %s0, %s358
          // Predicated region
          $region57: #{rel_partial_learnable_decoder_layer.7} parent=55 // pred_check
            _
          $region58: #{rel_partial_learnable_decoder_layer.7} parent=55 // pred_check_branch
            %361 = sbr.rel (0) target = $region60
          $region59: #{rel_partial_learnable_decoder_layer.7} parent=55 // pred_region
            // Predicated region
            $region61: #{rel_partial_learnable_decoder_layer.7} parent=59 // pred_check
              _
            $region62: #{rel_partial_learnable_decoder_layer.7} parent=59 // pred_check_branch
              %363 = sbr.rel (0) target = $region64
            $region63: #{rel_partial_learnable_decoder_layer.7} parent=59 // pred_region
              // Predicated region
              $region76: #{rel_partial_learnable_decoder_layer.7} parent=63 // pred_check
                _
              $region77: #{rel_partial_learnable_decoder_layer.7} parent=63 // pred_check_branch
                %408 = sbr.rel (0) target = $region79
              $region78: #{rel_partial_learnable_decoder_layer.7} parent=63 // pred_region
                loop: start=0, step=1, limit=1
                $region80: #{rel_partial_learnable_decoder_layer.7} parent=78 // loop_pre_header
                  _
                $region81: #{rel_partial_learnable_decoder_layer.7} parent=78 // loop_header
                  %s410 = sphi 0, %s414
                  %p411 = scmp.ge.s32.totalorder %s410, 1
                  %s415 = sphi %s359, %s359
                  %s416 = sphi %s354, %s354
                $region82: #{rel_partial_learnable_decoder_layer.7} parent=78 // loop_header_branch
                  %413 = sbr.rel (%p411) target = $region86
                $region83: #{rel_partial_learnable_decoder_layer.7} parent=78 // loop_body
                  %v417 = vld [vmem:[%s415] sm:$0xff]
                  %418 = vst [vmem:[%s416] sm:$0xff] %v417
                  %v419 = vld [vmem:[%s415 + $0x10] sm:$0xff]
                  %420 = vst [vmem:[%s416 + $0x8] sm:$0xff] %v419
                  %v421 = vld [vmem:[%s415 + $0x20] sm:$0xff]
                  %422 = vst [vmem:[%s416 + $0x10] sm:$0xff] %v421
                  %v423 = vld [vmem:[%s415 + $0x30] sm:$0xff]
                  %424 = vst [vmem:[%s416 + $0x18] sm:$0xff] %v423
                  %v425 = vld [vmem:[%s415 + $0x40] sm:$0xff]
                  %426 = vst [vmem:[%s416 + $0x20] sm:$0xff] %v425
                  %v427 = vld [vmem:[%s415 + $0x50] sm:$0xff]
                  %428 = vst [vmem:[%s416 + $0x28] sm:$0xff] %v427
                  %v429 = vld [vmem:[%s415 + $0x60] sm:$0xff]
                  %430 = vst [vmem:[%s416 + $0x30] sm:$0xff] %v429
                  %v431 = vld [vmem:[%s415 + $0x70] sm:$0xff]
                  %432 = vst [vmem:[%s416 + $0x38] sm:$0xff] %v431
                  %v433 = vld [vmem:[%s415 + $0x80] sm:$0xff]
                  %434 = vst [vmem:[%s416 + $0x40] sm:$0xff] %v433
                  %v435 = vld [vmem:[%s415 + $0x90] sm:$0xff]
                  %436 = vst [vmem:[%s416 + $0x48] sm:$0xff] %v435
                  %v437 = vld [vmem:[%s415 + $0xa0] sm:$0xff]
                  %438 = vst [vmem:[%s416 + $0x50] sm:$0xff] %v437
                  %v439 = vld [vmem:[%s415 + $0xb0] sm:$0xff]
                  %440 = vst [vmem:[%s416 + $0x58] sm:$0xff] %v439
                  %v441 = vld [vmem:[%s415 + $0xc0] sm:$0xff]
                  %442 = vst [vmem:[%s416 + $0x60] sm:$0xff] %v441
                  %v443 = vld [vmem:[%s415 + $0xd0] sm:$0xff]
                  %444 = vst [vmem:[%s416 + $0x68] sm:$0xff] %v443
                  %v445 = vld [vmem:[%s415 + $0xe0] sm:$0xff]
                  %446 = vst [vmem:[%s416 + $0x70] sm:$0xff] %v445
                  %v447 = vld [vmem:[%s415 + $0xf0] sm:$0xff]
                  %448 = vst [vmem:[%s416 + $0x78] sm:$0xff] %v447
                $region84: #{rel_partial_learnable_decoder_layer.7} parent=78 // loop_footer
                  %s414 = sadd.s32 1, %s410
                $region85: #{rel_partial_learnable_decoder_layer.7} parent=78 // loop_footer_branch
                  %409 = sbr.rel target = $region81
                $region86: #{rel_partial_learnable_decoder_layer.7} parent=78 // loop_exit
                  _
              $region79: #{rel_partial_learnable_decoder_layer.7} parent=63 // pred_fallthru
                _
              // Predicated region
              $region87: #{rel_partial_learnable_decoder_layer.7} parent=63 // pred_check
                _
              $region88: #{rel_partial_learnable_decoder_layer.7} parent=63 // pred_check_branch
                %450 = sbr.rel target = $region90
              $region89: #{rel_partial_learnable_decoder_layer.7} parent=63 // pred_region
                _
              $region90: #{rel_partial_learnable_decoder_layer.7} parent=63 // pred_fallthru
                _
            $region64: #{rel_partial_learnable_decoder_layer.7} parent=59 // pred_fallthru
              _
            // Predicated region
            $region65: #{rel_partial_learnable_decoder_layer.7} parent=59 // pred_check
              _
            $region66: #{rel_partial_learnable_decoder_layer.7} parent=59 // pred_check_branch
              %365 = sbr.rel target = $region68
            $region67: #{rel_partial_learnable_decoder_layer.7} parent=59 // pred_region
              loop: start=0, step=1, limit=1
              $region69: #{rel_partial_learnable_decoder_layer.7} parent=67 // loop_pre_header
                _
              $region70: #{rel_partial_learnable_decoder_layer.7} parent=67 // loop_header
                %s368 = sphi 0, %s372
                %p369 = scmp.ge.s32.totalorder %s368, 1
                %s373 = sphi %s359, %s359
                %s374 = sphi %s354, %s354
              $region71: #{rel_partial_learnable_decoder_layer.7} parent=67 // loop_header_branch
                %371 = sbr.rel (%p369) target = $region75
              $region72: #{rel_partial_learnable_decoder_layer.7} parent=67 // loop_body
                %v375 = vld [vmem:[%s373] sm:$0xff]
                %376 = vst [vmem:[%s374] sm:$0xff] %v375
                %v377 = vld [vmem:[%s373 + $0x10] sm:$0xff]
                %378 = vst [vmem:[%s374 + $0x8] sm:$0xff] %v377
                %v379 = vld [vmem:[%s373 + $0x20] sm:$0xff]
                %380 = vst [vmem:[%s374 + $0x10] sm:$0xff] %v379
                %v381 = vld [vmem:[%s373 + $0x30] sm:$0xff]
                %382 = vst [vmem:[%s374 + $0x18] sm:$0xff] %v381
                %v383 = vld [vmem:[%s373 + $0x40] sm:$0xff]
                %384 = vst [vmem:[%s374 + $0x20] sm:$0xff] %v383
                %v385 = vld [vmem:[%s373 + $0x50] sm:$0xff]
                %386 = vst [vmem:[%s374 + $0x28] sm:$0xff] %v385
                %v387 = vld [vmem:[%s373 + $0x60] sm:$0xff]
                %388 = vst [vmem:[%s374 + $0x30] sm:$0xff] %v387
                %v389 = vld [vmem:[%s373 + $0x70] sm:$0xff]
                %390 = vst [vmem:[%s374 + $0x38] sm:$0xff] %v389
                %v391 = vld [vmem:[%s373 + $0x80] sm:$0xff]
                %392 = vst [vmem:[%s374 + $0x40] sm:$0xff] %v391
                %v393 = vld [vmem:[%s373 + $0x90] sm:$0xff]
                %394 = vst [vmem:[%s374 + $0x48] sm:$0xff] %v393
                %v395 = vld [vmem:[%s373 + $0xa0] sm:$0xff]
                %396 = vst [vmem:[%s374 + $0x50] sm:$0xff] %v395
                %v397 = vld [vmem:[%s373 + $0xb0] sm:$0xff]
                %398 = vst [vmem:[%s374 + $0x58] sm:$0xff] %v397
                %v399 = vld [vmem:[%s373 + $0xc0] sm:$0xff]
                %400 = vst [vmem:[%s374 + $0x60] sm:$0xff] %v399
                %v401 = vld [vmem:[%s373 + $0xd0] sm:$0xff]
                %402 = vst [vmem:[%s374 + $0x68] sm:$0xff] %v401
                %v403 = vld [vmem:[%s373 + $0xe0] sm:$0xff]
                %404 = vst [vmem:[%s374 + $0x70] sm:$0xff] %v403
                %v405 = vld [vmem:[%s373 + $0xf0] sm:$0xff]
                %406 = vst [vmem:[%s374 + $0x78] sm:$0xff] %v405
              $region73: #{rel_partial_learnable_decoder_layer.7} parent=67 // loop_footer
                %s372 = sadd.s32 1, %s368
              $region74: #{rel_partial_learnable_decoder_layer.7} parent=67 // loop_footer_branch
                %367 = sbr.rel target = $region70
              $region75: #{rel_partial_learnable_decoder_layer.7} parent=67 // loop_exit
                _
            $region68: #{rel_partial_learnable_decoder_layer.7} parent=59 // pred_fallthru
              _
          $region60: #{rel_partial_learnable_decoder_layer.7} parent=55 // pred_fallthru
            _
          %451 = vnop
        $region56: #{rel_partial_learnable_decoder_layer.7} parent=51 // pred_fallthru
          _
        // Predicated region
        $region91: #{rel_partial_learnable_decoder_layer.7} parent=51 // pred_check
          %p452 = pneg %p79
        $region92: #{rel_partial_learnable_decoder_layer.7} parent=51 // pred_check_branch
          %454 = sbr.rel (%p452) target = $region94
        $region93: #{rel_partial_learnable_decoder_layer.7} parent=51 // pred_region
          %s455 = smul.u32 16, %s25
          %p456 = scmp.lt.s32.totalorder %s24, 1
          %s457 = scalar_select %p456, %s24, 1
          %p458 = scmp.lt.s32.totalorder %s455, 15
          %s459 = scalar_select %p458, %s455, 15
          %s460 = smul.addr %s457, 64
          %s461 = sadd.s32 %s459, %s460
          %s462 = smul.addr %s461, 4
          %s463 = scalar_lea.vmem %s1, %s462
          %s464 = smul.u32 16, %s25
        $region94: #{rel_partial_learnable_decoder_layer.7} parent=51 // pred_fallthru
          _
      $region52: #{rel_partial_learnable_decoder_layer.7} parent=5 // pred_fallthru
        _
      %p465 = scmp.le.s32.totalorder 1, %s17
      %p466 = scmp.lt.s32.totalorder %s17, 3
      %p467 = pnand %p465, %p466
      %p468 = pneg %p467
      // Predicated region
      $region95: #{rel_partial_learnable_decoder_layer.7} parent=5 // pred_check
        _
      $region96: #{rel_partial_learnable_decoder_layer.7} parent=5 // pred_check_branch
        %470 = sbr.rel (%p467) target = $region98
      $region97: #{rel_partial_learnable_decoder_layer.7} parent=5 // pred_region
        %s471 = ssub.s32 %s17, 1
        %s472 = sand.u32 %s44, 1
        %s473 = sand.u32 %s44, 1
        %s474 = smul.addr %s473, 128
        %s475 = scalar_lea.vmem [#allocation2], %s474
        // Predicated region
        $region99: #{rel_partial_learnable_decoder_layer.7} parent=97 // pred_check
          %p476 = pneg %p57
        $region100: #{rel_partial_learnable_decoder_layer.7} parent=97 // pred_check_branch
          %478 = sbr.rel (%p476) target = $region102
        $region101: #{rel_partial_learnable_decoder_layer.7} parent=97 // pred_region
          _
        $region102: #{rel_partial_learnable_decoder_layer.7} parent=97 // pred_fallthru
          _
        %s479 = sand.u32 %s44, 1
        %s480 = sand.u32 %s44, 1
        %s481 = smul.addr %s480, 128
        %s482 = scalar_lea.vmem [#allocation2], %s481
        %p483 = pneg %p57
        %p484 = pneg %p54
        %s485 = smul.u32 16, %s27
        %p486 = scmp.lt.s32.totalorder %s26, 1
        %s487 = scalar_select %p486, %s26, 1
        %p488 = scmp.lt.s32.totalorder %s485, 15
        %s489 = scalar_select %p488, %s485, 15
        %s490 = smul.addr %s487, 64
        %s491 = sadd.s32 %s489, %s490
        %s492 = smul.addr %s491, 4
        %s493 = scalar_lea.vmem %s1, %s492
        %p494 = pneg %p85
        %p495 = pneg %p82
        %p496 = pneg %p106
        %p497 = pneg %p103
        %p498 = pneg %p127
        %p499 = pneg %p124
        %p500 = pneg %p148
        %p501 = pneg %p145
        %p502 = pneg %p169
        %p503 = pneg %p166
        %p504 = pneg %p190
        %p505 = pneg %p187
        %p506 = pneg %p211
        %p507 = pneg %p208
        %p508 = pneg %p232
        %p509 = pneg %p229
        %p510 = pneg %p253
        %p511 = pneg %p250
        %p512 = pneg %p274
        %p513 = pneg %p271
        %p514 = pneg %p302
        %p515 = pneg %p299
        %s516 = sand.u32 %s289, 1
        %s517 = sand.u32 %s289, 1
        %s518 = smul.addr %s517, 128
        %s519 = scalar_lea.vmem [#allocation3], %s518
        %s520 = smul.u32 16, %s27
        %s521 = smul.u32 16, %s27
        %p522 = scmp.lt.s32.totalorder %s26, 1
        %s523 = scalar_select %p522, %s26, 1
        %p524 = scmp.lt.s32.totalorder %s521, 15
        %s525 = scalar_select %p524, %s521, 15
        %s526 = smul.addr %s523, 64
        %s527 = sadd.s32 %s525, %s526
        %s528 = smul.addr %s527, 4
        %s529 = scalar_lea.vmem %s1, %s528
        %s530 = smul.u32 16, %s27
        %s531 = smul.u32 16, %s27
        %v533 = vld [vmem:[%s529] sm:$0xf]
        %v534 = vld [vmem:[%s529 + $0x4] sm:$0xf]
        %v535 = vld [vmem:[%s529 + $0x8] sm:$0xf]
        %v536 = vld [vmem:[%s529 + $0xc] sm:$0xf]
        %v537 = vld [vmem:[%s529 + $0x10] sm:$0xf]
        %v538 = vld [vmem:[%s529 + $0x14] sm:$0xf]
        %v539 = vld [vmem:[%s529 + $0x18] sm:$0xf]
        %v540 = vld [vmem:[%s529 + $0x1c] sm:$0xf]
        %v541 = vld [vmem:[%s529 + $0x20] sm:$0xf]
        %v542 = vld [vmem:[%s529 + $0x24] sm:$0xf]
        %v543 = vld [vmem:[%s529 + $0x28] sm:$0xf]
        %v544 = vld [vmem:[%s529 + $0x2c] sm:$0xf]
        %v545 = vld [vmem:[%s529 + $0x30] sm:$0xf]
        %v546 = vld [vmem:[%s529 + $0x34] sm:$0xf]
        %v547 = vld [vmem:[%s529 + $0x38] sm:$0xf]
        %v548 = vld [vmem:[%s529 + $0x3c] sm:$0xf]
        %v549 = vld [vmem:[%s2] sm:$0xf]
        %v550 = vld [vmem:[%s2 + $0x4] sm:$0xf]
        %v551 = vld [vmem:[%s2 + $0x8] sm:$0xf]
        %v552 = vld [vmem:[%s2 + $0xc] sm:$0xf]
        %s553 = scalar_lea.vmem %s529, 64
        %v554 = vld [vmem:[%s553] sm:$0xf]
        %v555 = vld [vmem:[%s553 + $0x4] sm:$0xf]
        %v556 = vld [vmem:[%s553 + $0x8] sm:$0xf]
        %v557 = vld [vmem:[%s553 + $0xc] sm:$0xf]
        %v558 = vld [vmem:[%s553 + $0x10] sm:$0xf]
        %v559 = vld [vmem:[%s553 + $0x14] sm:$0xf]
        %v560 = vld [vmem:[%s553 + $0x18] sm:$0xf]
        %v561 = vld [vmem:[%s553 + $0x1c] sm:$0xf]
        %v562 = vld [vmem:[%s553 + $0x20] sm:$0xf]
        %v563 = vld [vmem:[%s553 + $0x24] sm:$0xf]
        %v564 = vld [vmem:[%s553 + $0x28] sm:$0xf]
        %v565 = vld [vmem:[%s553 + $0x2c] sm:$0xf]
        %v566 = vld [vmem:[%s553 + $0x30] sm:$0xf]
        %v567 = vld [vmem:[%s553 + $0x34] sm:$0xf]
        %v568 = vld [vmem:[%s553 + $0x38] sm:$0xf]
        %v569 = vld [vmem:[%s553 + $0x3c] sm:$0xf]
        %s570 = scalar_lea.vmem %s2, 16
        %v571 = vld [vmem:[%s570] sm:$0xf]
        %v572 = vld [vmem:[%s570 + $0x4] sm:$0xf]
        %v573 = vld [vmem:[%s570 + $0x8] sm:$0xf]
        %v574 = vld [vmem:[%s570 + $0xc] sm:$0xf]
        %v591 = vunpack.c.l.b16 %v554
        %v592 = vunpack.c.l.b16 %v555
        %v593 = vunpack.c.l.b16 %v556
        %v594 = vunpack.c.l.b16 %v557
        %v595 = vunpack.c.l.b16 %v558
        %v596 = vunpack.c.l.b16 %v559
        %v597 = vunpack.c.l.b16 %v560
        %v598 = vunpack.c.l.b16 %v561
        %v599 = vunpack.c.l.b16 %v562
        %v600 = vunpack.c.l.b16 %v563
        %v601 = vunpack.c.l.b16 %v564
        %v602 = vunpack.c.l.b16 %v565
        %v603 = vunpack.c.l.b16 %v566
        %v604 = vunpack.c.l.b16 %v567
        %v605 = vunpack.c.l.b16 %v568
        %v606 = vunpack.c.l.b16 %v569
        %v607 = vpack.c.b16 %v592, %v591
        %v608 = vpack.c.b16 %v594, %v593
        %v609 = vpack.c.b16 %v596, %v595
        %v610 = vpack.c.b16 %v598, %v597
        %v611 = vpack.c.b16 %v600, %v599
        %v612 = vpack.c.b16 %v602, %v601
        %v613 = vpack.c.b16 %v604, %v603
        %v614 = vpack.c.b16 %v606, %v605
        %v619 = vunpack.c.l.b16 %v571
        %v620 = vunpack.c.l.b16 %v572
        %v621 = vunpack.c.l.b16 %v573
        %v622 = vunpack.c.l.b16 %v574
        %v623 = vpack.c.b16 %v620, %v619
        %v624 = vpack.c.b16 %v622, %v621
        %vm627 = vcmask 261120
        %v629 = vsel %vm627, %v607, 0
        %v632 = vsel %vm627, %v608, 0
        %v635 = vsel %vm627, %v609, 0
        %v638 = vsel %vm627, %v610, 0
        %v641 = vsel %vm627, %v611, 0
        %v644 = vsel %vm627, %v612, 0
        %v647 = vsel %vm627, %v613, 0
        %v650 = vsel %vm627, %v614, 0
        %652 = vmatprep.subr.bf16.mxu0 0
        %653 = vmatpush1.bf16.msra.mxu0 %v623
        %654 = vmatprep.subr.bf16.mxu0 0
        %655 = vmatpush1.bf16.msra.mxu0 %v624
        %656 = vmatprep.subr.bf16.mxu0 0
        %657 = vmatpush1.bf16.msra.mxu0 0
        %658 = vmatprep.subr.bf16.mxu0 0
        %659 = vmatpush1.bf16.msra.mxu0 0
        %660 = vmatprep.subr.bf16.mxu0 0
        %661 = vmatpush1.bf16.msra.mxu0 0
        %662 = vmatprep.subr.bf16.mxu0 0
        %663 = vmatpush1.bf16.msra.mxu0 0
        %664 = vmatprep.subr.bf16.mxu0 0
        %665 = vmatpush1.bf16.msra.mxu0 0
        %666 = vmatprep.subr.bf16.mxu0 0
        %667 = vmatpush1.bf16.msra.mxu0 0
        %668 = vmatprep.subr.bf16.mxu0 0
        %669 = vmatpush1.bf16.msra.mxu0 0
        %670 = vmatprep.subr.bf16.mxu0 0
        %671 = vmatpush1.bf16.msra.mxu0 0
        %672 = vmatprep.subr.bf16.mxu0 0
        %673 = vmatpush1.bf16.msra.mxu0 0
        %674 = vmatprep.subr.bf16.mxu0 0
        %675 = vmatpush1.bf16.msra.mxu0 0
        %676 = vmatprep.subr.bf16.mxu0 0
        %677 = vmatpush1.bf16.msra.mxu0 0
        %678 = vmatprep.subr.bf16.mxu0 0
        %679 = vmatpush1.bf16.msra.mxu0 0
        %680 = vmatprep.subr.bf16.mxu0 0
        %681 = vmatpush1.bf16.msra.mxu0 0
        %682 = vmatprep.subr.bf16.mxu0 0
        %683 = vmatpush1.bf16.msra.mxu0 0
        %684 = vmatprep.mubr.bf16.mxu0 0
        %685 = vmatmul.mubr.bf16.gmra.mrb[0].mxu0 %v629
        %v686 = vpop.f32.mrb[0].mxu0
        %v687 = vadd.f32 0.0, %v686
        %v688 = vpop.f32.mrb[0].mxu0
        %v689 = vpop.f32.mrb[0].mxu0
        %v690 = vadd.f32 0.0, %v689
        %v691 = vpop.f32.mrb[0].mxu0
        %692 = vmatprep.mubr.bf16.mxu0 0
        %693 = vmatmul.mubr.bf16.gmra.mrb[0].mxu0 %v632
        %v694 = vpop.f32.mrb[0].mxu0
        %v695 = vadd.f32 0.0, %v694
        %v696 = vpop.f32.mrb[0].mxu0
        %v697 = vpop.f32.mrb[0].mxu0
        %v698 = vadd.f32 0.0, %v697
        %v699 = vpop.f32.mrb[0].mxu0
        %700 = vmatprep.mubr.bf16.mxu0 0
        %701 = vmatmul.mubr.bf16.gmra.mrb[0].mxu0 %v635
        %v702 = vpop.f32.mrb[0].mxu0
        %v703 = vadd.f32 0.0, %v702
        %v704 = vpop.f32.mrb[0].mxu0
        %v705 = vpop.f32.mrb[0].mxu0
        %v706 = vadd.f32 0.0, %v705
        %v707 = vpop.f32.mrb[0].mxu0
        %708 = vmatprep.mubr.bf16.mxu0 0
        %709 = vmatmul.mubr.bf16.gmra.mrb[0].mxu0 %v638
        %v710 = vpop.f32.mrb[0].mxu0
        %v711 = vadd.f32 0.0, %v710
        %v712 = vpop.f32.mrb[0].mxu0
        %v713 = vpop.f32.mrb[0].mxu0
        %v714 = vadd.f32 0.0, %v713
        %v715 = vpop.f32.mrb[0].mxu0
        %716 = vmatprep.mubr.bf16.mxu0 0
        %717 = vmatmul.mubr.bf16.gmra.mrb[0].mxu0 %v641
        %v718 = vpop.f32.mrb[0].mxu0
        %v719 = vadd.f32 0.0, %v718
        %v720 = vpop.f32.mrb[0].mxu0
        %v721 = vpop.f32.mrb[0].mxu0
        %v722 = vadd.f32 0.0, %v721
        %v723 = vpop.f32.mrb[0].mxu0
        %724 = vmatprep.mubr.bf16.mxu0 0
        %725 = vmatmul.mubr.bf16.gmra.mrb[0].mxu0 %v644
        %v726 = vpop.f32.mrb[0].mxu0
        %v727 = vadd.f32 0.0, %v726
        %v728 = vpop.f32.mrb[0].mxu0
        %v729 = vpop.f32.mrb[0].mxu0
        %v730 = vadd.f32 0.0, %v729
        %v731 = vpop.f32.mrb[0].mxu0
        %732 = vmatprep.mubr.bf16.mxu0 0
        %733 = vmatmul.mubr.bf16.gmra.mrb[0].mxu0 %v647
        %v734 = vpop.f32.mrb[0].mxu0
        %v735 = vadd.f32 0.0, %v734
        %v736 = vpop.f32.mrb[0].mxu0
        %v737 = vpop.f32.mrb[0].mxu0
        %v738 = vadd.f32 0.0, %v737
        %v739 = vpop.f32.mrb[0].mxu0
        %740 = vmatprep.mubr.bf16.mxu0 0
        %741 = vmatmul.mubr.bf16.gmra.mrb[0].mxu0 %v650
        %v742 = vpop.f32.mrb[0].mxu0
        %v743 = vadd.f32 0.0, %v742
        %v744 = vpop.f32.mrb[0].mxu0
        %v745 = vpop.f32.mrb[0].mxu0
        %v746 = vadd.f32 0.0, %v745
        %v747 = vpop.f32.mrb[0].mxu0
        %748 = vdwg.mxu0
        %v765 = vunpack.c.l.b16 %v533
        %v766 = vunpack.c.l.b16 %v534
        %v767 = vunpack.c.l.b16 %v535
        %v768 = vunpack.c.l.b16 %v536
        %v769 = vunpack.c.l.b16 %v537
        %v770 = vunpack.c.l.b16 %v538
        %v771 = vunpack.c.l.b16 %v539
        %v772 = vunpack.c.l.b16 %v540
        %v773 = vunpack.c.l.b16 %v541
        %v774 = vunpack.c.l.b16 %v542
        %v775 = vunpack.c.l.b16 %v543
        %v776 = vunpack.c.l.b16 %v544
        %v777 = vunpack.c.l.b16 %v545
        %v778 = vunpack.c.l.b16 %v546
        %v779 = vunpack.c.l.b16 %v547
        %v780 = vunpack.c.l.b16 %v548
        %v781 = vpack.c.b16 %v766, %v765
        %v782 = vpack.c.b16 %v768, %v767
        %v783 = vpack.c.b16 %v770, %v769
        %v784 = vpack.c.b16 %v772, %v771
        %v785 = vpack.c.b16 %v774, %v773
        %v786 = vpack.c.b16 %v776, %v775
        %v787 = vpack.c.b16 %v778, %v777
        %v788 = vpack.c.b16 %v780, %v779
        %v793 = vunpack.c.l.b16 %v549
        %v794 = vunpack.c.l.b16 %v550
        %v795 = vunpack.c.l.b16 %v551
        %v796 = vunpack.c.l.b16 %v552
        %v797 = vpack.c.b16 %v794, %v793
        %v798 = vpack.c.b16 %v796, %v795
        %v802 = vsel %vm627, %v781, 0
        %v805 = vsel %vm627, %v782, 0
        %v808 = vsel %vm627, %v783, 0
        %v811 = vsel %vm627, %v784, 0
        %v814 = vsel %vm627, %v785, 0
        %v817 = vsel %vm627, %v786, 0
        %v820 = vsel %vm627, %v787, 0
        %v823 = vsel %vm627, %v788, 0
        %825 = vmatprep.subr.bf16.mxu0 0
        %826 = vmatpush1.bf16.msra.mxu0 %v797
        %827 = vmatprep.subr.bf16.mxu0 0
        %828 = vmatpush1.bf16.msra.mxu0 %v798
        %829 = vmatprep.subr.bf16.mxu0 0
        %830 = vmatpush1.bf16.msra.mxu0 0
        %831 = vmatprep.subr.bf16.mxu0 0
        %832 = vmatpush1.bf16.msra.mxu0 0
        %833 = vmatprep.subr.bf16.mxu0 0
        %834 = vmatpush1.bf16.msra.mxu0 0
        %835 = vmatprep.subr.bf16.mxu0 0
        %836 = vmatpush1.bf16.msra.mxu0 0
        %837 = vmatprep.subr.bf16.mxu0 0
        %838 = vmatpush1.bf16.msra.mxu0 0
        %839 = vmatprep.subr.bf16.mxu0 0
        %840 = vmatpush1.bf16.msra.mxu0 0
        %841 = vmatprep.subr.bf16.mxu0 0
        %842 = vmatpush1.bf16.msra.mxu0 0
        %843 = vmatprep.subr.bf16.mxu0 0
        %844 = vmatpush1.bf16.msra.mxu0 0
        %845 = vmatprep.subr.bf16.mxu0 0
        %846 = vmatpush1.bf16.msra.mxu0 0
        %847 = vmatprep.subr.bf16.mxu0 0
        %848 = vmatpush1.bf16.msra.mxu0 0
        %849 = vmatprep.subr.bf16.mxu0 0
        %850 = vmatpush1.bf16.msra.mxu0 0
        %851 = vmatprep.subr.bf16.mxu0 0
        %852 = vmatpush1.bf16.msra.mxu0 0
        %853 = vmatprep.subr.bf16.mxu0 0
        %854 = vmatpush1.bf16.msra.mxu0 0
        %855 = vmatprep.subr.bf16.mxu0 0
        %856 = vmatpush1.bf16.msra.mxu0 0
        %857 = vmatprep.mubr.bf16.mxu0 0
        %858 = vmatmul.mubr.bf16.gmra.mrb[0].mxu0 %v802
        %v859 = vpop.f32.mrb[0].mxu0
        %v860 = vadd.f32 %v687, %v859
        %v861 = vpop.f32.mrb[0].mxu0
        %v862 = vpop.f32.mrb[0].mxu0
        %v863 = vadd.f32 %v690, %v862
        %v864 = vpop.f32.mrb[0].mxu0
        %865 = vmatprep.mubr.bf16.mxu0 0
        %866 = vmatmul.mubr.bf16.gmra.mrb[0].mxu0 %v805
        %v867 = vpop.f32.mrb[0].mxu0
        %v868 = vadd.f32 %v695, %v867
        %v869 = vpop.f32.mrb[0].mxu0
        %v870 = vpop.f32.mrb[0].mxu0
        %v871 = vadd.f32 %v698, %v870
        %v872 = vpop.f32.mrb[0].mxu0
        %873 = vmatprep.mubr.bf16.mxu0 0
        %874 = vmatmul.mubr.bf16.gmra.mrb[0].mxu0 %v808
        %v875 = vpop.f32.mrb[0].mxu0
        %v876 = vadd.f32 %v703, %v875
        %v877 = vpop.f32.mrb[0].mxu0
        %v878 = vpop.f32.mrb[0].mxu0
        %v879 = vadd.f32 %v706, %v878
        %v880 = vpop.f32.mrb[0].mxu0
        %881 = vmatprep.mubr.bf16.mxu0 0
        %882 = vmatmul.mubr.bf16.gmra.mrb[0].mxu0 %v811
        %v883 = vpop.f32.mrb[0].mxu0
        %v884 = vadd.f32 %v711, %v883
        %v885 = vpop.f32.mrb[0].mxu0
        %v886 = vpop.f32.mrb[0].mxu0
        %v887 = vadd.f32 %v714, %v886
        %v888 = vpop.f32.mrb[0].mxu0
        %889 = vmatprep.mubr.bf16.mxu0 0
        %890 = vmatmul.mubr.bf16.gmra.mrb[0].mxu0 %v814
        %v891 = vpop.f32.mrb[0].mxu0
        %v892 = vadd.f32 %v719, %v891
        %v893 = vpop.f32.mrb[0].mxu0
        %v894 = vpop.f32.mrb[0].mxu0
        %v895 = vadd.f32 %v722, %v894
        %v896 = vpop.f32.mrb[0].mxu0
        %897 = vmatprep.mubr.bf16.mxu0 0
        %898 = vmatmul.mubr.bf16.gmra.mrb[0].mxu0 %v817
        %v899 = vpop.f32.mrb[0].mxu0
        %v900 = vadd.f32 %v727, %v899
        %v901 = vpop.f32.mrb[0].mxu0
        %v902 = vpop.f32.mrb[0].mxu0
        %v903 = vadd.f32 %v730, %v902
        %v904 = vpop.f32.mrb[0].mxu0
        %905 = vmatprep.mubr.bf16.mxu0 0
        %906 = vmatmul.mubr.bf16.gmra.mrb[0].mxu0 %v820
        %v907 = vpop.f32.mrb[0].mxu0
        %v908 = vadd.f32 %v735, %v907
        %v909 = vpop.f32.mrb[0].mxu0
        %v910 = vpop.f32.mrb[0].mxu0
        %v911 = vadd.f32 %v738, %v910
        %v912 = vpop.f32.mrb[0].mxu0
        %913 = vmatprep.mubr.bf16.mxu0 0
        %914 = vmatmul.mubr.bf16.gmra.mrb[0].mxu0 %v823
        %v915 = vpop.f32.mrb[0].mxu0
        %v916 = vadd.f32 %v743, %v915
        %v917 = vpop.f32.mrb[0].mxu0
        %v918 = vpop.f32.mrb[0].mxu0
        %v919 = vadd.f32 %v746, %v918
        %v920 = vpop.f32.mrb[0].mxu0
        %921 = vdwg.mxu0
        %s922 = scalar_lea.vmem %s529, 128
        %v923 = vld [vmem:[%s922] sm:$0xf]
        %v924 = vld [vmem:[%s922 + $0x4] sm:$0xf]
        %v925 = vld [vmem:[%s922 + $0x8] sm:$0xf]
        %v926 = vld [vmem:[%s922 + $0xc] sm:$0xf]
        %v927 = vld [vmem:[%s922 + $0x10] sm:$0xf]
        %v928 = vld [vmem:[%s922 + $0x14] sm:$0xf]
        %v929 = vld [vmem:[%s922 + $0x18] sm:$0xf]
        %v930 = vld [vmem:[%s922 + $0x1c] sm:$0xf]
        %v931 = vld [vmem:[%s922 + $0x20] sm:$0xf]
        %v932 = vld [vmem:[%s922 + $0x24] sm:$0xf]
        %v933 = vld [vmem:[%s922 + $0x28] sm:$0xf]
        %v934 = vld [vmem:[%s922 + $0x2c] sm:$0xf]
        %v935 = vld [vmem:[%s922 + $0x30] sm:$0xf]
        %v936 = vld [vmem:[%s922 + $0x34] sm:$0xf]
        %v937 = vld [vmem:[%s922 + $0x38] sm:$0xf]
        %v938 = vld [vmem:[%s922 + $0x3c] sm:$0xf]
        %s939 = scalar_lea.vmem %s2, 32
        %v940 = vld [vmem:[%s939] sm:$0xf]
        %v941 = vld [vmem:[%s939 + $0x4] sm:$0xf]
        %v942 = vld [vmem:[%s939 + $0x8] sm:$0xf]
        %v943 = vld [vmem:[%s939 + $0xc] sm:$0xf]
        %v960 = vunpack.c.l.b16 %v923
        %v961 = vunpack.c.l.b16 %v924
        %v962 = vunpack.c.l.b16 %v925
        %v963 = vunpack.c.l.b16 %v926
        %v964 = vunpack.c.l.b16 %v927
        %v965 = vunpack.c.l.b16 %v928
        %v966 = vunpack.c.l.b16 %v929
        %v967 = vunpack.c.l.b16 %v930
        %v968 = vunpack.c.l.b16 %v931
        %v969 = vunpack.c.l.b16 %v932
        %v970 = vunpack.c.l.b16 %v933
        %v971 = vunpack.c.l.b16 %v934
        %v972 = vunpack.c.l.b16 %v935
        %v973 = vunpack.c.l.b16 %v936
        %v974 = vunpack.c.l.b16 %v937
        %v975 = vunpack.c.l.b16 %v938
        %v976 = vpack.c.b16 %v961, %v960
        %v977 = vpack.c.b16 %v963, %v962
        %v978 = vpack.c.b16 %v965, %v964
        %v979 = vpack.c.b16 %v967, %v966
        %v980 = vpack.c.b16 %v969, %v968
        %v981 = vpack.c.b16 %v971, %v970
        %v982 = vpack.c.b16 %v973, %v972
        %v983 = vpack.c.b16 %v975, %v974
        %v988 = vunpack.c.l.b16 %v940
        %v989 = vunpack.c.l.b16 %v941
        %v990 = vunpack.c.l.b16 %v942
        %v991 = vunpack.c.l.b16 %v943
        %v992 = vpack.c.b16 %v989, %v988
        %v993 = vpack.c.b16 %v991, %v990
        %v997 = vsel %vm627, %v976, 0
        %v1000 = vsel %vm627, %v977, 0
        %v1003 = vsel %vm627, %v978, 0
        %v1006 = vsel %vm627, %v979, 0
        %v1009 = vsel %vm627, %v980, 0
        %v1012 = vsel %vm627, %v981, 0
        %v1015 = vsel %vm627, %v982, 0
        %v1018 = vsel %vm627, %v983, 0
        %1020 = vmatprep.subr.bf16.mxu0 0
        %1021 = vmatpush1.bf16.msra.mxu0 %v992
        %1022 = vmatprep.subr.bf16.mxu0 0
        %1023 = vmatpush1.bf16.msra.mxu0 %v993
        %1024 = vmatprep.subr.bf16.mxu0 0
        %1025 = vmatpush1.bf16.msra.mxu0 0
        %1026 = vmatprep.subr.bf16.mxu0 0
        %1027 = vmatpush1.bf16.msra.mxu0 0
        %1028 = vmatprep.subr.bf16.mxu0 0
        %1029 = vmatpush1.bf16.msra.mxu0 0
        %1030 = vmatprep.subr.bf16.mxu0 0
        %1031 = vmatpush1.bf16.msra.mxu0 0
        %1032 = vmatprep.subr.bf16.mxu0 0
        %1033 = vmatpush1.bf16.msra.mxu0 0
        %1034 = vmatprep.subr.bf16.mxu0 0
        %1035 = vmatpush1.bf16.msra.mxu0 0
        %1036 = vmatprep.subr.bf16.mxu0 0
        %1037 = vmatpush1.bf16.msra.mxu0 0
        %1038 = vmatprep.subr.bf16.mxu0 0
        %1039 = vmatpush1.bf16.msra.mxu0 0
        %1040 = vmatprep.subr.bf16.mxu0 0
        %1041 = vmatpush1.bf16.msra.mxu0 0
        %1042 = vmatprep.subr.bf16.mxu0 0
        %1043 = vmatpush1.bf16.msra.mxu0 0
        %1044 = vmatprep.subr.bf16.mxu0 0
        %1045 = vmatpush1.bf16.msra.mxu0 0
        %1046 = vmatprep.subr.bf16.mxu0 0
        %1047 = vmatpush1.bf16.msra.mxu0 0
        %1048 = vmatprep.subr.bf16.mxu0 0
        %1049 = vmatpush1.bf16.msra.mxu0 0
        %1050 = vmatprep.subr.bf16.mxu0 0
        %1051 = vmatpush1.bf16.msra.mxu0 0
        %1052 = vmatprep.mubr.bf16.mxu0 0
        %1053 = vmatmul.mubr.bf16.gmra.mrb[0].mxu0 %v997
        %v1054 = vpop.f32.mrb[0].mxu0
        %v1055 = vadd.f32 0.0, %v1054
        %v1056 = vpop.f32.mrb[0].mxu0
        %v1057 = vpop.f32.mrb[0].mxu0
        %v1058 = vadd.f32 0.0, %v1057
        %v1059 = vpop.f32.mrb[0].mxu0
        %1060 = vmatprep.mubr.bf16.mxu0 0
        %1061 = vmatmul.mubr.bf16.gmra.mrb[0].mxu0 %v1000
        %v1062 = vpop.f32.mrb[0].mxu0
        %v1063 = vadd.f32 0.0, %v1062
        %v1064 = vpop.f32.mrb[0].mxu0
        %v1065 = vpop.f32.mrb[0].mxu0
        %v1066 = vadd.f32 0.0, %v1065
        %v1067 = vpop.f32.mrb[0].mxu0
        %1068 = vmatprep.mubr.bf16.mxu0 0
        %1069 = vmatmul.mubr.bf16.gmra.mrb[0].mxu0 %v1003
        %v1070 = vpop.f32.mrb[0].mxu0
        %v1071 = vadd.f32 0.0, %v1070
        %v1072 = vpop.f32.mrb[0].mxu0
        %v1073 = vpop.f32.mrb[0].mxu0
        %v1074 = vadd.f32 0.0, %v1073
        %v1075 = vpop.f32.mrb[0].mxu0
        %1076 = vmatprep.mubr.bf16.mxu0 0
        %1077 = vmatmul.mubr.bf16.gmra.mrb[0].mxu0 %v1006
        %v1078 = vpop.f32.mrb[0].mxu0
        %v1079 = vadd.f32 0.0, %v1078
        %v1080 = vpop.f32.mrb[0].mxu0
        %v1081 = vpop.f32.mrb[0].mxu0
        %v1082 = vadd.f32 0.0, %v1081
        %v1083 = vpop.f32.mrb[0].mxu0
        %1084 = vmatprep.mubr.bf16.mxu0 0
        %1085 = vmatmul.mubr.bf16.gmra.mrb[0].mxu0 %v1009
        %v1086 = vpop.f32.mrb[0].mxu0
        %v1087 = vadd.f32 0.0, %v1086
        %v1088 = vpop.f32.mrb[0].mxu0
        %v1089 = vpop.f32.mrb[0].mxu0
        %v1090 = vadd.f32 0.0, %v1089
        %v1091 = vpop.f32.mrb[0].mxu0
        %1092 = vmatprep.mubr.bf16.mxu0 0
        %1093 = vmatmul.mubr.bf16.gmra.mrb[0].mxu0 %v1012
        %v1094 = vpop.f32.mrb[0].mxu0
        %v1095 = vadd.f32 0.0, %v1094
        %v1096 = vpop.f32.mrb[0].mxu0
        %v1097 = vpop.f32.mrb[0].mxu0
        %v1098 = vadd.f32 0.0, %v1097
        %v1099 = vpop.f32.mrb[0].mxu0
        %1100 = vmatprep.mubr.bf16.mxu0 0
        %1101 = vmatmul.mubr.bf16.gmra.mrb[0].mxu0 %v1015
        %v1102 = vpop.f32.mrb[0].mxu0
        %v1103 = vadd.f32 0.0, %v1102
        %v1104 = vpop.f32.mrb[0].mxu0
        %v1105 = vpop.f32.mrb[0].mxu0
        %v1106 = vadd.f32 0.0, %v1105
        %v1107 = vpop.f32.mrb[0].mxu0
        %1108 = vmatprep.mubr.bf16.mxu0 0
        %1109 = vmatmul.mubr.bf16.gmra.mrb[0].mxu0 %v1018
        %v1110 = vpop.f32.mrb[0].mxu0
        %v1111 = vadd.f32 0.0, %v1110
        %v1112 = vpop.f32.mrb[0].mxu0
        %v1113 = vpop.f32.mrb[0].mxu0
        %v1114 = vadd.f32 0.0, %v1113
        %v1115 = vpop.f32.mrb[0].mxu0
        %1116 = vdwg.mxu0
        %v1117 = vadd.f32 %v860, %v1055
        %v1118 = vadd.f32 %v863, %v1058
        %v1119 = vadd.f32 %v868, %v1063
        %v1120 = vadd.f32 %v871, %v1066
        %v1121 = vadd.f32 %v876, %v1071
        %v1122 = vadd.f32 %v879, %v1074
        %v1123 = vadd.f32 %v884, %v1079
        %v1124 = vadd.f32 %v887, %v1082
        %v1125 = vadd.f32 %v892, %v1087
        %v1126 = vadd.f32 %v895, %v1090
        %v1127 = vadd.f32 %v900, %v1095
        %v1128 = vadd.f32 %v903, %v1098
        %v1129 = vadd.f32 %v908, %v1103
        %v1130 = vadd.f32 %v911, %v1106
        %v1131 = vadd.f32 %v916, %v1111
        %v1132 = vadd.f32 %v919, %v1114
        %s1133 = scalar_lea.vmem %s529, 192
        %v1134 = vld [vmem:[%s1133] sm:$0xf]
        %v1135 = vld [vmem:[%s1133 + $0x4] sm:$0xf]
        %v1136 = vld [vmem:[%s1133 + $0x8] sm:$0xf]
        %v1137 = vld [vmem:[%s1133 + $0xc] sm:$0xf]
        %v1138 = vld [vmem:[%s1133 + $0x10] sm:$0xf]
        %v1139 = vld [vmem:[%s1133 + $0x14] sm:$0xf]
        %v1140 = vld [vmem:[%s1133 + $0x18] sm:$0xf]
        %v1141 = vld [vmem:[%s1133 + $0x1c] sm:$0xf]
        %v1142 = vld [vmem:[%s1133 + $0x20] sm:$0xf]
        %v1143 = vld [vmem:[%s1133 + $0x24] sm:$0xf]
        %v1144 = vld [vmem:[%s1133 + $0x28] sm:$0xf]
        %v1145 = vld [vmem:[%s1133 + $0x2c] sm:$0xf]
        %v1146 = vld [vmem:[%s1133 + $0x30] sm:$0xf]
        %v1147 = vld [vmem:[%s1133 + $0x34] sm:$0xf]
        %v1148 = vld [vmem:[%s1133 + $0x38] sm:$0xf]
        %v1149 = vld [vmem:[%s1133 + $0x3c] sm:$0xf]
        %s1150 = scalar_lea.vmem %s2, 48
        %v1151 = vld [vmem:[%s1150] sm:$0xf]
        %v1152 = vld [vmem:[%s1150 + $0x4] sm:$0xf]
        %v1153 = vld [vmem:[%s1150 + $0x8] sm:$0xf]
        %v1154 = vld [vmem:[%s1150 + $0xc] sm:$0xf]
        %v1171 = vunpack.c.l.b16 %v1134
        %v1172 = vunpack.c.l.b16 %v1135
        %v1173 = vunpack.c.l.b16 %v1136
        %v1174 = vunpack.c.l.b16 %v1137
        %v1175 = vunpack.c.l.b16 %v1138
        %v1176 = vunpack.c.l.b16 %v1139
        %v1177 = vunpack.c.l.b16 %v1140
        %v1178 = vunpack.c.l.b16 %v1141
        %v1179 = vunpack.c.l.b16 %v1142
        %v1180 = vunpack.c.l.b16 %v1143
        %v1181 = vunpack.c.l.b16 %v1144
        %v1182 = vunpack.c.l.b16 %v1145
        %v1183 = vunpack.c.l.b16 %v1146
        %v1184 = vunpack.c.l.b16 %v1147
        %v1185 = vunpack.c.l.b16 %v1148
        %v1186 = vunpack.c.l.b16 %v1149
        %v1187 = vpack.c.b16 %v1172, %v1171
        %v1188 = vpack.c.b16 %v1174, %v1173
        %v1189 = vpack.c.b16 %v1176, %v1175
        %v1190 = vpack.c.b16 %v1178, %v1177
        %v1191 = vpack.c.b16 %v1180, %v1179
        %v1192 = vpack.c.b16 %v1182, %v1181
        %v1193 = vpack.c.b16 %v1184, %v1183
        %v1194 = vpack.c.b16 %v1186, %v1185
        %v1199 = vunpack.c.l.b16 %v1151
        %v1200 = vunpack.c.l.b16 %v1152
        %v1201 = vunpack.c.l.b16 %v1153
        %v1202 = vunpack.c.l.b16 %v1154
        %v1203 = vpack.c.b16 %v1200, %v1199
        %v1204 = vpack.c.b16 %v1202, %v1201
        %v1208 = vsel %vm627, %v1187, 0
        %v1211 = vsel %vm627, %v1188, 0
        %v1214 = vsel %vm627, %v1189, 0
        %v1217 = vsel %vm627, %v1190, 0
        %v1220 = vsel %vm627, %v1191, 0
        %v1223 = vsel %vm627, %v1192, 0
        %v1226 = vsel %vm627, %v1193, 0
        %v1229 = vsel %vm627, %v1194, 0
        %1231 = vmatprep.subr.bf16.mxu0 0
        %1232 = vmatpush1.bf16.msra.mxu0 %v1203
        %1233 = vmatprep.subr.bf16.mxu0 0
        %1234 = vmatpush1.bf16.msra.mxu0 %v1204
        %1235 = vmatprep.subr.bf16.mxu0 0
        %1236 = vmatpush1.bf16.msra.mxu0 0
        %1237 = vmatprep.subr.bf16.mxu0 0
        %1238 = vmatpush1.bf16.msra.mxu0 0
        %1239 = vmatprep.subr.bf16.mxu0 0
        %1240 = vmatpush1.bf16.msra.mxu0 0
        %1241 = vmatprep.subr.bf16.mxu0 0
        %1242 = vmatpush1.bf16.msra.mxu0 0
        %1243 = vmatprep.subr.bf16.mxu0 0
        %1244 = vmatpush1.bf16.msra.mxu0 0
        %1245 = vmatprep.subr.bf16.mxu0 0
        %1246 = vmatpush1.bf16.msra.mxu0 0
        %1247 = vmatprep.subr.bf16.mxu0 0
        %1248 = vmatpush1.bf16.msra.mxu0 0
        %1249 = vmatprep.subr.bf16.mxu0 0
        %1250 = vmatpush1.bf16.msra.mxu0 0
        %1251 = vmatprep.subr.bf16.mxu0 0
        %1252 = vmatpush1.bf16.msra.mxu0 0
        %1253 = vmatprep.subr.bf16.mxu0 0
        %1254 = vmatpush1.bf16.msra.mxu0 0
        %1255 = vmatprep.subr.bf16.mxu0 0
        %1256 = vmatpush1.bf16.msra.mxu0 0
        %1257 = vmatprep.subr.bf16.mxu0 0
        %1258 = vmatpush1.bf16.msra.mxu0 0
        %1259 = vmatprep.subr.bf16.mxu0 0
        %1260 = vmatpush1.bf16.msra.mxu0 0
        %1261 = vmatprep.subr.bf16.mxu0 0
        %1262 = vmatpush1.bf16.msra.mxu0 0
        %1263 = vmatprep.mubr.bf16.mxu0 0
        %1264 = vmatmul.mubr.bf16.gmra.mrb[0].mxu0 %v1208
        %v1265 = vpop.f32.mrb[0].mxu0
        %v1266 = vadd.f32 0.0, %v1265
        %v1267 = vpop.f32.mrb[0].mxu0
        %v1268 = vpop.f32.mrb[0].mxu0
        %v1269 = vadd.f32 0.0, %v1268
        %v1270 = vpop.f32.mrb[0].mxu0
        %1271 = vmatprep.mubr.bf16.mxu0 0
        %1272 = vmatmul.mubr.bf16.gmra.mrb[0].mxu0 %v1211
        %v1273 = vpop.f32.mrb[0].mxu0
        %v1274 = vadd.f32 0.0, %v1273
        %v1275 = vpop.f32.mrb[0].mxu0
        %v1276 = vpop.f32.mrb[0].mxu0
        %v1277 = vadd.f32 0.0, %v1276
        %v1278 = vpop.f32.mrb[0].mxu0
        %1279 = vmatprep.mubr.bf16.mxu0 0
        %1280 = vmatmul.mubr.bf16.gmra.mrb[0].mxu0 %v1214
        %v1281 = vpop.f32.mrb[0].mxu0
        %v1282 = vadd.f32 0.0, %v1281
        %v1283 = vpop.f32.mrb[0].mxu0
        %v1284 = vpop.f32.mrb[0].mxu0
        %v1285 = vadd.f32 0.0, %v1284
        %v1286 = vpop.f32.mrb[0].mxu0
        %1287 = vmatprep.mubr.bf16.mxu0 0
        %1288 = vmatmul.mubr.bf16.gmra.mrb[0].mxu0 %v1217
        %v1289 = vpop.f32.mrb[0].mxu0
        %v1290 = vadd.f32 0.0, %v1289
        %v1291 = vpop.f32.mrb[0].mxu0
        %v1292 = vpop.f32.mrb[0].mxu0
        %v1293 = vadd.f32 0.0, %v1292
        %v1294 = vpop.f32.mrb[0].mxu0
        %1295 = vmatprep.mubr.bf16.mxu0 0
        %1296 = vmatmul.mubr.bf16.gmra.mrb[0].mxu0 %v1220
        %v1297 = vpop.f32.mrb[0].mxu0
        %v1298 = vadd.f32 0.0, %v1297
        %v1299 = vpop.f32.mrb[0].mxu0
        %v1300 = vpop.f32.mrb[0].mxu0
        %v1301 = vadd.f32 0.0, %v1300
        %v1302 = vpop.f32.mrb[0].mxu0
        %1303 = vmatprep.mubr.bf16.mxu0 0
        %1304 = vmatmul.mubr.bf16.gmra.mrb[0].mxu0 %v1223
        %v1305 = vpop.f32.mrb[0].mxu0
        %v1306 = vadd.f32 0.0, %v1305
        %v1307 = vpop.f32.mrb[0].mxu0
        %v1308 = vpop.f32.mrb[0].mxu0
        %v1309 = vadd.f32 0.0, %v1308
        %v1310 = vpop.f32.mrb[0].mxu0
        %1311 = vmatprep.mubr.bf16.mxu0 0
        %1312 = vmatmul.mubr.bf16.gmra.mrb[0].mxu0 %v1226
        %v1313 = vpop.f32.mrb[0].mxu0
        %v1314 = vadd.f32 0.0, %v1313
        %v1315 = vpop.f32.mrb[0].mxu0
        %v1316 = vpop.f32.mrb[0].mxu0
        %v1317 = vadd.f32 0.0, %v1316
        %v1318 = vpop.f32.mrb[0].mxu0
        %1319 = vmatprep.mubr.bf16.mxu0 0
        %1320 = vmatmul.mubr.bf16.gmra.mrb[0].mxu0 %v1229
        %v1321 = vpop.f32.mrb[0].mxu0
        %v1322 = vadd.f32 0.0, %v1321
        %v1323 = vpop.f32.mrb[0].mxu0
        %v1324 = vpop.f32.mrb[0].mxu0
        %v1325 = vadd.f32 0.0, %v1324
        %v1326 = vpop.f32.mrb[0].mxu0
        %1327 = vdwg.mxu0
        %v1328 = vadd.f32 %v1117, %v1266
        %v1329 = vadd.f32 %v1118, %v1269
        %v1330 = vadd.f32 %v1119, %v1274
        %v1331 = vadd.f32 %v1120, %v1277
        %v1332 = vadd.f32 %v1121, %v1282
        %v1333 = vadd.f32 %v1122, %v1285
        %v1334 = vadd.f32 %v1123, %v1290
        %v1335 = vadd.f32 %v1124, %v1293
        %v1336 = vadd.f32 %v1125, %v1298
        %v1337 = vadd.f32 %v1126, %v1301
        %v1338 = vadd.f32 %v1127, %v1306
        %v1339 = vadd.f32 %v1128, %v1309
        %v1340 = vadd.f32 %v1129, %v1314
        %v1341 = vadd.f32 %v1130, %v1317
        %v1342 = vadd.f32 %v1131, %v1322
        %v1343 = vadd.f32 %v1132, %v1325
        %v1344 = vld [vmem:[%s475] sm:$0xff]
        %v1345 = vld [vmem:[%s475 + $0x8] sm:$0xff]
        %v1346 = vld [vmem:[%s475 + $0x10] sm:$0xff]
        %v1347 = vld [vmem:[%s475 + $0x18] sm:$0xff]
        %v1348 = vld [vmem:[%s475 + $0x20] sm:$0xff]
        %v1349 = vld [vmem:[%s475 + $0x28] sm:$0xff]
        %v1350 = vld [vmem:[%s475 + $0x30] sm:$0xff]
        %v1351 = vld [vmem:[%s475 + $0x38] sm:$0xff]
        %v1352 = vld [vmem:[%s475 + $0x40] sm:$0xff]
        %v1353 = vld [vmem:[%s475 + $0x48] sm:$0xff]
        %v1354 = vld [vmem:[%s475 + $0x50] sm:$0xff]
        %v1355 = vld [vmem:[%s475 + $0x58] sm:$0xff]
        %v1356 = vld [vmem:[%s475 + $0x60] sm:$0xff]
        %v1357 = vld [vmem:[%s475 + $0x68] sm:$0xff]
        %v1358 = vld [vmem:[%s475 + $0x70] sm:$0xff]
        %v1359 = vld [vmem:[%s475 + $0x78] sm:$0xff]
        %v1360 = vadd.f32 %v1344, %v1328
        %v1361 = vadd.f32 %v1345, %v1329
        %v1362 = vadd.f32 %v1346, %v1330
        %v1363 = vadd.f32 %v1347, %v1331
        %v1364 = vadd.f32 %v1348, %v1332
        %v1365 = vadd.f32 %v1349, %v1333
        %v1366 = vadd.f32 %v1350, %v1334
        %v1367 = vadd.f32 %v1351, %v1335
        %v1368 = vadd.f32 %v1352, %v1336
        %v1369 = vadd.f32 %v1353, %v1337
        %v1370 = vadd.f32 %v1354, %v1338
        %v1371 = vadd.f32 %v1355, %v1339
        %v1372 = vadd.f32 %v1356, %v1340
        %v1373 = vadd.f32 %v1357, %v1341
        %v1374 = vadd.f32 %v1358, %v1342
        %v1375 = vadd.f32 %v1359, %v1343
        %v1376 = vld [vmem:[%s3] sm:$0x1]
        %v1377 = vld [vmem:[%s4] sm:$0x1]
        %1378 = vadd.xlane.f32.xlu0 %v1360
        %v1379 = vpop.xlane.xlu0 %1378
        %1380 = vadd.xlane.f32.xlu0 %v1361
        %v1381 = vpop.xlane.xlu0 %1380
        %1382 = vadd.xlane.f32.xlu0 %v1362
        %v1383 = vpop.xlane.xlu0 %1382
        %1384 = vadd.xlane.f32.xlu0 %v1363
        %v1385 = vpop.xlane.xlu0 %1384
        %1386 = vadd.xlane.f32.xlu0 %v1364
        %v1387 = vpop.xlane.xlu0 %1386
        %1388 = vadd.xlane.f32.xlu0 %v1365
        %v1389 = vpop.xlane.xlu0 %1388
        %1390 = vadd.xlane.f32.xlu0 %v1366
        %v1391 = vpop.xlane.xlu0 %1390
        %1392 = vadd.xlane.f32.xlu0 %v1367
        %v1393 = vpop.xlane.xlu0 %1392
        %1394 = vadd.xlane.f32.xlu0 %v1368
        %v1395 = vpop.xlane.xlu0 %1394
        %1396 = vadd.xlane.f32.xlu0 %v1369
        %v1397 = vpop.xlane.xlu0 %1396
        %1398 = vadd.xlane.f32.xlu0 %v1370
        %v1399 = vpop.xlane.xlu0 %1398
        %1400 = vadd.xlane.f32.xlu0 %v1371
        %v1401 = vpop.xlane.xlu0 %1400
        %1402 = vadd.xlane.f32.xlu0 %v1372
        %v1403 = vpop.xlane.xlu0 %1402
        %1404 = vadd.xlane.f32.xlu0 %v1373
        %v1405 = vpop.xlane.xlu0 %1404
        %1406 = vadd.xlane.f32.xlu0 %v1374
        %v1407 = vpop.xlane.xlu0 %1406
        %1408 = vadd.xlane.f32.xlu0 %v1375
        %v1409 = vpop.xlane.xlu0 %1408
        %v1410 = vrcp.pop 128.0
        %v1411 = vmul.f32 %v1379, %v1410
        %v1412 = vmul.f32 %v1381, %v1410
        %v1413 = vmul.f32 %v1383, %v1410
        %v1414 = vmul.f32 %v1385, %v1410
        %v1415 = vmul.f32 %v1387, %v1410
        %v1416 = vmul.f32 %v1389, %v1410
        %v1417 = vmul.f32 %v1391, %v1410
        %v1418 = vmul.f32 %v1393, %v1410
        %v1419 = vmul.f32 %v1395, %v1410
        %v1420 = vmul.f32 %v1397, %v1410
        %v1421 = vmul.f32 %v1399, %v1410
        %v1422 = vmul.f32 %v1401, %v1410
        %v1423 = vmul.f32 %v1403, %v1410
        %v1424 = vmul.f32 %v1405, %v1410
        %v1425 = vmul.f32 %v1407, %v1410
        %v1426 = vmul.f32 %v1409, %v1410
        %v1427 = vsub.f32 %v1360, %v1411
        %v1428 = vsub.f32 %v1361, %v1412
        %v1429 = vsub.f32 %v1362, %v1413
        %v1430 = vsub.f32 %v1363, %v1414
        %v1431 = vsub.f32 %v1364, %v1415
        %v1432 = vsub.f32 %v1365, %v1416
        %v1433 = vsub.f32 %v1366, %v1417
        %v1434 = vsub.f32 %v1367, %v1418
        %v1435 = vsub.f32 %v1368, %v1419
        %v1436 = vsub.f32 %v1369, %v1420
        %v1437 = vsub.f32 %v1370, %v1421
        %v1438 = vsub.f32 %v1371, %v1422
        %v1439 = vsub.f32 %v1372, %v1423
        %v1440 = vsub.f32 %v1373, %v1424
        %v1441 = vsub.f32 %v1374, %v1425
        %v1442 = vsub.f32 %v1375, %v1426
        %v1443 = vmul.f32 %v1427, %v1427
        %v1444 = vmul.f32 %v1428, %v1428
        %v1445 = vmul.f32 %v1429, %v1429
        %v1446 = vmul.f32 %v1430, %v1430
        %v1447 = vmul.f32 %v1431, %v1431
        %v1448 = vmul.f32 %v1432, %v1432
        %v1449 = vmul.f32 %v1433, %v1433
        %v1450 = vmul.f32 %v1434, %v1434
        %v1451 = vmul.f32 %v1435, %v1435
        %v1452 = vmul.f32 %v1436, %v1436
        %v1453 = vmul.f32 %v1437, %v1437
        %v1454 = vmul.f32 %v1438, %v1438
        %v1455 = vmul.f32 %v1439, %v1439
        %v1456 = vmul.f32 %v1440, %v1440
        %v1457 = vmul.f32 %v1441, %v1441
        %v1458 = vmul.f32 %v1442, %v1442
        %1459 = vadd.xlane.f32.xlu0 %v1443
        %v1460 = vpop.xlane.xlu0 %1459
        %1461 = vadd.xlane.f32.xlu0 %v1444
        %v1462 = vpop.xlane.xlu0 %1461
        %1463 = vadd.xlane.f32.xlu0 %v1445
        %v1464 = vpop.xlane.xlu0 %1463
        %1465 = vadd.xlane.f32.xlu0 %v1446
        %v1466 = vpop.xlane.xlu0 %1465
        %1467 = vadd.xlane.f32.xlu0 %v1447
        %v1468 = vpop.xlane.xlu0 %1467
        %1469 = vadd.xlane.f32.xlu0 %v1448
        %v1470 = vpop.xlane.xlu0 %1469
        %1471 = vadd.xlane.f32.xlu0 %v1449
        %v1472 = vpop.xlane.xlu0 %1471
        %1473 = vadd.xlane.f32.xlu0 %v1450
        %v1474 = vpop.xlane.xlu0 %1473
        %1475 = vadd.xlane.f32.xlu0 %v1451
        %v1476 = vpop.xlane.xlu0 %1475
        %1477 = vadd.xlane.f32.xlu0 %v1452
        %v1478 = vpop.xlane.xlu0 %1477
        %1479 = vadd.xlane.f32.xlu0 %v1453
        %v1480 = vpop.xlane.xlu0 %1479
        %1481 = vadd.xlane.f32.xlu0 %v1454
        %v1482 = vpop.xlane.xlu0 %1481
        %1483 = vadd.xlane.f32.xlu0 %v1455
        %v1484 = vpop.xlane.xlu0 %1483
        %1485 = vadd.xlane.f32.xlu0 %v1456
        %v1486 = vpop.xlane.xlu0 %1485
        %1487 = vadd.xlane.f32.xlu0 %v1457
        %v1488 = vpop.xlane.xlu0 %1487
        %1489 = vadd.xlane.f32.xlu0 %v1458
        %v1490 = vpop.xlane.xlu0 %1489
        %v1491 = vmul.f32 %v1460, %v1410
        %v1492 = vmul.f32 %v1462, %v1410
        %v1493 = vmul.f32 %v1464, %v1410
        %v1494 = vmul.f32 %v1466, %v1410
        %v1495 = vmul.f32 %v1468, %v1410
        %v1496 = vmul.f32 %v1470, %v1410
        %v1497 = vmul.f32 %v1472, %v1410
        %v1498 = vmul.f32 %v1474, %v1410
        %v1499 = vmul.f32 %v1476, %v1410
        %v1500 = vmul.f32 %v1478, %v1410
        %v1501 = vmul.f32 %v1480, %v1410
        %v1502 = vmul.f32 %v1482, %v1410
        %v1503 = vmul.f32 %v1484, %v1410
        %v1504 = vmul.f32 %v1486, %v1410
        %v1505 = vmul.f32 %v1488, %v1410
        %v1506 = vmul.f32 %v1490, %v1410
        %v1507 = vadd.f32 %v1491, 1e-05
        %v1508 = vadd.f32 %v1492, 1e-05
        %v1509 = vadd.f32 %v1493, 1e-05
        %v1510 = vadd.f32 %v1494, 1e-05
        %v1511 = vadd.f32 %v1495, 1e-05
        %v1512 = vadd.f32 %v1496, 1e-05
        %v1513 = vadd.f32 %v1497, 1e-05
        %v1514 = vadd.f32 %v1498, 1e-05
        %v1515 = vadd.f32 %v1499, 1e-05
        %v1516 = vadd.f32 %v1500, 1e-05
        %v1517 = vadd.f32 %v1501, 1e-05
        %v1518 = vadd.f32 %v1502, 1e-05
        %v1519 = vadd.f32 %v1503, 1e-05
        %v1520 = vadd.f32 %v1504, 1e-05
        %v1521 = vadd.f32 %v1505, 1e-05
        %v1522 = vadd.f32 %v1506, 1e-05
        %v1523 = vrsqrt.pop %v1507
        %v1524 = vrsqrt.pop %v1508
        %v1525 = vrsqrt.pop %v1509
        %v1526 = vrsqrt.pop %v1510
        %v1527 = vrsqrt.pop %v1511
        %v1528 = vrsqrt.pop %v1512
        %v1529 = vrsqrt.pop %v1513
        %v1530 = vrsqrt.pop %v1514
        %v1531 = vrsqrt.pop %v1515
        %v1532 = vrsqrt.pop %v1516
        %v1533 = vrsqrt.pop %v1517
        %v1534 = vrsqrt.pop %v1518
        %v1535 = vrsqrt.pop %v1519
        %v1536 = vrsqrt.pop %v1520
        %v1537 = vrsqrt.pop %v1521
        %v1538 = vrsqrt.pop %v1522
        %v1539 = vmul.f32 %v1427, %v1523
        %v1540 = vmul.f32 %v1428, %v1524
        %v1541 = vmul.f32 %v1429, %v1525
        %v1542 = vmul.f32 %v1430, %v1526
        %v1543 = vmul.f32 %v1431, %v1527
        %v1544 = vmul.f32 %v1432, %v1528
        %v1545 = vmul.f32 %v1433, %v1529
        %v1546 = vmul.f32 %v1434, %v1530
        %v1547 = vmul.f32 %v1435, %v1531
        %v1548 = vmul.f32 %v1436, %v1532
        %v1549 = vmul.f32 %v1437, %v1533
        %v1550 = vmul.f32 %v1438, %v1534
        %v1551 = vmul.f32 %v1439, %v1535
        %v1552 = vmul.f32 %v1440, %v1536
        %v1553 = vmul.f32 %v1441, %v1537
        %v1554 = vmul.f32 %v1442, %v1538
        %v1556 = vlaneseq
        %v1557 = vshrl.u32 %v1556, 7
        %v1558 = vsub.s32 0, %v1557
        %v1559 = vrot.slane %v1376, %v1558
        %v1561 = vmul.f32 %v1539, %v1559
        %v1562 = vmul.f32 %v1540, %v1559
        %v1563 = vmul.f32 %v1541, %v1559
        %v1564 = vmul.f32 %v1542, %v1559
        %v1565 = vmul.f32 %v1543, %v1559
        %v1566 = vmul.f32 %v1544, %v1559
        %v1567 = vmul.f32 %v1545, %v1559
        %v1568 = vmul.f32 %v1546, %v1559
        %v1569 = vmul.f32 %v1547, %v1559
        %v1570 = vmul.f32 %v1548, %v1559
        %v1571 = vmul.f32 %v1549, %v1559
        %v1572 = vmul.f32 %v1550, %v1559
        %v1573 = vmul.f32 %v1551, %v1559
        %v1574 = vmul.f32 %v1552, %v1559
        %v1575 = vmul.f32 %v1553, %v1559
        %v1576 = vmul.f32 %v1554, %v1559
        %v1578 = vlaneseq
        %v1579 = vshrl.u32 %v1578, 7
        %v1580 = vsub.s32 0, %v1579
        %v1581 = vrot.slane %v1377, %v1580
        %v1583 = vadd.f32 %v1561, %v1581
        %v1584 = vadd.f32 %v1562, %v1581
        %v1585 = vadd.f32 %v1563, %v1581
        %v1586 = vadd.f32 %v1564, %v1581
        %v1587 = vadd.f32 %v1565, %v1581
        %v1588 = vadd.f32 %v1566, %v1581
        %v1589 = vadd.f32 %v1567, %v1581
        %v1590 = vadd.f32 %v1568, %v1581
        %v1591 = vadd.f32 %v1569, %v1581
        %v1592 = vadd.f32 %v1570, %v1581
        %v1593 = vadd.f32 %v1571, %v1581
        %v1594 = vadd.f32 %v1572, %v1581
        %v1595 = vadd.f32 %v1573, %v1581
        %v1596 = vadd.f32 %v1574, %v1581
        %v1597 = vadd.f32 %v1575, %v1581
        %v1598 = vadd.f32 %v1576, %v1581
        %v1599 = vpack.c.bf16 %v1584, %v1583
        %v1600 = vpack.c.bf16 %v1586, %v1585
        %v1601 = vpack.c.bf16 %v1588, %v1587
        %v1602 = vpack.c.bf16 %v1590, %v1589
        %v1603 = vpack.c.bf16 %v1592, %v1591
        %v1604 = vpack.c.bf16 %v1594, %v1593
        %v1605 = vpack.c.bf16 %v1596, %v1595
        %v1606 = vpack.c.bf16 %v1598, %v1597
        %v1607 = vld [vmem:[%s5] sm:$0xf]
        %v1608 = vld [vmem:[%s5 + $0x4] sm:$0xf]
        %v1609 = vld [vmem:[%s5 + $0x8] sm:$0xf]
        %v1610 = vld [vmem:[%s5 + $0xc] sm:$0xf]
        %v1611 = vld [vmem:[%s5 + $0x10] sm:$0xf]
        %v1612 = vld [vmem:[%s5 + $0x14] sm:$0xf]
        %v1613 = vld [vmem:[%s5 + $0x18] sm:$0xf]
        %v1614 = vld [vmem:[%s5 + $0x1c] sm:$0xf]
        %v1615 = vld [vmem:[%s5 + $0x20] sm:$0xf]
        %v1616 = vld [vmem:[%s5 + $0x24] sm:$0xf]
        %v1617 = vld [vmem:[%s5 + $0x28] sm:$0xf]
        %v1618 = vld [vmem:[%s5 + $0x2c] sm:$0xf]
        %v1619 = vld [vmem:[%s5 + $0x30] sm:$0xf]
        %v1620 = vld [vmem:[%s5 + $0x34] sm:$0xf]
        %v1621 = vld [vmem:[%s5 + $0x38] sm:$0xf]
        %v1622 = vld [vmem:[%s5 + $0x3c] sm:$0xf]
        %v1623 = vld [vmem:[%s5 + $0x40] sm:$0xf]
        %v1624 = vld [vmem:[%s5 + $0x44] sm:$0xf]
        %v1625 = vld [vmem:[%s5 + $0x48] sm:$0xf]
        %v1626 = vld [vmem:[%s5 + $0x4c] sm:$0xf]
        %v1627 = vld [vmem:[%s5 + $0x50] sm:$0xf]
        %v1628 = vld [vmem:[%s5 + $0x54] sm:$0xf]
        %v1629 = vld [vmem:[%s5 + $0x58] sm:$0xf]
        %v1630 = vld [vmem:[%s5 + $0x5c] sm:$0xf]
        %v1631 = vld [vmem:[%s5 + $0x60] sm:$0xf]
        %v1632 = vld [vmem:[%s5 + $0x64] sm:$0xf]
        %v1633 = vld [vmem:[%s5 + $0x68] sm:$0xf]
        %v1634 = vld [vmem:[%s5 + $0x6c] sm:$0xf]
        %v1635 = vld [vmem:[%s5 + $0x70] sm:$0xf]
        %v1636 = vld [vmem:[%s5 + $0x74] sm:$0xf]
        %v1637 = vld [vmem:[%s5 + $0x78] sm:$0xf]
        %v1638 = vld [vmem:[%s5 + $0x7c] sm:$0xf]
        %v1639 = vld [vmem:[%s6] sm:$0x3]
        %v1641 = vlaneseq
        %v1642 = vshrl.u32 %v1641, 7
        %v1643 = vsub.s32 0, %v1642
        %v1644 = vrot.slane %v1639, %v1643
        %v1645 = vlaneseq
        %v1646 = vshrl.u32 %v1645, 7
        %v1647 = vsub.s32 1, %v1646
        %v1648 = vrot.slane %v1639, %v1647
        %v1683 = vunpack.c.l.b16 %v1607
        %v1684 = vunpack.c.l.b16 %v1608
        %v1685 = vunpack.c.l.b16 %v1609
        %v1686 = vunpack.c.l.b16 %v1610
        %v1687 = vunpack.c.l.b16 %v1611
        %v1688 = vunpack.c.l.b16 %v1612
        %v1689 = vunpack.c.l.b16 %v1613
        %v1690 = vunpack.c.l.b16 %v1614
        %v1691 = vunpack.c.l.b16 %v1615
        %v1692 = vunpack.c.l.b16 %v1616
        %v1693 = vunpack.c.l.b16 %v1617
        %v1694 = vunpack.c.l.b16 %v1618
        %v1695 = vunpack.c.l.b16 %v1619
        %v1696 = vunpack.c.l.b16 %v1620
        %v1697 = vunpack.c.l.b16 %v1621
        %v1698 = vunpack.c.l.b16 %v1622
        %v1699 = vunpack.c.l.b16 %v1623
        %v1700 = vunpack.c.l.b16 %v1624
        %v1701 = vunpack.c.l.b16 %v1625
        %v1702 = vunpack.c.l.b16 %v1626
        %v1703 = vunpack.c.l.b16 %v1627
        %v1704 = vunpack.c.l.b16 %v1628
        %v1705 = vunpack.c.l.b16 %v1629
        %v1706 = vunpack.c.l.b16 %v1630
        %v1707 = vunpack.c.l.b16 %v1631
        %v1708 = vunpack.c.l.b16 %v1632
        %v1709 = vunpack.c.l.b16 %v1633
        %v1710 = vunpack.c.l.b16 %v1634
        %v1711 = vunpack.c.l.b16 %v1635
        %v1712 = vunpack.c.l.b16 %v1636
        %v1713 = vunpack.c.l.b16 %v1637
        %v1714 = vunpack.c.l.b16 %v1638
        %v1715 = vpack.c.b16 %v1684, %v1683
        %v1716 = vpack.c.b16 %v1686, %v1685
        %v1717 = vpack.c.b16 %v1688, %v1687
        %v1718 = vpack.c.b16 %v1690, %v1689
        %v1719 = vpack.c.b16 %v1692, %v1691
        %v1720 = vpack.c.b16 %v1694, %v1693
        %v1721 = vpack.c.b16 %v1696, %v1695
        %v1722 = vpack.c.b16 %v1698, %v1697
        %v1723 = vpack.c.b16 %v1700, %v1699
        %v1724 = vpack.c.b16 %v1702, %v1701
        %v1725 = vpack.c.b16 %v1704, %v1703
        %v1726 = vpack.c.b16 %v1706, %v1705
        %v1727 = vpack.c.b16 %v1708, %v1707
        %v1728 = vpack.c.b16 %v1710, %v1709
        %v1729 = vpack.c.b16 %v1712, %v1711
        %v1730 = vpack.c.b16 %v1714, %v1713
        %1747 = vmatprep.subr.bf16.mxu0 0
        %1748 = vmatpush1.bf16.xpose.msra.mxu0 %v1715
        %1749 = vmatprep.subr.bf16.mxu0 0
        %1750 = vmatpush1.bf16.xpose.msra.mxu0 %v1716
        %1751 = vmatprep.subr.bf16.mxu0 0
        %1752 = vmatpush1.bf16.xpose.msra.mxu0 %v1717
        %1753 = vmatprep.subr.bf16.mxu0 0
        %1754 = vmatpush1.bf16.xpose.msra.mxu0 %v1718
        %1755 = vmatprep.subr.bf16.mxu0 0
        %1756 = vmatpush1.bf16.xpose.msra.mxu0 %v1719
        %1757 = vmatprep.subr.bf16.mxu0 0
        %1758 = vmatpush1.bf16.xpose.msra.mxu0 %v1720
        %1759 = vmatprep.subr.bf16.mxu0 0
        %1760 = vmatpush1.bf16.xpose.msra.mxu0 %v1721
        %1761 = vmatprep.subr.bf16.mxu0 0
        %1762 = vmatpush1.bf16.xpose.msra.mxu0 %v1722
        %1763 = vmatprep.subr.bf16.mxu0 0
        %1764 = vmatpush1.bf16.xpose.msra.mxu0 %v1723
        %1765 = vmatprep.subr.bf16.mxu0 0
        %1766 = vmatpush1.bf16.xpose.msra.mxu0 %v1724
        %1767 = vmatprep.subr.bf16.mxu0 0
        %1768 = vmatpush1.bf16.xpose.msra.mxu0 %v1725
        %1769 = vmatprep.subr.bf16.mxu0 0
        %1770 = vmatpush1.bf16.xpose.msra.mxu0 %v1726
        %1771 = vmatprep.subr.bf16.mxu0 0
        %1772 = vmatpush1.bf16.xpose.msra.mxu0 %v1727
        %1773 = vmatprep.subr.bf16.mxu0 0
        %1774 = vmatpush1.bf16.xpose.msra.mxu0 %v1728
        %1775 = vmatprep.subr.bf16.mxu0 0
        %1776 = vmatpush1.bf16.xpose.msra.mxu0 %v1729
        %1777 = vmatprep.subr.bf16.mxu0 0
        %1778 = vmatpush1.bf16.xpose.msra.mxu0 %v1730
        %1779 = vmatprep.mubr.bf16.mxu0 0
        %1780 = vmatmul.mubr.bf16.gmra.mrb[0].mxu0 %v1599
        %v1781 = vpop.f32.mrb[0].mxu0
        %v1782 = vadd.f32 %v1644, %v1781
        %v1783 = vpop.f32.mrb[0].mxu0
        %v1784 = vadd.f32 %v1648, %v1783
        %v1785 = vpop.f32.mrb[0].mxu0
        %v1786 = vadd.f32 %v1644, %v1785
        %v1787 = vpop.f32.mrb[0].mxu0
        %v1788 = vadd.f32 %v1648, %v1787
        %1789 = vmatprep.mubr.bf16.mxu0 0
        %1790 = vmatmul.mubr.bf16.gmra.mrb[0].mxu0 %v1600
        %v1791 = vpop.f32.mrb[0].mxu0
        %v1792 = vadd.f32 %v1644, %v1791
        %v1793 = vpop.f32.mrb[0].mxu0
        %v1794 = vadd.f32 %v1648, %v1793
        %v1795 = vpop.f32.mrb[0].mxu0
        %v1796 = vadd.f32 %v1644, %v1795
        %v1797 = vpop.f32.mrb[0].mxu0
        %v1798 = vadd.f32 %v1648, %v1797
        %1799 = vmatprep.mubr.bf16.mxu0 0
        %1800 = vmatmul.mubr.bf16.gmra.mrb[0].mxu0 %v1601
        %v1801 = vpop.f32.mrb[0].mxu0
        %v1802 = vadd.f32 %v1644, %v1801
        %v1803 = vpop.f32.mrb[0].mxu0
        %v1804 = vadd.f32 %v1648, %v1803
        %v1805 = vpop.f32.mrb[0].mxu0
        %v1806 = vadd.f32 %v1644, %v1805
        %v1807 = vpop.f32.mrb[0].mxu0
        %v1808 = vadd.f32 %v1648, %v1807
        %1809 = vmatprep.mubr.bf16.mxu0 0
        %1810 = vmatmul.mubr.bf16.gmra.mrb[0].mxu0 %v1602
        %v1811 = vpop.f32.mrb[0].mxu0
        %v1812 = vadd.f32 %v1644, %v1811
        %v1813 = vpop.f32.mrb[0].mxu0
        %v1814 = vadd.f32 %v1648, %v1813
        %v1815 = vpop.f32.mrb[0].mxu0
        %v1816 = vadd.f32 %v1644, %v1815
        %v1817 = vpop.f32.mrb[0].mxu0
        %v1818 = vadd.f32 %v1648, %v1817
        %1819 = vmatprep.mubr.bf16.mxu0 0
        %1820 = vmatmul.mubr.bf16.gmra.mrb[0].mxu0 %v1603
        %v1821 = vpop.f32.mrb[0].mxu0
        %v1822 = vadd.f32 %v1644, %v1821
        %v1823 = vpop.f32.mrb[0].mxu0
        %v1824 = vadd.f32 %v1648, %v1823
        %v1825 = vpop.f32.mrb[0].mxu0
        %v1826 = vadd.f32 %v1644, %v1825
        %v1827 = vpop.f32.mrb[0].mxu0
        %v1828 = vadd.f32 %v1648, %v1827
        %1829 = vmatprep.mubr.bf16.mxu0 0
        %1830 = vmatmul.mubr.bf16.gmra.mrb[0].mxu0 %v1604
        %v1831 = vpop.f32.mrb[0].mxu0
        %v1832 = vadd.f32 %v1644, %v1831
        %v1833 = vpop.f32.mrb[0].mxu0
        %v1834 = vadd.f32 %v1648, %v1833
        %v1835 = vpop.f32.mrb[0].mxu0
        %v1836 = vadd.f32 %v1644, %v1835
        %v1837 = vpop.f32.mrb[0].mxu0
        %v1838 = vadd.f32 %v1648, %v1837
        %1839 = vmatprep.mubr.bf16.mxu0 0
        %1840 = vmatmul.mubr.bf16.gmra.mrb[0].mxu0 %v1605
        %v1841 = vpop.f32.mrb[0].mxu0
        %v1842 = vadd.f32 %v1644, %v1841
        %v1843 = vpop.f32.mrb[0].mxu0
        %v1844 = vadd.f32 %v1648, %v1843
        %v1845 = vpop.f32.mrb[0].mxu0
        %v1846 = vadd.f32 %v1644, %v1845
        %v1847 = vpop.f32.mrb[0].mxu0
        %v1848 = vadd.f32 %v1648, %v1847
        %1849 = vmatprep.mubr.bf16.mxu0 0
        %1850 = vmatmul.mubr.bf16.gmra.mrb[0].mxu0 %v1606
        %v1851 = vpop.f32.mrb[0].mxu0
        %v1852 = vadd.f32 %v1644, %v1851
        %v1853 = vpop.f32.mrb[0].mxu0
        %v1854 = vadd.f32 %v1648, %v1853
        %v1855 = vpop.f32.mrb[0].mxu0
        %v1856 = vadd.f32 %v1644, %v1855
        %v1857 = vpop.f32.mrb[0].mxu0
        %v1858 = vadd.f32 %v1648, %v1857
        %1859 = vdwg.mxu0
        %v1860 = vmax.f32 %v1782, 0.0
        %v1861 = vmax.f32 %v1784, 0.0
        %v1862 = vmax.f32 %v1786, 0.0
        %v1863 = vmax.f32 %v1788, 0.0
        %v1864 = vmax.f32 %v1792, 0.0
        %v1865 = vmax.f32 %v1794, 0.0
        %v1866 = vmax.f32 %v1796, 0.0
        %v1867 = vmax.f32 %v1798, 0.0
        %v1868 = vmax.f32 %v1802, 0.0
        %v1869 = vmax.f32 %v1804, 0.0
        %v1870 = vmax.f32 %v1806, 0.0
        %v1871 = vmax.f32 %v1808, 0.0
        %v1872 = vmax.f32 %v1812, 0.0
        %v1873 = vmax.f32 %v1814, 0.0
        %v1874 = vmax.f32 %v1816, 0.0
        %v1875 = vmax.f32 %v1818, 0.0
        %v1876 = vmax.f32 %v1822, 0.0
        %v1877 = vmax.f32 %v1824, 0.0
        %v1878 = vmax.f32 %v1826, 0.0
        %v1879 = vmax.f32 %v1828, 0.0
        %v1880 = vmax.f32 %v1832, 0.0
        %v1881 = vmax.f32 %v1834, 0.0
        %v1882 = vmax.f32 %v1836, 0.0
        %v1883 = vmax.f32 %v1838, 0.0
        %v1884 = vmax.f32 %v1842, 0.0
        %v1885 = vmax.f32 %v1844, 0.0
        %v1886 = vmax.f32 %v1846, 0.0
        %v1887 = vmax.f32 %v1848, 0.0
        %v1888 = vmax.f32 %v1852, 0.0
        %v1889 = vmax.f32 %v1854, 0.0
        %v1890 = vmax.f32 %v1856, 0.0
        %v1891 = vmax.f32 %v1858, 0.0
        %v1892 = vpack.c.bf16 %v1862, %v1860
        %v1893 = vpack.c.bf16 %v1863, %v1861
        %v1894 = vpack.c.bf16 %v1866, %v1864
        %v1895 = vpack.c.bf16 %v1867, %v1865
        %v1896 = vpack.c.bf16 %v1870, %v1868
        %v1897 = vpack.c.bf16 %v1871, %v1869
        %v1898 = vpack.c.bf16 %v1874, %v1872
        %v1899 = vpack.c.bf16 %v1875, %v1873
        %v1900 = vpack.c.bf16 %v1878, %v1876
        %v1901 = vpack.c.bf16 %v1879, %v1877
        %v1902 = vpack.c.bf16 %v1882, %v1880
        %v1903 = vpack.c.bf16 %v1883, %v1881
        %v1904 = vpack.c.bf16 %v1886, %v1884
        %v1905 = vpack.c.bf16 %v1887, %v1885
        %v1906 = vpack.c.bf16 %v1890, %v1888
        %v1907 = vpack.c.bf16 %v1891, %v1889
        %v1908 = vld [vmem:[%s7] sm:$0xff]
        %v1909 = vld [vmem:[%s7 + $0x8] sm:$0xff]
        %v1910 = vld [vmem:[%s7 + $0x10] sm:$0xff]
        %v1911 = vld [vmem:[%s7 + $0x18] sm:$0xff]
        %v1912 = vld [vmem:[%s7 + $0x20] sm:$0xff]
        %v1913 = vld [vmem:[%s7 + $0x28] sm:$0xff]
        %v1914 = vld [vmem:[%s7 + $0x30] sm:$0xff]
        %v1915 = vld [vmem:[%s7 + $0x38] sm:$0xff]
        %v1916 = vld [vmem:[%s7 + $0x40] sm:$0xff]
        %v1917 = vld [vmem:[%s7 + $0x48] sm:$0xff]
        %v1918 = vld [vmem:[%s7 + $0x50] sm:$0xff]
        %v1919 = vld [vmem:[%s7 + $0x58] sm:$0xff]
        %v1920 = vld [vmem:[%s7 + $0x60] sm:$0xff]
        %v1921 = vld [vmem:[%s7 + $0x68] sm:$0xff]
        %v1922 = vld [vmem:[%s7 + $0x70] sm:$0xff]
        %v1923 = vld [vmem:[%s7 + $0x78] sm:$0xff]
        %v1924 = vld [vmem:[%s8] sm:$0x1]
        %v1926 = vlaneseq
        %v1927 = vshrl.u32 %v1926, 7
        %v1928 = vsub.s32 0, %v1927
        %v1929 = vrot.slane %v1924, %v1928
        %v1947 = vunpack.c.l.b16 %v1908
        %v1948 = vunpack.c.h.b16 %v1908
        %v1949 = vunpack.c.l.b16 %v1909
        %v1950 = vunpack.c.h.b16 %v1909
        %v1951 = vunpack.c.l.b16 %v1910
        %v1952 = vunpack.c.h.b16 %v1910
        %v1953 = vunpack.c.l.b16 %v1911
        %v1954 = vunpack.c.h.b16 %v1911
        %v1955 = vunpack.c.l.b16 %v1912
        %v1956 = vunpack.c.h.b16 %v1912
        %v1957 = vunpack.c.l.b16 %v1913
        %v1958 = vunpack.c.h.b16 %v1913
        %v1959 = vunpack.c.l.b16 %v1914
        %v1960 = vunpack.c.h.b16 %v1914
        %v1961 = vunpack.c.l.b16 %v1915
        %v1962 = vunpack.c.h.b16 %v1915
        %v1963 = vunpack.c.l.b16 %v1916
        %v1964 = vunpack.c.h.b16 %v1916
        %v1965 = vunpack.c.l.b16 %v1917
        %v1966 = vunpack.c.h.b16 %v1917
        %v1967 = vunpack.c.l.b16 %v1918
        %v1968 = vunpack.c.h.b16 %v1918
        %v1969 = vunpack.c.l.b16 %v1919
        %v1970 = vunpack.c.h.b16 %v1919
        %v1971 = vunpack.c.l.b16 %v1920
        %v1972 = vunpack.c.h.b16 %v1920
        %v1973 = vunpack.c.l.b16 %v1921
        %v1974 = vunpack.c.h.b16 %v1921
        %v1975 = vunpack.c.l.b16 %v1922
        %v1976 = vunpack.c.h.b16 %v1922
        %v1977 = vunpack.c.l.b16 %v1923
        %v1978 = vunpack.c.h.b16 %v1923
        %v1979 = vpack.c.b16 %v1949, %v1947
        %v1980 = vpack.c.b16 %v1950, %v1948
        %v1981 = vpack.c.b16 %v1953, %v1951
        %v1982 = vpack.c.b16 %v1954, %v1952
        %v1983 = vpack.c.b16 %v1957, %v1955
        %v1984 = vpack.c.b16 %v1958, %v1956
        %v1985 = vpack.c.b16 %v1961, %v1959
        %v1986 = vpack.c.b16 %v1962, %v1960
        %v1987 = vpack.c.b16 %v1965, %v1963
        %v1988 = vpack.c.b16 %v1966, %v1964
        %v1989 = vpack.c.b16 %v1969, %v1967
        %v1990 = vpack.c.b16 %v1970, %v1968
        %v1991 = vpack.c.b16 %v1973, %v1971
        %v1992 = vpack.c.b16 %v1974, %v1972
        %v1993 = vpack.c.b16 %v1977, %v1975
        %v1994 = vpack.c.b16 %v1978, %v1976
        %2011 = vmatprep.subr.bf16.mxu0 %v1980
        %2012 = vmatpush1.bf16.xpose.msra.mxu0 %v1979
        %2013 = vmatprep.subr.bf16.mxu0 %v1982
        %2014 = vmatpush1.bf16.xpose.msra.mxu0 %v1981
        %2015 = vmatprep.subr.bf16.mxu0 %v1984
        %2016 = vmatpush1.bf16.xpose.msra.mxu0 %v1983
        %2017 = vmatprep.subr.bf16.mxu0 %v1986
        %2018 = vmatpush1.bf16.xpose.msra.mxu0 %v1985
        %2019 = vmatprep.subr.bf16.mxu0 %v1988
        %2020 = vmatpush1.bf16.xpose.msra.mxu0 %v1987
        %2021 = vmatprep.subr.bf16.mxu0 %v1990
        %2022 = vmatpush1.bf16.xpose.msra.mxu0 %v1989
        %2023 = vmatprep.subr.bf16.mxu0 %v1992
        %2024 = vmatpush1.bf16.xpose.msra.mxu0 %v1991
        %2025 = vmatprep.subr.bf16.mxu0 %v1994
        %2026 = vmatpush1.bf16.xpose.msra.mxu0 %v1993
        %2027 = vmatprep.subr.bf16.mxu0 0
        %2028 = vmatpush1.bf16.xpose.msra.mxu0 0
        %2029 = vmatprep.subr.bf16.mxu0 0
        %2030 = vmatpush1.bf16.xpose.msra.mxu0 0
        %2031 = vmatprep.subr.bf16.mxu0 0
        %2032 = vmatpush1.bf16.xpose.msra.mxu0 0
        %2033 = vmatprep.subr.bf16.mxu0 0
        %2034 = vmatpush1.bf16.xpose.msra.mxu0 0
        %2035 = vmatprep.subr.bf16.mxu0 0
        %2036 = vmatpush1.bf16.xpose.msra.mxu0 0
        %2037 = vmatprep.subr.bf16.mxu0 0
        %2038 = vmatpush1.bf16.xpose.msra.mxu0 0
        %2039 = vmatprep.subr.bf16.mxu0 0
        %2040 = vmatpush1.bf16.xpose.msra.mxu0 0
        %2041 = vmatprep.subr.bf16.mxu0 0
        %2042 = vmatpush1.bf16.xpose.msra.mxu0 0
        %2043 = vmatprep.mubr.bf16.mxu0 %v1893
        %2044 = vmatmul.mubr.bf16.gmra.mrb[0].mxu0 %v1892
        %v2045 = vpop.f32.mrb[0].mxu0
        %v2046 = vadd.f32 %v1929, %v2045
        %v2047 = vpop.f32.mrb[0].mxu0
        %v2048 = vpop.f32.mrb[0].mxu0
        %v2049 = vadd.f32 %v1929, %v2048
        %v2050 = vpop.f32.mrb[0].mxu0
        %2051 = vmatprep.mubr.bf16.mxu0 %v1895
        %2052 = vmatmul.mubr.bf16.gmra.mrb[0].mxu0 %v1894
        %v2053 = vpop.f32.mrb[0].mxu0
        %v2054 = vadd.f32 %v1929, %v2053
        %v2055 = vpop.f32.mrb[0].mxu0
        %v2056 = vpop.f32.mrb[0].mxu0
        %v2057 = vadd.f32 %v1929, %v2056
        %v2058 = vpop.f32.mrb[0].mxu0
        %2059 = vmatprep.mubr.bf16.mxu0 %v1897
        %2060 = vmatmul.mubr.bf16.gmra.mrb[0].mxu0 %v1896
        %v2061 = vpop.f32.mrb[0].mxu0
        %v2062 = vadd.f32 %v1929, %v2061
        %v2063 = vpop.f32.mrb[0].mxu0
        %v2064 = vpop.f32.mrb[0].mxu0
        %v2065 = vadd.f32 %v1929, %v2064
        %v2066 = vpop.f32.mrb[0].mxu0
        %2067 = vmatprep.mubr.bf16.mxu0 %v1899
        %2068 = vmatmul.mubr.bf16.gmra.mrb[0].mxu0 %v1898
        %v2069 = vpop.f32.mrb[0].mxu0
        %v2070 = vadd.f32 %v1929, %v2069
        %v2071 = vpop.f32.mrb[0].mxu0
        %v2072 = vpop.f32.mrb[0].mxu0
        %v2073 = vadd.f32 %v1929, %v2072
        %v2074 = vpop.f32.mrb[0].mxu0
        %2075 = vmatprep.mubr.bf16.mxu0 %v1901
        %2076 = vmatmul.mubr.bf16.gmra.mrb[0].mxu0 %v1900
        %v2077 = vpop.f32.mrb[0].mxu0
        %v2078 = vadd.f32 %v1929, %v2077
        %v2079 = vpop.f32.mrb[0].mxu0
        %v2080 = vpop.f32.mrb[0].mxu0
        %v2081 = vadd.f32 %v1929, %v2080
        %v2082 = vpop.f32.mrb[0].mxu0
        %2083 = vmatprep.mubr.bf16.mxu0 %v1903
        %2084 = vmatmul.mubr.bf16.gmra.mrb[0].mxu0 %v1902
        %v2085 = vpop.f32.mrb[0].mxu0
        %v2086 = vadd.f32 %v1929, %v2085
        %v2087 = vpop.f32.mrb[0].mxu0
        %v2088 = vpop.f32.mrb[0].mxu0
        %v2089 = vadd.f32 %v1929, %v2088
        %v2090 = vpop.f32.mrb[0].mxu0
        %2091 = vmatprep.mubr.bf16.mxu0 %v1905
        %2092 = vmatmul.mubr.bf16.gmra.mrb[0].mxu0 %v1904
        %v2093 = vpop.f32.mrb[0].mxu0
        %v2094 = vadd.f32 %v1929, %v2093
        %v2095 = vpop.f32.mrb[0].mxu0
        %v2096 = vpop.f32.mrb[0].mxu0
        %v2097 = vadd.f32 %v1929, %v2096
        %v2098 = vpop.f32.mrb[0].mxu0
        %2099 = vmatprep.mubr.bf16.mxu0 %v1907
        %2100 = vmatmul.mubr.bf16.gmra.mrb[0].mxu0 %v1906
        %v2101 = vpop.f32.mrb[0].mxu0
        %v2102 = vadd.f32 %v1929, %v2101
        %v2103 = vpop.f32.mrb[0].mxu0
        %v2104 = vpop.f32.mrb[0].mxu0
        %v2105 = vadd.f32 %v1929, %v2104
        %v2106 = vpop.f32.mrb[0].mxu0
        %2107 = vdwg.mxu0
        %v2108 = vadd.f32 %v1583, %v2046
        %v2109 = vadd.f32 %v1584, %v2049
        %v2110 = vadd.f32 %v1585, %v2054
        %v2111 = vadd.f32 %v1586, %v2057
        %v2112 = vadd.f32 %v1587, %v2062
        %v2113 = vadd.f32 %v1588, %v2065
        %v2114 = vadd.f32 %v1589, %v2070
        %v2115 = vadd.f32 %v1590, %v2073
        %v2116 = vadd.f32 %v1591, %v2078
        %v2117 = vadd.f32 %v1592, %v2081
        %v2118 = vadd.f32 %v1593, %v2086
        %v2119 = vadd.f32 %v1594, %v2089
        %v2120 = vadd.f32 %v1595, %v2094
        %v2121 = vadd.f32 %v1596, %v2097
        %v2122 = vadd.f32 %v1597, %v2102
        %v2123 = vadd.f32 %v1598, %v2105
        %v2124 = vld [vmem:[%s9] sm:$0x1]
        %v2125 = vld [vmem:[%s10] sm:$0x1]
        %2126 = vadd.xlane.f32.xlu0 %v2108
        %v2127 = vpop.xlane.xlu0 %2126
        %2128 = vadd.xlane.f32.xlu0 %v2109
        %v2129 = vpop.xlane.xlu0 %2128
        %2130 = vadd.xlane.f32.xlu0 %v2110
        %v2131 = vpop.xlane.xlu0 %2130
        %2132 = vadd.xlane.f32.xlu0 %v2111
        %v2133 = vpop.xlane.xlu0 %2132
        %2134 = vadd.xlane.f32.xlu0 %v2112
        %v2135 = vpop.xlane.xlu0 %2134
        %2136 = vadd.xlane.f32.xlu0 %v2113
        %v2137 = vpop.xlane.xlu0 %2136
        %2138 = vadd.xlane.f32.xlu0 %v2114
        %v2139 = vpop.xlane.xlu0 %2138
        %2140 = vadd.xlane.f32.xlu0 %v2115
        %v2141 = vpop.xlane.xlu0 %2140
        %2142 = vadd.xlane.f32.xlu0 %v2116
        %v2143 = vpop.xlane.xlu0 %2142
        %2144 = vadd.xlane.f32.xlu0 %v2117
        %v2145 = vpop.xlane.xlu0 %2144
        %2146 = vadd.xlane.f32.xlu0 %v2118
        %v2147 = vpop.xlane.xlu0 %2146
        %2148 = vadd.xlane.f32.xlu0 %v2119
        %v2149 = vpop.xlane.xlu0 %2148
        %2150 = vadd.xlane.f32.xlu0 %v2120
        %v2151 = vpop.xlane.xlu0 %2150
        %2152 = vadd.xlane.f32.xlu0 %v2121
        %v2153 = vpop.xlane.xlu0 %2152
        %2154 = vadd.xlane.f32.xlu0 %v2122
        %v2155 = vpop.xlane.xlu0 %2154
        %2156 = vadd.xlane.f32.xlu0 %v2123
        %v2157 = vpop.xlane.xlu0 %2156
        %v2158 = vmul.f32 %v2127, %v1410
        %v2159 = vmul.f32 %v2129, %v1410
        %v2160 = vmul.f32 %v2131, %v1410
        %v2161 = vmul.f32 %v2133, %v1410
        %v2162 = vmul.f32 %v2135, %v1410
        %v2163 = vmul.f32 %v2137, %v1410
        %v2164 = vmul.f32 %v2139, %v1410
        %v2165 = vmul.f32 %v2141, %v1410
        %v2166 = vmul.f32 %v2143, %v1410
        %v2167 = vmul.f32 %v2145, %v1410
        %v2168 = vmul.f32 %v2147, %v1410
        %v2169 = vmul.f32 %v2149, %v1410
        %v2170 = vmul.f32 %v2151, %v1410
        %v2171 = vmul.f32 %v2153, %v1410
        %v2172 = vmul.f32 %v2155, %v1410
        %v2173 = vmul.f32 %v2157, %v1410
        %v2174 = vsub.f32 %v2108, %v2158
        %v2175 = vsub.f32 %v2109, %v2159
        %v2176 = vsub.f32 %v2110, %v2160
        %v2177 = vsub.f32 %v2111, %v2161
        %v2178 = vsub.f32 %v2112, %v2162
        %v2179 = vsub.f32 %v2113, %v2163
        %v2180 = vsub.f32 %v2114, %v2164
        %v2181 = vsub.f32 %v2115, %v2165
        %v2182 = vsub.f32 %v2116, %v2166
        %v2183 = vsub.f32 %v2117, %v2167
        %v2184 = vsub.f32 %v2118, %v2168
        %v2185 = vsub.f32 %v2119, %v2169
        %v2186 = vsub.f32 %v2120, %v2170
        %v2187 = vsub.f32 %v2121, %v2171
        %v2188 = vsub.f32 %v2122, %v2172
        %v2189 = vsub.f32 %v2123, %v2173
        %v2190 = vmul.f32 %v2174, %v2174
        %v2191 = vmul.f32 %v2175, %v2175
        %v2192 = vmul.f32 %v2176, %v2176
        %v2193 = vmul.f32 %v2177, %v2177
        %v2194 = vmul.f32 %v2178, %v2178
        %v2195 = vmul.f32 %v2179, %v2179
        %v2196 = vmul.f32 %v2180, %v2180
        %v2197 = vmul.f32 %v2181, %v2181
        %v2198 = vmul.f32 %v2182, %v2182
        %v2199 = vmul.f32 %v2183, %v2183
        %v2200 = vmul.f32 %v2184, %v2184
        %v2201 = vmul.f32 %v2185, %v2185
        %v2202 = vmul.f32 %v2186, %v2186
        %v2203 = vmul.f32 %v2187, %v2187
        %v2204 = vmul.f32 %v2188, %v2188
        %v2205 = vmul.f32 %v2189, %v2189
        %2206 = vadd.xlane.f32.xlu0 %v2190
        %v2207 = vpop.xlane.xlu0 %2206
        %2208 = vadd.xlane.f32.xlu0 %v2191
        %v2209 = vpop.xlane.xlu0 %2208
        %2210 = vadd.xlane.f32.xlu0 %v2192
        %v2211 = vpop.xlane.xlu0 %2210
        %2212 = vadd.xlane.f32.xlu0 %v2193
        %v2213 = vpop.xlane.xlu0 %2212
        %2214 = vadd.xlane.f32.xlu0 %v2194
        %v2215 = vpop.xlane.xlu0 %2214
        %2216 = vadd.xlane.f32.xlu0 %v2195
        %v2217 = vpop.xlane.xlu0 %2216
        %2218 = vadd.xlane.f32.xlu0 %v2196
        %v2219 = vpop.xlane.xlu0 %2218
        %2220 = vadd.xlane.f32.xlu0 %v2197
        %v2221 = vpop.xlane.xlu0 %2220
        %2222 = vadd.xlane.f32.xlu0 %v2198
        %v2223 = vpop.xlane.xlu0 %2222
        %2224 = vadd.xlane.f32.xlu0 %v2199
        %v2225 = vpop.xlane.xlu0 %2224
        %2226 = vadd.xlane.f32.xlu0 %v2200
        %v2227 = vpop.xlane.xlu0 %2226
        %2228 = vadd.xlane.f32.xlu0 %v2201
        %v2229 = vpop.xlane.xlu0 %2228
        %2230 = vadd.xlane.f32.xlu0 %v2202
        %v2231 = vpop.xlane.xlu0 %2230
        %2232 = vadd.xlane.f32.xlu0 %v2203
        %v2233 = vpop.xlane.xlu0 %2232
        %2234 = vadd.xlane.f32.xlu0 %v2204
        %v2235 = vpop.xlane.xlu0 %2234
        %2236 = vadd.xlane.f32.xlu0 %v2205
        %v2237 = vpop.xlane.xlu0 %2236
        %v2238 = vmul.f32 %v2207, %v1410
        %v2239 = vmul.f32 %v2209, %v1410
        %v2240 = vmul.f32 %v2211, %v1410
        %v2241 = vmul.f32 %v2213, %v1410
        %v2242 = vmul.f32 %v2215, %v1410
        %v2243 = vmul.f32 %v2217, %v1410
        %v2244 = vmul.f32 %v2219, %v1410
        %v2245 = vmul.f32 %v2221, %v1410
        %v2246 = vmul.f32 %v2223, %v1410
        %v2247 = vmul.f32 %v2225, %v1410
        %v2248 = vmul.f32 %v2227, %v1410
        %v2249 = vmul.f32 %v2229, %v1410
        %v2250 = vmul.f32 %v2231, %v1410
        %v2251 = vmul.f32 %v2233, %v1410
        %v2252 = vmul.f32 %v2235, %v1410
        %v2253 = vmul.f32 %v2237, %v1410
        %v2254 = vadd.f32 %v2238, 1e-05
        %v2255 = vadd.f32 %v2239, 1e-05
        %v2256 = vadd.f32 %v2240, 1e-05
        %v2257 = vadd.f32 %v2241, 1e-05
        %v2258 = vadd.f32 %v2242, 1e-05
        %v2259 = vadd.f32 %v2243, 1e-05
        %v2260 = vadd.f32 %v2244, 1e-05
        %v2261 = vadd.f32 %v2245, 1e-05
        %v2262 = vadd.f32 %v2246, 1e-05
        %v2263 = vadd.f32 %v2247, 1e-05
        %v2264 = vadd.f32 %v2248, 1e-05
        %v2265 = vadd.f32 %v2249, 1e-05
        %v2266 = vadd.f32 %v2250, 1e-05
        %v2267 = vadd.f32 %v2251, 1e-05
        %v2268 = vadd.f32 %v2252, 1e-05
        %v2269 = vadd.f32 %v2253, 1e-05
        %v2270 = vrsqrt.pop %v2254
        %v2271 = vrsqrt.pop %v2255
        %v2272 = vrsqrt.pop %v2256
        %v2273 = vrsqrt.pop %v2257
        %v2274 = vrsqrt.pop %v2258
        %v2275 = vrsqrt.pop %v2259
        %v2276 = vrsqrt.pop %v2260
        %v2277 = vrsqrt.pop %v2261
        %v2278 = vrsqrt.pop %v2262
        %v2279 = vrsqrt.pop %v2263
        %v2280 = vrsqrt.pop %v2264
        %v2281 = vrsqrt.pop %v2265
        %v2282 = vrsqrt.pop %v2266
        %v2283 = vrsqrt.pop %v2267
        %v2284 = vrsqrt.pop %v2268
        %v2285 = vrsqrt.pop %v2269
        %v2286 = vmul.f32 %v2174, %v2270
        %v2287 = vmul.f32 %v2175, %v2271
        %v2288 = vmul.f32 %v2176, %v2272
        %v2289 = vmul.f32 %v2177, %v2273
        %v2290 = vmul.f32 %v2178, %v2274
        %v2291 = vmul.f32 %v2179, %v2275
        %v2292 = vmul.f32 %v2180, %v2276
        %v2293 = vmul.f32 %v2181, %v2277
        %v2294 = vmul.f32 %v2182, %v2278
        %v2295 = vmul.f32 %v2183, %v2279
        %v2296 = vmul.f32 %v2184, %v2280
        %v2297 = vmul.f32 %v2185, %v2281
        %v2298 = vmul.f32 %v2186, %v2282
        %v2299 = vmul.f32 %v2187, %v2283
        %v2300 = vmul.f32 %v2188, %v2284
        %v2301 = vmul.f32 %v2189, %v2285
        %v2303 = vlaneseq
        %v2304 = vshrl.u32 %v2303, 7
        %v2305 = vsub.s32 0, %v2304
        %v2306 = vrot.slane %v2124, %v2305
        %v2308 = vmul.f32 %v2286, %v2306
        %v2309 = vmul.f32 %v2287, %v2306
        %v2310 = vmul.f32 %v2288, %v2306
        %v2311 = vmul.f32 %v2289, %v2306
        %v2312 = vmul.f32 %v2290, %v2306
        %v2313 = vmul.f32 %v2291, %v2306
        %v2314 = vmul.f32 %v2292, %v2306
        %v2315 = vmul.f32 %v2293, %v2306
        %v2316 = vmul.f32 %v2294, %v2306
        %v2317 = vmul.f32 %v2295, %v2306
        %v2318 = vmul.f32 %v2296, %v2306
        %v2319 = vmul.f32 %v2297, %v2306
        %v2320 = vmul.f32 %v2298, %v2306
        %v2321 = vmul.f32 %v2299, %v2306
        %v2322 = vmul.f32 %v2300, %v2306
        %v2323 = vmul.f32 %v2301, %v2306
        %v2325 = vlaneseq
        %v2326 = vshrl.u32 %v2325, 7
        %v2327 = vsub.s32 0, %v2326
        %v2328 = vrot.slane %v2125, %v2327
        %v2330 = vadd.f32 %v2308, %v2328
        %v2331 = vadd.f32 %v2309, %v2328
        %v2332 = vadd.f32 %v2310, %v2328
        %v2333 = vadd.f32 %v2311, %v2328
        %v2334 = vadd.f32 %v2312, %v2328
        %v2335 = vadd.f32 %v2313, %v2328
        %v2336 = vadd.f32 %v2314, %v2328
        %v2337 = vadd.f32 %v2315, %v2328
        %v2338 = vadd.f32 %v2316, %v2328
        %v2339 = vadd.f32 %v2317, %v2328
        %v2340 = vadd.f32 %v2318, %v2328
        %v2341 = vadd.f32 %v2319, %v2328
        %v2342 = vadd.f32 %v2320, %v2328
        %v2343 = vadd.f32 %v2321, %v2328
        %v2344 = vadd.f32 %v2322, %v2328
        %v2345 = vadd.f32 %v2323, %v2328
        %2346 = vst [vmem:[%s519] sm:$0xff] %v2330
        %2347 = vst [vmem:[%s519 + $0x8] sm:$0xff] %v2331
        %2348 = vst [vmem:[%s519 + $0x10] sm:$0xff] %v2332
        %2349 = vst [vmem:[%s519 + $0x18] sm:$0xff] %v2333
        %2350 = vst [vmem:[%s519 + $0x20] sm:$0xff] %v2334
        %2351 = vst [vmem:[%s519 + $0x28] sm:$0xff] %v2335
        %2352 = vst [vmem:[%s519 + $0x30] sm:$0xff] %v2336
        %2353 = vst [vmem:[%s519 + $0x38] sm:$0xff] %v2337
        %2354 = vst [vmem:[%s519 + $0x40] sm:$0xff] %v2338
        %2355 = vst [vmem:[%s519 + $0x48] sm:$0xff] %v2339
        %2356 = vst [vmem:[%s519 + $0x50] sm:$0xff] %v2340
        %2357 = vst [vmem:[%s519 + $0x58] sm:$0xff] %v2341
        %2358 = vst [vmem:[%s519 + $0x60] sm:$0xff] %v2342
        %2359 = vst [vmem:[%s519 + $0x68] sm:$0xff] %v2343
        %2360 = vst [vmem:[%s519 + $0x70] sm:$0xff] %v2344
        %2361 = vst [vmem:[%s519 + $0x78] sm:$0xff] %v2345
        %s2362 = sand.u32 %s289, 1
        %s2363 = sand.u32 %s289, 1
        %s2364 = smul.addr %s2363, 128
        %s2365 = scalar_lea.vmem [#allocation3], %s2364
        // Predicated region
        $region103: #{rel_partial_learnable_decoder_layer.7} parent=97 // pred_check
          %p2366 = pneg %p299
        $region104: #{rel_partial_learnable_decoder_layer.7} parent=97 // pred_check_branch
          %2368 = sbr.rel (%p2366) target = $region106
        $region105: #{rel_partial_learnable_decoder_layer.7} parent=97 // pred_region
          %s2369 = smul.u32 16, %s27
          %s2370 = smul.addr %s2369, 2
          %s2371 = sadd.s32 %s26, %s2370
          %s2372 = smul.addr %s2371, 8
          %s2373 = scalar_lea.vmem %s11, %s2372
          // Predicated region
          $region107: #{rel_partial_learnable_decoder_layer.7} parent=105 // pred_check
            _
          $region108: #{rel_partial_learnable_decoder_layer.7} parent=105 // pred_check_branch
            %2375 = sbr.rel (0) target = $region110
          $region109: #{rel_partial_learnable_decoder_layer.7} parent=105 // pred_region
            // Predicated region
            $region111: #{rel_partial_learnable_decoder_layer.7} parent=109 // pred_check
              _
            $region112: #{rel_partial_learnable_decoder_layer.7} parent=109 // pred_check_branch
              %2377 = sbr.rel (0) target = $region114
            $region113: #{rel_partial_learnable_decoder_layer.7} parent=109 // pred_region
              // Predicated region
              $region126: #{rel_partial_learnable_decoder_layer.7} parent=113 // pred_check
                _
              $region127: #{rel_partial_learnable_decoder_layer.7} parent=113 // pred_check_branch
                %2422 = sbr.rel (0) target = $region129
              $region128: #{rel_partial_learnable_decoder_layer.7} parent=113 // pred_region
                loop: start=0, step=1, limit=1
                $region130: #{rel_partial_learnable_decoder_layer.7} parent=128 // loop_pre_header
                  _
                $region131: #{rel_partial_learnable_decoder_layer.7} parent=128 // loop_header
                  %s2424 = sphi 0, %s2428
                  %p2425 = scmp.ge.s32.totalorder %s2424, 1
                  %s2429 = sphi %s2365, %s2365
                  %s2430 = sphi %s2373, %s2373
                $region132: #{rel_partial_learnable_decoder_layer.7} parent=128 // loop_header_branch
                  %2427 = sbr.rel (%p2425) target = $region136
                $region133: #{rel_partial_learnable_decoder_layer.7} parent=128 // loop_body
                  %v2431 = vld [vmem:[%s2429] sm:$0xff]
                  %2432 = vst [vmem:[%s2430] sm:$0xff] %v2431
                  %v2433 = vld [vmem:[%s2429 + $0x8] sm:$0xff]
                  %2434 = vst [vmem:[%s2430 + $0x10] sm:$0xff] %v2433
                  %v2435 = vld [vmem:[%s2429 + $0x10] sm:$0xff]
                  %2436 = vst [vmem:[%s2430 + $0x20] sm:$0xff] %v2435
                  %v2437 = vld [vmem:[%s2429 + $0x18] sm:$0xff]
                  %2438 = vst [vmem:[%s2430 + $0x30] sm:$0xff] %v2437
                  %v2439 = vld [vmem:[%s2429 + $0x20] sm:$0xff]
                  %2440 = vst [vmem:[%s2430 + $0x40] sm:$0xff] %v2439
                  %v2441 = vld [vmem:[%s2429 + $0x28] sm:$0xff]
                  %2442 = vst [vmem:[%s2430 + $0x50] sm:$0xff] %v2441
                  %v2443 = vld [vmem:[%s2429 + $0x30] sm:$0xff]
                  %2444 = vst [vmem:[%s2430 + $0x60] sm:$0xff] %v2443
                  %v2445 = vld [vmem:[%s2429 + $0x38] sm:$0xff]
                  %2446 = vst [vmem:[%s2430 + $0x70] sm:$0xff] %v2445
                  %v2447 = vld [vmem:[%s2429 + $0x40] sm:$0xff]
                  %2448 = vst [vmem:[%s2430 + $0x80] sm:$0xff] %v2447
                  %v2449 = vld [vmem:[%s2429 + $0x48] sm:$0xff]
                  %2450 = vst [vmem:[%s2430 + $0x90] sm:$0xff] %v2449
                  %v2451 = vld [vmem:[%s2429 + $0x50] sm:$0xff]
                  %2452 = vst [vmem:[%s2430 + $0xa0] sm:$0xff] %v2451
                  %v2453 = vld [vmem:[%s2429 + $0x58] sm:$0xff]
                  %2454 = vst [vmem:[%s2430 + $0xb0] sm:$0xff] %v2453
                  %v2455 = vld [vmem:[%s2429 + $0x60] sm:$0xff]
                  %2456 = vst [vmem:[%s2430 + $0xc0] sm:$0xff] %v2455
                  %v2457 = vld [vmem:[%s2429 + $0x68] sm:$0xff]
                  %2458 = vst [vmem:[%s2430 + $0xd0] sm:$0xff] %v2457
                  %v2459 = vld [vmem:[%s2429 + $0x70] sm:$0xff]
                  %2460 = vst [vmem:[%s2430 + $0xe0] sm:$0xff] %v2459
                  %v2461 = vld [vmem:[%s2429 + $0x78] sm:$0xff]
                  %2462 = vst [vmem:[%s2430 + $0xf0] sm:$0xff] %v2461
                $region134: #{rel_partial_learnable_decoder_layer.7} parent=128 // loop_footer
                  %s2428 = sadd.s32 1, %s2424
                $region135: #{rel_partial_learnable_decoder_layer.7} parent=128 // loop_footer_branch
                  %2423 = sbr.rel target = $region131
                $region136: #{rel_partial_learnable_decoder_layer.7} parent=128 // loop_exit
                  _
              $region129: #{rel_partial_learnable_decoder_layer.7} parent=113 // pred_fallthru
                _
              // Predicated region
              $region137: #{rel_partial_learnable_decoder_layer.7} parent=113 // pred_check
                _
              $region138: #{rel_partial_learnable_decoder_layer.7} parent=113 // pred_check_branch
                %2464 = sbr.rel target = $region140
              $region139: #{rel_partial_learnable_decoder_layer.7} parent=113 // pred_region
                _
              $region140: #{rel_partial_learnable_decoder_layer.7} parent=113 // pred_fallthru
                _
            $region114: #{rel_partial_learnable_decoder_layer.7} parent=109 // pred_fallthru
              _
            // Predicated region
            $region115: #{rel_partial_learnable_decoder_layer.7} parent=109 // pred_check
              _
            $region116: #{rel_partial_learnable_decoder_layer.7} parent=109 // pred_check_branch
              %2379 = sbr.rel target = $region118
            $region117: #{rel_partial_learnable_decoder_layer.7} parent=109 // pred_region
              loop: start=0, step=1, limit=1
              $region119: #{rel_partial_learnable_decoder_layer.7} parent=117 // loop_pre_header
                _
              $region120: #{rel_partial_learnable_decoder_layer.7} parent=117 // loop_header
                %s2382 = sphi 0, %s2386
                %p2383 = scmp.ge.s32.totalorder %s2382, 1
                %s2387 = sphi %s2365, %s2365
                %s2388 = sphi %s2373, %s2373
              $region121: #{rel_partial_learnable_decoder_layer.7} parent=117 // loop_header_branch
                %2385 = sbr.rel (%p2383) target = $region125
              $region122: #{rel_partial_learnable_decoder_layer.7} parent=117 // loop_body
                %v2389 = vld [vmem:[%s2387] sm:$0xff]
                %2390 = vst [vmem:[%s2388] sm:$0xff] %v2389
                %v2391 = vld [vmem:[%s2387 + $0x8] sm:$0xff]
                %2392 = vst [vmem:[%s2388 + $0x10] sm:$0xff] %v2391
                %v2393 = vld [vmem:[%s2387 + $0x10] sm:$0xff]
                %2394 = vst [vmem:[%s2388 + $0x20] sm:$0xff] %v2393
                %v2395 = vld [vmem:[%s2387 + $0x18] sm:$0xff]
                %2396 = vst [vmem:[%s2388 + $0x30] sm:$0xff] %v2395
                %v2397 = vld [vmem:[%s2387 + $0x20] sm:$0xff]
                %2398 = vst [vmem:[%s2388 + $0x40] sm:$0xff] %v2397
                %v2399 = vld [vmem:[%s2387 + $0x28] sm:$0xff]
                %2400 = vst [vmem:[%s2388 + $0x50] sm:$0xff] %v2399
                %v2401 = vld [vmem:[%s2387 + $0x30] sm:$0xff]
                %2402 = vst [vmem:[%s2388 + $0x60] sm:$0xff] %v2401
                %v2403 = vld [vmem:[%s2387 + $0x38] sm:$0xff]
                %2404 = vst [vmem:[%s2388 + $0x70] sm:$0xff] %v2403
                %v2405 = vld [vmem:[%s2387 + $0x40] sm:$0xff]
                %2406 = vst [vmem:[%s2388 + $0x80] sm:$0xff] %v2405
                %v2407 = vld [vmem:[%s2387 + $0x48] sm:$0xff]
                %2408 = vst [vmem:[%s2388 + $0x90] sm:$0xff] %v2407
                %v2409 = vld [vmem:[%s2387 + $0x50] sm:$0xff]
                %2410 = vst [vmem:[%s2388 + $0xa0] sm:$0xff] %v2409
                %v2411 = vld [vmem:[%s2387 + $0x58] sm:$0xff]
                %2412 = vst [vmem:[%s2388 + $0xb0] sm:$0xff] %v2411
                %v2413 = vld [vmem:[%s2387 + $0x60] sm:$0xff]
                %2414 = vst [vmem:[%s2388 + $0xc0] sm:$0xff] %v2413
                %v2415 = vld [vmem:[%s2387 + $0x68] sm:$0xff]
                %2416 = vst [vmem:[%s2388 + $0xd0] sm:$0xff] %v2415
                %v2417 = vld [vmem:[%s2387 + $0x70] sm:$0xff]
                %2418 = vst [vmem:[%s2388 + $0xe0] sm:$0xff] %v2417
                %v2419 = vld [vmem:[%s2387 + $0x78] sm:$0xff]
                %2420 = vst [vmem:[%s2388 + $0xf0] sm:$0xff] %v2419
              $region123: #{rel_partial_learnable_decoder_layer.7} parent=117 // loop_footer
                %s2386 = sadd.s32 1, %s2382
              $region124: #{rel_partial_learnable_decoder_layer.7} parent=117 // loop_footer_branch
                %2381 = sbr.rel target = $region120
              $region125: #{rel_partial_learnable_decoder_layer.7} parent=117 // loop_exit
                _
            $region118: #{rel_partial_learnable_decoder_layer.7} parent=109 // pred_fallthru
              _
          $region110: #{rel_partial_learnable_decoder_layer.7} parent=105 // pred_fallthru
            _
          %2465 = vnop
        $region106: #{rel_partial_learnable_decoder_layer.7} parent=97 // pred_fallthru
          _
      $region98: #{rel_partial_learnable_decoder_layer.7} parent=5 // pred_fallthru
        _
      %p2466 = scmp.le.s32.totalorder 2, %s17
      // Predicated region
      $region141: #{rel_partial_learnable_decoder_layer.7} parent=5 // pred_check
        %p2467 = pneg %p2466
      $region142: #{rel_partial_learnable_decoder_layer.7} parent=5 // pred_check_branch
        %2469 = sbr.rel (%p2467) target = $region144
      $region143: #{rel_partial_learnable_decoder_layer.7} parent=5 // pred_region
        %s2470 = ssub.s32 %s17, 2
        // Predicated region
        $region145: #{rel_partial_learnable_decoder_layer.7} parent=143 // pred_check
          %p2471 = pneg %p305
        $region146: #{rel_partial_learnable_decoder_layer.7} parent=143 // pred_check_branch
          %2473 = sbr.rel (%p2471) target = $region148
        $region147: #{rel_partial_learnable_decoder_layer.7} parent=143 // pred_region
          %s2474 = sand.u32 %s290, 1
          %s2475 = sand.u32 %s290, 1
          %s2476 = smul.addr %s2475, 128
          %s2477 = scalar_lea.vmem [#allocation3], %s2476
        $region148: #{rel_partial_learnable_decoder_layer.7} parent=143 // pred_fallthru
          _
      $region144: #{rel_partial_learnable_decoder_layer.7} parent=5 // pred_fallthru
        _
    $region6: #{rel_partial_learnable_decoder_layer.7} parent=1 // loop_footer
      %s21 = sadd.s32 1, %s17
    $region7: #{rel_partial_learnable_decoder_layer.7} parent=1 // loop_footer_branch
      %16 = sbr.rel target = $region3
    $region8: #{rel_partial_learnable_decoder_layer.7} parent=1 // loop_exit
      _

</llo_original>
